<compile_context>
chip_gen: v6e
topology: v6e:2x2x1
jax: 0.10.0
libtpu: 0.0.40
codegen_flags: <defaults>
</compile_context>

<pallas_src>
import functools

import jax
import jax.numpy as jnp
from jax.experimental import pallas as pl
from jax.experimental.pallas import tpu as pltpu

LANE = 128
VMEM_LIMIT = 32 * 1024 * 1024  # scoped-VMEM budget, safe on v5e/v6e/v7x


# ---------------------------------------------------------------------------
# helpers
# ---------------------------------------------------------------------------
def _round_up(x, m):
    return ((x + m - 1) // m) * m


def _pick_tile(total, target, mult):
    """Largest tile <= target dividing `total`, multiple of `mult` (else full)."""
    if total <= target:
        return total
    for t in range(target, 0, -1):
        if total % t == 0 and t % mult == 0:
            return t
    return total


# ---------------------------------------------------------------------------
# fused Conv(3x3,pad1) -> BN(eval) -> ReLU -> MaxPool(2,2) kernel
# ---------------------------------------------------------------------------
def _conv_bn_relu_pool_kernel(a_ref, w_ref, scale_ref, shift_ref, o_ref, *, hp, wp):
    """One image per grid step.

    a_ref:  (8, 1, (hp+1)*wp, Cin) bf16 pre-shifted pooling-phase slabs.
            Variant a = py*4 + px*2 + ow holds padded-input element
            xp[2r+py, px+2*ow+2*j, :] at row r*wp + j.
    w_ref:  (9, Cin, Cout_pad) bf16 conv taps (kh*3+kw major).
    scale/shift: (1, Cout_pad) f32 folded conv-bias + BatchNorm affine.
    o_ref:  (1, hp*wp, Cout_pad) bf16 pooled output (row = h*wp + w).
    """
    hw = hp * wp
    cout = o_ref.shape[-1]
    acc = jnp.zeros((4 * hw, cout), jnp.float32)

    # 3x3 taps; each tap is ONE matmul over the 4 pooling quadrants stacked on M.
    for kh in range(3):
        for kw in range(3):
            slabs = []
            for dy in range(2):            # quadrants (0,0),(0,1),(1,0),(1,1)
                for dx in range(2):
                    sy, sx = dy + kh, dx + kw
                    a = (sy % 2) * 4 + (sx % 2) * 2 + (sx // 2)
                    oh = sy // 2
                    slabs.append(a_ref[a, 0, oh * wp: oh * wp + hw, :])
            lhs = jnp.concatenate(slabs, axis=0)               # (4*hw, Cin) bf16
            acc = acc + jnp.dot(lhs, w_ref[kh * 3 + kw],
                                preferred_element_type=jnp.float32)

    # BN affine + ReLU once over all quadrants (sign-safe: affine before max),
    # then the 2x2 max reduction over the four aligned quadrant chunks.
    act = jnp.maximum(acc * scale_ref[...] + shift_ref[...], 0.0)
    pooled = jnp.maximum(jnp.maximum(act[0:hw], act[hw:2 * hw]),
                         jnp.maximum(act[2 * hw:3 * hw], act[3 * hw:4 * hw]))
    o_ref[0] = pooled.astype(o_ref.dtype)


def conv_bn_relu_pool(slabs, w, scale, shift, hp, wp):
    """slabs: (8, N, (hp+1)*wp, Cin) bf16; w: (9, Cin, Cout_pad) bf16;
    scale/shift: (Cout_pad,) f32. Returns (N, hp*wp, Cout_pad) bf16."""
    _, n, rows, cin = slabs.shape
    cout = w.shape[-1]
    scale = scale.reshape(1, cout).astype(jnp.float32)
    shift = shift.reshape(1, cout).astype(jnp.float32)
    cost = pl.CostEstimate(
        flops=2 * 9 * n * (4 * hp * wp) * cin * cout,
        transcendentals=0,
        bytes_accessed=(slabs.size * 2 + w.size * 2
                        + (scale.size + shift.size) * 4
                        + n * hp * wp * cout * 2),
    )
    return pl.pallas_call(
        functools.partial(_conv_bn_relu_pool_kernel, hp=hp, wp=wp),
        out_shape=jax.ShapeDtypeStruct((n, hp * wp, cout), jnp.bfloat16),
        grid_spec=pltpu.PrefetchScalarGridSpec(
            num_scalar_prefetch=0,
            grid=(n,),
            in_specs=[
                pl.BlockSpec((8, 1, rows, cin), lambda i: (0, i, 0, 0)),
                pl.BlockSpec((9, cin, cout), lambda i: (0, 0, 0)),
                pl.BlockSpec((1, cout), lambda i: (0, 0)),
                pl.BlockSpec((1, cout), lambda i: (0, 0)),
            ],
            out_specs=pl.BlockSpec((1, hp * wp, cout), lambda i: (i, 0, 0)),
        ),
        compiler_params=pltpu.CompilerParams(
            dimension_semantics=("parallel",),
            vmem_limit_bytes=VMEM_LIMIT,
        ),
        cost_estimate=cost,
    )(slabs, w, scale, shift)


# ---------------------------------------------------------------------------
# fused classifier: Linear(flat,128) + ReLU + [Dropout=identity] + Linear(128,nc)
# ---------------------------------------------------------------------------
def _classifier_kernel(x_ref, w1_ref, b1_ref, w2_ref, b2_ref, o_ref):
    h = jnp.dot(x_ref[...], w1_ref[...], preferred_element_type=jnp.float32)
    h = jnp.maximum(h + b1_ref[...], 0.0)
    # Dropout(0.5) is identity at inference.
    out = jnp.dot(h.astype(jnp.bfloat16), w2_ref[...],
                  preferred_element_type=jnp.float32)
    o_ref[...] = (out + b2_ref[...]).astype(o_ref.dtype)


def classifier(x, w1, b1, w2, b2):
    """x: (M, K) bf16; w1: (K, H) bf16; w2: (H, Npad) bf16. Returns (M, Npad) f32."""
    m, k = x.shape
    hdim = w1.shape[1]
    npad = w2.shape[1]
    b1 = b1.reshape(1, hdim).astype(jnp.float32)
    b2 = b2.reshape(1, npad).astype(jnp.float32)
    tm = _pick_tile(m, 256, 8)
    cost = pl.CostEstimate(
        flops=2 * m * k * hdim + 2 * m * hdim * npad,
        transcendentals=0,
        bytes_accessed=(x.size * 2 + w1.size * 2 + w2.size * 2
                        + (b1.size + b2.size) * 4 + m * npad * 4),
    )
    return pl.pallas_call(
        _classifier_kernel,
        out_shape=jax.ShapeDtypeStruct((m, npad), jnp.float32),
        grid_spec=pltpu.PrefetchScalarGridSpec(
            num_scalar_prefetch=0,
            grid=(m // tm,),
            in_specs=[
                pl.BlockSpec((tm, k), lambda i: (i, 0)),
                pl.BlockSpec((k, hdim), lambda i: (0, 0)),
                pl.BlockSpec((1, hdim), lambda i: (0, 0)),
                pl.BlockSpec((hdim, npad), lambda i: (0, 0)),
                pl.BlockSpec((1, npad), lambda i: (0, 0)),
            ],
            out_specs=pl.BlockSpec((tm, npad), lambda i: (i, 0)),
        ),
        compiler_params=pltpu.CompilerParams(
            dimension_semantics=("parallel",),
            vmem_limit_bytes=VMEM_LIMIT,
        ),
        cost_estimate=cost,
    )(x, w1, b1, w2, b2)


# ---------------------------------------------------------------------------
# Glue (plain JAX): pooling-phase decomposition, BN folding, parameter setup
# ---------------------------------------------------------------------------
def pool_phase_slabs(x_nhwc, cin_pad):
    """Decompose an NHWC image (H, W even) into 8 pre-shifted pooling-phase
    slabs so the fused conv kernel assembles all 3x3 patch reads with
    contiguous static VMEM slices only (~2x the input in HBM vs 9x im2col).

        slab[py*4 + px*2 + ow][n, r*wp + j, :] = xp[n, 2r+py, px+2*ow+2*j, :]

    xp = zero-padded (pad=1) input, r in [0, hp], j in [0, wp)."""
    n, h, w, c = x_nhwc.shape
    hp, wp = h // 2, w // 2
    xp = jnp.pad(x_nhwc, ((0, 0), (1, 1), (1, 1), (0, cin_pad - c)))
    slabs = []
    for py in range(2):
        for px in range(2):
            for ow in range(2):
                s = xp[:, py::2, px + 2 * ow: px + 2 * ow + 2 * wp: 2, :]
                slabs.append(s.reshape(n, (hp + 1) * wp, cin_pad))
    return jnp.stack(slabs, axis=0).astype(jnp.bfloat16)


def bn_fold(conv_bias, bn):
    """Fold conv bias + BatchNorm(eval) into per-channel (scale, shift)."""
    gamma, beta, mean, var, eps = bn
    s = gamma / jnp.sqrt(var + eps)
    t = (conv_bias - mean) * s + beta
    return s, t


def init_params(num_channels, image_size, num_classes, key):
    ks = jax.random.split(key, 6)
    flat_dim = (image_size // 4) ** 2 * 64

    def bn_params(c):
        # PyTorch BatchNorm2d defaults: gamma=1, beta=0, mean=0, var=1
        return (jnp.ones((c,), jnp.float32), jnp.zeros((c,), jnp.float32),
                jnp.zeros((c,), jnp.float32), jnp.ones((c,), jnp.float32), 1e-5)

    return {
        # conv weights stored (kh, kw, C_in, C_out); torch layout is
        # (C_out, C_in, kh, kw) -> transpose (2, 3, 1, 0) when porting.
        "conv1_w": jax.random.normal(ks[0], (3, 3, num_channels, 32), jnp.float32) * 0.05,
        "conv1_b": jax.random.normal(ks[1], (32,), jnp.float32) * 0.05,
        "bn1": bn_params(32),
        "conv2_w": jax.random.normal(ks[2], (3, 3, 32, 64), jnp.float32) * 0.05,
        "conv2_b": jax.random.normal(ks[3], (64,), jnp.float32) * 0.05,
        "bn2": bn_params(64),
        # linear weights stored (in, out); flatten order is torch's (C, H, W)
        "fc1_w": jax.random.normal(ks[4], (flat_dim, 128), jnp.float32) * 0.02,
        "fc1_b": jnp.zeros((128,), jnp.float32),
        "fc2_w": jax.random.normal(ks[5], (128, num_classes), jnp.float32) * 0.02,
        "fc2_b": jnp.zeros((num_classes,), jnp.float32),
    }


# ---------------------------------------------------------------------------
# Forward pass
# ---------------------------------------------------------------------------
def simple_cnn_forward(x_nchw, params):
    x_nchw = x_nchw.astype(jnp.float32)
    n, c, h, w = x_nchw.shape
    assert h % 4 == 0 and w % 4 == 0, "two MaxPool(2,2) stages need H, W % 4 == 0"
    num_classes = params["fc2_w"].shape[1]
    x = jnp.transpose(x_nchw, (0, 2, 3, 1))                       # NHWC

    # -- block 1: Conv(3x3,pad1) -> BN -> ReLU -> MaxPool(2,2), fused kernel.
    h1, w1 = h // 2, w // 2
    c1p = _round_up(c, 16)
    s1, t1 = bn_fold(params["conv1_b"], params["bn1"])
    wk1 = jnp.pad(params["conv1_w"].astype(jnp.bfloat16),
                  ((0, 0), (0, 0), (0, c1p - c), (0, LANE - 32))
                  ).reshape(9, c1p, LANE)
    a1 = pool_phase_slabs(x, c1p)
    y = conv_bn_relu_pool(a1, wk1,
                          jnp.pad(s1, (0, LANE - 32)),
                          jnp.pad(t1, (0, LANE - 32)), h1, w1)    # (n, h1*w1, 128) bf16

    # -- block 2: consumes the 128-lane-padded conv1 output directly
    #    (conv2 weights zero-padded along C_in -> no slice/re-pad pass).
    h2, w2 = h1 // 2, w1 // 2
    s2, t2 = bn_fold(params["conv2_b"], params["bn2"])
    wk2 = jnp.pad(params["conv2_w"].astype(jnp.bfloat16),
                  ((0, 0), (0, 0), (0, LANE - 32), (0, LANE - 64))
                  ).reshape(9, LANE, LANE)
    a2 = pool_phase_slabs(y.reshape(n, h1, w1, LANE), LANE)
    z = conv_bn_relu_pool(a2, wk2,
                          jnp.pad(s2, (0, LANE - 64)),
                          jnp.pad(t2, (0, LANE - 64)), h2, w2)    # (n, h2*w2, 128) bf16

    # -- classifier: fc1 + ReLU + (Dropout=identity) + fc2 in one fused kernel.
    #    torch's (C,H,W) flatten order and the channel padding are folded into
    #    the fc1 weight rows -> the conv2 output is consumed in native layout.
    flat = z.reshape(n, h2 * w2 * LANE)                           # bf16, no transpose
    w1e = params["fc1_w"].reshape(64, h2, w2, 128)                # (c, h, w, out)
    w1e = jnp.transpose(w1e, (1, 2, 0, 3))                        # (h, w, c, out)
    w1e = jnp.pad(w1e, ((0, 0), (0, 0), (0, LANE - 64), (0, 0)))
    w1e = w1e.reshape(h2 * w2 * LANE, 128).astype(jnp.bfloat16)
    w2e = jnp.pad(params["fc2_w"].astype(jnp.bfloat16),
                  ((0, 0), (0, LANE - num_classes)))
    b2e = jnp.pad(params["fc2_b"].astype(jnp.float32), (0, LANE - num_classes))
    logits = classifier(flat, w1e, params["fc1_b"], w2e, b2e)     # (n, 128) f32
    return logits[:, :num_classes]


# ---------------------------------------------------------------------------
if __name__ == "__main__":
    batch, num_channels, image_size, num_classes = 2, 4, 16, 10

    key = jax.random.PRNGKey(0)
    k_x, k_p = jax.random.split(key)
    x = jax.random.normal(k_x, (batch, num_channels, image_size, image_size),
                          jnp.float32)
    params = init_params(num_channels, image_size, num_classes, k_p)

    out = jax.jit(simple_cnn_forward)(x, params)
    out = jax.block_until_ready(out)
    assert out.shape == (batch, num_classes), out.shape
    assert bool(jnp.all(jnp.isfinite(out)))
    print("KERNEL_OK")
</pallas_src>

<mosaic_0001>
module attributes {stable_mosaic.version = 11 : i64} {
  func.func @_conv_bn_relu_pool_kernel(%arg0: i32, %arg1: memref<8x1x72x16xbf16, #tpu.memory_space<vmem>>, %arg2: memref<9x16x128xbf16, #tpu.memory_space<vmem>>, %arg3: memref<1x128xf32, #tpu.memory_space<vmem>>, %arg4: memref<1x128xf32, #tpu.memory_space<vmem>>, %arg5: memref<1x64x128xbf16, #tpu.memory_space<vmem>>) attributes {dimension_semantics = [#tpu.dimension_semantics<parallel>], iteration_bounds = array<i64: 2>, scalar_prefetch = 0 : i64, scratch_operands = 0 : i64, tpu.core_type = #tpu.core_type<tc>, window_params = [{transform_indices = @transform_0, window_bounds = array<i64: 8, 1, 72, 16>}, {pipeline_mode = #tpu.pipeline_mode<synchronous>, transform_indices = @transform_1, window_bounds = array<i64: 9, 16, 128>}, {pipeline_mode = #tpu.pipeline_mode<synchronous>, transform_indices = @transform_2, window_bounds = array<i64: 1, 128>}, {pipeline_mode = #tpu.pipeline_mode<synchronous>, transform_indices = @transform_3, window_bounds = array<i64: 1, 128>}, {transform_indices = @transform_4, window_bounds = array<i64: 1, 64, 128>}]} {
    %cst = arith.constant 0.000000e+00 : f32
    %0 = vector.broadcast %cst : f32 to vector<256x128xf32>
    %c0 = arith.constant 0 : index
    %c0_0 = arith.constant 0 : index
    %c0_1 = arith.constant 0 : index
    %c0_2 = arith.constant 0 : index
    %1 = vector.load %arg1[%c0, %c0_0, %c0_1, %c0_2] : memref<8x1x72x16xbf16, #tpu.memory_space<vmem>>, vector<1x1x64x16xbf16>
    %2 = vector.shape_cast %1 : vector<1x1x64x16xbf16> to vector<64x16xbf16>
    %c2 = arith.constant 2 : index
    %c0_3 = arith.constant 0 : index
    %c0_4 = arith.constant 0 : index
    %c0_5 = arith.constant 0 : index
    %3 = vector.load %arg1[%c2, %c0_3, %c0_4, %c0_5] : memref<8x1x72x16xbf16, #tpu.memory_space<vmem>>, vector<1x1x64x16xbf16>
    %4 = vector.shape_cast %3 : vector<1x1x64x16xbf16> to vector<64x16xbf16>
    %c4 = arith.constant 4 : index
    %c0_6 = arith.constant 0 : index
    %c0_7 = arith.constant 0 : index
    %c0_8 = arith.constant 0 : index
    %5 = vector.load %arg1[%c4, %c0_6, %c0_7, %c0_8] : memref<8x1x72x16xbf16, #tpu.memory_space<vmem>>, vector<1x1x64x16xbf16>
    %6 = vector.shape_cast %5 : vector<1x1x64x16xbf16> to vector<64x16xbf16>
    %c6 = arith.constant 6 : index
    %c0_9 = arith.constant 0 : index
    %c0_10 = arith.constant 0 : index
    %c0_11 = arith.constant 0 : index
    %7 = vector.load %arg1[%c6, %c0_9, %c0_10, %c0_11] : memref<8x1x72x16xbf16, #tpu.memory_space<vmem>>, vector<1x1x64x16xbf16>
    %8 = vector.shape_cast %7 : vector<1x1x64x16xbf16> to vector<64x16xbf16>
    %9 = tpu.concatenate %2, %4, %6, %8 in 0 : vector<64x16xbf16>, vector<64x16xbf16>, vector<64x16xbf16>, vector<64x16xbf16> -> vector<256x16xbf16>
    %c0_12 = arith.constant 0 : index
    %c0_13 = arith.constant 0 : index
    %c0_14 = arith.constant 0 : index
    %10 = vector.load %arg2[%c0_12, %c0_13, %c0_14] : memref<9x16x128xbf16, #tpu.memory_space<vmem>>, vector<1x16x128xbf16>
    %11 = vector.shape_cast %10 : vector<1x16x128xbf16> to vector<16x128xbf16>
    %cst_15 = arith.constant dense<0.000000e+00> : vector<256x128xf32>
    %12 = tpu.matmul %9, %11, %cst_15 {dimension_numbers = #tpu.dot_dimension_numbers<[1], [0], [0], [1], [0, 0, 1, 1], [], []>} : vector<256x16xbf16>, vector<16x128xbf16>, vector<256x128xf32> -> vector<256x128xf32>
    %13 = arith.addf %0, %12 : vector<256x128xf32>
    %c2_16 = arith.constant 2 : index
    %c0_17 = arith.constant 0 : index
    %c0_18 = arith.constant 0 : index
    %c0_19 = arith.constant 0 : index
    %14 = vector.load %arg1[%c2_16, %c0_17, %c0_18, %c0_19] : memref<8x1x72x16xbf16, #tpu.memory_space<vmem>>, vector<1x1x64x16xbf16>
    %15 = vector.shape_cast %14 : vector<1x1x64x16xbf16> to vector<64x16xbf16>
    %c1 = arith.constant 1 : index
    %c0_20 = arith.constant 0 : index
    %c0_21 = arith.constant 0 : index
    %c0_22 = arith.constant 0 : index
    %16 = vector.load %arg1[%c1, %c0_20, %c0_21, %c0_22] : memref<8x1x72x16xbf16, #tpu.memory_space<vmem>>, vector<1x1x64x16xbf16>
    %17 = vector.shape_cast %16 : vector<1x1x64x16xbf16> to vector<64x16xbf16>
    %c6_23 = arith.constant 6 : index
    %c0_24 = arith.constant 0 : index
    %c0_25 = arith.constant 0 : index
    %c0_26 = arith.constant 0 : index
    %18 = vector.load %arg1[%c6_23, %c0_24, %c0_25, %c0_26] : memref<8x1x72x16xbf16, #tpu.memory_space<vmem>>, vector<1x1x64x16xbf16>
    %19 = vector.shape_cast %18 : vector<1x1x64x16xbf16> to vector<64x16xbf16>
    %c5 = arith.constant 5 : index
    %c0_27 = arith.constant 0 : index
    %c0_28 = arith.constant 0 : index
    %c0_29 = arith.constant 0 : index
    %20 = vector.load %arg1[%c5, %c0_27, %c0_28, %c0_29] : memref<8x1x72x16xbf16, #tpu.memory_space<vmem>>, vector<1x1x64x16xbf16>
    %21 = vector.shape_cast %20 : vector<1x1x64x16xbf16> to vector<64x16xbf16>
    %22 = tpu.concatenate %15, %17, %19, %21 in 0 : vector<64x16xbf16>, vector<64x16xbf16>, vector<64x16xbf16>, vector<64x16xbf16> -> vector<256x16xbf16>
    %c1_30 = arith.constant 1 : index
    %c0_31 = arith.constant 0 : index
    %c0_32 = arith.constant 0 : index
    %23 = vector.load %arg2[%c1_30, %c0_31, %c0_32] : memref<9x16x128xbf16, #tpu.memory_space<vmem>>, vector<1x16x128xbf16>
    %24 = vector.shape_cast %23 : vector<1x16x128xbf16> to vector<16x128xbf16>
    %cst_33 = arith.constant dense<0.000000e+00> : vector<256x128xf32>
    %25 = tpu.matmul %22, %24, %cst_33 {dimension_numbers = #tpu.dot_dimension_numbers<[1], [0], [0], [1], [0, 0, 1, 1], [], []>} : vector<256x16xbf16>, vector<16x128xbf16>, vector<256x128xf32> -> vector<256x128xf32>
    %26 = arith.addf %13, %25 : vector<256x128xf32>
    %c1_34 = arith.constant 1 : index
    %c0_35 = arith.constant 0 : index
    %c0_36 = arith.constant 0 : index
    %c0_37 = arith.constant 0 : index
    %27 = vector.load %arg1[%c1_34, %c0_35, %c0_36, %c0_37] : memref<8x1x72x16xbf16, #tpu.memory_space<vmem>>, vector<1x1x64x16xbf16>
    %28 = vector.shape_cast %27 : vector<1x1x64x16xbf16> to vector<64x16xbf16>
    %c3 = arith.constant 3 : index
    %c0_38 = arith.constant 0 : index
    %c0_39 = arith.constant 0 : index
    %c0_40 = arith.constant 0 : index
    %29 = vector.load %arg1[%c3, %c0_38, %c0_39, %c0_40] : memref<8x1x72x16xbf16, #tpu.memory_space<vmem>>, vector<1x1x64x16xbf16>
    %30 = vector.shape_cast %29 : vector<1x1x64x16xbf16> to vector<64x16xbf16>
    %c5_41 = arith.constant 5 : index
    %c0_42 = arith.constant 0 : index
    %c0_43 = arith.constant 0 : index
    %c0_44 = arith.constant 0 : index
    %31 = vector.load %arg1[%c5_41, %c0_42, %c0_43, %c0_44] : memref<8x1x72x16xbf16, #tpu.memory_space<vmem>>, vector<1x1x64x16xbf16>
    %32 = vector.shape_cast %31 : vector<1x1x64x16xbf16> to vector<64x16xbf16>
    %c7 = arith.constant 7 : index
    %c0_45 = arith.constant 0 : index
    %c0_46 = arith.constant 0 : index
    %c0_47 = arith.constant 0 : index
    %33 = vector.load %arg1[%c7, %c0_45, %c0_46, %c0_47] : memref<8x1x72x16xbf16, #tpu.memory_space<vmem>>, vector<1x1x64x16xbf16>
    %34 = vector.shape_cast %33 : vector<1x1x64x16xbf16> to vector<64x16xbf16>
    %35 = tpu.concatenate %28, %30, %32, %34 in 0 : vector<64x16xbf16>, vector<64x16xbf16>, vector<64x16xbf16>, vector<64x16xbf16> -> vector<256x16xbf16>
    %c2_48 = arith.constant 2 : index
    %c0_49 = arith.constant 0 : index
    %c0_50 = arith.constant 0 : index
    %36 = vector.load %arg2[%c2_48, %c0_49, %c0_50] : memref<9x16x128xbf16, #tpu.memory_space<vmem>>, vector<1x16x128xbf16>
    %37 = vector.shape_cast %36 : vector<1x16x128xbf16> to vector<16x128xbf16>
    %cst_51 = arith.constant dense<0.000000e+00> : vector<256x128xf32>
    %38 = tpu.matmul %35, %37, %cst_51 {dimension_numbers = #tpu.dot_dimension_numbers<[1], [0], [0], [1], [0, 0, 1, 1], [], []>} : vector<256x16xbf16>, vector<16x128xbf16>, vector<256x128xf32> -> vector<256x128xf32>
    %39 = arith.addf %26, %38 : vector<256x128xf32>
    %c4_52 = arith.constant 4 : index
    %c0_53 = arith.constant 0 : index
    %c0_54 = arith.constant 0 : index
    %c0_55 = arith.constant 0 : index
    %40 = vector.load %arg1[%c4_52, %c0_53, %c0_54, %c0_55] : memref<8x1x72x16xbf16, #tpu.memory_space<vmem>>, vector<1x1x64x16xbf16>
    %41 = vector.shape_cast %40 : vector<1x1x64x16xbf16> to vector<64x16xbf16>
    %c6_56 = arith.constant 6 : index
    %c0_57 = arith.constant 0 : index
    %c0_58 = arith.constant 0 : index
    %c0_59 = arith.constant 0 : index
    %42 = vector.load %arg1[%c6_56, %c0_57, %c0_58, %c0_59] : memref<8x1x72x16xbf16, #tpu.memory_space<vmem>>, vector<1x1x64x16xbf16>
    %43 = vector.shape_cast %42 : vector<1x1x64x16xbf16> to vector<64x16xbf16>
    %c0_60 = arith.constant 0 : index
    %c0_61 = arith.constant 0 : index
    %c8 = arith.constant 8 : index
    %c0_62 = arith.constant 0 : index
    %44 = vector.load %arg1[%c0_60, %c0_61, %c8, %c0_62] : memref<8x1x72x16xbf16, #tpu.memory_space<vmem>>, vector<1x1x64x16xbf16>
    %45 = vector.shape_cast %44 : vector<1x1x64x16xbf16> to vector<64x16xbf16>
    %c2_63 = arith.constant 2 : index
    %c0_64 = arith.constant 0 : index
    %c8_65 = arith.constant 8 : index
    %c0_66 = arith.constant 0 : index
    %46 = vector.load %arg1[%c2_63, %c0_64, %c8_65, %c0_66] : memref<8x1x72x16xbf16, #tpu.memory_space<vmem>>, vector<1x1x64x16xbf16>
    %47 = vector.shape_cast %46 : vector<1x1x64x16xbf16> to vector<64x16xbf16>
    %48 = tpu.concatenate %41, %43, %45, %47 in 0 : vector<64x16xbf16>, vector<64x16xbf16>, vector<64x16xbf16>, vector<64x16xbf16> -> vector<256x16xbf16>
    %c3_67 = arith.constant 3 : index
    %c0_68 = arith.constant 0 : index
    %c0_69 = arith.constant 0 : index
    %49 = vector.load %arg2[%c3_67, %c0_68, %c0_69] : memref<9x16x128xbf16, #tpu.memory_space<vmem>>, vector<1x16x128xbf16>
    %50 = vector.shape_cast %49 : vector<1x16x128xbf16> to vector<16x128xbf16>
    %cst_70 = arith.constant dense<0.000000e+00> : vector<256x128xf32>
    %51 = tpu.matmul %48, %50, %cst_70 {dimension_numbers = #tpu.dot_dimension_numbers<[1], [0], [0], [1], [0, 0, 1, 1], [], []>} : vector<256x16xbf16>, vector<16x128xbf16>, vector<256x128xf32> -> vector<256x128xf32>
    %52 = arith.addf %39, %51 : vector<256x128xf32>
    %c6_71 = arith.constant 6 : index
    %c0_72 = arith.constant 0 : index
    %c0_73 = arith.constant 0 : index
    %c0_74 = arith.constant 0 : index
    %53 = vector.load %arg1[%c6_71, %c0_72, %c0_73, %c0_74] : memref<8x1x72x16xbf16, #tpu.memory_space<vmem>>, vector<1x1x64x16xbf16>
    %54 = vector.shape_cast %53 : vector<1x1x64x16xbf16> to vector<64x16xbf16>
    %c5_75 = arith.constant 5 : index
    %c0_76 = arith.constant 0 : index
    %c0_77 = arith.constant 0 : index
    %c0_78 = arith.constant 0 : index
    %55 = vector.load %arg1[%c5_75, %c0_76, %c0_77, %c0_78] : memref<8x1x72x16xbf16, #tpu.memory_space<vmem>>, vector<1x1x64x16xbf16>
    %56 = vector.shape_cast %55 : vector<1x1x64x16xbf16> to vector<64x16xbf16>
    %c2_79 = arith.constant 2 : index
    %c0_80 = arith.constant 0 : index
    %c8_81 = arith.constant 8 : index
    %c0_82 = arith.constant 0 : index
    %57 = vector.load %arg1[%c2_79, %c0_80, %c8_81, %c0_82] : memref<8x1x72x16xbf16, #tpu.memory_space<vmem>>, vector<1x1x64x16xbf16>
    %58 = vector.shape_cast %57 : vector<1x1x64x16xbf16> to vector<64x16xbf16>
    %c1_83 = arith.constant 1 : index
    %c0_84 = arith.constant 0 : index
    %c8_85 = arith.constant 8 : index
    %c0_86 = arith.constant 0 : index
    %59 = vector.load %arg1[%c1_83, %c0_84, %c8_85, %c0_86] : memref<8x1x72x16xbf16, #tpu.memory_space<vmem>>, vector<1x1x64x16xbf16>
    %60 = vector.shape_cast %59 : vector<1x1x64x16xbf16> to vector<64x16xbf16>
    %61 = tpu.concatenate %54, %56, %58, %60 in 0 : vector<64x16xbf16>, vector<64x16xbf16>, vector<64x16xbf16>, vector<64x16xbf16> -> vector<256x16xbf16>
    %c4_87 = arith.constant 4 : index
    %c0_88 = arith.constant 0 : index
    %c0_89 = arith.constant 0 : index
    %62 = vector.load %arg2[%c4_87, %c0_88, %c0_89] : memref<9x16x128xbf16, #tpu.memory_space<vmem>>, vector<1x16x128xbf16>
    %63 = vector.shape_cast %62 : vector<1x16x128xbf16> to vector<16x128xbf16>
    %cst_90 = arith.constant dense<0.000000e+00> : vector<256x128xf32>
    %64 = tpu.matmul %61, %63, %cst_90 {dimension_numbers = #tpu.dot_dimension_numbers<[1], [0], [0], [1], [0, 0, 1, 1], [], []>} : vector<256x16xbf16>, vector<16x128xbf16>, vector<256x128xf32> -> vector<256x128xf32>
    %65 = arith.addf %52, %64 : vector<256x128xf32>
    %c5_91 = arith.constant 5 : index
    %c0_92 = arith.constant 0 : index
    %c0_93 = arith.constant 0 : index
    %c0_94 = arith.constant 0 : index
    %66 = vector.load %arg1[%c5_91, %c0_92, %c0_93, %c0_94] : memref<8x1x72x16xbf16, #tpu.memory_space<vmem>>, vector<1x1x64x16xbf16>
    %67 = vector.shape_cast %66 : vector<1x1x64x16xbf16> to vector<64x16xbf16>
    %c7_95 = arith.constant 7 : index
    %c0_96 = arith.constant 0 : index
    %c0_97 = arith.constant 0 : index
    %c0_98 = arith.constant 0 : index
    %68 = vector.load %arg1[%c7_95, %c0_96, %c0_97, %c0_98] : memref<8x1x72x16xbf16, #tpu.memory_space<vmem>>, vector<1x1x64x16xbf16>
    %69 = vector.shape_cast %68 : vector<1x1x64x16xbf16> to vector<64x16xbf16>
    %c1_99 = arith.constant 1 : index
    %c0_100 = arith.constant 0 : index
    %c8_101 = arith.constant 8 : index
    %c0_102 = arith.constant 0 : index
    %70 = vector.load %arg1[%c1_99, %c0_100, %c8_101, %c0_102] : memref<8x1x72x16xbf16, #tpu.memory_space<vmem>>, vector<1x1x64x16xbf16>
    %71 = vector.shape_cast %70 : vector<1x1x64x16xbf16> to vector<64x16xbf16>
    %c3_103 = arith.constant 3 : index
    %c0_104 = arith.constant 0 : index
    %c8_105 = arith.constant 8 : index
    %c0_106 = arith.constant 0 : index
    %72 = vector.load %arg1[%c3_103, %c0_104, %c8_105, %c0_106] : memref<8x1x72x16xbf16, #tpu.memory_space<vmem>>, vector<1x1x64x16xbf16>
    %73 = vector.shape_cast %72 : vector<1x1x64x16xbf16> to vector<64x16xbf16>
    %74 = tpu.concatenate %67, %69, %71, %73 in 0 : vector<64x16xbf16>, vector<64x16xbf16>, vector<64x16xbf16>, vector<64x16xbf16> -> vector<256x16xbf16>
    %c5_107 = arith.constant 5 : index
    %c0_108 = arith.constant 0 : index
    %c0_109 = arith.constant 0 : index
    %75 = vector.load %arg2[%c5_107, %c0_108, %c0_109] : memref<9x16x128xbf16, #tpu.memory_space<vmem>>, vector<1x16x128xbf16>
    %76 = vector.shape_cast %75 : vector<1x16x128xbf16> to vector<16x128xbf16>
    %cst_110 = arith.constant dense<0.000000e+00> : vector<256x128xf32>
    %77 = tpu.matmul %74, %76, %cst_110 {dimension_numbers = #tpu.dot_dimension_numbers<[1], [0], [0], [1], [0, 0, 1, 1], [], []>} : vector<256x16xbf16>, vector<16x128xbf16>, vector<256x128xf32> -> vector<256x128xf32>
    %78 = arith.addf %65, %77 : vector<256x128xf32>
    %c0_111 = arith.constant 0 : index
    %c0_112 = arith.constant 0 : index
    %c8_113 = arith.constant 8 : index
    %c0_114 = arith.constant 0 : index
    %79 = vector.load %arg1[%c0_111, %c0_112, %c8_113, %c0_114] : memref<8x1x72x16xbf16, #tpu.memory_space<vmem>>, vector<1x1x64x16xbf16>
    %80 = vector.shape_cast %79 : vector<1x1x64x16xbf16> to vector<64x16xbf16>
    %c2_115 = arith.constant 2 : index
    %c0_116 = arith.constant 0 : index
    %c8_117 = arith.constant 8 : index
    %c0_118 = arith.constant 0 : index
    %81 = vector.load %arg1[%c2_115, %c0_116, %c8_117, %c0_118] : memref<8x1x72x16xbf16, #tpu.memory_space<vmem>>, vector<1x1x64x16xbf16>
    %82 = vector.shape_cast %81 : vector<1x1x64x16xbf16> to vector<64x16xbf16>
    %c4_119 = arith.constant 4 : index
    %c0_120 = arith.constant 0 : index
    %c8_121 = arith.constant 8 : index
    %c0_122 = arith.constant 0 : index
    %83 = vector.load %arg1[%c4_119, %c0_120, %c8_121, %c0_122] : memref<8x1x72x16xbf16, #tpu.memory_space<vmem>>, vector<1x1x64x16xbf16>
    %84 = vector.shape_cast %83 : vector<1x1x64x16xbf16> to vector<64x16xbf16>
    %c6_123 = arith.constant 6 : index
    %c0_124 = arith.constant 0 : index
    %c8_125 = arith.constant 8 : index
    %c0_126 = arith.constant 0 : index
    %85 = vector.load %arg1[%c6_123, %c0_124, %c8_125, %c0_126] : memref<8x1x72x16xbf16, #tpu.memory_space<vmem>>, vector<1x1x64x16xbf16>
    %86 = vector.shape_cast %85 : vector<1x1x64x16xbf16> to vector<64x16xbf16>
    %87 = tpu.concatenate %80, %82, %84, %86 in 0 : vector<64x16xbf16>, vector<64x16xbf16>, vector<64x16xbf16>, vector<64x16xbf16> -> vector<256x16xbf16>
    %c6_127 = arith.constant 6 : index
    %c0_128 = arith.constant 0 : index
    %c0_129 = arith.constant 0 : index
    %88 = vector.load %arg2[%c6_127, %c0_128, %c0_129] : memref<9x16x128xbf16, #tpu.memory_space<vmem>>, vector<1x16x128xbf16>
    %89 = vector.shape_cast %88 : vector<1x16x128xbf16> to vector<16x128xbf16>
    %cst_130 = arith.constant dense<0.000000e+00> : vector<256x128xf32>
    %90 = tpu.matmul %87, %89, %cst_130 {dimension_numbers = #tpu.dot_dimension_numbers<[1], [0], [0], [1], [0, 0, 1, 1], [], []>} : vector<256x16xbf16>, vector<16x128xbf16>, vector<256x128xf32> -> vector<256x128xf32>
    %91 = arith.addf %78, %90 : vector<256x128xf32>
    %c2_131 = arith.constant 2 : index
    %c0_132 = arith.constant 0 : index
    %c8_133 = arith.constant 8 : index
    %c0_134 = arith.constant 0 : index
    %92 = vector.load %arg1[%c2_131, %c0_132, %c8_133, %c0_134] : memref<8x1x72x16xbf16, #tpu.memory_space<vmem>>, vector<1x1x64x16xbf16>
    %93 = vector.shape_cast %92 : vector<1x1x64x16xbf16> to vector<64x16xbf16>
    %c1_135 = arith.constant 1 : index
    %c0_136 = arith.constant 0 : index
    %c8_137 = arith.constant 8 : index
    %c0_138 = arith.constant 0 : index
    %94 = vector.load %arg1[%c1_135, %c0_136, %c8_137, %c0_138] : memref<8x1x72x16xbf16, #tpu.memory_space<vmem>>, vector<1x1x64x16xbf16>
    %95 = vector.shape_cast %94 : vector<1x1x64x16xbf16> to vector<64x16xbf16>
    %c6_139 = arith.constant 6 : index
    %c0_140 = arith.constant 0 : index
    %c8_141 = arith.constant 8 : index
    %c0_142 = arith.constant 0 : index
    %96 = vector.load %arg1[%c6_139, %c0_140, %c8_141, %c0_142] : memref<8x1x72x16xbf16, #tpu.memory_space<vmem>>, vector<1x1x64x16xbf16>
    %97 = vector.shape_cast %96 : vector<1x1x64x16xbf16> to vector<64x16xbf16>
    %c5_143 = arith.constant 5 : index
    %c0_144 = arith.constant 0 : index
    %c8_145 = arith.constant 8 : index
    %c0_146 = arith.constant 0 : index
    %98 = vector.load %arg1[%c5_143, %c0_144, %c8_145, %c0_146] : memref<8x1x72x16xbf16, #tpu.memory_space<vmem>>, vector<1x1x64x16xbf16>
    %99 = vector.shape_cast %98 : vector<1x1x64x16xbf16> to vector<64x16xbf16>
    %100 = tpu.concatenate %93, %95, %97, %99 in 0 : vector<64x16xbf16>, vector<64x16xbf16>, vector<64x16xbf16>, vector<64x16xbf16> -> vector<256x16xbf16>
    %c7_147 = arith.constant 7 : index
    %c0_148 = arith.constant 0 : index
    %c0_149 = arith.constant 0 : index
    %101 = vector.load %arg2[%c7_147, %c0_148, %c0_149] : memref<9x16x128xbf16, #tpu.memory_space<vmem>>, vector<1x16x128xbf16>
    %102 = vector.shape_cast %101 : vector<1x16x128xbf16> to vector<16x128xbf16>
    %cst_150 = arith.constant dense<0.000000e+00> : vector<256x128xf32>
    %103 = tpu.matmul %100, %102, %cst_150 {dimension_numbers = #tpu.dot_dimension_numbers<[1], [0], [0], [1], [0, 0, 1, 1], [], []>} : vector<256x16xbf16>, vector<16x128xbf16>, vector<256x128xf32> -> vector<256x128xf32>
    %104 = arith.addf %91, %103 : vector<256x128xf32>
    %c1_151 = arith.constant 1 : index
    %c0_152 = arith.constant 0 : index
    %c8_153 = arith.constant 8 : index
    %c0_154 = arith.constant 0 : index
    %105 = vector.load %arg1[%c1_151, %c0_152, %c8_153, %c0_154] : memref<8x1x72x16xbf16, #tpu.memory_space<vmem>>, vector<1x1x64x16xbf16>
    %106 = vector.shape_cast %105 : vector<1x1x64x16xbf16> to vector<64x16xbf16>
    %c3_155 = arith.constant 3 : index
    %c0_156 = arith.constant 0 : index
    %c8_157 = arith.constant 8 : index
    %c0_158 = arith.constant 0 : index
    %107 = vector.load %arg1[%c3_155, %c0_156, %c8_157, %c0_158] : memref<8x1x72x16xbf16, #tpu.memory_space<vmem>>, vector<1x1x64x16xbf16>
    %108 = vector.shape_cast %107 : vector<1x1x64x16xbf16> to vector<64x16xbf16>
    %c5_159 = arith.constant 5 : index
    %c0_160 = arith.constant 0 : index
    %c8_161 = arith.constant 8 : index
    %c0_162 = arith.constant 0 : index
    %109 = vector.load %arg1[%c5_159, %c0_160, %c8_161, %c0_162] : memref<8x1x72x16xbf16, #tpu.memory_space<vmem>>, vector<1x1x64x16xbf16>
    %110 = vector.shape_cast %109 : vector<1x1x64x16xbf16> to vector<64x16xbf16>
    %c7_163 = arith.constant 7 : index
    %c0_164 = arith.constant 0 : index
    %c8_165 = arith.constant 8 : index
    %c0_166 = arith.constant 0 : index
    %111 = vector.load %arg1[%c7_163, %c0_164, %c8_165, %c0_166] : memref<8x1x72x16xbf16, #tpu.memory_space<vmem>>, vector<1x1x64x16xbf16>
    %112 = vector.shape_cast %111 : vector<1x1x64x16xbf16> to vector<64x16xbf16>
    %113 = tpu.concatenate %106, %108, %110, %112 in 0 : vector<64x16xbf16>, vector<64x16xbf16>, vector<64x16xbf16>, vector<64x16xbf16> -> vector<256x16xbf16>
    %c8_167 = arith.constant 8 : index
    %c0_168 = arith.constant 0 : index
    %c0_169 = arith.constant 0 : index
    %114 = vector.load %arg2[%c8_167, %c0_168, %c0_169] : memref<9x16x128xbf16, #tpu.memory_space<vmem>>, vector<1x16x128xbf16>
    %115 = vector.shape_cast %114 : vector<1x16x128xbf16> to vector<16x128xbf16>
    %cst_170 = arith.constant dense<0.000000e+00> : vector<256x128xf32>
    %116 = tpu.matmul %113, %115, %cst_170 {dimension_numbers = #tpu.dot_dimension_numbers<[1], [0], [0], [1], [0, 0, 1, 1], [], []>} : vector<256x16xbf16>, vector<16x128xbf16>, vector<256x128xf32> -> vector<256x128xf32>
    %117 = arith.addf %104, %116 : vector<256x128xf32>
    %c0_171 = arith.constant 0 : index
    %c0_172 = arith.constant 0 : index
    %118 = vector.load %arg3[%c0_171, %c0_172] : memref<1x128xf32, #tpu.memory_space<vmem>>, vector<1x128xf32>
    %119 = vector.broadcast %118 : vector<1x128xf32> to vector<256x128xf32>
    %120 = arith.mulf %117, %119 : vector<256x128xf32>
    %c0_173 = arith.constant 0 : index
    %c0_174 = arith.constant 0 : index
    %121 = vector.load %arg4[%c0_173, %c0_174] : memref<1x128xf32, #tpu.memory_space<vmem>>, vector<1x128xf32>
    %122 = vector.broadcast %121 : vector<1x128xf32> to vector<256x128xf32>
    %123 = arith.addf %120, %122 : vector<256x128xf32>
    %cst_175 = arith.constant 0.000000e+00 : f32
    %124 = vector.broadcast %cst_175 : f32 to vector<256x128xf32>
    %125 = arith.maximumf %123, %124 : vector<256x128xf32>
    %126 = vector.extract_strided_slice %125 {offsets = [0, 0], sizes = [64, 128], strides = [1, 1]} : vector<256x128xf32> to vector<64x128xf32>
    %127 = vector.extract_strided_slice %125 {offsets = [64, 0], sizes = [64, 128], strides = [1, 1]} : vector<256x128xf32> to vector<64x128xf32>
    %128 = arith.maximumf %126, %127 : vector<64x128xf32>
    %129 = vector.extract_strided_slice %125 {offsets = [128, 0], sizes = [64, 128], strides = [1, 1]} : vector<256x128xf32> to vector<64x128xf32>
    %130 = vector.extract_strided_slice %125 {offsets = [192, 0], sizes = [64, 128], strides = [1, 1]} : vector<256x128xf32> to vector<64x128xf32>
    %131 = arith.maximumf %129, %130 : vector<64x128xf32>
    %132 = arith.maximumf %128, %131 : vector<64x128xf32>
    %133 = arith.truncf %132 : vector<64x128xf32> to vector<64x128xbf16>
    %c0_176 = arith.constant 0 : index
    %c0_177 = arith.constant 0 : index
    %c0_178 = arith.constant 0 : index
    %134 = vector.load %arg5[%c0_176, %c0_177, %c0_178] : memref<1x64x128xbf16, #tpu.memory_space<vmem>>, vector<1x64x128xbf16>
    %135 = vector.shape_cast %134 : vector<1x64x128xbf16> to vector<64x128xbf16>
    %136 = vector.shape_cast %133 : vector<64x128xbf16> to vector<1x64x128xbf16>
    tpu.vector_store %arg5[%c0_176, %c0_177, %c0_178], %136 {strides = array<i32>} : memref<1x64x128xbf16, #tpu.memory_space<vmem>>, vector<1x64x128xbf16>,
    return
  }
  func.func @transform_0(%arg0: i32) -> (i32, i32, i32, i32) {
    %c0_i32 = arith.constant 0 : i32
    %c0_i32_0 = arith.constant 0 : i32
    %c0_i32_1 = arith.constant 0 : i32
    %c0_i32_2 = arith.constant 0 : i32
    return %c0_i32, %arg0, %c0_i32_0, %c0_i32_1 : i32, i32, i32, i32
  }
  func.func @transform_1(%arg0: i32) -> (i32, i32, i32) {
    %c0_i32 = arith.constant 0 : i32
    %c0_i32_0 = arith.constant 0 : i32
    %c0_i32_1 = arith.constant 0 : i32
    %c0_i32_2 = arith.constant 0 : i32
    return %c0_i32, %c0_i32_0, %c0_i32_1 : i32, i32, i32
  }
  func.func @transform_2(%arg0: i32) -> (i32, i32) {
    %c0_i32 = arith.constant 0 : i32
    %c0_i32_0 = arith.constant 0 : i32
    %c0_i32_1 = arith.constant 0 : i32
    return %c0_i32, %c0_i32_0 : i32, i32
  }
  func.func @transform_3(%arg0: i32) -> (i32, i32) {
    %c0_i32 = arith.constant 0 : i32
    %c0_i32_0 = arith.constant 0 : i32
    %c0_i32_1 = arith.constant 0 : i32
    return %c0_i32, %c0_i32_0 : i32, i32
  }
  func.func @transform_4(%arg0: i32) -> (i32, i32, i32) {
    %c0_i32 = arith.constant 0 : i32
    %c0_i32_0 = arith.constant 0 : i32
    %c0_i32_1 = arith.constant 0 : i32
    return %arg0, %c0_i32, %c0_i32_0 : i32, i32, i32
  }
}

module attributes {stable_mosaic.version = 11 : i64} {
  func.func @_conv_bn_relu_pool_kernel(%arg0: i32, %arg1: memref<8x1x20x128xbf16, #tpu.memory_space<vmem>>, %arg2: memref<9x128x128xbf16, #tpu.memory_space<vmem>>, %arg3: memref<1x128xf32, #tpu.memory_space<vmem>>, %arg4: memref<1x128xf32, #tpu.memory_space<vmem>>, %arg5: memref<1x16x128xbf16, #tpu.memory_space<vmem>>) attributes {dimension_semantics = [#tpu.dimension_semantics<parallel>], iteration_bounds = array<i64: 2>, scalar_prefetch = 0 : i64, scratch_operands = 0 : i64, tpu.core_type = #tpu.core_type<tc>, window_params = [{transform_indices = @transform_0, window_bounds = array<i64: 8, 1, 20, 128>}, {pipeline_mode = #tpu.pipeline_mode<synchronous>, transform_indices = @transform_1, window_bounds = array<i64: 9, 128, 128>}, {pipeline_mode = #tpu.pipeline_mode<synchronous>, transform_indices = @transform_2, window_bounds = array<i64: 1, 128>}, {pipeline_mode = #tpu.pipeline_mode<synchronous>, transform_indices = @transform_3, window_bounds = array<i64: 1, 128>}, {transform_indices = @transform_4, window_bounds = array<i64: 1, 16, 128>}]} {
    %cst = arith.constant 0.000000e+00 : f32
    %0 = vector.broadcast %cst : f32 to vector<64x128xf32>
    %c0 = arith.constant 0 : index
    %c0_0 = arith.constant 0 : index
    %c0_1 = arith.constant 0 : index
    %c0_2 = arith.constant 0 : index
    %1 = vector.load %arg1[%c0, %c0_0, %c0_1, %c0_2] : memref<8x1x20x128xbf16, #tpu.memory_space<vmem>>, vector<1x1x16x128xbf16>
    %2 = vector.shape_cast %1 : vector<1x1x16x128xbf16> to vector<16x128xbf16>
    %c2 = arith.constant 2 : index
    %c0_3 = arith.constant 0 : index
    %c0_4 = arith.constant 0 : index
    %c0_5 = arith.constant 0 : index
    %3 = vector.load %arg1[%c2, %c0_3, %c0_4, %c0_5] : memref<8x1x20x128xbf16, #tpu.memory_space<vmem>>, vector<1x1x16x128xbf16>
    %4 = vector.shape_cast %3 : vector<1x1x16x128xbf16> to vector<16x128xbf16>
    %c4 = arith.constant 4 : index
    %c0_6 = arith.constant 0 : index
    %c0_7 = arith.constant 0 : index
    %c0_8 = arith.constant 0 : index
    %5 = vector.load %arg1[%c4, %c0_6, %c0_7, %c0_8] : memref<8x1x20x128xbf16, #tpu.memory_space<vmem>>, vector<1x1x16x128xbf16>
    %6 = vector.shape_cast %5 : vector<1x1x16x128xbf16> to vector<16x128xbf16>
    %c6 = arith.constant 6 : index
    %c0_9 = arith.constant 0 : index
    %c0_10 = arith.constant 0 : index
    %c0_11 = arith.constant 0 : index
    %7 = vector.load %arg1[%c6, %c0_9, %c0_10, %c0_11] : memref<8x1x20x128xbf16, #tpu.memory_space<vmem>>, vector<1x1x16x128xbf16>
    %8 = vector.shape_cast %7 : vector<1x1x16x128xbf16> to vector<16x128xbf16>
    %9 = tpu.concatenate %2, %4, %6, %8 in 0 : vector<16x128xbf16>, vector<16x128xbf16>, vector<16x128xbf16>, vector<16x128xbf16> -> vector<64x128xbf16>
    %c0_12 = arith.constant 0 : index
    %c0_13 = arith.constant 0 : index
    %c0_14 = arith.constant 0 : index
    %10 = vector.load %arg2[%c0_12, %c0_13, %c0_14] : memref<9x128x128xbf16, #tpu.memory_space<vmem>>, vector<1x128x128xbf16>
    %11 = vector.shape_cast %10 : vector<1x128x128xbf16> to vector<128x128xbf16>
    %cst_15 = arith.constant dense<0.000000e+00> : vector<64x128xf32>
    %12 = tpu.matmul %9, %11, %cst_15 {dimension_numbers = #tpu.dot_dimension_numbers<[1], [0], [0], [1], [0, 0, 1, 1], [], []>} : vector<64x128xbf16>, vector<128x128xbf16>, vector<64x128xf32> -> vector<64x128xf32>
    %13 = arith.addf %0, %12 : vector<64x128xf32>
    %c2_16 = arith.constant 2 : index
    %c0_17 = arith.constant 0 : index
    %c0_18 = arith.constant 0 : index
    %c0_19 = arith.constant 0 : index
    %14 = vector.load %arg1[%c2_16, %c0_17, %c0_18, %c0_19] : memref<8x1x20x128xbf16, #tpu.memory_space<vmem>>, vector<1x1x16x128xbf16>
    %15 = vector.shape_cast %14 : vector<1x1x16x128xbf16> to vector<16x128xbf16>
    %c1 = arith.constant 1 : index
    %c0_20 = arith.constant 0 : index
    %c0_21 = arith.constant 0 : index
    %c0_22 = arith.constant 0 : index
    %16 = vector.load %arg1[%c1, %c0_20, %c0_21, %c0_22] : memref<8x1x20x128xbf16, #tpu.memory_space<vmem>>, vector<1x1x16x128xbf16>
    %17 = vector.shape_cast %16 : vector<1x1x16x128xbf16> to vector<16x128xbf16>
    %c6_23 = arith.constant 6 : index
    %c0_24 = arith.constant 0 : index
    %c0_25 = arith.constant 0 : index
    %c0_26 = arith.constant 0 : index
    %18 = vector.load %arg1[%c6_23, %c0_24, %c0_25, %c0_26] : memref<8x1x20x128xbf16, #tpu.memory_space<vmem>>, vector<1x1x16x128xbf16>
    %19 = vector.shape_cast %18 : vector<1x1x16x128xbf16> to vector<16x128xbf16>
    %c5 = arith.constant 5 : index
    %c0_27 = arith.constant 0 : index
    %c0_28 = arith.constant 0 : index
    %c0_29 = arith.constant 0 : index
    %20 = vector.load %arg1[%c5, %c0_27, %c0_28, %c0_29] : memref<8x1x20x128xbf16, #tpu.memory_space<vmem>>, vector<1x1x16x128xbf16>
    %21 = vector.shape_cast %20 : vector<1x1x16x128xbf16> to vector<16x128xbf16>
    %22 = tpu.concatenate %15, %17, %19, %21 in 0 : vector<16x128xbf16>, vector<16x128xbf16>, vector<16x128xbf16>, vector<16x128xbf16> -> vector<64x128xbf16>
    %c1_30 = arith.constant 1 : index
    %c0_31 = arith.constant 0 : index
    %c0_32 = arith.constant 0 : index
    %23 = vector.load %arg2[%c1_30, %c0_31, %c0_32] : memref<9x128x128xbf16, #tpu.memory_space<vmem>>, vector<1x128x128xbf16>
    %24 = vector.shape_cast %23 : vector<1x128x128xbf16> to vector<128x128xbf16>
    %cst_33 = arith.constant dense<0.000000e+00> : vector<64x128xf32>
    %25 = tpu.matmul %22, %24, %cst_33 {dimension_numbers = #tpu.dot_dimension_numbers<[1], [0], [0], [1], [0, 0, 1, 1], [], []>} : vector<64x128xbf16>, vector<128x128xbf16>, vector<64x128xf32> -> vector<64x128xf32>
    %26 = arith.addf %13, %25 : vector<64x128xf32>
    %c1_34 = arith.constant 1 : index
    %c0_35 = arith.constant 0 : index
    %c0_36 = arith.constant 0 : index
    %c0_37 = arith.constant 0 : index
    %27 = vector.load %arg1[%c1_34, %c0_35, %c0_36, %c0_37] : memref<8x1x20x128xbf16, #tpu.memory_space<vmem>>, vector<1x1x16x128xbf16>
    %28 = vector.shape_cast %27 : vector<1x1x16x128xbf16> to vector<16x128xbf16>
    %c3 = arith.constant 3 : index
    %c0_38 = arith.constant 0 : index
    %c0_39 = arith.constant 0 : index
    %c0_40 = arith.constant 0 : index
    %29 = vector.load %arg1[%c3, %c0_38, %c0_39, %c0_40] : memref<8x1x20x128xbf16, #tpu.memory_space<vmem>>, vector<1x1x16x128xbf16>
    %30 = vector.shape_cast %29 : vector<1x1x16x128xbf16> to vector<16x128xbf16>
    %c5_41 = arith.constant 5 : index
    %c0_42 = arith.constant 0 : index
    %c0_43 = arith.constant 0 : index
    %c0_44 = arith.constant 0 : index
    %31 = vector.load %arg1[%c5_41, %c0_42, %c0_43, %c0_44] : memref<8x1x20x128xbf16, #tpu.memory_space<vmem>>, vector<1x1x16x128xbf16>
    %32 = vector.shape_cast %31 : vector<1x1x16x128xbf16> to vector<16x128xbf16>
    %c7 = arith.constant 7 : index
    %c0_45 = arith.constant 0 : index
    %c0_46 = arith.constant 0 : index
    %c0_47 = arith.constant 0 : index
    %33 = vector.load %arg1[%c7, %c0_45, %c0_46, %c0_47] : memref<8x1x20x128xbf16, #tpu.memory_space<vmem>>, vector<1x1x16x128xbf16>
    %34 = vector.shape_cast %33 : vector<1x1x16x128xbf16> to vector<16x128xbf16>
    %35 = tpu.concatenate %28, %30, %32, %34 in 0 : vector<16x128xbf16>, vector<16x128xbf16>, vector<16x128xbf16>, vector<16x128xbf16> -> vector<64x128xbf16>
    %c2_48 = arith.constant 2 : index
    %c0_49 = arith.constant 0 : index
    %c0_50 = arith.constant 0 : index
    %36 = vector.load %arg2[%c2_48, %c0_49, %c0_50] : memref<9x128x128xbf16, #tpu.memory_space<vmem>>, vector<1x128x128xbf16>
    %37 = vector.shape_cast %36 : vector<1x128x128xbf16> to vector<128x128xbf16>
    %cst_51 = arith.constant dense<0.000000e+00> : vector<64x128xf32>
    %38 = tpu.matmul %35, %37, %cst_51 {dimension_numbers = #tpu.dot_dimension_numbers<[1], [0], [0], [1], [0, 0, 1, 1], [], []>} : vector<64x128xbf16>, vector<128x128xbf16>, vector<64x128xf32> -> vector<64x128xf32>
    %39 = arith.addf %26, %38 : vector<64x128xf32>
    %c4_52 = arith.constant 4 : index
    %c0_53 = arith.constant 0 : index
    %c0_54 = arith.constant 0 : index
    %c0_55 = arith.constant 0 : index
    %40 = vector.load %arg1[%c4_52, %c0_53, %c0_54, %c0_55] : memref<8x1x20x128xbf16, #tpu.memory_space<vmem>>, vector<1x1x16x128xbf16>
    %41 = vector.shape_cast %40 : vector<1x1x16x128xbf16> to vector<16x128xbf16>
    %c6_56 = arith.constant 6 : index
    %c0_57 = arith.constant 0 : index
    %c0_58 = arith.constant 0 : index
    %c0_59 = arith.constant 0 : index
    %42 = vector.load %arg1[%c6_56, %c0_57, %c0_58, %c0_59] : memref<8x1x20x128xbf16, #tpu.memory_space<vmem>>, vector<1x1x16x128xbf16>
    %43 = vector.shape_cast %42 : vector<1x1x16x128xbf16> to vector<16x128xbf16>
    %c0_60 = arith.constant 0 : index
    %c0_61 = arith.constant 0 : index
    %c4_62 = arith.constant 4 : index
    %c0_63 = arith.constant 0 : index
    %44 = vector.load %arg1[%c0_60, %c0_61, %c4_62, %c0_63] : memref<8x1x20x128xbf16, #tpu.memory_space<vmem>>, vector<1x1x16x128xbf16>
    %45 = vector.shape_cast %44 : vector<1x1x16x128xbf16> to vector<16x128xbf16>
    %c2_64 = arith.constant 2 : index
    %c0_65 = arith.constant 0 : index
    %c4_66 = arith.constant 4 : index
    %c0_67 = arith.constant 0 : index
    %46 = vector.load %arg1[%c2_64, %c0_65, %c4_66, %c0_67] : memref<8x1x20x128xbf16, #tpu.memory_space<vmem>>, vector<1x1x16x128xbf16>
    %47 = vector.shape_cast %46 : vector<1x1x16x128xbf16> to vector<16x128xbf16>
    %48 = tpu.concatenate %41, %43, %45, %47 in 0 : vector<16x128xbf16>, vector<16x128xbf16>, vector<16x128xbf16>, vector<16x128xbf16> -> vector<64x128xbf16>
    %c3_68 = arith.constant 3 : index
    %c0_69 = arith.constant 0 : index
    %c0_70 = arith.constant 0 : index
    %49 = vector.load %arg2[%c3_68, %c0_69, %c0_70] : memref<9x128x128xbf16, #tpu.memory_space<vmem>>, vector<1x128x128xbf16>
    %50 = vector.shape_cast %49 : vector<1x128x128xbf16> to vector<128x128xbf16>
    %cst_71 = arith.constant dense<0.000000e+00> : vector<64x128xf32>
    %51 = tpu.matmul %48, %50, %cst_71 {dimension_numbers = #tpu.dot_dimension_numbers<[1], [0], [0], [1], [0, 0, 1, 1], [], []>} : vector<64x128xbf16>, vector<128x128xbf16>, vector<64x128xf32> -> vector<64x128xf32>
    %52 = arith.addf %39, %51 : vector<64x128xf32>
    %c6_72 = arith.constant 6 : index
    %c0_73 = arith.constant 0 : index
    %c0_74 = arith.constant 0 : index
    %c0_75 = arith.constant 0 : index
    %53 = vector.load %arg1[%c6_72, %c0_73, %c0_74, %c0_75] : memref<8x1x20x128xbf16, #tpu.memory_space<vmem>>, vector<1x1x16x128xbf16>
    %54 = vector.shape_cast %53 : vector<1x1x16x128xbf16> to vector<16x128xbf16>
    %c5_76 = arith.constant 5 : index
    %c0_77 = arith.constant 0 : index
    %c0_78 = arith.constant 0 : index
    %c0_79 = arith.constant 0 : index
    %55 = vector.load %arg1[%c5_76, %c0_77, %c0_78, %c0_79] : memref<8x1x20x128xbf16, #tpu.memory_space<vmem>>, vector<1x1x16x128xbf16>
    %56 = vector.shape_cast %55 : vector<1x1x16x128xbf16> to vector<16x128xbf16>
    %c2_80 = arith.constant 2 : index
    %c0_81 = arith.constant 0 : index
    %c4_82 = arith.constant 4 : index
    %c0_83 = arith.constant 0 : index
    %57 = vector.load %arg1[%c2_80, %c0_81, %c4_82, %c0_83] : memref<8x1x20x128xbf16, #tpu.memory_space<vmem>>, vector<1x1x16x128xbf16>
    %58 = vector.shape_cast %57 : vector<1x1x16x128xbf16> to vector<16x128xbf16>
    %c1_84 = arith.constant 1 : index
    %c0_85 = arith.constant 0 : index
    %c4_86 = arith.constant 4 : index
    %c0_87 = arith.constant 0 : index
    %59 = vector.load %arg1[%c1_84, %c0_85, %c4_86, %c0_87] : memref<8x1x20x128xbf16, #tpu.memory_space<vmem>>, vector<1x1x16x128xbf16>
    %60 = vector.shape_cast %59 : vector<1x1x16x128xbf16> to vector<16x128xbf16>
    %61 = tpu.concatenate %54, %56, %58, %60 in 0 : vector<16x128xbf16>, vector<16x128xbf16>, vector<16x128xbf16>, vector<16x128xbf16> -> vector<64x128xbf16>
    %c4_88 = arith.constant 4 : index
    %c0_89 = arith.constant 0 : index
    %c0_90 = arith.constant 0 : index
    %62 = vector.load %arg2[%c4_88, %c0_89, %c0_90] : memref<9x128x128xbf16, #tpu.memory_space<vmem>>, vector<1x128x128xbf16>
    %63 = vector.shape_cast %62 : vector<1x128x128xbf16> to vector<128x128xbf16>
    %cst_91 = arith.constant dense<0.000000e+00> : vector<64x128xf32>
    %64 = tpu.matmul %61, %63, %cst_91 {dimension_numbers = #tpu.dot_dimension_numbers<[1], [0], [0], [1], [0, 0, 1, 1], [], []>} : vector<64x128xbf16>, vector<128x128xbf16>, vector<64x128xf32> -> vector<64x128xf32>
    %65 = arith.addf %52, %64 : vector<64x128xf32>
    %c5_92 = arith.constant 5 : index
    %c0_93 = arith.constant 0 : index
    %c0_94 = arith.constant 0 : index
    %c0_95 = arith.constant 0 : index
    %66 = vector.load %arg1[%c5_92, %c0_93, %c0_94, %c0_95] : memref<8x1x20x128xbf16, #tpu.memory_space<vmem>>, vector<1x1x16x128xbf16>
    %67 = vector.shape_cast %66 : vector<1x1x16x128xbf16> to vector<16x128xbf16>
    %c7_96 = arith.constant 7 : index
    %c0_97 = arith.constant 0 : index
    %c0_98 = arith.constant 0 : index
    %c0_99 = arith.constant 0 : index
    %68 = vector.load %arg1[%c7_96, %c0_97, %c0_98, %c0_99] : memref<8x1x20x128xbf16, #tpu.memory_space<vmem>>, vector<1x1x16x128xbf16>
    %69 = vector.shape_cast %68 : vector<1x1x16x128xbf16> to vector<16x128xbf16>
    %c1_100 = arith.constant 1 : index
    %c0_101 = arith.constant 0 : index
    %c4_102 = arith.constant 4 : index
    %c0_103 = arith.constant 0 : index
    %70 = vector.load %arg1[%c1_100, %c0_101, %c4_102, %c0_103] : memref<8x1x20x128xbf16, #tpu.memory_space<vmem>>, vector<1x1x16x128xbf16>
    %71 = vector.shape_cast %70 : vector<1x1x16x128xbf16> to vector<16x128xbf16>
    %c3_104 = arith.constant 3 : index
    %c0_105 = arith.constant 0 : index
    %c4_106 = arith.constant 4 : index
    %c0_107 = arith.constant 0 : index
    %72 = vector.load %arg1[%c3_104, %c0_105, %c4_106, %c0_107] : memref<8x1x20x128xbf16, #tpu.memory_space<vmem>>, vector<1x1x16x128xbf16>
    %73 = vector.shape_cast %72 : vector<1x1x16x128xbf16> to vector<16x128xbf16>
    %74 = tpu.concatenate %67, %69, %71, %73 in 0 : vector<16x128xbf16>, vector<16x128xbf16>, vector<16x128xbf16>, vector<16x128xbf16> -> vector<64x128xbf16>
    %c5_108 = arith.constant 5 : index
    %c0_109 = arith.constant 0 : index
    %c0_110 = arith.constant 0 : index
    %75 = vector.load %arg2[%c5_108, %c0_109, %c0_110] : memref<9x128x128xbf16, #tpu.memory_space<vmem>>, vector<1x128x128xbf16>
    %76 = vector.shape_cast %75 : vector<1x128x128xbf16> to vector<128x128xbf16>
    %cst_111 = arith.constant dense<0.000000e+00> : vector<64x128xf32>
    %77 = tpu.matmul %74, %76, %cst_111 {dimension_numbers = #tpu.dot_dimension_numbers<[1], [0], [0], [1], [0, 0, 1, 1], [], []>} : vector<64x128xbf16>, vector<128x128xbf16>, vector<64x128xf32> -> vector<64x128xf32>
    %78 = arith.addf %65, %77 : vector<64x128xf32>
    %c0_112 = arith.constant 0 : index
    %c0_113 = arith.constant 0 : index
    %c4_114 = arith.constant 4 : index
    %c0_115 = arith.constant 0 : index
    %79 = vector.load %arg1[%c0_112, %c0_113, %c4_114, %c0_115] : memref<8x1x20x128xbf16, #tpu.memory_space<vmem>>, vector<1x1x16x128xbf16>
    %80 = vector.shape_cast %79 : vector<1x1x16x128xbf16> to vector<16x128xbf16>
    %c2_116 = arith.constant 2 : index
    %c0_117 = arith.constant 0 : index
    %c4_118 = arith.constant 4 : index
    %c0_119 = arith.constant 0 : index
    %81 = vector.load %arg1[%c2_116, %c0_117, %c4_118, %c0_119] : memref<8x1x20x128xbf16, #tpu.memory_space<vmem>>, vector<1x1x16x128xbf16>
    %82 = vector.shape_cast %81 : vector<1x1x16x128xbf16> to vector<16x128xbf16>
    %c4_120 = arith.constant 4 : index
    %c0_121 = arith.constant 0 : index
    %c4_122 = arith.constant 4 : index
    %c0_123 = arith.constant 0 : index
    %83 = vector.load %arg1[%c4_120, %c0_121, %c4_122, %c0_123] : memref<8x1x20x128xbf16, #tpu.memory_space<vmem>>, vector<1x1x16x128xbf16>
    %84 = vector.shape_cast %83 : vector<1x1x16x128xbf16> to vector<16x128xbf16>
    %c6_124 = arith.constant 6 : index
    %c0_125 = arith.constant 0 : index
    %c4_126 = arith.constant 4 : index
    %c0_127 = arith.constant 0 : index
    %85 = vector.load %arg1[%c6_124, %c0_125, %c4_126, %c0_127] : memref<8x1x20x128xbf16, #tpu.memory_space<vmem>>, vector<1x1x16x128xbf16>
    %86 = vector.shape_cast %85 : vector<1x1x16x128xbf16> to vector<16x128xbf16>
    %87 = tpu.concatenate %80, %82, %84, %86 in 0 : vector<16x128xbf16>, vector<16x128xbf16>, vector<16x128xbf16>, vector<16x128xbf16> -> vector<64x128xbf16>
    %c6_128 = arith.constant 6 : index
    %c0_129 = arith.constant 0 : index
    %c0_130 = arith.constant 0 : index
    %88 = vector.load %arg2[%c6_128, %c0_129, %c0_130] : memref<9x128x128xbf16, #tpu.memory_space<vmem>>, vector<1x128x128xbf16>
    %89 = vector.shape_cast %88 : vector<1x128x128xbf16> to vector<128x128xbf16>
    %cst_131 = arith.constant dense<0.000000e+00> : vector<64x128xf32>
    %90 = tpu.matmul %87, %89, %cst_131 {dimension_numbers = #tpu.dot_dimension_numbers<[1], [0], [0], [1], [0, 0, 1, 1], [], []>} : vector<64x128xbf16>, vector<128x128xbf16>, vector<64x128xf32> -> vector<64x128xf32>
    %91 = arith.addf %78, %90 : vector<64x128xf32>
    %c2_132 = arith.constant 2 : index
    %c0_133 = arith.constant 0 : index
    %c4_134 = arith.constant 4 : index
    %c0_135 = arith.constant 0 : index
    %92 = vector.load %arg1[%c2_132, %c0_133, %c4_134, %c0_135] : memref<8x1x20x128xbf16, #tpu.memory_space<vmem>>, vector<1x1x16x128xbf16>
    %93 = vector.shape_cast %92 : vector<1x1x16x128xbf16> to vector<16x128xbf16>
    %c1_136 = arith.constant 1 : index
    %c0_137 = arith.constant 0 : index
    %c4_138 = arith.constant 4 : index
    %c0_139 = arith.constant 0 : index
    %94 = vector.load %arg1[%c1_136, %c0_137, %c4_138, %c0_139] : memref<8x1x20x128xbf16, #tpu.memory_space<vmem>>, vector<1x1x16x128xbf16>
    %95 = vector.shape_cast %94 : vector<1x1x16x128xbf16> to vector<16x128xbf16>
    %c6_140 = arith.constant 6 : index
    %c0_141 = arith.constant 0 : index
    %c4_142 = arith.constant 4 : index
    %c0_143 = arith.constant 0 : index
    %96 = vector.load %arg1[%c6_140, %c0_141, %c4_142, %c0_143] : memref<8x1x20x128xbf16, #tpu.memory_space<vmem>>, vector<1x1x16x128xbf16>
    %97 = vector.shape_cast %96 : vector<1x1x16x128xbf16> to vector<16x128xbf16>
    %c5_144 = arith.constant 5 : index
    %c0_145 = arith.constant 0 : index
    %c4_146 = arith.constant 4 : index
    %c0_147 = arith.constant 0 : index
    %98 = vector.load %arg1[%c5_144, %c0_145, %c4_146, %c0_147] : memref<8x1x20x128xbf16, #tpu.memory_space<vmem>>, vector<1x1x16x128xbf16>
    %99 = vector.shape_cast %98 : vector<1x1x16x128xbf16> to vector<16x128xbf16>
    %100 = tpu.concatenate %93, %95, %97, %99 in 0 : vector<16x128xbf16>, vector<16x128xbf16>, vector<16x128xbf16>, vector<16x128xbf16> -> vector<64x128xbf16>
    %c7_148 = arith.constant 7 : index
    %c0_149 = arith.constant 0 : index
    %c0_150 = arith.constant 0 : index
    %101 = vector.load %arg2[%c7_148, %c0_149, %c0_150] : memref<9x128x128xbf16, #tpu.memory_space<vmem>>, vector<1x128x128xbf16>
    %102 = vector.shape_cast %101 : vector<1x128x128xbf16> to vector<128x128xbf16>
    %cst_151 = arith.constant dense<0.000000e+00> : vector<64x128xf32>
    %103 = tpu.matmul %100, %102, %cst_151 {dimension_numbers = #tpu.dot_dimension_numbers<[1], [0], [0], [1], [0, 0, 1, 1], [], []>} : vector<64x128xbf16>, vector<128x128xbf16>, vector<64x128xf32> -> vector<64x128xf32>
    %104 = arith.addf %91, %103 : vector<64x128xf32>
    %c1_152 = arith.constant 1 : index
    %c0_153 = arith.constant 0 : index
    %c4_154 = arith.constant 4 : index
    %c0_155 = arith.constant 0 : index
    %105 = vector.load %arg1[%c1_152, %c0_153, %c4_154, %c0_155] : memref<8x1x20x128xbf16, #tpu.memory_space<vmem>>, vector<1x1x16x128xbf16>
    %106 = vector.shape_cast %105 : vector<1x1x16x128xbf16> to vector<16x128xbf16>
    %c3_156 = arith.constant 3 : index
    %c0_157 = arith.constant 0 : index
    %c4_158 = arith.constant 4 : index
    %c0_159 = arith.constant 0 : index
    %107 = vector.load %arg1[%c3_156, %c0_157, %c4_158, %c0_159] : memref<8x1x20x128xbf16, #tpu.memory_space<vmem>>, vector<1x1x16x128xbf16>
    %108 = vector.shape_cast %107 : vector<1x1x16x128xbf16> to vector<16x128xbf16>
    %c5_160 = arith.constant 5 : index
    %c0_161 = arith.constant 0 : index
    %c4_162 = arith.constant 4 : index
    %c0_163 = arith.constant 0 : index
    %109 = vector.load %arg1[%c5_160, %c0_161, %c4_162, %c0_163] : memref<8x1x20x128xbf16, #tpu.memory_space<vmem>>, vector<1x1x16x128xbf16>
    %110 = vector.shape_cast %109 : vector<1x1x16x128xbf16> to vector<16x128xbf16>
    %c7_164 = arith.constant 7 : index
    %c0_165 = arith.constant 0 : index
    %c4_166 = arith.constant 4 : index
    %c0_167 = arith.constant 0 : index
    %111 = vector.load %arg1[%c7_164, %c0_165, %c4_166, %c0_167] : memref<8x1x20x128xbf16, #tpu.memory_space<vmem>>, vector<1x1x16x128xbf16>
    %112 = vector.shape_cast %111 : vector<1x1x16x128xbf16> to vector<16x128xbf16>
    %113 = tpu.concatenate %106, %108, %110, %112 in 0 : vector<16x128xbf16>, vector<16x128xbf16>, vector<16x128xbf16>, vector<16x128xbf16> -> vector<64x128xbf16>
    %c8 = arith.constant 8 : index
    %c0_168 = arith.constant 0 : index
    %c0_169 = arith.constant 0 : index
    %114 = vector.load %arg2[%c8, %c0_168, %c0_169] : memref<9x128x128xbf16, #tpu.memory_space<vmem>>, vector<1x128x128xbf16>
    %115 = vector.shape_cast %114 : vector<1x128x128xbf16> to vector<128x128xbf16>
    %cst_170 = arith.constant dense<0.000000e+00> : vector<64x128xf32>
    %116 = tpu.matmul %113, %115, %cst_170 {dimension_numbers = #tpu.dot_dimension_numbers<[1], [0], [0], [1], [0, 0, 1, 1], [], []>} : vector<64x128xbf16>, vector<128x128xbf16>, vector<64x128xf32> -> vector<64x128xf32>
    %117 = arith.addf %104, %116 : vector<64x128xf32>
    %c0_171 = arith.constant 0 : index
    %c0_172 = arith.constant 0 : index
    %118 = vector.load %arg3[%c0_171, %c0_172] : memref<1x128xf32, #tpu.memory_space<vmem>>, vector<1x128xf32>
    %119 = vector.broadcast %118 : vector<1x128xf32> to vector<64x128xf32>
    %120 = arith.mulf %117, %119 : vector<64x128xf32>
    %c0_173 = arith.constant 0 : index
    %c0_174 = arith.constant 0 : index
    %121 = vector.load %arg4[%c0_173, %c0_174] : memref<1x128xf32, #tpu.memory_space<vmem>>, vector<1x128xf32>
    %122 = vector.broadcast %121 : vector<1x128xf32> to vector<64x128xf32>
    %123 = arith.addf %120, %122 : vector<64x128xf32>
    %cst_175 = arith.constant 0.000000e+00 : f32
    %124 = vector.broadcast %cst_175 : f32 to vector<64x128xf32>
    %125 = arith.maximumf %123, %124 : vector<64x128xf32>
    %126 = vector.extract_strided_slice %125 {offsets = [0, 0], sizes = [16, 128], strides = [1, 1]} : vector<64x128xf32> to vector<16x128xf32>
    %127 = vector.extract_strided_slice %125 {offsets = [16, 0], sizes = [16, 128], strides = [1, 1]} : vector<64x128xf32> to vector<16x128xf32>
    %128 = arith.maximumf %126, %127 : vector<16x128xf32>
    %129 = vector.extract_strided_slice %125 {offsets = [32, 0], sizes = [16, 128], strides = [1, 1]} : vector<64x128xf32> to vector<16x128xf32>
    %130 = vector.extract_strided_slice %125 {offsets = [48, 0], sizes = [16, 128], strides = [1, 1]} : vector<64x128xf32> to vector<16x128xf32>
    %131 = arith.maximumf %129, %130 : vector<16x128xf32>
    %132 = arith.maximumf %128, %131 : vector<16x128xf32>
    %133 = arith.truncf %132 : vector<16x128xf32> to vector<16x128xbf16>
    %c0_176 = arith.constant 0 : index
    %c0_177 = arith.constant 0 : index
    %c0_178 = arith.constant 0 : index
    %134 = vector.load %arg5[%c0_176, %c0_177, %c0_178] : memref<1x16x128xbf16, #tpu.memory_space<vmem>>, vector<1x16x128xbf16>
    %135 = vector.shape_cast %134 : vector<1x16x128xbf16> to vector<16x128xbf16>
    %136 = vector.shape_cast %133 : vector<16x128xbf16> to vector<1x16x128xbf16>
    tpu.vector_store %arg5[%c0_176, %c0_177, %c0_178], %136 {strides = array<i32>} : memref<1x16x128xbf16, #tpu.memory_space<vmem>>, vector<1x16x128xbf16>,
    return
  }
  func.func @transform_0(%arg0: i32) -> (i32, i32, i32, i32) {
    %c0_i32 = arith.constant 0 : i32
    %c0_i32_0 = arith.constant 0 : i32
    %c0_i32_1 = arith.constant 0 : i32
    %c0_i32_2 = arith.constant 0 : i32
    return %c0_i32, %arg0, %c0_i32_0, %c0_i32_1 : i32, i32, i32, i32
  }
  func.func @transform_1(%arg0: i32) -> (i32, i32, i32) {
    %c0_i32 = arith.constant 0 : i32
    %c0_i32_0 = arith.constant 0 : i32
    %c0_i32_1 = arith.constant 0 : i32
    %c0_i32_2 = arith.constant 0 : i32
    return %c0_i32, %c0_i32_0, %c0_i32_1 : i32, i32, i32
  }
  func.func @transform_2(%arg0: i32) -> (i32, i32) {
    %c0_i32 = arith.constant 0 : i32
    %c0_i32_0 = arith.constant 0 : i32
    %c0_i32_1 = arith.constant 0 : i32
    return %c0_i32, %c0_i32_0 : i32, i32
  }
  func.func @transform_3(%arg0: i32) -> (i32, i32) {
    %c0_i32 = arith.constant 0 : i32
    %c0_i32_0 = arith.constant 0 : i32
    %c0_i32_1 = arith.constant 0 : i32
    return %c0_i32, %c0_i32_0 : i32, i32
  }
  func.func @transform_4(%arg0: i32) -> (i32, i32, i32) {
    %c0_i32 = arith.constant 0 : i32
    %c0_i32_0 = arith.constant 0 : i32
    %c0_i32_1 = arith.constant 0 : i32
    return %arg0, %c0_i32, %c0_i32_0 : i32, i32, i32
  }
}

module attributes {stable_mosaic.version = 11 : i64} {
  func.func @_classifier_kernel(%arg0: i32, %arg1: memref<2x2048xbf16, #tpu.memory_space<vmem>>, %arg2: memref<2048x128xbf16, #tpu.memory_space<vmem>>, %arg3: memref<1x128xf32, #tpu.memory_space<vmem>>, %arg4: memref<128x128xbf16, #tpu.memory_space<vmem>>, %arg5: memref<1x128xf32, #tpu.memory_space<vmem>>, %arg6: memref<2x128xf32, #tpu.memory_space<vmem>>) attributes {dimension_semantics = [#tpu.dimension_semantics<parallel>], iteration_bounds = array<i64: 1>, scalar_prefetch = 0 : i64, scratch_operands = 0 : i64, tpu.core_type = #tpu.core_type<tc>, window_params = [{transform_indices = @transform_0, window_bounds = array<i64: 2, 2048>}, {pipeline_mode = #tpu.pipeline_mode<synchronous>, transform_indices = @transform_1, window_bounds = array<i64: 2048, 128>}, {pipeline_mode = #tpu.pipeline_mode<synchronous>, transform_indices = @transform_2, window_bounds = array<i64: 1, 128>}, {pipeline_mode = #tpu.pipeline_mode<synchronous>, transform_indices = @transform_3, window_bounds = array<i64: 128, 128>}, {pipeline_mode = #tpu.pipeline_mode<synchronous>, transform_indices = @transform_4, window_bounds = array<i64: 1, 128>}, {transform_indices = @transform_5, window_bounds = array<i64: 2, 128>}]} {
    %c0 = arith.constant 0 : index
    %c0_0 = arith.constant 0 : index
    %0 = vector.load %arg1[%c0, %c0_0] : memref<2x2048xbf16, #tpu.memory_space<vmem>>, vector<2x2048xbf16>
    %c0_1 = arith.constant 0 : index
    %c0_2 = arith.constant 0 : index
    %1 = vector.load %arg2[%c0_1, %c0_2] : memref<2048x128xbf16, #tpu.memory_space<vmem>>, vector<2048x128xbf16>
    %cst = arith.constant dense<0.000000e+00> : vector<2x128xf32>
    %2 = tpu.matmul %0, %1, %cst {dimension_numbers = #tpu.dot_dimension_numbers<[1], [0], [0], [1], [0, 0, 1, 1], [], []>} : vector<2x2048xbf16>, vector<2048x128xbf16>, vector<2x128xf32> -> vector<2x128xf32>
    %c0_3 = arith.constant 0 : index
    %c0_4 = arith.constant 0 : index
    %3 = vector.load %arg3[%c0_3, %c0_4] : memref<1x128xf32, #tpu.memory_space<vmem>>, vector<1x128xf32>
    %4 = vector.broadcast %3 : vector<1x128xf32> to vector<2x128xf32>
    %5 = arith.addf %2, %4 : vector<2x128xf32>
    %cst_5 = arith.constant 0.000000e+00 : f32
    %6 = vector.broadcast %cst_5 : f32 to vector<2x128xf32>
    %7 = arith.maximumf %5, %6 : vector<2x128xf32>
    %8 = arith.truncf %7 : vector<2x128xf32> to vector<2x128xbf16>
    %c0_6 = arith.constant 0 : index
    %c0_7 = arith.constant 0 : index
    %9 = vector.load %arg4[%c0_6, %c0_7] : memref<128x128xbf16, #tpu.memory_space<vmem>>, vector<128x128xbf16>
    %cst_8 = arith.constant dense<0.000000e+00> : vector<2x128xf32>
    %10 = tpu.matmul %8, %9, %cst_8 {dimension_numbers = #tpu.dot_dimension_numbers<[1], [0], [0], [1], [0, 0, 1, 1], [], []>} : vector<2x128xbf16>, vector<128x128xbf16>, vector<2x128xf32> -> vector<2x128xf32>
    %c0_9 = arith.constant 0 : index
    %c0_10 = arith.constant 0 : index
    %11 = vector.load %arg5[%c0_9, %c0_10] : memref<1x128xf32, #tpu.memory_space<vmem>>, vector<1x128xf32>
    %12 = vector.broadcast %11 : vector<1x128xf32> to vector<2x128xf32>
    %13 = arith.addf %10, %12 : vector<2x128xf32>
    %c0_11 = arith.constant 0 : index
    %c0_12 = arith.constant 0 : index
    %14 = vector.load %arg6[%c0_11, %c0_12] : memref<2x128xf32, #tpu.memory_space<vmem>>, vector<2x128xf32>
    tpu.vector_store %arg6[%c0_11, %c0_12], %13 {strides = array<i32>} : memref<2x128xf32, #tpu.memory_space<vmem>>, vector<2x128xf32>,
    return
  }
  func.func @transform_0(%arg0: i32) -> (i32, i32) {
    %c0_i32 = arith.constant 0 : i32
    %c0_i32_0 = arith.constant 0 : i32
    return %arg0, %c0_i32 : i32, i32
  }
  func.func @transform_1(%arg0: i32) -> (i32, i32) {
    %c0_i32 = arith.constant 0 : i32
    %c0_i32_0 = arith.constant 0 : i32
    %c0_i32_1 = arith.constant 0 : i32
    return %c0_i32, %c0_i32_0 : i32, i32
  }
  func.func @transform_2(%arg0: i32) -> (i32, i32) {
    %c0_i32 = arith.constant 0 : i32
    %c0_i32_0 = arith.constant 0 : i32
    %c0_i32_1 = arith.constant 0 : i32
    return %c0_i32, %c0_i32_0 : i32, i32
  }
  func.func @transform_3(%arg0: i32) -> (i32, i32) {
    %c0_i32 = arith.constant 0 : i32
    %c0_i32_0 = arith.constant 0 : i32
    %c0_i32_1 = arith.constant 0 : i32
    return %c0_i32, %c0_i32_0 : i32, i32
  }
  func.func @transform_4(%arg0: i32) -> (i32, i32) {
    %c0_i32 = arith.constant 0 : i32
    %c0_i32_0 = arith.constant 0 : i32
    %c0_i32_1 = arith.constant 0 : i32
    return %c0_i32, %c0_i32_0 : i32, i32
  }
  func.func @transform_5(%arg0: i32) -> (i32, i32) {
    %c0_i32 = arith.constant 0 : i32
    %c0_i32_0 = arith.constant 0 : i32
    return %arg0, %c0_i32 : i32, i32
  }
}

</mosaic_0001>

<llo_original>
// kernel: simple_cnn_forward.3
$region0: #{simple_cnn_forward.3}
  #allocation0 [shape = 'u32[]', space=smem, size = 0x4, offset = 0x4, fixed_abs, tag = 'smem constant byte address 0x4 - core index']
  #allocation1 [shape = 'u32[144,128]{1,0:T(1,128)}', space=vmem, size = 0x12000, scoped, tag = 'internal scratch']
  %s0 = inlined_call_operand.vmem [shape: bf16[8,2,72,16], index: 0, kind: input, shape index: {}]
  %s1 = inlined_call_operand.vmem [shape: bf16[9,16,128], index: 1, kind: input, shape index: {}]
  %s2 = inlined_call_operand.vmem [shape: f32[1,128], index: 2, kind: input, shape index: {}]
  %s3 = inlined_call_operand.vmem [shape: f32[1,128], index: 3, kind: input, shape index: {}]
  %s4 = inlined_call_operand.vmem [shape: bf16[2,64,128], index: 4, kind: output, shape index: {}]
  %s5 = sld [smem:[#allocation0]]
  $region90: #{simple_cnn_forward.3} parent=0
    _
  %s7 = ssub.s32 1, %s5
  %s8 = scalar_select 0, %s7, %s5
  $region1: #{simple_cnn_forward.3} parent=0
    #allocation2 [shape = 'u8[294912]{0}', space=vmem, size = 0x48000, scoped, tag = 'input window, operand 0']
    loop: start=0, step=1, limit=4
    $region2: #{simple_cnn_forward.3} parent=1 // loop_pre_header
      _
    $region3: #{simple_cnn_forward.3} parent=1 // loop_header
      %s10 = sphi 0, %s14
      %p11 = scmp.ge.s32.totalorder %s10, 4
      %s20 = sphi 0, %s22
      %s23 = sphi 0, %s20
      %s24 = sphi 0, %s23
      %s40 = sphi 0, %s24
      %s44 = sphi 0, %s44
      %s46 = sphi 0, %s44
      %s47 = sphi 0, %s46
      %s61 = sphi 0, %s47
      %s65 = sphi 0, %s65
      %s67 = sphi 0, %s65
      %s68 = sphi 0, %s67
      %s82 = sphi 0, %s68
      %s86 = sphi 0, %s86
      %s88 = sphi 0, %s86
      %s89 = sphi 0, %s88
      %s103 = sphi 0, %s89
      %s109 = sphi 0, %s111
      %s112 = sphi 0, %s109
      %s113 = sphi 0, %s112
      %s129 = sphi 0, %s113
    $region4: #{simple_cnn_forward.3} parent=1 // loop_header_branch
      %13 = sbr.rel (%p11) target = $region8
    $region5: #{simple_cnn_forward.3} parent=1 // loop_body
      %s15 = ssub.s32 %s10, 1
      %s16 = ssub.s32 %s10, 2
      %s17 = sadd.s32 %s10, 1
      %s18 = ssub.s32 %s10, %s17
      %p19 = scmp.eq.s32.totalorder %s18, 0
      %s21 = sadd.s32 %s20, 1
      %s22 = scalar_select %p19, %s20, %s21
      %p25 = pneg %p19
      %p26 = scmp.eq.s32.totalorder %s10, 1
      %p27 = por %p25, %p26
      %p28 = scmp.ne.s32.totalorder %s20, %s23
      %p29 = scmp.eq.s32.totalorder %s10, 0
      %p30 = por %p28, %p29
      %p31 = scmp.ne.s32.totalorder %s20, %s23
      %p32 = scmp.eq.s32.totalorder %s15, 1
      %p33 = por %p31, %p32
      %p34 = scmp.ne.s32.totalorder %s23, %s24
      %p35 = scmp.eq.s32.totalorder %s15, 0
      %p36 = por %p34, %p35
      %p37 = scmp.ne.s32.totalorder %s23, %s24
      %p38 = scmp.eq.s32.totalorder %s16, 1
      %p39 = por %p37, %p38
      %p41 = scmp.ne.s32.totalorder %s24, %s40
      %p42 = scmp.eq.s32.totalorder %s16, 0
      %p43 = por %p41, %p42
      %s45 = sadd.s32 %s44, 1
      %p48 = scmp.eq.s32.totalorder %s10, 1
      %p49 = scmp.ne.s32.totalorder %s44, %s46
      %p50 = scmp.eq.s32.totalorder %s10, 0
      %p51 = por %p49, %p50
      %p52 = scmp.ne.s32.totalorder %s44, %s46
      %p53 = scmp.eq.s32.totalorder %s15, 1
      %p54 = por %p52, %p53
      %p55 = scmp.ne.s32.totalorder %s46, %s47
      %p56 = scmp.eq.s32.totalorder %s15, 0
      %p57 = por %p55, %p56
      %p58 = scmp.ne.s32.totalorder %s46, %s47
      %p59 = scmp.eq.s32.totalorder %s16, 1
      %p60 = por %p58, %p59
      %p62 = scmp.ne.s32.totalorder %s47, %s61
      %p63 = scmp.eq.s32.totalorder %s16, 0
      %p64 = por %p62, %p63
      %s66 = sadd.s32 %s65, 1
      %p69 = scmp.eq.s32.totalorder %s10, 1
      %p70 = scmp.ne.s32.totalorder %s65, %s67
      %p71 = scmp.eq.s32.totalorder %s10, 0
      %p72 = por %p70, %p71
      %p73 = scmp.ne.s32.totalorder %s65, %s67
      %p74 = scmp.eq.s32.totalorder %s15, 1
      %p75 = por %p73, %p74
      %p76 = scmp.ne.s32.totalorder %s67, %s68
      %p77 = scmp.eq.s32.totalorder %s15, 0
      %p78 = por %p76, %p77
      %p79 = scmp.ne.s32.totalorder %s67, %s68
      %p80 = scmp.eq.s32.totalorder %s16, 1
      %p81 = por %p79, %p80
      %p83 = scmp.ne.s32.totalorder %s68, %s82
      %p84 = scmp.eq.s32.totalorder %s16, 0
      %p85 = por %p83, %p84
      %s87 = sadd.s32 %s86, 1
      %p90 = scmp.eq.s32.totalorder %s10, 1
      %p91 = scmp.ne.s32.totalorder %s86, %s88
      %p92 = scmp.eq.s32.totalorder %s10, 0
      %p93 = por %p91, %p92
      %p94 = scmp.ne.s32.totalorder %s86, %s88
      %p95 = scmp.eq.s32.totalorder %s15, 1
      %p96 = por %p94, %p95
      %p97 = scmp.ne.s32.totalorder %s88, %s89
      %p98 = scmp.eq.s32.totalorder %s15, 0
      %p99 = por %p97, %p98
      %p100 = scmp.ne.s32.totalorder %s88, %s89
      %p101 = scmp.eq.s32.totalorder %s16, 1
      %p102 = por %p100, %p101
      %p104 = scmp.ne.s32.totalorder %s89, %s103
      %p105 = scmp.eq.s32.totalorder %s16, 0
      %p106 = por %p104, %p105
      %s107 = ssub.s32 %s10, %s17
      %p108 = scmp.eq.s32.totalorder %s107, 0
      %s110 = sadd.s32 %s109, 1
      %s111 = scalar_select %p108, %s109, %s110
      %p114 = pneg %p108
      %p115 = scmp.eq.s32.totalorder %s10, 1
      %p116 = por %p114, %p115
      %p117 = scmp.ne.s32.totalorder %s109, %s112
      %p118 = scmp.eq.s32.totalorder %s10, 0
      %p119 = por %p117, %p118
      %p120 = scmp.ne.s32.totalorder %s109, %s112
      %p121 = scmp.eq.s32.totalorder %s15, 1
      %p122 = por %p120, %p121
      %p123 = scmp.ne.s32.totalorder %s112, %s113
      %p124 = scmp.eq.s32.totalorder %s15, 0
      %p125 = por %p123, %p124
      %p126 = scmp.ne.s32.totalorder %s112, %s113
      %p127 = scmp.eq.s32.totalorder %s16, 1
      %p128 = por %p126, %p127
      %p130 = scmp.ne.s32.totalorder %s113, %s129
      %p131 = scmp.eq.s32.totalorder %s16, 0
      %p132 = por %p130, %p131
      %p133 = scmp.le.s32.totalorder 1, %s10
      %p134 = scmp.lt.s32.totalorder %s10, 3
      %p135 = pnand %p133, %p134
      %p136 = pneg %p135
      // Predicated region
      $region9: #{simple_cnn_forward.3} parent=5 // pred_check
        _
      $region10: #{simple_cnn_forward.3} parent=5 // pred_check_branch
        %138 = sbr.rel (%p135) target = $region12
      $region11: #{simple_cnn_forward.3} parent=5 // pred_region
        %s139 = ssub.s32 %s10, 1
        // Predicated region
        $region13: #{simple_cnn_forward.3} parent=11 // pred_check
          %p140 = pneg %p57
        $region14: #{simple_cnn_forward.3} parent=11 // pred_check_branch
          %142 = sbr.rel (%p140) target = $region16
        $region15: #{simple_cnn_forward.3} parent=11 // pred_region
          _
        $region16: #{simple_cnn_forward.3} parent=11 // pred_fallthru
          _
        // Predicated region
        $region17: #{simple_cnn_forward.3} parent=11 // pred_check
          %p143 = pneg %p78
        $region18: #{simple_cnn_forward.3} parent=11 // pred_check_branch
          %145 = sbr.rel (%p143) target = $region20
        $region19: #{simple_cnn_forward.3} parent=11 // pred_region
          _
        $region20: #{simple_cnn_forward.3} parent=11 // pred_fallthru
          _
        // Predicated region
        $region21: #{simple_cnn_forward.3} parent=11 // pred_check
          %p146 = pneg %p99
        $region22: #{simple_cnn_forward.3} parent=11 // pred_check_branch
          %148 = sbr.rel (%p146) target = $region24
        $region23: #{simple_cnn_forward.3} parent=11 // pred_region
          _
        $region24: #{simple_cnn_forward.3} parent=11 // pred_fallthru
          _
      $region12: #{simple_cnn_forward.3} parent=5 // pred_fallthru
        _
      %p149 = scmp.lt.s32.totalorder %s10, 2
      // Predicated region
      $region25: #{simple_cnn_forward.3} parent=5 // pred_check
        %p150 = pneg %p149
      $region26: #{simple_cnn_forward.3} parent=5 // pred_check_branch
        %152 = sbr.rel (%p150) target = $region28
      $region27: #{simple_cnn_forward.3} parent=5 // pred_region
        // Predicated region
        $region29: #{simple_cnn_forward.3} parent=27 // pred_check
          %p153 = pneg %p30
        $region30: #{simple_cnn_forward.3} parent=27 // pred_check_branch
          %155 = sbr.rel (%p153) target = $region32
        $region31: #{simple_cnn_forward.3} parent=27 // pred_region
          %s156 = sand.u32 %s20, 1
          %s157 = sand.u32 %s20, 1
          %s158 = smul.addr %s157, 288
          %s159 = scalar_lea.vmem [#allocation2], %s158
          %s160 = smul.addr %s10, 9
          %s161 = smul.addr %s160, 4
          %s162 = scalar_lea.vmem %s0, %s161
          // Predicated region
          $region33: #{simple_cnn_forward.3} parent=31 // pred_check
            _
          $region34: #{simple_cnn_forward.3} parent=31 // pred_check_branch
            %164 = sbr.rel (0) target = $region36
          $region35: #{simple_cnn_forward.3} parent=31 // pred_region
            // Predicated region
            $region37: #{simple_cnn_forward.3} parent=35 // pred_check
              _
            $region38: #{simple_cnn_forward.3} parent=35 // pred_check_branch
              %166 = sbr.rel target = $region40
            $region39: #{simple_cnn_forward.3} parent=35 // pred_region
              // Predicated region
              $region52: #{simple_cnn_forward.3} parent=39 // pred_check
                _
              $region53: #{simple_cnn_forward.3} parent=39 // pred_check_branch
                %324 = sbr.rel (0) target = $region55
              $region54: #{simple_cnn_forward.3} parent=39 // pred_region
                loop: start=0, step=1, limit=1
                $region56: #{simple_cnn_forward.3} parent=54 // loop_pre_header
                  _
                $region57: #{simple_cnn_forward.3} parent=54 // loop_header
                  %s326 = sphi 0, %s330
                  %p327 = scmp.ge.s32.totalorder %s326, 1
                  %s331 = sphi %s162, %s162
                  %s332 = sphi %s159, %s159
                $region58: #{simple_cnn_forward.3} parent=54 // loop_header_branch
                  %329 = sbr.rel (%p327) target = $region62
                $region59: #{simple_cnn_forward.3} parent=54 // loop_body
                  _
                $region60: #{simple_cnn_forward.3} parent=54 // loop_footer
                  %s330 = sadd.s32 1, %s326
                $region61: #{simple_cnn_forward.3} parent=54 // loop_footer_branch
                  %325 = sbr.rel target = $region57
                $region62: #{simple_cnn_forward.3} parent=54 // loop_exit
                  _
                %s334 = ssub.s32 16, 1
                loop: start=0, step=1, limit=1
                $region63: #{simple_cnn_forward.3} parent=54 // loop_pre_header
                  _
                $region64: #{simple_cnn_forward.3} parent=54 // loop_header
                  %s336 = sphi 0, %s340
                  %p337 = scmp.ge.s32.totalorder %s336, 1
                  %s341 = sphi %s162, %s162
                  %s342 = sphi %s159, %s159
                $region65: #{simple_cnn_forward.3} parent=54 // loop_header_branch
                  %339 = sbr.rel (%p337) target = $region69
                $region66: #{simple_cnn_forward.3} parent=54 // loop_body
                  %v343 = vld [vmem:[%s341] sm:%s334]
                  %344 = vst [vmem:[%s342] sm:%s334] %v343
                  %v345 = vld [vmem:[%s341 + $0x4] sm:%s334]
                  %346 = vst [vmem:[%s342 + $0x4] sm:%s334] %v345
                  %v347 = vld [vmem:[%s341 + $0x8] sm:%s334]
                  %348 = vst [vmem:[%s342 + $0x8] sm:%s334] %v347
                  %v349 = vld [vmem:[%s341 + $0xc] sm:%s334]
                  %350 = vst [vmem:[%s342 + $0xc] sm:%s334] %v349
                  %v351 = vld [vmem:[%s341 + $0x10] sm:%s334]
                  %352 = vst [vmem:[%s342 + $0x10] sm:%s334] %v351
                  %v353 = vld [vmem:[%s341 + $0x14] sm:%s334]
                  %354 = vst [vmem:[%s342 + $0x14] sm:%s334] %v353
                  %v355 = vld [vmem:[%s341 + $0x18] sm:%s334]
                  %356 = vst [vmem:[%s342 + $0x18] sm:%s334] %v355
                  %v357 = vld [vmem:[%s341 + $0x1c] sm:%s334]
                  %358 = vst [vmem:[%s342 + $0x1c] sm:%s334] %v357
                  %v359 = vld [vmem:[%s341 + $0x20] sm:%s334]
                  %360 = vst [vmem:[%s342 + $0x20] sm:%s334] %v359
                  %v361 = vld [vmem:[%s341 + $0x48] sm:%s334]
                  %362 = vst [vmem:[%s342 + $0x24] sm:%s334] %v361
                  %v363 = vld [vmem:[%s341 + $0x4c] sm:%s334]
                  %364 = vst [vmem:[%s342 + $0x28] sm:%s334] %v363
                  %v365 = vld [vmem:[%s341 + $0x50] sm:%s334]
                  %366 = vst [vmem:[%s342 + $0x2c] sm:%s334] %v365
                  %v367 = vld [vmem:[%s341 + $0x54] sm:%s334]
                  %368 = vst [vmem:[%s342 + $0x30] sm:%s334] %v367
                  %v369 = vld [vmem:[%s341 + $0x58] sm:%s334]
                  %370 = vst [vmem:[%s342 + $0x34] sm:%s334] %v369
                  %v371 = vld [vmem:[%s341 + $0x5c] sm:%s334]
                  %372 = vst [vmem:[%s342 + $0x38] sm:%s334] %v371
                  %v373 = vld [vmem:[%s341 + $0x60] sm:%s334]
                  %374 = vst [vmem:[%s342 + $0x3c] sm:%s334] %v373
                  %v375 = vld [vmem:[%s341 + $0x64] sm:%s334]
                  %376 = vst [vmem:[%s342 + $0x40] sm:%s334] %v375
                  %v377 = vld [vmem:[%s341 + $0x68] sm:%s334]
                  %378 = vst [vmem:[%s342 + $0x44] sm:%s334] %v377
                  %v379 = vld [vmem:[%s341 + $0x90] sm:%s334]
                  %380 = vst [vmem:[%s342 + $0x48] sm:%s334] %v379
                  %v381 = vld [vmem:[%s341 + $0x94] sm:%s334]
                  %382 = vst [vmem:[%s342 + $0x4c] sm:%s334] %v381
                  %v383 = vld [vmem:[%s341 + $0x98] sm:%s334]
                  %384 = vst [vmem:[%s342 + $0x50] sm:%s334] %v383
                  %v385 = vld [vmem:[%s341 + $0x9c] sm:%s334]
                  %386 = vst [vmem:[%s342 + $0x54] sm:%s334] %v385
                  %v387 = vld [vmem:[%s341 + $0xa0] sm:%s334]
                  %388 = vst [vmem:[%s342 + $0x58] sm:%s334] %v387
                  %v389 = vld [vmem:[%s341 + $0xa4] sm:%s334]
                  %390 = vst [vmem:[%s342 + $0x5c] sm:%s334] %v389
                  %v391 = vld [vmem:[%s341 + $0xa8] sm:%s334]
                  %392 = vst [vmem:[%s342 + $0x60] sm:%s334] %v391
                  %v393 = vld [vmem:[%s341 + $0xac] sm:%s334]
                  %394 = vst [vmem:[%s342 + $0x64] sm:%s334] %v393
                  %v395 = vld [vmem:[%s341 + $0xb0] sm:%s334]
                  %396 = vst [vmem:[%s342 + $0x68] sm:%s334] %v395
                  %v397 = vld [vmem:[%s341 + $0xd8] sm:%s334]
                  %398 = vst [vmem:[%s342 + $0x6c] sm:%s334] %v397
                  %v399 = vld [vmem:[%s341 + $0xdc] sm:%s334]
                  %400 = vst [vmem:[%s342 + $0x70] sm:%s334] %v399
                  %v401 = vld [vmem:[%s341 + $0xe0] sm:%s334]
                  %402 = vst [vmem:[%s342 + $0x74] sm:%s334] %v401
                  %v403 = vld [vmem:[%s341 + $0xe4] sm:%s334]
                  %404 = vst [vmem:[%s342 + $0x78] sm:%s334] %v403
                  %v405 = vld [vmem:[%s341 + $0xe8] sm:%s334]
                  %406 = vst [vmem:[%s342 + $0x7c] sm:%s334] %v405
                  %v407 = vld [vmem:[%s341 + $0xec] sm:%s334]
                  %408 = vst [vmem:[%s342 + $0x80] sm:%s334] %v407
                  %v409 = vld [vmem:[%s341 + $0xf0] sm:%s334]
                  %410 = vst [vmem:[%s342 + $0x84] sm:%s334] %v409
                  %v411 = vld [vmem:[%s341 + $0xf4] sm:%s334]
                  %412 = vst [vmem:[%s342 + $0x88] sm:%s334] %v411
                  %v413 = vld [vmem:[%s341 + $0xf8] sm:%s334]
                  %414 = vst [vmem:[%s342 + $0x8c] sm:%s334] %v413
                  %v415 = vld [vmem:[%s341 + $0x120] sm:%s334]
                  %416 = vst [vmem:[%s342 + $0x90] sm:%s334] %v415
                  %v417 = vld [vmem:[%s341 + $0x124] sm:%s334]
                  %418 = vst [vmem:[%s342 + $0x94] sm:%s334] %v417
                  %v419 = vld [vmem:[%s341 + $0x128] sm:%s334]
                  %420 = vst [vmem:[%s342 + $0x98] sm:%s334] %v419
                  %v421 = vld [vmem:[%s341 + $0x12c] sm:%s334]
                  %422 = vst [vmem:[%s342 + $0x9c] sm:%s334] %v421
                  %v423 = vld [vmem:[%s341 + $0x130] sm:%s334]
                  %424 = vst [vmem:[%s342 + $0xa0] sm:%s334] %v423
                  %v425 = vld [vmem:[%s341 + $0x134] sm:%s334]
                  %426 = vst [vmem:[%s342 + $0xa4] sm:%s334] %v425
                  %v427 = vld [vmem:[%s341 + $0x138] sm:%s334]
                  %428 = vst [vmem:[%s342 + $0xa8] sm:%s334] %v427
                  %v429 = vld [vmem:[%s341 + $0x13c] sm:%s334]
                  %430 = vst [vmem:[%s342 + $0xac] sm:%s334] %v429
                  %v431 = vld [vmem:[%s341 + $0x140] sm:%s334]
                  %432 = vst [vmem:[%s342 + $0xb0] sm:%s334] %v431
                  %v433 = vld [vmem:[%s341 + $0x168] sm:%s334]
                  %434 = vst [vmem:[%s342 + $0xb4] sm:%s334] %v433
                  %v435 = vld [vmem:[%s341 + $0x16c] sm:%s334]
                  %436 = vst [vmem:[%s342 + $0xb8] sm:%s334] %v435
                  %v437 = vld [vmem:[%s341 + $0x170] sm:%s334]
                  %438 = vst [vmem:[%s342 + $0xbc] sm:%s334] %v437
                  %v439 = vld [vmem:[%s341 + $0x174] sm:%s334]
                  %440 = vst [vmem:[%s342 + $0xc0] sm:%s334] %v439
                  %v441 = vld [vmem:[%s341 + $0x178] sm:%s334]
                  %442 = vst [vmem:[%s342 + $0xc4] sm:%s334] %v441
                  %v443 = vld [vmem:[%s341 + $0x17c] sm:%s334]
                  %444 = vst [vmem:[%s342 + $0xc8] sm:%s334] %v443
                  %v445 = vld [vmem:[%s341 + $0x180] sm:%s334]
                  %446 = vst [vmem:[%s342 + $0xcc] sm:%s334] %v445
                  %v447 = vld [vmem:[%s341 + $0x184] sm:%s334]
                  %448 = vst [vmem:[%s342 + $0xd0] sm:%s334] %v447
                  %v449 = vld [vmem:[%s341 + $0x188] sm:%s334]
                  %450 = vst [vmem:[%s342 + $0xd4] sm:%s334] %v449
                  %v451 = vld [vmem:[%s341 + $0x1b0] sm:%s334]
                  %452 = vst [vmem:[%s342 + $0xd8] sm:%s334] %v451
                  %v453 = vld [vmem:[%s341 + $0x1b4] sm:%s334]
                  %454 = vst [vmem:[%s342 + $0xdc] sm:%s334] %v453
                  %v455 = vld [vmem:[%s341 + $0x1b8] sm:%s334]
                  %456 = vst [vmem:[%s342 + $0xe0] sm:%s334] %v455
                  %v457 = vld [vmem:[%s341 + $0x1bc] sm:%s334]
                  %458 = vst [vmem:[%s342 + $0xe4] sm:%s334] %v457
                  %v459 = vld [vmem:[%s341 + $0x1c0] sm:%s334]
                  %460 = vst [vmem:[%s342 + $0xe8] sm:%s334] %v459
                  %v461 = vld [vmem:[%s341 + $0x1c4] sm:%s334]
                  %462 = vst [vmem:[%s342 + $0xec] sm:%s334] %v461
                  %v463 = vld [vmem:[%s341 + $0x1c8] sm:%s334]
                  %464 = vst [vmem:[%s342 + $0xf0] sm:%s334] %v463
                  %v465 = vld [vmem:[%s341 + $0x1cc] sm:%s334]
                  %466 = vst [vmem:[%s342 + $0xf4] sm:%s334] %v465
                  %v467 = vld [vmem:[%s341 + $0x1d0] sm:%s334]
                  %468 = vst [vmem:[%s342 + $0xf8] sm:%s334] %v467
                  %v469 = vld [vmem:[%s341 + $0x1f8] sm:%s334]
                  %470 = vst [vmem:[%s342 + $0xfc] sm:%s334] %v469
                  %v471 = vld [vmem:[%s341 + $0x1fc] sm:%s334]
                  %472 = vst [vmem:[%s342 + $0x100] sm:%s334] %v471
                  %v473 = vld [vmem:[%s341 + $0x200] sm:%s334]
                  %474 = vst [vmem:[%s342 + $0x104] sm:%s334] %v473
                  %v475 = vld [vmem:[%s341 + $0x204] sm:%s334]
                  %476 = vst [vmem:[%s342 + $0x108] sm:%s334] %v475
                  %v477 = vld [vmem:[%s341 + $0x208] sm:%s334]
                  %478 = vst [vmem:[%s342 + $0x10c] sm:%s334] %v477
                  %v479 = vld [vmem:[%s341 + $0x20c] sm:%s334]
                  %480 = vst [vmem:[%s342 + $0x110] sm:%s334] %v479
                  %v481 = vld [vmem:[%s341 + $0x210] sm:%s334]
                  %482 = vst [vmem:[%s342 + $0x114] sm:%s334] %v481
                  %v483 = vld [vmem:[%s341 + $0x214] sm:%s334]
                  %484 = vst [vmem:[%s342 + $0x118] sm:%s334] %v483
                  %v485 = vld [vmem:[%s341 + $0x218] sm:%s334]
                  %486 = vst [vmem:[%s342 + $0x11c] sm:%s334] %v485
                $region67: #{simple_cnn_forward.3} parent=54 // loop_footer
                  %s340 = sadd.s32 1, %s336
                $region68: #{simple_cnn_forward.3} parent=54 // loop_footer_branch
                  %335 = sbr.rel target = $region64
                $region69: #{simple_cnn_forward.3} parent=54 // loop_exit
                  _
              $region55: #{simple_cnn_forward.3} parent=39 // pred_fallthru
                _
            $region40: #{simple_cnn_forward.3} parent=35 // pred_fallthru
              _
            // Predicated region
            $region41: #{simple_cnn_forward.3} parent=35 // pred_check
              _
            $region42: #{simple_cnn_forward.3} parent=35 // pred_check_branch
              %168 = sbr.rel (0) target = $region44
            $region43: #{simple_cnn_forward.3} parent=35 // pred_region
              %s170 = ssub.s32 16, 1
              loop: start=0, step=1, limit=1
              $region45: #{simple_cnn_forward.3} parent=43 // loop_pre_header
                _
              $region46: #{simple_cnn_forward.3} parent=43 // loop_header
                %s172 = sphi 0, %s176
                %p173 = scmp.ge.s32.totalorder %s172, 1
                %s177 = sphi %s162, %s162
                %s178 = sphi %s159, %s159
              $region47: #{simple_cnn_forward.3} parent=43 // loop_header_branch
                %175 = sbr.rel (%p173) target = $region51
              $region48: #{simple_cnn_forward.3} parent=43 // loop_body
                %v179 = vld [vmem:[%s177] sm:%s170]
                %180 = vst [vmem:[%s178] sm:%s170] %v179
                %v181 = vld [vmem:[%s177 + $0x4] sm:%s170]
                %182 = vst [vmem:[%s178 + $0x4] sm:%s170] %v181
                %v183 = vld [vmem:[%s177 + $0x8] sm:%s170]
                %184 = vst [vmem:[%s178 + $0x8] sm:%s170] %v183
                %v185 = vld [vmem:[%s177 + $0xc] sm:%s170]
                %186 = vst [vmem:[%s178 + $0xc] sm:%s170] %v185
                %v187 = vld [vmem:[%s177 + $0x10] sm:%s170]
                %188 = vst [vmem:[%s178 + $0x10] sm:%s170] %v187
                %v189 = vld [vmem:[%s177 + $0x14] sm:%s170]
                %190 = vst [vmem:[%s178 + $0x14] sm:%s170] %v189
                %v191 = vld [vmem:[%s177 + $0x18] sm:%s170]
                %192 = vst [vmem:[%s178 + $0x18] sm:%s170] %v191
                %v193 = vld [vmem:[%s177 + $0x1c] sm:%s170]
                %194 = vst [vmem:[%s178 + $0x1c] sm:%s170] %v193
                %v195 = vld [vmem:[%s177 + $0x20] sm:%s170]
                %196 = vst [vmem:[%s178 + $0x20] sm:%s170] %v195
                %v197 = vld [vmem:[%s177 + $0x48] sm:%s170]
                %198 = vst [vmem:[%s178 + $0x24] sm:%s170] %v197
                %v199 = vld [vmem:[%s177 + $0x4c] sm:%s170]
                %200 = vst [vmem:[%s178 + $0x28] sm:%s170] %v199
                %v201 = vld [vmem:[%s177 + $0x50] sm:%s170]
                %202 = vst [vmem:[%s178 + $0x2c] sm:%s170] %v201
                %v203 = vld [vmem:[%s177 + $0x54] sm:%s170]
                %204 = vst [vmem:[%s178 + $0x30] sm:%s170] %v203
                %v205 = vld [vmem:[%s177 + $0x58] sm:%s170]
                %206 = vst [vmem:[%s178 + $0x34] sm:%s170] %v205
                %v207 = vld [vmem:[%s177 + $0x5c] sm:%s170]
                %208 = vst [vmem:[%s178 + $0x38] sm:%s170] %v207
                %v209 = vld [vmem:[%s177 + $0x60] sm:%s170]
                %210 = vst [vmem:[%s178 + $0x3c] sm:%s170] %v209
                %v211 = vld [vmem:[%s177 + $0x64] sm:%s170]
                %212 = vst [vmem:[%s178 + $0x40] sm:%s170] %v211
                %v213 = vld [vmem:[%s177 + $0x68] sm:%s170]
                %214 = vst [vmem:[%s178 + $0x44] sm:%s170] %v213
                %v215 = vld [vmem:[%s177 + $0x90] sm:%s170]
                %216 = vst [vmem:[%s178 + $0x48] sm:%s170] %v215
                %v217 = vld [vmem:[%s177 + $0x94] sm:%s170]
                %218 = vst [vmem:[%s178 + $0x4c] sm:%s170] %v217
                %v219 = vld [vmem:[%s177 + $0x98] sm:%s170]
                %220 = vst [vmem:[%s178 + $0x50] sm:%s170] %v219
                %v221 = vld [vmem:[%s177 + $0x9c] sm:%s170]
                %222 = vst [vmem:[%s178 + $0x54] sm:%s170] %v221
                %v223 = vld [vmem:[%s177 + $0xa0] sm:%s170]
                %224 = vst [vmem:[%s178 + $0x58] sm:%s170] %v223
                %v225 = vld [vmem:[%s177 + $0xa4] sm:%s170]
                %226 = vst [vmem:[%s178 + $0x5c] sm:%s170] %v225
                %v227 = vld [vmem:[%s177 + $0xa8] sm:%s170]
                %228 = vst [vmem:[%s178 + $0x60] sm:%s170] %v227
                %v229 = vld [vmem:[%s177 + $0xac] sm:%s170]
                %230 = vst [vmem:[%s178 + $0x64] sm:%s170] %v229
                %v231 = vld [vmem:[%s177 + $0xb0] sm:%s170]
                %232 = vst [vmem:[%s178 + $0x68] sm:%s170] %v231
                %v233 = vld [vmem:[%s177 + $0xd8] sm:%s170]
                %234 = vst [vmem:[%s178 + $0x6c] sm:%s170] %v233
                %v235 = vld [vmem:[%s177 + $0xdc] sm:%s170]
                %236 = vst [vmem:[%s178 + $0x70] sm:%s170] %v235
                %v237 = vld [vmem:[%s177 + $0xe0] sm:%s170]
                %238 = vst [vmem:[%s178 + $0x74] sm:%s170] %v237
                %v239 = vld [vmem:[%s177 + $0xe4] sm:%s170]
                %240 = vst [vmem:[%s178 + $0x78] sm:%s170] %v239
                %v241 = vld [vmem:[%s177 + $0xe8] sm:%s170]
                %242 = vst [vmem:[%s178 + $0x7c] sm:%s170] %v241
                %v243 = vld [vmem:[%s177 + $0xec] sm:%s170]
                %244 = vst [vmem:[%s178 + $0x80] sm:%s170] %v243
                %v245 = vld [vmem:[%s177 + $0xf0] sm:%s170]
                %246 = vst [vmem:[%s178 + $0x84] sm:%s170] %v245
                %v247 = vld [vmem:[%s177 + $0xf4] sm:%s170]
                %248 = vst [vmem:[%s178 + $0x88] sm:%s170] %v247
                %v249 = vld [vmem:[%s177 + $0xf8] sm:%s170]
                %250 = vst [vmem:[%s178 + $0x8c] sm:%s170] %v249
                %v251 = vld [vmem:[%s177 + $0x120] sm:%s170]
                %252 = vst [vmem:[%s178 + $0x90] sm:%s170] %v251
                %v253 = vld [vmem:[%s177 + $0x124] sm:%s170]
                %254 = vst [vmem:[%s178 + $0x94] sm:%s170] %v253
                %v255 = vld [vmem:[%s177 + $0x128] sm:%s170]
                %256 = vst [vmem:[%s178 + $0x98] sm:%s170] %v255
                %v257 = vld [vmem:[%s177 + $0x12c] sm:%s170]
                %258 = vst [vmem:[%s178 + $0x9c] sm:%s170] %v257
                %v259 = vld [vmem:[%s177 + $0x130] sm:%s170]
                %260 = vst [vmem:[%s178 + $0xa0] sm:%s170] %v259
                %v261 = vld [vmem:[%s177 + $0x134] sm:%s170]
                %262 = vst [vmem:[%s178 + $0xa4] sm:%s170] %v261
                %v263 = vld [vmem:[%s177 + $0x138] sm:%s170]
                %264 = vst [vmem:[%s178 + $0xa8] sm:%s170] %v263
                %v265 = vld [vmem:[%s177 + $0x13c] sm:%s170]
                %266 = vst [vmem:[%s178 + $0xac] sm:%s170] %v265
                %v267 = vld [vmem:[%s177 + $0x140] sm:%s170]
                %268 = vst [vmem:[%s178 + $0xb0] sm:%s170] %v267
                %v269 = vld [vmem:[%s177 + $0x168] sm:%s170]
                %270 = vst [vmem:[%s178 + $0xb4] sm:%s170] %v269
                %v271 = vld [vmem:[%s177 + $0x16c] sm:%s170]
                %272 = vst [vmem:[%s178 + $0xb8] sm:%s170] %v271
                %v273 = vld [vmem:[%s177 + $0x170] sm:%s170]
                %274 = vst [vmem:[%s178 + $0xbc] sm:%s170] %v273
                %v275 = vld [vmem:[%s177 + $0x174] sm:%s170]
                %276 = vst [vmem:[%s178 + $0xc0] sm:%s170] %v275
                %v277 = vld [vmem:[%s177 + $0x178] sm:%s170]
                %278 = vst [vmem:[%s178 + $0xc4] sm:%s170] %v277
                %v279 = vld [vmem:[%s177 + $0x17c] sm:%s170]
                %280 = vst [vmem:[%s178 + $0xc8] sm:%s170] %v279
                %v281 = vld [vmem:[%s177 + $0x180] sm:%s170]
                %282 = vst [vmem:[%s178 + $0xcc] sm:%s170] %v281
                %v283 = vld [vmem:[%s177 + $0x184] sm:%s170]
                %284 = vst [vmem:[%s178 + $0xd0] sm:%s170] %v283
                %v285 = vld [vmem:[%s177 + $0x188] sm:%s170]
                %286 = vst [vmem:[%s178 + $0xd4] sm:%s170] %v285
                %v287 = vld [vmem:[%s177 + $0x1b0] sm:%s170]
                %288 = vst [vmem:[%s178 + $0xd8] sm:%s170] %v287
                %v289 = vld [vmem:[%s177 + $0x1b4] sm:%s170]
                %290 = vst [vmem:[%s178 + $0xdc] sm:%s170] %v289
                %v291 = vld [vmem:[%s177 + $0x1b8] sm:%s170]
                %292 = vst [vmem:[%s178 + $0xe0] sm:%s170] %v291
                %v293 = vld [vmem:[%s177 + $0x1bc] sm:%s170]
                %294 = vst [vmem:[%s178 + $0xe4] sm:%s170] %v293
                %v295 = vld [vmem:[%s177 + $0x1c0] sm:%s170]
                %296 = vst [vmem:[%s178 + $0xe8] sm:%s170] %v295
                %v297 = vld [vmem:[%s177 + $0x1c4] sm:%s170]
                %298 = vst [vmem:[%s178 + $0xec] sm:%s170] %v297
                %v299 = vld [vmem:[%s177 + $0x1c8] sm:%s170]
                %300 = vst [vmem:[%s178 + $0xf0] sm:%s170] %v299
                %v301 = vld [vmem:[%s177 + $0x1cc] sm:%s170]
                %302 = vst [vmem:[%s178 + $0xf4] sm:%s170] %v301
                %v303 = vld [vmem:[%s177 + $0x1d0] sm:%s170]
                %304 = vst [vmem:[%s178 + $0xf8] sm:%s170] %v303
                %v305 = vld [vmem:[%s177 + $0x1f8] sm:%s170]
                %306 = vst [vmem:[%s178 + $0xfc] sm:%s170] %v305
                %v307 = vld [vmem:[%s177 + $0x1fc] sm:%s170]
                %308 = vst [vmem:[%s178 + $0x100] sm:%s170] %v307
                %v309 = vld [vmem:[%s177 + $0x200] sm:%s170]
                %310 = vst [vmem:[%s178 + $0x104] sm:%s170] %v309
                %v311 = vld [vmem:[%s177 + $0x204] sm:%s170]
                %312 = vst [vmem:[%s178 + $0x108] sm:%s170] %v311
                %v313 = vld [vmem:[%s177 + $0x208] sm:%s170]
                %314 = vst [vmem:[%s178 + $0x10c] sm:%s170] %v313
                %v315 = vld [vmem:[%s177 + $0x20c] sm:%s170]
                %316 = vst [vmem:[%s178 + $0x110] sm:%s170] %v315
                %v317 = vld [vmem:[%s177 + $0x210] sm:%s170]
                %318 = vst [vmem:[%s178 + $0x114] sm:%s170] %v317
                %v319 = vld [vmem:[%s177 + $0x214] sm:%s170]
                %320 = vst [vmem:[%s178 + $0x118] sm:%s170] %v319
                %v321 = vld [vmem:[%s177 + $0x218] sm:%s170]
                %322 = vst [vmem:[%s178 + $0x11c] sm:%s170] %v321
              $region49: #{simple_cnn_forward.3} parent=43 // loop_footer
                %s176 = sadd.s32 1, %s172
              $region50: #{simple_cnn_forward.3} parent=43 // loop_footer_branch
                %171 = sbr.rel target = $region46
              $region51: #{simple_cnn_forward.3} parent=43 // loop_exit
                _
            $region44: #{simple_cnn_forward.3} parent=35 // pred_fallthru
              _
          $region36: #{simple_cnn_forward.3} parent=31 // pred_fallthru
            _
          %487 = vnop
        $region32: #{simple_cnn_forward.3} parent=27 // pred_fallthru
          _
      $region28: #{simple_cnn_forward.3} parent=5 // pred_fallthru
        _
      %p488 = scmp.le.s32.totalorder 1, %s10
      %p489 = scmp.lt.s32.totalorder %s10, 3
      %p490 = pnand %p488, %p489
      %p491 = pneg %p490
      // Predicated region
      $region70: #{simple_cnn_forward.3} parent=5 // pred_check
        _
      $region71: #{simple_cnn_forward.3} parent=5 // pred_check_branch
        %493 = sbr.rel (%p490) target = $region73
      $region72: #{simple_cnn_forward.3} parent=5 // pred_region
        %s494 = ssub.s32 %s10, 1
        %s495 = sand.u32 %s23, 1
        %s496 = sand.u32 %s23, 1
        %s497 = smul.addr %s496, 288
        %s498 = scalar_lea.vmem [#allocation2], %s497
        // Predicated region
        $region74: #{simple_cnn_forward.3} parent=72 // pred_check
          %p499 = pneg %p36
        $region75: #{simple_cnn_forward.3} parent=72 // pred_check_branch
          %501 = sbr.rel (%p499) target = $region77
        $region76: #{simple_cnn_forward.3} parent=72 // pred_region
          _
        $region77: #{simple_cnn_forward.3} parent=72 // pred_fallthru
          _
        %s502 = sand.u32 %s23, 1
        %s503 = sand.u32 %s23, 1
        %s504 = smul.addr %s503, 288
        %s505 = scalar_lea.vmem [#allocation2], %s504
        %p506 = pneg %p36
        %p507 = pneg %p33
        %p508 = pneg %p57
        %p509 = pneg %p54
        %p510 = pneg %p78
        %p511 = pneg %p75
        %p512 = pneg %p99
        %p513 = pneg %p96
        %p514 = pneg %p125
        %p515 = pneg %p122
        %p516 = scmp.lt.s32.totalorder %s15, 1
        %s517 = scalar_select %p516, %s15, 1
        %s518 = smul.addr %s517, 8
        %s519 = smul.addr %s518, 4
        %s520 = scalar_lea.vmem %s4, %s519
        %p521 = scmp.lt.s32.totalorder %s15, 1
        %s522 = scalar_select %p521, %s15, 1
        %s523 = smul.addr %s522, 8
        %s524 = smul.addr %s523, 4
        %s525 = scalar_lea.vmem %s4, %s524
        %v527 = vld [vmem:[%s498] sm:$0xf]
        %v528 = vld [vmem:[%s498 + $0x4] sm:$0xf]
        %v529 = vld [vmem:[%s498 + $0x8] sm:$0xf]
        %v530 = vld [vmem:[%s498 + $0xc] sm:$0xf]
        %v531 = vld [vmem:[%s498 + $0x10] sm:$0xf]
        %v532 = vld [vmem:[%s498 + $0x14] sm:$0xf]
        %v533 = vld [vmem:[%s498 + $0x18] sm:$0xf]
        %v534 = vld [vmem:[%s498 + $0x1c] sm:$0xf]
        %s535 = scalar_lea.vmem %s498, 72 [#allocation2]
        %v536 = vld [vmem:[%s535] sm:$0xf]
        %v537 = vld [vmem:[%s535 + $0x4] sm:$0xf]
        %v538 = vld [vmem:[%s535 + $0x8] sm:$0xf]
        %v539 = vld [vmem:[%s535 + $0xc] sm:$0xf]
        %v540 = vld [vmem:[%s535 + $0x10] sm:$0xf]
        %v541 = vld [vmem:[%s535 + $0x14] sm:$0xf]
        %v542 = vld [vmem:[%s535 + $0x18] sm:$0xf]
        %v543 = vld [vmem:[%s535 + $0x1c] sm:$0xf]
        %s544 = scalar_lea.vmem %s498, 144 [#allocation2]
        %v545 = vld [vmem:[%s544] sm:$0xf]
        %v546 = vld [vmem:[%s544 + $0x4] sm:$0xf]
        %v547 = vld [vmem:[%s544 + $0x8] sm:$0xf]
        %v548 = vld [vmem:[%s544 + $0xc] sm:$0xf]
        %v549 = vld [vmem:[%s544 + $0x10] sm:$0xf]
        %v550 = vld [vmem:[%s544 + $0x14] sm:$0xf]
        %v551 = vld [vmem:[%s544 + $0x18] sm:$0xf]
        %v552 = vld [vmem:[%s544 + $0x1c] sm:$0xf]
        %s553 = scalar_lea.vmem %s498, 216 [#allocation2]
        %v554 = vld [vmem:[%s553] sm:$0xf]
        %v555 = vld [vmem:[%s553 + $0x4] sm:$0xf]
        %v556 = vld [vmem:[%s553 + $0x8] sm:$0xf]
        %v557 = vld [vmem:[%s553 + $0xc] sm:$0xf]
        %v558 = vld [vmem:[%s553 + $0x10] sm:$0xf]
        %v559 = vld [vmem:[%s553 + $0x14] sm:$0xf]
        %v560 = vld [vmem:[%s553 + $0x18] sm:$0xf]
        %v561 = vld [vmem:[%s553 + $0x1c] sm:$0xf]
        %v570 = vunpack.c.l.b16 %v527
        %v571 = vunpack.c.l.b16 %v528
        %v572 = vunpack.c.l.b16 %v529
        %v573 = vunpack.c.l.b16 %v530
        %v574 = vunpack.c.l.b16 %v531
        %v575 = vunpack.c.l.b16 %v532
        %v576 = vunpack.c.l.b16 %v533
        %v577 = vunpack.c.l.b16 %v534
        %v578 = vpack.c.b16 %v571, %v570
        %v579 = vpack.c.b16 %v573, %v572
        %v580 = vpack.c.b16 %v575, %v574
        %v581 = vpack.c.b16 %v577, %v576
        %v590 = vunpack.c.l.b16 %v536
        %v591 = vunpack.c.l.b16 %v537
        %v592 = vunpack.c.l.b16 %v538
        %v593 = vunpack.c.l.b16 %v539
        %v594 = vunpack.c.l.b16 %v540
        %v595 = vunpack.c.l.b16 %v541
        %v596 = vunpack.c.l.b16 %v542
        %v597 = vunpack.c.l.b16 %v543
        %v598 = vpack.c.b16 %v591, %v590
        %v599 = vpack.c.b16 %v593, %v592
        %v600 = vpack.c.b16 %v595, %v594
        %v601 = vpack.c.b16 %v597, %v596
        %v610 = vunpack.c.l.b16 %v545
        %v611 = vunpack.c.l.b16 %v546
        %v612 = vunpack.c.l.b16 %v547
        %v613 = vunpack.c.l.b16 %v548
        %v614 = vunpack.c.l.b16 %v549
        %v615 = vunpack.c.l.b16 %v550
        %v616 = vunpack.c.l.b16 %v551
        %v617 = vunpack.c.l.b16 %v552
        %v618 = vpack.c.b16 %v611, %v610
        %v619 = vpack.c.b16 %v613, %v612
        %v620 = vpack.c.b16 %v615, %v614
        %v621 = vpack.c.b16 %v617, %v616
        %v630 = vunpack.c.l.b16 %v554
        %v631 = vunpack.c.l.b16 %v555
        %v632 = vunpack.c.l.b16 %v556
        %v633 = vunpack.c.l.b16 %v557
        %v634 = vunpack.c.l.b16 %v558
        %v635 = vunpack.c.l.b16 %v559
        %v636 = vunpack.c.l.b16 %v560
        %v637 = vunpack.c.l.b16 %v561
        %v638 = vpack.c.b16 %v631, %v630
        %v639 = vpack.c.b16 %v633, %v632
        %v640 = vpack.c.b16 %v635, %v634
        %v641 = vpack.c.b16 %v637, %v636
        %v642 = vld [vmem:[%s1] sm:$0xf]
        %v643 = vld [vmem:[%s1 + $0x4] sm:$0xf]
        %s644 = scalar_lea.vmem %s498, 36 [#allocation2]
        %v645 = vld [vmem:[%s644] sm:$0xf]
        %v646 = vld [vmem:[%s644 + $0x4] sm:$0xf]
        %v647 = vld [vmem:[%s644 + $0x8] sm:$0xf]
        %v648 = vld [vmem:[%s644 + $0xc] sm:$0xf]
        %v649 = vld [vmem:[%s644 + $0x10] sm:$0xf]
        %v650 = vld [vmem:[%s644 + $0x14] sm:$0xf]
        %v651 = vld [vmem:[%s644 + $0x18] sm:$0xf]
        %v652 = vld [vmem:[%s644 + $0x1c] sm:$0xf]
        %s653 = scalar_lea.vmem %s498, 180 [#allocation2]
        %v654 = vld [vmem:[%s653] sm:$0xf]
        %v655 = vld [vmem:[%s653 + $0x4] sm:$0xf]
        %v656 = vld [vmem:[%s653 + $0x8] sm:$0xf]
        %v657 = vld [vmem:[%s653 + $0xc] sm:$0xf]
        %v658 = vld [vmem:[%s653 + $0x10] sm:$0xf]
        %v659 = vld [vmem:[%s653 + $0x14] sm:$0xf]
        %v660 = vld [vmem:[%s653 + $0x18] sm:$0xf]
        %v661 = vld [vmem:[%s653 + $0x1c] sm:$0xf]
        %v670 = vunpack.c.l.b16 %v645
        %v671 = vunpack.c.l.b16 %v646
        %v672 = vunpack.c.l.b16 %v647
        %v673 = vunpack.c.l.b16 %v648
        %v674 = vunpack.c.l.b16 %v649
        %v675 = vunpack.c.l.b16 %v650
        %v676 = vunpack.c.l.b16 %v651
        %v677 = vunpack.c.l.b16 %v652
        %v678 = vpack.c.b16 %v671, %v670
        %v679 = vpack.c.b16 %v673, %v672
        %v680 = vpack.c.b16 %v675, %v674
        %v681 = vpack.c.b16 %v677, %v676
        %v690 = vunpack.c.l.b16 %v654
        %v691 = vunpack.c.l.b16 %v655
        %v692 = vunpack.c.l.b16 %v656
        %v693 = vunpack.c.l.b16 %v657
        %v694 = vunpack.c.l.b16 %v658
        %v695 = vunpack.c.l.b16 %v659
        %v696 = vunpack.c.l.b16 %v660
        %v697 = vunpack.c.l.b16 %v661
        %v698 = vpack.c.b16 %v691, %v690
        %v699 = vpack.c.b16 %v693, %v692
        %v700 = vpack.c.b16 %v695, %v694
        %v701 = vpack.c.b16 %v697, %v696
        %s702 = scalar_lea.vmem %s1, 8
        %v703 = vld [vmem:[%s702] sm:$0xf]
        %v704 = vld [vmem:[%s702 + $0x4] sm:$0xf]
        %v707 = vunpack.c.l.b16 %v703
        %v708 = vunpack.c.l.b16 %v704
        %v709 = vpack.c.b16 %v708, %v707
        %vm711 = vcmask 130048
        %v713 = vsel %vm711, %v598, 0
        %v716 = vsel %vm711, %v599, 0
        %v719 = vsel %vm711, %v600, 0
        %v722 = vsel %vm711, %v601, 0
        %v725 = vsel %vm711, %v678, 0
        %v728 = vsel %vm711, %v679, 0
        %v731 = vsel %vm711, %v680, 0
        %v734 = vsel %vm711, %v681, 0
        %v737 = vsel %vm711, %v638, 0
        %v740 = vsel %vm711, %v639, 0
        %v743 = vsel %vm711, %v640, 0
        %v746 = vsel %vm711, %v641, 0
        %v749 = vsel %vm711, %v698, 0
        %v752 = vsel %vm711, %v699, 0
        %v755 = vsel %vm711, %v700, 0
        %v758 = vsel %vm711, %v701, 0
        %760 = vmatprep.subr.bf16.mxu0 0
        %761 = vmatpush1.bf16.msra.mxu0 0
        %762 = vmatprep.subr.bf16.mxu0 0
        %763 = vmatpush1.bf16.msra.mxu0 0
        %764 = vmatprep.subr.bf16.mxu0 0
        %765 = vmatpush1.bf16.msra.mxu0 0
        %766 = vmatprep.subr.bf16.mxu0 0
        %767 = vmatpush1.bf16.msra.mxu0 0
        %768 = vmatprep.subr.bf16.mxu0 0
        %769 = vmatpush1.bf16.msra.mxu0 0
        %770 = vmatprep.subr.bf16.mxu0 0
        %771 = vmatpush1.bf16.msra.mxu0 0
        %772 = vmatprep.subr.bf16.mxu0 0
        %773 = vmatpush1.bf16.msra.mxu0 0
        %774 = vmatprep.subr.bf16.mxu0 0
        %775 = vmatpush1.bf16.msra.mxu0 %v709
        %776 = vmatprep.subr.bf16.mxu0 0
        %777 = vmatpush2.bf16.msra.mxu0 0
        %778 = vmatprep.subr.bf16.mxu0 0
        %779 = vmatpush2.bf16.msra.mxu0 0
        %780 = vmatprep.subr.bf16.mxu0 0
        %781 = vmatpush2.bf16.msra.mxu0 0
        %782 = vmatprep.subr.bf16.mxu0 0
        %783 = vmatpush2.bf16.msra.mxu0 0
        %784 = vmatprep.subr.bf16.mxu0 0
        %785 = vmatpush2.bf16.msra.mxu0 0
        %786 = vmatprep.subr.bf16.mxu0 0
        %787 = vmatpush2.bf16.msra.mxu0 0
        %788 = vmatprep.subr.bf16.mxu0 0
        %789 = vmatpush2.bf16.msra.mxu0 0
        %790 = vmatprep.subr.bf16.mxu0 0
        %791 = vmatpush2.bf16.msra.mxu0 0
        %792 = vmatprep.mubr.bf16.mxu0 0
        %793 = vmatmul.mubr.bf16.gmra.mxu0 %v713
        %v794 = vpop.f32.mrf.mxu0
        %v795 = vadd.f32 0.0, %v794
        %v796 = vpop.f32.mrf.mxu0
        %v797 = vpop.f32.mrf.mxu0
        %v798 = vadd.f32 0.0, %v797
        %v799 = vpop.f32.mrf.mxu0
        %800 = vmatprep.mubr.bf16.mxu0 0
        %801 = vmatmul.mubr.bf16.gmra.mxu0 %v716
        %v802 = vpop.f32.mrf.mxu0
        %v803 = vadd.f32 0.0, %v802
        %v804 = vpop.f32.mrf.mxu0
        %v805 = vpop.f32.mrf.mxu0
        %v806 = vadd.f32 0.0, %v805
        %v807 = vpop.f32.mrf.mxu0
        %808 = vmatprep.mubr.bf16.mxu0 0
        %809 = vmatmul.mubr.bf16.gmra.mxu0 %v719
        %v810 = vpop.f32.mrf.mxu0
        %v811 = vadd.f32 0.0, %v810
        %v812 = vpop.f32.mrf.mxu0
        %v813 = vpop.f32.mrf.mxu0
        %v814 = vadd.f32 0.0, %v813
        %v815 = vpop.f32.mrf.mxu0
        %816 = vmatprep.mubr.bf16.mxu0 0
        %817 = vmatmul.mubr.bf16.gmra.mxu0 %v722
        %v818 = vpop.f32.mrf.mxu0
        %v819 = vadd.f32 0.0, %v818
        %v820 = vpop.f32.mrf.mxu0
        %v821 = vpop.f32.mrf.mxu0
        %v822 = vadd.f32 0.0, %v821
        %v823 = vpop.f32.mrf.mxu0
        %824 = vmatprep.mubr.bf16.mxu0 0
        %825 = vmatmul.mubr.bf16.gmra.mxu0 %v725
        %v826 = vpop.f32.mrf.mxu0
        %v827 = vadd.f32 0.0, %v826
        %v828 = vpop.f32.mrf.mxu0
        %v829 = vpop.f32.mrf.mxu0
        %v830 = vadd.f32 0.0, %v829
        %v831 = vpop.f32.mrf.mxu0
        %832 = vmatprep.mubr.bf16.mxu0 0
        %833 = vmatmul.mubr.bf16.gmra.mxu0 %v728
        %v834 = vpop.f32.mrf.mxu0
        %v835 = vadd.f32 0.0, %v834
        %v836 = vpop.f32.mrf.mxu0
        %v837 = vpop.f32.mrf.mxu0
        %v838 = vadd.f32 0.0, %v837
        %v839 = vpop.f32.mrf.mxu0
        %840 = vmatprep.mubr.bf16.mxu0 0
        %841 = vmatmul.mubr.bf16.gmra.mxu0 %v731
        %v842 = vpop.f32.mrf.mxu0
        %v843 = vadd.f32 0.0, %v842
        %v844 = vpop.f32.mrf.mxu0
        %v845 = vpop.f32.mrf.mxu0
        %v846 = vadd.f32 0.0, %v845
        %v847 = vpop.f32.mrf.mxu0
        %848 = vmatprep.mubr.bf16.mxu0 0
        %849 = vmatmul.mubr.bf16.gmra.mxu0 %v734
        %v850 = vpop.f32.mrf.mxu0
        %v851 = vadd.f32 0.0, %v850
        %v852 = vpop.f32.mrf.mxu0
        %v853 = vpop.f32.mrf.mxu0
        %v854 = vadd.f32 0.0, %v853
        %v855 = vpop.f32.mrf.mxu0
        %856 = vmatprep.mubr.bf16.mxu0 0
        %857 = vmatmul.mubr.bf16.gmra.mxu0 %v737
        %v858 = vpop.f32.mrf.mxu0
        %v859 = vadd.f32 0.0, %v858
        %v860 = vpop.f32.mrf.mxu0
        %v861 = vpop.f32.mrf.mxu0
        %v862 = vadd.f32 0.0, %v861
        %v863 = vpop.f32.mrf.mxu0
        %864 = vmatprep.mubr.bf16.mxu0 0
        %865 = vmatmul.mubr.bf16.gmra.mxu0 %v740
        %v866 = vpop.f32.mrf.mxu0
        %v867 = vadd.f32 0.0, %v866
        %v868 = vpop.f32.mrf.mxu0
        %v869 = vpop.f32.mrf.mxu0
        %v870 = vadd.f32 0.0, %v869
        %v871 = vpop.f32.mrf.mxu0
        %872 = vmatprep.mubr.bf16.mxu0 0
        %873 = vmatmul.mubr.bf16.gmra.mxu0 %v743
        %v874 = vpop.f32.mrf.mxu0
        %v875 = vadd.f32 0.0, %v874
        %v876 = vpop.f32.mrf.mxu0
        %v877 = vpop.f32.mrf.mxu0
        %v878 = vadd.f32 0.0, %v877
        %v879 = vpop.f32.mrf.mxu0
        %880 = vmatprep.mubr.bf16.mxu0 0
        %881 = vmatmul.mubr.bf16.gmra.mxu0 %v746
        %v882 = vpop.f32.mrf.mxu0
        %v883 = vadd.f32 0.0, %v882
        %v884 = vpop.f32.mrf.mxu0
        %v885 = vpop.f32.mrf.mxu0
        %v886 = vadd.f32 0.0, %v885
        %v887 = vpop.f32.mrf.mxu0
        %888 = vmatprep.mubr.bf16.mxu0 0
        %889 = vmatmul.mubr.bf16.gmra.mxu0 %v749
        %v890 = vpop.f32.mrf.mxu0
        %v891 = vadd.f32 0.0, %v890
        %v892 = vpop.f32.mrf.mxu0
        %v893 = vpop.f32.mrf.mxu0
        %v894 = vadd.f32 0.0, %v893
        %v895 = vpop.f32.mrf.mxu0
        %896 = vmatprep.mubr.bf16.mxu0 0
        %897 = vmatmul.mubr.bf16.gmra.mxu0 %v752
        %v898 = vpop.f32.mrf.mxu0
        %v899 = vadd.f32 0.0, %v898
        %v900 = vpop.f32.mrf.mxu0
        %v901 = vpop.f32.mrf.mxu0
        %v902 = vadd.f32 0.0, %v901
        %v903 = vpop.f32.mrf.mxu0
        %904 = vmatprep.mubr.bf16.mxu0 0
        %905 = vmatmul.mubr.bf16.gmra.mxu0 %v755
        %v906 = vpop.f32.mrf.mxu0
        %v907 = vadd.f32 0.0, %v906
        %v908 = vpop.f32.mrf.mxu0
        %v909 = vpop.f32.mrf.mxu0
        %v910 = vadd.f32 0.0, %v909
        %v911 = vpop.f32.mrf.mxu0
        %912 = vmatprep.mubr.bf16.mxu0 0
        %913 = vmatmul.mubr.bf16.gmra.mxu0 %v758
        %v914 = vpop.f32.mrf.mxu0
        %v915 = vadd.f32 0.0, %v914
        %v916 = vpop.f32.mrf.mxu0
        %v917 = vpop.f32.mrf.mxu0
        %v918 = vadd.f32 0.0, %v917
        %v919 = vpop.f32.mrf.mxu0
        %920 = vdwg.mxu0
        %v923 = vunpack.c.l.b16 %v642
        %v924 = vunpack.c.l.b16 %v643
        %v925 = vpack.c.b16 %v924, %v923
        %v928 = vsel %vm711, %v578, 0
        %v931 = vsel %vm711, %v579, 0
        %v934 = vsel %vm711, %v580, 0
        %v937 = vsel %vm711, %v581, 0
        %v940 = vsel %vm711, %v618, 0
        %v943 = vsel %vm711, %v619, 0
        %v946 = vsel %vm711, %v620, 0
        %v949 = vsel %vm711, %v621, 0
        %951 = vmatprep.subr.bf16.mxu0 0
        %952 = vmatpush1.bf16.msra.mxu0 0
        %953 = vmatprep.subr.bf16.mxu0 0
        %954 = vmatpush1.bf16.msra.mxu0 0
        %955 = vmatprep.subr.bf16.mxu0 0
        %956 = vmatpush1.bf16.msra.mxu0 0
        %957 = vmatprep.subr.bf16.mxu0 0
        %958 = vmatpush1.bf16.msra.mxu0 0
        %959 = vmatprep.subr.bf16.mxu0 0
        %960 = vmatpush1.bf16.msra.mxu0 0
        %961 = vmatprep.subr.bf16.mxu0 0
        %962 = vmatpush1.bf16.msra.mxu0 0
        %963 = vmatprep.subr.bf16.mxu0 0
        %964 = vmatpush1.bf16.msra.mxu0 0
        %965 = vmatprep.subr.bf16.mxu0 0
        %966 = vmatpush1.bf16.msra.mxu0 %v925
        %967 = vmatprep.subr.bf16.mxu0 0
        %968 = vmatpush2.bf16.msra.mxu0 0
        %969 = vmatprep.subr.bf16.mxu0 0
        %970 = vmatpush2.bf16.msra.mxu0 0
        %971 = vmatprep.subr.bf16.mxu0 0
        %972 = vmatpush2.bf16.msra.mxu0 0
        %973 = vmatprep.subr.bf16.mxu0 0
        %974 = vmatpush2.bf16.msra.mxu0 0
        %975 = vmatprep.subr.bf16.mxu0 0
        %976 = vmatpush2.bf16.msra.mxu0 0
        %977 = vmatprep.subr.bf16.mxu0 0
        %978 = vmatpush2.bf16.msra.mxu0 0
        %979 = vmatprep.subr.bf16.mxu0 0
        %980 = vmatpush2.bf16.msra.mxu0 0
        %981 = vmatprep.subr.bf16.mxu0 0
        %982 = vmatpush2.bf16.msra.mxu0 0
        %983 = vmatprep.mubr.bf16.mxu0 0
        %984 = vmatmul.mubr.bf16.gmra.mxu0 %v928
        %v985 = vpop.f32.mrf.mxu0
        %v986 = vadd.f32 %v795, %v985
        %v987 = vpop.f32.mrf.mxu0
        %v988 = vpop.f32.mrf.mxu0
        %v989 = vadd.f32 %v798, %v988
        %v990 = vpop.f32.mrf.mxu0
        %991 = vmatprep.mubr.bf16.mxu0 0
        %992 = vmatmul.mubr.bf16.gmra.mxu0 %v931
        %v993 = vpop.f32.mrf.mxu0
        %v994 = vadd.f32 %v803, %v993
        %v995 = vpop.f32.mrf.mxu0
        %v996 = vpop.f32.mrf.mxu0
        %v997 = vadd.f32 %v806, %v996
        %v998 = vpop.f32.mrf.mxu0
        %999 = vmatprep.mubr.bf16.mxu0 0
        %1000 = vmatmul.mubr.bf16.gmra.mxu0 %v934
        %v1001 = vpop.f32.mrf.mxu0
        %v1002 = vadd.f32 %v811, %v1001
        %v1003 = vpop.f32.mrf.mxu0
        %v1004 = vpop.f32.mrf.mxu0
        %v1005 = vadd.f32 %v814, %v1004
        %v1006 = vpop.f32.mrf.mxu0
        %1007 = vmatprep.mubr.bf16.mxu0 0
        %1008 = vmatmul.mubr.bf16.gmra.mxu0 %v937
        %v1009 = vpop.f32.mrf.mxu0
        %v1010 = vadd.f32 %v819, %v1009
        %v1011 = vpop.f32.mrf.mxu0
        %v1012 = vpop.f32.mrf.mxu0
        %v1013 = vadd.f32 %v822, %v1012
        %v1014 = vpop.f32.mrf.mxu0
        %1015 = vmatprep.mubr.bf16.mxu0 0
        %1016 = vmatmul.mubr.bf16.gmra.mxu0 %v713
        %v1017 = vpop.f32.mrf.mxu0
        %v1018 = vadd.f32 %v827, %v1017
        %v1019 = vpop.f32.mrf.mxu0
        %v1020 = vpop.f32.mrf.mxu0
        %v1021 = vadd.f32 %v830, %v1020
        %v1022 = vpop.f32.mrf.mxu0
        %1023 = vmatprep.mubr.bf16.mxu0 0
        %1024 = vmatmul.mubr.bf16.gmra.mxu0 %v716
        %v1025 = vpop.f32.mrf.mxu0
        %v1026 = vadd.f32 %v835, %v1025
        %v1027 = vpop.f32.mrf.mxu0
        %v1028 = vpop.f32.mrf.mxu0
        %v1029 = vadd.f32 %v838, %v1028
        %v1030 = vpop.f32.mrf.mxu0
        %1031 = vmatprep.mubr.bf16.mxu0 0
        %1032 = vmatmul.mubr.bf16.gmra.mxu0 %v719
        %v1033 = vpop.f32.mrf.mxu0
        %v1034 = vadd.f32 %v843, %v1033
        %v1035 = vpop.f32.mrf.mxu0
        %v1036 = vpop.f32.mrf.mxu0
        %v1037 = vadd.f32 %v846, %v1036
        %v1038 = vpop.f32.mrf.mxu0
        %1039 = vmatprep.mubr.bf16.mxu0 0
        %1040 = vmatmul.mubr.bf16.gmra.mxu0 %v722
        %v1041 = vpop.f32.mrf.mxu0
        %v1042 = vadd.f32 %v851, %v1041
        %v1043 = vpop.f32.mrf.mxu0
        %v1044 = vpop.f32.mrf.mxu0
        %v1045 = vadd.f32 %v854, %v1044
        %v1046 = vpop.f32.mrf.mxu0
        %1047 = vmatprep.mubr.bf16.mxu0 0
        %1048 = vmatmul.mubr.bf16.gmra.mxu0 %v940
        %v1049 = vpop.f32.mrf.mxu0
        %v1050 = vadd.f32 %v859, %v1049
        %v1051 = vpop.f32.mrf.mxu0
        %v1052 = vpop.f32.mrf.mxu0
        %v1053 = vadd.f32 %v862, %v1052
        %v1054 = vpop.f32.mrf.mxu0
        %1055 = vmatprep.mubr.bf16.mxu0 0
        %1056 = vmatmul.mubr.bf16.gmra.mxu0 %v943
        %v1057 = vpop.f32.mrf.mxu0
        %v1058 = vadd.f32 %v867, %v1057
        %v1059 = vpop.f32.mrf.mxu0
        %v1060 = vpop.f32.mrf.mxu0
        %v1061 = vadd.f32 %v870, %v1060
        %v1062 = vpop.f32.mrf.mxu0
        %1063 = vmatprep.mubr.bf16.mxu0 0
        %1064 = vmatmul.mubr.bf16.gmra.mxu0 %v946
        %v1065 = vpop.f32.mrf.mxu0
        %v1066 = vadd.f32 %v875, %v1065
        %v1067 = vpop.f32.mrf.mxu0
        %v1068 = vpop.f32.mrf.mxu0
        %v1069 = vadd.f32 %v878, %v1068
        %v1070 = vpop.f32.mrf.mxu0
        %1071 = vmatprep.mubr.bf16.mxu0 0
        %1072 = vmatmul.mubr.bf16.gmra.mxu0 %v949
        %v1073 = vpop.f32.mrf.mxu0
        %v1074 = vadd.f32 %v883, %v1073
        %v1075 = vpop.f32.mrf.mxu0
        %v1076 = vpop.f32.mrf.mxu0
        %v1077 = vadd.f32 %v886, %v1076
        %v1078 = vpop.f32.mrf.mxu0
        %1079 = vmatprep.mubr.bf16.mxu0 0
        %1080 = vmatmul.mubr.bf16.gmra.mxu0 %v737
        %v1081 = vpop.f32.mrf.mxu0
        %v1082 = vadd.f32 %v891, %v1081
        %v1083 = vpop.f32.mrf.mxu0
        %v1084 = vpop.f32.mrf.mxu0
        %v1085 = vadd.f32 %v894, %v1084
        %v1086 = vpop.f32.mrf.mxu0
        %1087 = vmatprep.mubr.bf16.mxu0 0
        %1088 = vmatmul.mubr.bf16.gmra.mxu0 %v740
        %v1089 = vpop.f32.mrf.mxu0
        %v1090 = vadd.f32 %v899, %v1089
        %v1091 = vpop.f32.mrf.mxu0
        %v1092 = vpop.f32.mrf.mxu0
        %v1093 = vadd.f32 %v902, %v1092
        %v1094 = vpop.f32.mrf.mxu0
        %1095 = vmatprep.mubr.bf16.mxu0 0
        %1096 = vmatmul.mubr.bf16.gmra.mxu0 %v743
        %v1097 = vpop.f32.mrf.mxu0
        %v1098 = vadd.f32 %v907, %v1097
        %v1099 = vpop.f32.mrf.mxu0
        %v1100 = vpop.f32.mrf.mxu0
        %v1101 = vadd.f32 %v910, %v1100
        %v1102 = vpop.f32.mrf.mxu0
        %1103 = vmatprep.mubr.bf16.mxu0 0
        %1104 = vmatmul.mubr.bf16.gmra.mxu0 %v746
        %v1105 = vpop.f32.mrf.mxu0
        %v1106 = vadd.f32 %v915, %v1105
        %v1107 = vpop.f32.mrf.mxu0
        %v1108 = vpop.f32.mrf.mxu0
        %v1109 = vadd.f32 %v918, %v1108
        %v1110 = vpop.f32.mrf.mxu0
        %1111 = vdwg.mxu0
        %s1112 = scalar_lea.vmem %s498, 108 [#allocation2]
        %v1113 = vld [vmem:[%s1112] sm:$0xf]
        %v1114 = vld [vmem:[%s1112 + $0x4] sm:$0xf]
        %v1115 = vld [vmem:[%s1112 + $0x8] sm:$0xf]
        %v1116 = vld [vmem:[%s1112 + $0xc] sm:$0xf]
        %v1117 = vld [vmem:[%s1112 + $0x10] sm:$0xf]
        %v1118 = vld [vmem:[%s1112 + $0x14] sm:$0xf]
        %v1119 = vld [vmem:[%s1112 + $0x18] sm:$0xf]
        %v1120 = vld [vmem:[%s1112 + $0x1c] sm:$0xf]
        %s1121 = scalar_lea.vmem %s498, 252 [#allocation2]
        %v1122 = vld [vmem:[%s1121] sm:$0xf]
        %v1123 = vld [vmem:[%s1121 + $0x4] sm:$0xf]
        %v1124 = vld [vmem:[%s1121 + $0x8] sm:$0xf]
        %v1125 = vld [vmem:[%s1121 + $0xc] sm:$0xf]
        %v1126 = vld [vmem:[%s1121 + $0x10] sm:$0xf]
        %v1127 = vld [vmem:[%s1121 + $0x14] sm:$0xf]
        %v1128 = vld [vmem:[%s1121 + $0x18] sm:$0xf]
        %v1129 = vld [vmem:[%s1121 + $0x1c] sm:$0xf]
        %v1138 = vunpack.c.l.b16 %v1113
        %v1139 = vunpack.c.l.b16 %v1114
        %v1140 = vunpack.c.l.b16 %v1115
        %v1141 = vunpack.c.l.b16 %v1116
        %v1142 = vunpack.c.l.b16 %v1117
        %v1143 = vunpack.c.l.b16 %v1118
        %v1144 = vunpack.c.l.b16 %v1119
        %v1145 = vunpack.c.l.b16 %v1120
        %v1146 = vpack.c.b16 %v1139, %v1138
        %v1147 = vpack.c.b16 %v1141, %v1140
        %v1148 = vpack.c.b16 %v1143, %v1142
        %v1149 = vpack.c.b16 %v1145, %v1144
        %v1158 = vunpack.c.l.b16 %v1122
        %v1159 = vunpack.c.l.b16 %v1123
        %v1160 = vunpack.c.l.b16 %v1124
        %v1161 = vunpack.c.l.b16 %v1125
        %v1162 = vunpack.c.l.b16 %v1126
        %v1163 = vunpack.c.l.b16 %v1127
        %v1164 = vunpack.c.l.b16 %v1128
        %v1165 = vunpack.c.l.b16 %v1129
        %v1166 = vpack.c.b16 %v1159, %v1158
        %v1167 = vpack.c.b16 %v1161, %v1160
        %v1168 = vpack.c.b16 %v1163, %v1162
        %v1169 = vpack.c.b16 %v1165, %v1164
        %s1170 = scalar_lea.vmem %s1, 16
        %v1171 = vld [vmem:[%s1170] sm:$0xf]
        %v1172 = vld [vmem:[%s1170 + $0x4] sm:$0xf]
        %v1175 = vunpack.c.l.b16 %v1171
        %v1176 = vunpack.c.l.b16 %v1172
        %v1177 = vpack.c.b16 %v1176, %v1175
        %v1180 = vsel %vm711, %v1146, 0
        %v1183 = vsel %vm711, %v1147, 0
        %v1186 = vsel %vm711, %v1148, 0
        %v1189 = vsel %vm711, %v1149, 0
        %v1192 = vsel %vm711, %v1166, 0
        %v1195 = vsel %vm711, %v1167, 0
        %v1198 = vsel %vm711, %v1168, 0
        %v1201 = vsel %vm711, %v1169, 0
        %1203 = vmatprep.subr.bf16.mxu0 0
        %1204 = vmatpush1.bf16.msra.mxu0 0
        %1205 = vmatprep.subr.bf16.mxu0 0
        %1206 = vmatpush1.bf16.msra.mxu0 0
        %1207 = vmatprep.subr.bf16.mxu0 0
        %1208 = vmatpush1.bf16.msra.mxu0 0
        %1209 = vmatprep.subr.bf16.mxu0 0
        %1210 = vmatpush1.bf16.msra.mxu0 0
        %1211 = vmatprep.subr.bf16.mxu0 0
        %1212 = vmatpush1.bf16.msra.mxu0 0
        %1213 = vmatprep.subr.bf16.mxu0 0
        %1214 = vmatpush1.bf16.msra.mxu0 0
        %1215 = vmatprep.subr.bf16.mxu0 0
        %1216 = vmatpush1.bf16.msra.mxu0 0
        %1217 = vmatprep.subr.bf16.mxu0 0
        %1218 = vmatpush1.bf16.msra.mxu0 %v1177
        %1219 = vmatprep.subr.bf16.mxu0 0
        %1220 = vmatpush2.bf16.msra.mxu0 0
        %1221 = vmatprep.subr.bf16.mxu0 0
        %1222 = vmatpush2.bf16.msra.mxu0 0
        %1223 = vmatprep.subr.bf16.mxu0 0
        %1224 = vmatpush2.bf16.msra.mxu0 0
        %1225 = vmatprep.subr.bf16.mxu0 0
        %1226 = vmatpush2.bf16.msra.mxu0 0
        %1227 = vmatprep.subr.bf16.mxu0 0
        %1228 = vmatpush2.bf16.msra.mxu0 0
        %1229 = vmatprep.subr.bf16.mxu0 0
        %1230 = vmatpush2.bf16.msra.mxu0 0
        %1231 = vmatprep.subr.bf16.mxu0 0
        %1232 = vmatpush2.bf16.msra.mxu0 0
        %1233 = vmatprep.subr.bf16.mxu0 0
        %1234 = vmatpush2.bf16.msra.mxu0 0
        %1235 = vmatprep.mubr.bf16.mxu0 0
        %1236 = vmatmul.mubr.bf16.gmra.mxu0 %v725
        %v1237 = vpop.f32.mrf.mxu0
        %v1238 = vadd.f32 0.0, %v1237
        %v1239 = vpop.f32.mrf.mxu0
        %v1240 = vpop.f32.mrf.mxu0
        %v1241 = vadd.f32 0.0, %v1240
        %v1242 = vpop.f32.mrf.mxu0
        %1243 = vmatprep.mubr.bf16.mxu0 0
        %1244 = vmatmul.mubr.bf16.gmra.mxu0 %v728
        %v1245 = vpop.f32.mrf.mxu0
        %v1246 = vadd.f32 0.0, %v1245
        %v1247 = vpop.f32.mrf.mxu0
        %v1248 = vpop.f32.mrf.mxu0
        %v1249 = vadd.f32 0.0, %v1248
        %v1250 = vpop.f32.mrf.mxu0
        %1251 = vmatprep.mubr.bf16.mxu0 0
        %1252 = vmatmul.mubr.bf16.gmra.mxu0 %v731
        %v1253 = vpop.f32.mrf.mxu0
        %v1254 = vadd.f32 0.0, %v1253
        %v1255 = vpop.f32.mrf.mxu0
        %v1256 = vpop.f32.mrf.mxu0
        %v1257 = vadd.f32 0.0, %v1256
        %v1258 = vpop.f32.mrf.mxu0
        %1259 = vmatprep.mubr.bf16.mxu0 0
        %1260 = vmatmul.mubr.bf16.gmra.mxu0 %v734
        %v1261 = vpop.f32.mrf.mxu0
        %v1262 = vadd.f32 0.0, %v1261
        %v1263 = vpop.f32.mrf.mxu0
        %v1264 = vpop.f32.mrf.mxu0
        %v1265 = vadd.f32 0.0, %v1264
        %v1266 = vpop.f32.mrf.mxu0
        %1267 = vmatprep.mubr.bf16.mxu0 0
        %1268 = vmatmul.mubr.bf16.gmra.mxu0 %v1180
        %v1269 = vpop.f32.mrf.mxu0
        %v1270 = vadd.f32 0.0, %v1269
        %v1271 = vpop.f32.mrf.mxu0
        %v1272 = vpop.f32.mrf.mxu0
        %v1273 = vadd.f32 0.0, %v1272
        %v1274 = vpop.f32.mrf.mxu0
        %1275 = vmatprep.mubr.bf16.mxu0 0
        %1276 = vmatmul.mubr.bf16.gmra.mxu0 %v1183
        %v1277 = vpop.f32.mrf.mxu0
        %v1278 = vadd.f32 0.0, %v1277
        %v1279 = vpop.f32.mrf.mxu0
        %v1280 = vpop.f32.mrf.mxu0
        %v1281 = vadd.f32 0.0, %v1280
        %v1282 = vpop.f32.mrf.mxu0
        %1283 = vmatprep.mubr.bf16.mxu0 0
        %1284 = vmatmul.mubr.bf16.gmra.mxu0 %v1186
        %v1285 = vpop.f32.mrf.mxu0
        %v1286 = vadd.f32 0.0, %v1285
        %v1287 = vpop.f32.mrf.mxu0
        %v1288 = vpop.f32.mrf.mxu0
        %v1289 = vadd.f32 0.0, %v1288
        %v1290 = vpop.f32.mrf.mxu0
        %1291 = vmatprep.mubr.bf16.mxu0 0
        %1292 = vmatmul.mubr.bf16.gmra.mxu0 %v1189
        %v1293 = vpop.f32.mrf.mxu0
        %v1294 = vadd.f32 0.0, %v1293
        %v1295 = vpop.f32.mrf.mxu0
        %v1296 = vpop.f32.mrf.mxu0
        %v1297 = vadd.f32 0.0, %v1296
        %v1298 = vpop.f32.mrf.mxu0
        %1299 = vmatprep.mubr.bf16.mxu0 0
        %1300 = vmatmul.mubr.bf16.gmra.mxu0 %v749
        %v1301 = vpop.f32.mrf.mxu0
        %v1302 = vadd.f32 0.0, %v1301
        %v1303 = vpop.f32.mrf.mxu0
        %v1304 = vpop.f32.mrf.mxu0
        %v1305 = vadd.f32 0.0, %v1304
        %v1306 = vpop.f32.mrf.mxu0
        %1307 = vmatprep.mubr.bf16.mxu0 0
        %1308 = vmatmul.mubr.bf16.gmra.mxu0 %v752
        %v1309 = vpop.f32.mrf.mxu0
        %v1310 = vadd.f32 0.0, %v1309
        %v1311 = vpop.f32.mrf.mxu0
        %v1312 = vpop.f32.mrf.mxu0
        %v1313 = vadd.f32 0.0, %v1312
        %v1314 = vpop.f32.mrf.mxu0
        %1315 = vmatprep.mubr.bf16.mxu0 0
        %1316 = vmatmul.mubr.bf16.gmra.mxu0 %v755
        %v1317 = vpop.f32.mrf.mxu0
        %v1318 = vadd.f32 0.0, %v1317
        %v1319 = vpop.f32.mrf.mxu0
        %v1320 = vpop.f32.mrf.mxu0
        %v1321 = vadd.f32 0.0, %v1320
        %v1322 = vpop.f32.mrf.mxu0
        %1323 = vmatprep.mubr.bf16.mxu0 0
        %1324 = vmatmul.mubr.bf16.gmra.mxu0 %v758
        %v1325 = vpop.f32.mrf.mxu0
        %v1326 = vadd.f32 0.0, %v1325
        %v1327 = vpop.f32.mrf.mxu0
        %v1328 = vpop.f32.mrf.mxu0
        %v1329 = vadd.f32 0.0, %v1328
        %v1330 = vpop.f32.mrf.mxu0
        %1331 = vmatprep.mubr.bf16.mxu0 0
        %1332 = vmatmul.mubr.bf16.gmra.mxu0 %v1192
        %v1333 = vpop.f32.mrf.mxu0
        %v1334 = vadd.f32 0.0, %v1333
        %v1335 = vpop.f32.mrf.mxu0
        %v1336 = vpop.f32.mrf.mxu0
        %v1337 = vadd.f32 0.0, %v1336
        %v1338 = vpop.f32.mrf.mxu0
        %1339 = vmatprep.mubr.bf16.mxu0 0
        %1340 = vmatmul.mubr.bf16.gmra.mxu0 %v1195
        %v1341 = vpop.f32.mrf.mxu0
        %v1342 = vadd.f32 0.0, %v1341
        %v1343 = vpop.f32.mrf.mxu0
        %v1344 = vpop.f32.mrf.mxu0
        %v1345 = vadd.f32 0.0, %v1344
        %v1346 = vpop.f32.mrf.mxu0
        %1347 = vmatprep.mubr.bf16.mxu0 0
        %1348 = vmatmul.mubr.bf16.gmra.mxu0 %v1198
        %v1349 = vpop.f32.mrf.mxu0
        %v1350 = vadd.f32 0.0, %v1349
        %v1351 = vpop.f32.mrf.mxu0
        %v1352 = vpop.f32.mrf.mxu0
        %v1353 = vadd.f32 0.0, %v1352
        %v1354 = vpop.f32.mrf.mxu0
        %1355 = vmatprep.mubr.bf16.mxu0 0
        %1356 = vmatmul.mubr.bf16.gmra.mxu0 %v1201
        %v1357 = vpop.f32.mrf.mxu0
        %v1358 = vadd.f32 0.0, %v1357
        %v1359 = vpop.f32.mrf.mxu0
        %v1360 = vpop.f32.mrf.mxu0
        %v1361 = vadd.f32 0.0, %v1360
        %v1362 = vpop.f32.mrf.mxu0
        %1363 = vdwg.mxu0
        %v1364 = vadd.f32 %v986, %v1238
        %v1365 = vadd.f32 %v989, %v1241
        %v1366 = vadd.f32 %v994, %v1246
        %v1367 = vadd.f32 %v997, %v1249
        %v1368 = vadd.f32 %v1002, %v1254
        %v1369 = vadd.f32 %v1005, %v1257
        %v1370 = vadd.f32 %v1010, %v1262
        %v1371 = vadd.f32 %v1013, %v1265
        %v1372 = vadd.f32 %v1018, %v1270
        %v1373 = vadd.f32 %v1021, %v1273
        %v1374 = vadd.f32 %v1026, %v1278
        %v1375 = vadd.f32 %v1029, %v1281
        %v1376 = vadd.f32 %v1034, %v1286
        %v1377 = vadd.f32 %v1037, %v1289
        %v1378 = vadd.f32 %v1042, %v1294
        %v1379 = vadd.f32 %v1045, %v1297
        %v1380 = vadd.f32 %v1050, %v1302
        %v1381 = vadd.f32 %v1053, %v1305
        %v1382 = vadd.f32 %v1058, %v1310
        %v1383 = vadd.f32 %v1061, %v1313
        %v1384 = vadd.f32 %v1066, %v1318
        %v1385 = vadd.f32 %v1069, %v1321
        %v1386 = vadd.f32 %v1074, %v1326
        %v1387 = vadd.f32 %v1077, %v1329
        %v1388 = vadd.f32 %v1082, %v1334
        %v1389 = vadd.f32 %v1085, %v1337
        %v1390 = vadd.f32 %v1090, %v1342
        %v1391 = vadd.f32 %v1093, %v1345
        %v1392 = vadd.f32 %v1098, %v1350
        %v1393 = vadd.f32 %v1101, %v1353
        %v1394 = vadd.f32 %v1106, %v1358
        %v1395 = vadd.f32 %v1109, %v1361
        %v1396 = vld [vmem:[%s498 + $0x4] sm:$0xf]
        %v1397 = vld [vmem:[%s498 + $0x8] sm:$0xf]
        %v1398 = vld [vmem:[%s498 + $0xc] sm:$0xf]
        %v1399 = vld [vmem:[%s498 + $0x10] sm:$0xf]
        %v1400 = vld [vmem:[%s498 + $0x14] sm:$0xf]
        %v1401 = vld [vmem:[%s498 + $0x18] sm:$0xf]
        %v1402 = vld [vmem:[%s498 + $0x1c] sm:$0xf]
        %v1403 = vld [vmem:[%s498 + $0x20] sm:$0xf]
        %v1404 = vld [vmem:[%s535 + $0x4] sm:$0xf]
        %v1405 = vld [vmem:[%s535 + $0x8] sm:$0xf]
        %v1406 = vld [vmem:[%s535 + $0xc] sm:$0xf]
        %v1407 = vld [vmem:[%s535 + $0x10] sm:$0xf]
        %v1408 = vld [vmem:[%s535 + $0x14] sm:$0xf]
        %v1409 = vld [vmem:[%s535 + $0x18] sm:$0xf]
        %v1410 = vld [vmem:[%s535 + $0x1c] sm:$0xf]
        %v1411 = vld [vmem:[%s535 + $0x20] sm:$0xf]
        %v1420 = vunpack.c.l.b16 %v1396
        %v1421 = vunpack.c.l.b16 %v1397
        %v1422 = vunpack.c.l.b16 %v1398
        %v1423 = vunpack.c.l.b16 %v1399
        %v1424 = vunpack.c.l.b16 %v1400
        %v1425 = vunpack.c.l.b16 %v1401
        %v1426 = vunpack.c.l.b16 %v1402
        %v1427 = vunpack.c.l.b16 %v1403
        %v1428 = vpack.c.b16 %v1421, %v1420
        %v1429 = vpack.c.b16 %v1423, %v1422
        %v1430 = vpack.c.b16 %v1425, %v1424
        %v1431 = vpack.c.b16 %v1427, %v1426
        %v1440 = vunpack.c.l.b16 %v1404
        %v1441 = vunpack.c.l.b16 %v1405
        %v1442 = vunpack.c.l.b16 %v1406
        %v1443 = vunpack.c.l.b16 %v1407
        %v1444 = vunpack.c.l.b16 %v1408
        %v1445 = vunpack.c.l.b16 %v1409
        %v1446 = vunpack.c.l.b16 %v1410
        %v1447 = vunpack.c.l.b16 %v1411
        %v1448 = vpack.c.b16 %v1441, %v1440
        %v1449 = vpack.c.b16 %v1443, %v1442
        %v1450 = vpack.c.b16 %v1445, %v1444
        %v1451 = vpack.c.b16 %v1447, %v1446
        %s1452 = scalar_lea.vmem %s1, 24
        %v1453 = vld [vmem:[%s1452] sm:$0xf]
        %v1454 = vld [vmem:[%s1452 + $0x4] sm:$0xf]
        %v1457 = vunpack.c.l.b16 %v1453
        %v1458 = vunpack.c.l.b16 %v1454
        %v1459 = vpack.c.b16 %v1458, %v1457
        %v1462 = vsel %vm711, %v1428, 0
        %v1465 = vsel %vm711, %v1429, 0
        %v1468 = vsel %vm711, %v1430, 0
        %v1471 = vsel %vm711, %v1431, 0
        %v1474 = vsel %vm711, %v1448, 0
        %v1477 = vsel %vm711, %v1449, 0
        %v1480 = vsel %vm711, %v1450, 0
        %v1483 = vsel %vm711, %v1451, 0
        %1485 = vmatprep.subr.bf16.mxu0 0
        %1486 = vmatpush1.bf16.msra.mxu0 0
        %1487 = vmatprep.subr.bf16.mxu0 0
        %1488 = vmatpush1.bf16.msra.mxu0 0
        %1489 = vmatprep.subr.bf16.mxu0 0
        %1490 = vmatpush1.bf16.msra.mxu0 0
        %1491 = vmatprep.subr.bf16.mxu0 0
        %1492 = vmatpush1.bf16.msra.mxu0 0
        %1493 = vmatprep.subr.bf16.mxu0 0
        %1494 = vmatpush1.bf16.msra.mxu0 0
        %1495 = vmatprep.subr.bf16.mxu0 0
        %1496 = vmatpush1.bf16.msra.mxu0 0
        %1497 = vmatprep.subr.bf16.mxu0 0
        %1498 = vmatpush1.bf16.msra.mxu0 0
        %1499 = vmatprep.subr.bf16.mxu0 0
        %1500 = vmatpush1.bf16.msra.mxu0 %v1459
        %1501 = vmatprep.subr.bf16.mxu0 0
        %1502 = vmatpush2.bf16.msra.mxu0 0
        %1503 = vmatprep.subr.bf16.mxu0 0
        %1504 = vmatpush2.bf16.msra.mxu0 0
        %1505 = vmatprep.subr.bf16.mxu0 0
        %1506 = vmatpush2.bf16.msra.mxu0 0
        %1507 = vmatprep.subr.bf16.mxu0 0
        %1508 = vmatpush2.bf16.msra.mxu0 0
        %1509 = vmatprep.subr.bf16.mxu0 0
        %1510 = vmatpush2.bf16.msra.mxu0 0
        %1511 = vmatprep.subr.bf16.mxu0 0
        %1512 = vmatpush2.bf16.msra.mxu0 0
        %1513 = vmatprep.subr.bf16.mxu0 0
        %1514 = vmatpush2.bf16.msra.mxu0 0
        %1515 = vmatprep.subr.bf16.mxu0 0
        %1516 = vmatpush2.bf16.msra.mxu0 0
        %1517 = vmatprep.mubr.bf16.mxu0 0
        %1518 = vmatmul.mubr.bf16.gmra.mxu0 %v940
        %v1519 = vpop.f32.mrf.mxu0
        %v1520 = vadd.f32 0.0, %v1519
        %v1521 = vpop.f32.mrf.mxu0
        %v1522 = vpop.f32.mrf.mxu0
        %v1523 = vadd.f32 0.0, %v1522
        %v1524 = vpop.f32.mrf.mxu0
        %1525 = vmatprep.mubr.bf16.mxu0 0
        %1526 = vmatmul.mubr.bf16.gmra.mxu0 %v943
        %v1527 = vpop.f32.mrf.mxu0
        %v1528 = vadd.f32 0.0, %v1527
        %v1529 = vpop.f32.mrf.mxu0
        %v1530 = vpop.f32.mrf.mxu0
        %v1531 = vadd.f32 0.0, %v1530
        %v1532 = vpop.f32.mrf.mxu0
        %1533 = vmatprep.mubr.bf16.mxu0 0
        %1534 = vmatmul.mubr.bf16.gmra.mxu0 %v946
        %v1535 = vpop.f32.mrf.mxu0
        %v1536 = vadd.f32 0.0, %v1535
        %v1537 = vpop.f32.mrf.mxu0
        %v1538 = vpop.f32.mrf.mxu0
        %v1539 = vadd.f32 0.0, %v1538
        %v1540 = vpop.f32.mrf.mxu0
        %1541 = vmatprep.mubr.bf16.mxu0 0
        %1542 = vmatmul.mubr.bf16.gmra.mxu0 %v949
        %v1543 = vpop.f32.mrf.mxu0
        %v1544 = vadd.f32 0.0, %v1543
        %v1545 = vpop.f32.mrf.mxu0
        %v1546 = vpop.f32.mrf.mxu0
        %v1547 = vadd.f32 0.0, %v1546
        %v1548 = vpop.f32.mrf.mxu0
        %1549 = vmatprep.mubr.bf16.mxu0 0
        %1550 = vmatmul.mubr.bf16.gmra.mxu0 %v737
        %v1551 = vpop.f32.mrf.mxu0
        %v1552 = vadd.f32 0.0, %v1551
        %v1553 = vpop.f32.mrf.mxu0
        %v1554 = vpop.f32.mrf.mxu0
        %v1555 = vadd.f32 0.0, %v1554
        %v1556 = vpop.f32.mrf.mxu0
        %1557 = vmatprep.mubr.bf16.mxu0 0
        %1558 = vmatmul.mubr.bf16.gmra.mxu0 %v740
        %v1559 = vpop.f32.mrf.mxu0
        %v1560 = vadd.f32 0.0, %v1559
        %v1561 = vpop.f32.mrf.mxu0
        %v1562 = vpop.f32.mrf.mxu0
        %v1563 = vadd.f32 0.0, %v1562
        %v1564 = vpop.f32.mrf.mxu0
        %1565 = vmatprep.mubr.bf16.mxu0 0
        %1566 = vmatmul.mubr.bf16.gmra.mxu0 %v743
        %v1567 = vpop.f32.mrf.mxu0
        %v1568 = vadd.f32 0.0, %v1567
        %v1569 = vpop.f32.mrf.mxu0
        %v1570 = vpop.f32.mrf.mxu0
        %v1571 = vadd.f32 0.0, %v1570
        %v1572 = vpop.f32.mrf.mxu0
        %1573 = vmatprep.mubr.bf16.mxu0 0
        %1574 = vmatmul.mubr.bf16.gmra.mxu0 %v746
        %v1575 = vpop.f32.mrf.mxu0
        %v1576 = vadd.f32 0.0, %v1575
        %v1577 = vpop.f32.mrf.mxu0
        %v1578 = vpop.f32.mrf.mxu0
        %v1579 = vadd.f32 0.0, %v1578
        %v1580 = vpop.f32.mrf.mxu0
        %1581 = vmatprep.mubr.bf16.mxu0 0
        %1582 = vmatmul.mubr.bf16.gmra.mxu0 %v1462
        %v1583 = vpop.f32.mrf.mxu0
        %v1584 = vadd.f32 0.0, %v1583
        %v1585 = vpop.f32.mrf.mxu0
        %v1586 = vpop.f32.mrf.mxu0
        %v1587 = vadd.f32 0.0, %v1586
        %v1588 = vpop.f32.mrf.mxu0
        %1589 = vmatprep.mubr.bf16.mxu0 0
        %1590 = vmatmul.mubr.bf16.gmra.mxu0 %v1465
        %v1591 = vpop.f32.mrf.mxu0
        %v1592 = vadd.f32 0.0, %v1591
        %v1593 = vpop.f32.mrf.mxu0
        %v1594 = vpop.f32.mrf.mxu0
        %v1595 = vadd.f32 0.0, %v1594
        %v1596 = vpop.f32.mrf.mxu0
        %1597 = vmatprep.mubr.bf16.mxu0 0
        %1598 = vmatmul.mubr.bf16.gmra.mxu0 %v1468
        %v1599 = vpop.f32.mrf.mxu0
        %v1600 = vadd.f32 0.0, %v1599
        %v1601 = vpop.f32.mrf.mxu0
        %v1602 = vpop.f32.mrf.mxu0
        %v1603 = vadd.f32 0.0, %v1602
        %v1604 = vpop.f32.mrf.mxu0
        %1605 = vmatprep.mubr.bf16.mxu0 0
        %1606 = vmatmul.mubr.bf16.gmra.mxu0 %v1471
        %v1607 = vpop.f32.mrf.mxu0
        %v1608 = vadd.f32 0.0, %v1607
        %v1609 = vpop.f32.mrf.mxu0
        %v1610 = vpop.f32.mrf.mxu0
        %v1611 = vadd.f32 0.0, %v1610
        %v1612 = vpop.f32.mrf.mxu0
        %1613 = vmatprep.mubr.bf16.mxu0 0
        %1614 = vmatmul.mubr.bf16.gmra.mxu0 %v1474
        %v1615 = vpop.f32.mrf.mxu0
        %v1616 = vadd.f32 0.0, %v1615
        %v1617 = vpop.f32.mrf.mxu0
        %v1618 = vpop.f32.mrf.mxu0
        %v1619 = vadd.f32 0.0, %v1618
        %v1620 = vpop.f32.mrf.mxu0
        %1621 = vmatprep.mubr.bf16.mxu0 0
        %1622 = vmatmul.mubr.bf16.gmra.mxu0 %v1477
        %v1623 = vpop.f32.mrf.mxu0
        %v1624 = vadd.f32 0.0, %v1623
        %v1625 = vpop.f32.mrf.mxu0
        %v1626 = vpop.f32.mrf.mxu0
        %v1627 = vadd.f32 0.0, %v1626
        %v1628 = vpop.f32.mrf.mxu0
        %1629 = vmatprep.mubr.bf16.mxu0 0
        %1630 = vmatmul.mubr.bf16.gmra.mxu0 %v1480
        %v1631 = vpop.f32.mrf.mxu0
        %v1632 = vadd.f32 0.0, %v1631
        %v1633 = vpop.f32.mrf.mxu0
        %v1634 = vpop.f32.mrf.mxu0
        %v1635 = vadd.f32 0.0, %v1634
        %v1636 = vpop.f32.mrf.mxu0
        %1637 = vmatprep.mubr.bf16.mxu0 0
        %1638 = vmatmul.mubr.bf16.gmra.mxu0 %v1483
        %v1639 = vpop.f32.mrf.mxu0
        %v1640 = vadd.f32 0.0, %v1639
        %v1641 = vpop.f32.mrf.mxu0
        %v1642 = vpop.f32.mrf.mxu0
        %v1643 = vadd.f32 0.0, %v1642
        %v1644 = vpop.f32.mrf.mxu0
        %1645 = vdwg.mxu0
        %v1646 = vadd.f32 %v1364, %v1520
        %v1647 = vadd.f32 %v1365, %v1523
        %v1648 = vadd.f32 %v1366, %v1528
        %v1649 = vadd.f32 %v1367, %v1531
        %v1650 = vadd.f32 %v1368, %v1536
        %v1651 = vadd.f32 %v1369, %v1539
        %v1652 = vadd.f32 %v1370, %v1544
        %v1653 = vadd.f32 %v1371, %v1547
        %v1654 = vadd.f32 %v1372, %v1552
        %v1655 = vadd.f32 %v1373, %v1555
        %v1656 = vadd.f32 %v1374, %v1560
        %v1657 = vadd.f32 %v1375, %v1563
        %v1658 = vadd.f32 %v1376, %v1568
        %v1659 = vadd.f32 %v1377, %v1571
        %v1660 = vadd.f32 %v1378, %v1576
        %v1661 = vadd.f32 %v1379, %v1579
        %v1662 = vadd.f32 %v1380, %v1584
        %v1663 = vadd.f32 %v1381, %v1587
        %v1664 = vadd.f32 %v1382, %v1592
        %v1665 = vadd.f32 %v1383, %v1595
        %v1666 = vadd.f32 %v1384, %v1600
        %v1667 = vadd.f32 %v1385, %v1603
        %v1668 = vadd.f32 %v1386, %v1608
        %v1669 = vadd.f32 %v1387, %v1611
        %v1670 = vadd.f32 %v1388, %v1616
        %v1671 = vadd.f32 %v1389, %v1619
        %v1672 = vadd.f32 %v1390, %v1624
        %v1673 = vadd.f32 %v1391, %v1627
        %v1674 = vadd.f32 %v1392, %v1632
        %v1675 = vadd.f32 %v1393, %v1635
        %v1676 = vadd.f32 %v1394, %v1640
        %v1677 = vadd.f32 %v1395, %v1643
        %v1678 = vld [vmem:[%s644 + $0x4] sm:$0xf]
        %v1679 = vld [vmem:[%s644 + $0x8] sm:$0xf]
        %v1680 = vld [vmem:[%s644 + $0xc] sm:$0xf]
        %v1681 = vld [vmem:[%s644 + $0x10] sm:$0xf]
        %v1682 = vld [vmem:[%s644 + $0x14] sm:$0xf]
        %v1683 = vld [vmem:[%s644 + $0x18] sm:$0xf]
        %v1684 = vld [vmem:[%s644 + $0x1c] sm:$0xf]
        %v1685 = vld [vmem:[%s644 + $0x20] sm:$0xf]
        %v1694 = vunpack.c.l.b16 %v1678
        %v1695 = vunpack.c.l.b16 %v1679
        %v1696 = vunpack.c.l.b16 %v1680
        %v1697 = vunpack.c.l.b16 %v1681
        %v1698 = vunpack.c.l.b16 %v1682
        %v1699 = vunpack.c.l.b16 %v1683
        %v1700 = vunpack.c.l.b16 %v1684
        %v1701 = vunpack.c.l.b16 %v1685
        %v1702 = vpack.c.b16 %v1695, %v1694
        %v1703 = vpack.c.b16 %v1697, %v1696
        %v1704 = vpack.c.b16 %v1699, %v1698
        %v1705 = vpack.c.b16 %v1701, %v1700
        %s1706 = scalar_lea.vmem %s1, 32
        %v1707 = vld [vmem:[%s1706] sm:$0xf]
        %v1708 = vld [vmem:[%s1706 + $0x4] sm:$0xf]
        %v1711 = vunpack.c.l.b16 %v1707
        %v1712 = vunpack.c.l.b16 %v1708
        %v1713 = vpack.c.b16 %v1712, %v1711
        %v1716 = vsel %vm711, %v1702, 0
        %v1719 = vsel %vm711, %v1703, 0
        %v1722 = vsel %vm711, %v1704, 0
        %v1725 = vsel %vm711, %v1705, 0
        %1727 = vmatprep.subr.bf16.mxu0 0
        %1728 = vmatpush1.bf16.msra.mxu0 0
        %1729 = vmatprep.subr.bf16.mxu0 0
        %1730 = vmatpush1.bf16.msra.mxu0 0
        %1731 = vmatprep.subr.bf16.mxu0 0
        %1732 = vmatpush1.bf16.msra.mxu0 0
        %1733 = vmatprep.subr.bf16.mxu0 0
        %1734 = vmatpush1.bf16.msra.mxu0 0
        %1735 = vmatprep.subr.bf16.mxu0 0
        %1736 = vmatpush1.bf16.msra.mxu0 0
        %1737 = vmatprep.subr.bf16.mxu0 0
        %1738 = vmatpush1.bf16.msra.mxu0 0
        %1739 = vmatprep.subr.bf16.mxu0 0
        %1740 = vmatpush1.bf16.msra.mxu0 0
        %1741 = vmatprep.subr.bf16.mxu0 0
        %1742 = vmatpush1.bf16.msra.mxu0 %v1713
        %1743 = vmatprep.subr.bf16.mxu0 0
        %1744 = vmatpush2.bf16.msra.mxu0 0
        %1745 = vmatprep.subr.bf16.mxu0 0
        %1746 = vmatpush2.bf16.msra.mxu0 0
        %1747 = vmatprep.subr.bf16.mxu0 0
        %1748 = vmatpush2.bf16.msra.mxu0 0
        %1749 = vmatprep.subr.bf16.mxu0 0
        %1750 = vmatpush2.bf16.msra.mxu0 0
        %1751 = vmatprep.subr.bf16.mxu0 0
        %1752 = vmatpush2.bf16.msra.mxu0 0
        %1753 = vmatprep.subr.bf16.mxu0 0
        %1754 = vmatpush2.bf16.msra.mxu0 0
        %1755 = vmatprep.subr.bf16.mxu0 0
        %1756 = vmatpush2.bf16.msra.mxu0 0
        %1757 = vmatprep.subr.bf16.mxu0 0
        %1758 = vmatpush2.bf16.msra.mxu0 0
        %1759 = vmatprep.mubr.bf16.mxu0 0
        %1760 = vmatmul.mubr.bf16.gmra.mxu0 %v737
        %v1761 = vpop.f32.mrf.mxu0
        %v1762 = vadd.f32 0.0, %v1761
        %v1763 = vpop.f32.mrf.mxu0
        %v1764 = vpop.f32.mrf.mxu0
        %v1765 = vadd.f32 0.0, %v1764
        %v1766 = vpop.f32.mrf.mxu0
        %1767 = vmatprep.mubr.bf16.mxu0 0
        %1768 = vmatmul.mubr.bf16.gmra.mxu0 %v740
        %v1769 = vpop.f32.mrf.mxu0
        %v1770 = vadd.f32 0.0, %v1769
        %v1771 = vpop.f32.mrf.mxu0
        %v1772 = vpop.f32.mrf.mxu0
        %v1773 = vadd.f32 0.0, %v1772
        %v1774 = vpop.f32.mrf.mxu0
        %1775 = vmatprep.mubr.bf16.mxu0 0
        %1776 = vmatmul.mubr.bf16.gmra.mxu0 %v743
        %v1777 = vpop.f32.mrf.mxu0
        %v1778 = vadd.f32 0.0, %v1777
        %v1779 = vpop.f32.mrf.mxu0
        %v1780 = vpop.f32.mrf.mxu0
        %v1781 = vadd.f32 0.0, %v1780
        %v1782 = vpop.f32.mrf.mxu0
        %1783 = vmatprep.mubr.bf16.mxu0 0
        %1784 = vmatmul.mubr.bf16.gmra.mxu0 %v746
        %v1785 = vpop.f32.mrf.mxu0
        %v1786 = vadd.f32 0.0, %v1785
        %v1787 = vpop.f32.mrf.mxu0
        %v1788 = vpop.f32.mrf.mxu0
        %v1789 = vadd.f32 0.0, %v1788
        %v1790 = vpop.f32.mrf.mxu0
        %1791 = vmatprep.mubr.bf16.mxu0 0
        %1792 = vmatmul.mubr.bf16.gmra.mxu0 %v749
        %v1793 = vpop.f32.mrf.mxu0
        %v1794 = vadd.f32 0.0, %v1793
        %v1795 = vpop.f32.mrf.mxu0
        %v1796 = vpop.f32.mrf.mxu0
        %v1797 = vadd.f32 0.0, %v1796
        %v1798 = vpop.f32.mrf.mxu0
        %1799 = vmatprep.mubr.bf16.mxu0 0
        %1800 = vmatmul.mubr.bf16.gmra.mxu0 %v752
        %v1801 = vpop.f32.mrf.mxu0
        %v1802 = vadd.f32 0.0, %v1801
        %v1803 = vpop.f32.mrf.mxu0
        %v1804 = vpop.f32.mrf.mxu0
        %v1805 = vadd.f32 0.0, %v1804
        %v1806 = vpop.f32.mrf.mxu0
        %1807 = vmatprep.mubr.bf16.mxu0 0
        %1808 = vmatmul.mubr.bf16.gmra.mxu0 %v755
        %v1809 = vpop.f32.mrf.mxu0
        %v1810 = vadd.f32 0.0, %v1809
        %v1811 = vpop.f32.mrf.mxu0
        %v1812 = vpop.f32.mrf.mxu0
        %v1813 = vadd.f32 0.0, %v1812
        %v1814 = vpop.f32.mrf.mxu0
        %1815 = vmatprep.mubr.bf16.mxu0 0
        %1816 = vmatmul.mubr.bf16.gmra.mxu0 %v758
        %v1817 = vpop.f32.mrf.mxu0
        %v1818 = vadd.f32 0.0, %v1817
        %v1819 = vpop.f32.mrf.mxu0
        %v1820 = vpop.f32.mrf.mxu0
        %v1821 = vadd.f32 0.0, %v1820
        %v1822 = vpop.f32.mrf.mxu0
        %1823 = vmatprep.mubr.bf16.mxu0 0
        %1824 = vmatmul.mubr.bf16.gmra.mxu0 %v1474
        %v1825 = vpop.f32.mrf.mxu0
        %v1826 = vadd.f32 0.0, %v1825
        %v1827 = vpop.f32.mrf.mxu0
        %v1828 = vpop.f32.mrf.mxu0
        %v1829 = vadd.f32 0.0, %v1828
        %v1830 = vpop.f32.mrf.mxu0
        %1831 = vmatprep.mubr.bf16.mxu0 0
        %1832 = vmatmul.mubr.bf16.gmra.mxu0 %v1477
        %v1833 = vpop.f32.mrf.mxu0
        %v1834 = vadd.f32 0.0, %v1833
        %v1835 = vpop.f32.mrf.mxu0
        %v1836 = vpop.f32.mrf.mxu0
        %v1837 = vadd.f32 0.0, %v1836
        %v1838 = vpop.f32.mrf.mxu0
        %1839 = vmatprep.mubr.bf16.mxu0 0
        %1840 = vmatmul.mubr.bf16.gmra.mxu0 %v1480
        %v1841 = vpop.f32.mrf.mxu0
        %v1842 = vadd.f32 0.0, %v1841
        %v1843 = vpop.f32.mrf.mxu0
        %v1844 = vpop.f32.mrf.mxu0
        %v1845 = vadd.f32 0.0, %v1844
        %v1846 = vpop.f32.mrf.mxu0
        %1847 = vmatprep.mubr.bf16.mxu0 0
        %1848 = vmatmul.mubr.bf16.gmra.mxu0 %v1483
        %v1849 = vpop.f32.mrf.mxu0
        %v1850 = vadd.f32 0.0, %v1849
        %v1851 = vpop.f32.mrf.mxu0
        %v1852 = vpop.f32.mrf.mxu0
        %v1853 = vadd.f32 0.0, %v1852
        %v1854 = vpop.f32.mrf.mxu0
        %1855 = vmatprep.mubr.bf16.mxu0 0
        %1856 = vmatmul.mubr.bf16.gmra.mxu0 %v1716
        %v1857 = vpop.f32.mrf.mxu0
        %v1858 = vadd.f32 0.0, %v1857
        %v1859 = vpop.f32.mrf.mxu0
        %v1860 = vpop.f32.mrf.mxu0
        %v1861 = vadd.f32 0.0, %v1860
        %v1862 = vpop.f32.mrf.mxu0
        %1863 = vmatprep.mubr.bf16.mxu0 0
        %1864 = vmatmul.mubr.bf16.gmra.mxu0 %v1719
        %v1865 = vpop.f32.mrf.mxu0
        %v1866 = vadd.f32 0.0, %v1865
        %v1867 = vpop.f32.mrf.mxu0
        %v1868 = vpop.f32.mrf.mxu0
        %v1869 = vadd.f32 0.0, %v1868
        %v1870 = vpop.f32.mrf.mxu0
        %1871 = vmatprep.mubr.bf16.mxu0 0
        %1872 = vmatmul.mubr.bf16.gmra.mxu0 %v1722
        %v1873 = vpop.f32.mrf.mxu0
        %v1874 = vadd.f32 0.0, %v1873
        %v1875 = vpop.f32.mrf.mxu0
        %v1876 = vpop.f32.mrf.mxu0
        %v1877 = vadd.f32 0.0, %v1876
        %v1878 = vpop.f32.mrf.mxu0
        %1879 = vmatprep.mubr.bf16.mxu0 0
        %1880 = vmatmul.mubr.bf16.gmra.mxu0 %v1725
        %v1881 = vpop.f32.mrf.mxu0
        %v1882 = vadd.f32 0.0, %v1881
        %v1883 = vpop.f32.mrf.mxu0
        %v1884 = vpop.f32.mrf.mxu0
        %v1885 = vadd.f32 0.0, %v1884
        %v1886 = vpop.f32.mrf.mxu0
        %1887 = vdwg.mxu0
        %v1888 = vadd.f32 %v1646, %v1762
        %v1889 = vadd.f32 %v1647, %v1765
        %v1890 = vadd.f32 %v1648, %v1770
        %v1891 = vadd.f32 %v1649, %v1773
        %v1892 = vadd.f32 %v1650, %v1778
        %v1893 = vadd.f32 %v1651, %v1781
        %v1894 = vadd.f32 %v1652, %v1786
        %v1895 = vadd.f32 %v1653, %v1789
        %v1896 = vadd.f32 %v1654, %v1794
        %v1897 = vadd.f32 %v1655, %v1797
        %v1898 = vadd.f32 %v1656, %v1802
        %v1899 = vadd.f32 %v1657, %v1805
        %v1900 = vadd.f32 %v1658, %v1810
        %v1901 = vadd.f32 %v1659, %v1813
        %v1902 = vadd.f32 %v1660, %v1818
        %v1903 = vadd.f32 %v1661, %v1821
        %v1904 = vadd.f32 %v1662, %v1826
        %v1905 = vadd.f32 %v1663, %v1829
        %v1906 = vadd.f32 %v1664, %v1834
        %v1907 = vadd.f32 %v1665, %v1837
        %v1908 = vadd.f32 %v1666, %v1842
        %v1909 = vadd.f32 %v1667, %v1845
        %v1910 = vadd.f32 %v1668, %v1850
        %v1911 = vadd.f32 %v1669, %v1853
        %v1912 = vadd.f32 %v1670, %v1858
        %v1913 = vadd.f32 %v1671, %v1861
        %v1914 = vadd.f32 %v1672, %v1866
        %v1915 = vadd.f32 %v1673, %v1869
        %v1916 = vadd.f32 %v1674, %v1874
        %v1917 = vadd.f32 %v1675, %v1877
        %v1918 = vadd.f32 %v1676, %v1882
        %v1919 = vadd.f32 %v1677, %v1885
        %v1920 = vld [vmem:[%s1112 + $0x4] sm:$0xf]
        %v1921 = vld [vmem:[%s1112 + $0x8] sm:$0xf]
        %v1922 = vld [vmem:[%s1112 + $0xc] sm:$0xf]
        %v1923 = vld [vmem:[%s1112 + $0x10] sm:$0xf]
        %v1924 = vld [vmem:[%s1112 + $0x14] sm:$0xf]
        %v1925 = vld [vmem:[%s1112 + $0x18] sm:$0xf]
        %v1926 = vld [vmem:[%s1112 + $0x1c] sm:$0xf]
        %v1927 = vld [vmem:[%s1112 + $0x20] sm:$0xf]
        %v1936 = vunpack.c.l.b16 %v1920
        %v1937 = vunpack.c.l.b16 %v1921
        %v1938 = vunpack.c.l.b16 %v1922
        %v1939 = vunpack.c.l.b16 %v1923
        %v1940 = vunpack.c.l.b16 %v1924
        %v1941 = vunpack.c.l.b16 %v1925
        %v1942 = vunpack.c.l.b16 %v1926
        %v1943 = vunpack.c.l.b16 %v1927
        %v1944 = vpack.c.b16 %v1937, %v1936
        %v1945 = vpack.c.b16 %v1939, %v1938
        %v1946 = vpack.c.b16 %v1941, %v1940
        %v1947 = vpack.c.b16 %v1943, %v1942
        %s1948 = scalar_lea.vmem %s1, 40
        %v1949 = vld [vmem:[%s1948] sm:$0xf]
        %v1950 = vld [vmem:[%s1948 + $0x4] sm:$0xf]
        %v1953 = vunpack.c.l.b16 %v1949
        %v1954 = vunpack.c.l.b16 %v1950
        %v1955 = vpack.c.b16 %v1954, %v1953
        %v1958 = vsel %vm711, %v1944, 0
        %v1961 = vsel %vm711, %v1945, 0
        %v1964 = vsel %vm711, %v1946, 0
        %v1967 = vsel %vm711, %v1947, 0
        %1969 = vmatprep.subr.bf16.mxu0 0
        %1970 = vmatpush1.bf16.msra.mxu0 0
        %1971 = vmatprep.subr.bf16.mxu0 0
        %1972 = vmatpush1.bf16.msra.mxu0 0
        %1973 = vmatprep.subr.bf16.mxu0 0
        %1974 = vmatpush1.bf16.msra.mxu0 0
        %1975 = vmatprep.subr.bf16.mxu0 0
        %1976 = vmatpush1.bf16.msra.mxu0 0
        %1977 = vmatprep.subr.bf16.mxu0 0
        %1978 = vmatpush1.bf16.msra.mxu0 0
        %1979 = vmatprep.subr.bf16.mxu0 0
        %1980 = vmatpush1.bf16.msra.mxu0 0
        %1981 = vmatprep.subr.bf16.mxu0 0
        %1982 = vmatpush1.bf16.msra.mxu0 0
        %1983 = vmatprep.subr.bf16.mxu0 0
        %1984 = vmatpush1.bf16.msra.mxu0 %v1955
        %1985 = vmatprep.subr.bf16.mxu0 0
        %1986 = vmatpush2.bf16.msra.mxu0 0
        %1987 = vmatprep.subr.bf16.mxu0 0
        %1988 = vmatpush2.bf16.msra.mxu0 0
        %1989 = vmatprep.subr.bf16.mxu0 0
        %1990 = vmatpush2.bf16.msra.mxu0 0
        %1991 = vmatprep.subr.bf16.mxu0 0
        %1992 = vmatpush2.bf16.msra.mxu0 0
        %1993 = vmatprep.subr.bf16.mxu0 0
        %1994 = vmatpush2.bf16.msra.mxu0 0
        %1995 = vmatprep.subr.bf16.mxu0 0
        %1996 = vmatpush2.bf16.msra.mxu0 0
        %1997 = vmatprep.subr.bf16.mxu0 0
        %1998 = vmatpush2.bf16.msra.mxu0 0
        %1999 = vmatprep.subr.bf16.mxu0 0
        %2000 = vmatpush2.bf16.msra.mxu0 0
        %2001 = vmatprep.mubr.bf16.mxu0 0
        %2002 = vmatmul.mubr.bf16.gmra.mxu0 %v749
        %v2003 = vpop.f32.mrf.mxu0
        %v2004 = vadd.f32 0.0, %v2003
        %v2005 = vpop.f32.mrf.mxu0
        %v2006 = vpop.f32.mrf.mxu0
        %v2007 = vadd.f32 0.0, %v2006
        %v2008 = vpop.f32.mrf.mxu0
        %2009 = vmatprep.mubr.bf16.mxu0 0
        %2010 = vmatmul.mubr.bf16.gmra.mxu0 %v752
        %v2011 = vpop.f32.mrf.mxu0
        %v2012 = vadd.f32 0.0, %v2011
        %v2013 = vpop.f32.mrf.mxu0
        %v2014 = vpop.f32.mrf.mxu0
        %v2015 = vadd.f32 0.0, %v2014
        %v2016 = vpop.f32.mrf.mxu0
        %2017 = vmatprep.mubr.bf16.mxu0 0
        %2018 = vmatmul.mubr.bf16.gmra.mxu0 %v755
        %v2019 = vpop.f32.mrf.mxu0
        %v2020 = vadd.f32 0.0, %v2019
        %v2021 = vpop.f32.mrf.mxu0
        %v2022 = vpop.f32.mrf.mxu0
        %v2023 = vadd.f32 0.0, %v2022
        %v2024 = vpop.f32.mrf.mxu0
        %2025 = vmatprep.mubr.bf16.mxu0 0
        %2026 = vmatmul.mubr.bf16.gmra.mxu0 %v758
        %v2027 = vpop.f32.mrf.mxu0
        %v2028 = vadd.f32 0.0, %v2027
        %v2029 = vpop.f32.mrf.mxu0
        %v2030 = vpop.f32.mrf.mxu0
        %v2031 = vadd.f32 0.0, %v2030
        %v2032 = vpop.f32.mrf.mxu0
        %2033 = vmatprep.mubr.bf16.mxu0 0
        %2034 = vmatmul.mubr.bf16.gmra.mxu0 %v1192
        %v2035 = vpop.f32.mrf.mxu0
        %v2036 = vadd.f32 0.0, %v2035
        %v2037 = vpop.f32.mrf.mxu0
        %v2038 = vpop.f32.mrf.mxu0
        %v2039 = vadd.f32 0.0, %v2038
        %v2040 = vpop.f32.mrf.mxu0
        %2041 = vmatprep.mubr.bf16.mxu0 0
        %2042 = vmatmul.mubr.bf16.gmra.mxu0 %v1195
        %v2043 = vpop.f32.mrf.mxu0
        %v2044 = vadd.f32 0.0, %v2043
        %v2045 = vpop.f32.mrf.mxu0
        %v2046 = vpop.f32.mrf.mxu0
        %v2047 = vadd.f32 0.0, %v2046
        %v2048 = vpop.f32.mrf.mxu0
        %2049 = vmatprep.mubr.bf16.mxu0 0
        %2050 = vmatmul.mubr.bf16.gmra.mxu0 %v1198
        %v2051 = vpop.f32.mrf.mxu0
        %v2052 = vadd.f32 0.0, %v2051
        %v2053 = vpop.f32.mrf.mxu0
        %v2054 = vpop.f32.mrf.mxu0
        %v2055 = vadd.f32 0.0, %v2054
        %v2056 = vpop.f32.mrf.mxu0
        %2057 = vmatprep.mubr.bf16.mxu0 0
        %2058 = vmatmul.mubr.bf16.gmra.mxu0 %v1201
        %v2059 = vpop.f32.mrf.mxu0
        %v2060 = vadd.f32 0.0, %v2059
        %v2061 = vpop.f32.mrf.mxu0
        %v2062 = vpop.f32.mrf.mxu0
        %v2063 = vadd.f32 0.0, %v2062
        %v2064 = vpop.f32.mrf.mxu0
        %2065 = vmatprep.mubr.bf16.mxu0 0
        %2066 = vmatmul.mubr.bf16.gmra.mxu0 %v1716
        %v2067 = vpop.f32.mrf.mxu0
        %v2068 = vadd.f32 0.0, %v2067
        %v2069 = vpop.f32.mrf.mxu0
        %v2070 = vpop.f32.mrf.mxu0
        %v2071 = vadd.f32 0.0, %v2070
        %v2072 = vpop.f32.mrf.mxu0
        %2073 = vmatprep.mubr.bf16.mxu0 0
        %2074 = vmatmul.mubr.bf16.gmra.mxu0 %v1719
        %v2075 = vpop.f32.mrf.mxu0
        %v2076 = vadd.f32 0.0, %v2075
        %v2077 = vpop.f32.mrf.mxu0
        %v2078 = vpop.f32.mrf.mxu0
        %v2079 = vadd.f32 0.0, %v2078
        %v2080 = vpop.f32.mrf.mxu0
        %2081 = vmatprep.mubr.bf16.mxu0 0
        %2082 = vmatmul.mubr.bf16.gmra.mxu0 %v1722
        %v2083 = vpop.f32.mrf.mxu0
        %v2084 = vadd.f32 0.0, %v2083
        %v2085 = vpop.f32.mrf.mxu0
        %v2086 = vpop.f32.mrf.mxu0
        %v2087 = vadd.f32 0.0, %v2086
        %v2088 = vpop.f32.mrf.mxu0
        %2089 = vmatprep.mubr.bf16.mxu0 0
        %2090 = vmatmul.mubr.bf16.gmra.mxu0 %v1725
        %v2091 = vpop.f32.mrf.mxu0
        %v2092 = vadd.f32 0.0, %v2091
        %v2093 = vpop.f32.mrf.mxu0
        %v2094 = vpop.f32.mrf.mxu0
        %v2095 = vadd.f32 0.0, %v2094
        %v2096 = vpop.f32.mrf.mxu0
        %2097 = vmatprep.mubr.bf16.mxu0 0
        %2098 = vmatmul.mubr.bf16.gmra.mxu0 %v1958
        %v2099 = vpop.f32.mrf.mxu0
        %v2100 = vadd.f32 0.0, %v2099
        %v2101 = vpop.f32.mrf.mxu0
        %v2102 = vpop.f32.mrf.mxu0
        %v2103 = vadd.f32 0.0, %v2102
        %v2104 = vpop.f32.mrf.mxu0
        %2105 = vmatprep.mubr.bf16.mxu0 0
        %2106 = vmatmul.mubr.bf16.gmra.mxu0 %v1961
        %v2107 = vpop.f32.mrf.mxu0
        %v2108 = vadd.f32 0.0, %v2107
        %v2109 = vpop.f32.mrf.mxu0
        %v2110 = vpop.f32.mrf.mxu0
        %v2111 = vadd.f32 0.0, %v2110
        %v2112 = vpop.f32.mrf.mxu0
        %2113 = vmatprep.mubr.bf16.mxu0 0
        %2114 = vmatmul.mubr.bf16.gmra.mxu0 %v1964
        %v2115 = vpop.f32.mrf.mxu0
        %v2116 = vadd.f32 0.0, %v2115
        %v2117 = vpop.f32.mrf.mxu0
        %v2118 = vpop.f32.mrf.mxu0
        %v2119 = vadd.f32 0.0, %v2118
        %v2120 = vpop.f32.mrf.mxu0
        %2121 = vmatprep.mubr.bf16.mxu0 0
        %2122 = vmatmul.mubr.bf16.gmra.mxu0 %v1967
        %v2123 = vpop.f32.mrf.mxu0
        %v2124 = vadd.f32 0.0, %v2123
        %v2125 = vpop.f32.mrf.mxu0
        %v2126 = vpop.f32.mrf.mxu0
        %v2127 = vadd.f32 0.0, %v2126
        %v2128 = vpop.f32.mrf.mxu0
        %2129 = vdwg.mxu0
        %v2130 = vadd.f32 %v1888, %v2004
        %v2131 = vadd.f32 %v1889, %v2007
        %v2132 = vadd.f32 %v1890, %v2012
        %v2133 = vadd.f32 %v1891, %v2015
        %v2134 = vadd.f32 %v1892, %v2020
        %v2135 = vadd.f32 %v1893, %v2023
        %v2136 = vadd.f32 %v1894, %v2028
        %v2137 = vadd.f32 %v1895, %v2031
        %v2138 = vadd.f32 %v1896, %v2036
        %v2139 = vadd.f32 %v1897, %v2039
        %v2140 = vadd.f32 %v1898, %v2044
        %v2141 = vadd.f32 %v1899, %v2047
        %v2142 = vadd.f32 %v1900, %v2052
        %v2143 = vadd.f32 %v1901, %v2055
        %v2144 = vadd.f32 %v1902, %v2060
        %v2145 = vadd.f32 %v1903, %v2063
        %v2146 = vadd.f32 %v1904, %v2068
        %v2147 = vadd.f32 %v1905, %v2071
        %v2148 = vadd.f32 %v1906, %v2076
        %v2149 = vadd.f32 %v1907, %v2079
        %v2150 = vadd.f32 %v1908, %v2084
        %v2151 = vadd.f32 %v1909, %v2087
        %v2152 = vadd.f32 %v1910, %v2092
        %v2153 = vadd.f32 %v1911, %v2095
        %v2154 = vadd.f32 %v1912, %v2100
        %v2155 = vadd.f32 %v1913, %v2103
        %v2156 = vadd.f32 %v1914, %v2108
        %v2157 = vadd.f32 %v1915, %v2111
        %v2158 = vadd.f32 %v1916, %v2116
        %v2159 = vadd.f32 %v1917, %v2119
        %v2160 = vadd.f32 %v1918, %v2124
        %v2161 = vadd.f32 %v1919, %v2127
        %v2162 = vld [vmem:[%s544 + $0x4] sm:$0xf]
        %v2163 = vld [vmem:[%s544 + $0x8] sm:$0xf]
        %v2164 = vld [vmem:[%s544 + $0xc] sm:$0xf]
        %v2165 = vld [vmem:[%s544 + $0x10] sm:$0xf]
        %v2166 = vld [vmem:[%s544 + $0x14] sm:$0xf]
        %v2167 = vld [vmem:[%s544 + $0x18] sm:$0xf]
        %v2168 = vld [vmem:[%s544 + $0x1c] sm:$0xf]
        %v2169 = vld [vmem:[%s544 + $0x20] sm:$0xf]
        %v2170 = vld [vmem:[%s553 + $0x4] sm:$0xf]
        %v2171 = vld [vmem:[%s553 + $0x8] sm:$0xf]
        %v2172 = vld [vmem:[%s553 + $0xc] sm:$0xf]
        %v2173 = vld [vmem:[%s553 + $0x10] sm:$0xf]
        %v2174 = vld [vmem:[%s553 + $0x14] sm:$0xf]
        %v2175 = vld [vmem:[%s553 + $0x18] sm:$0xf]
        %v2176 = vld [vmem:[%s553 + $0x1c] sm:$0xf]
        %v2177 = vld [vmem:[%s553 + $0x20] sm:$0xf]
        %v2186 = vunpack.c.l.b16 %v2162
        %v2187 = vunpack.c.l.b16 %v2163
        %v2188 = vunpack.c.l.b16 %v2164
        %v2189 = vunpack.c.l.b16 %v2165
        %v2190 = vunpack.c.l.b16 %v2166
        %v2191 = vunpack.c.l.b16 %v2167
        %v2192 = vunpack.c.l.b16 %v2168
        %v2193 = vunpack.c.l.b16 %v2169
        %v2194 = vpack.c.b16 %v2187, %v2186
        %v2195 = vpack.c.b16 %v2189, %v2188
        %v2196 = vpack.c.b16 %v2191, %v2190
        %v2197 = vpack.c.b16 %v2193, %v2192
        %v2206 = vunpack.c.l.b16 %v2170
        %v2207 = vunpack.c.l.b16 %v2171
        %v2208 = vunpack.c.l.b16 %v2172
        %v2209 = vunpack.c.l.b16 %v2173
        %v2210 = vunpack.c.l.b16 %v2174
        %v2211 = vunpack.c.l.b16 %v2175
        %v2212 = vunpack.c.l.b16 %v2176
        %v2213 = vunpack.c.l.b16 %v2177
        %v2214 = vpack.c.b16 %v2207, %v2206
        %v2215 = vpack.c.b16 %v2209, %v2208
        %v2216 = vpack.c.b16 %v2211, %v2210
        %v2217 = vpack.c.b16 %v2213, %v2212
        %s2218 = scalar_lea.vmem %s1, 48
        %v2219 = vld [vmem:[%s2218] sm:$0xf]
        %v2220 = vld [vmem:[%s2218 + $0x4] sm:$0xf]
        %v2223 = vunpack.c.l.b16 %v2219
        %v2224 = vunpack.c.l.b16 %v2220
        %v2225 = vpack.c.b16 %v2224, %v2223
        %v2228 = vsel %vm711, %v2194, 0
        %v2231 = vsel %vm711, %v2195, 0
        %v2234 = vsel %vm711, %v2196, 0
        %v2237 = vsel %vm711, %v2197, 0
        %v2240 = vsel %vm711, %v2214, 0
        %v2243 = vsel %vm711, %v2215, 0
        %v2246 = vsel %vm711, %v2216, 0
        %v2249 = vsel %vm711, %v2217, 0
        %2251 = vmatprep.subr.bf16.mxu0 0
        %2252 = vmatpush1.bf16.msra.mxu0 0
        %2253 = vmatprep.subr.bf16.mxu0 0
        %2254 = vmatpush1.bf16.msra.mxu0 0
        %2255 = vmatprep.subr.bf16.mxu0 0
        %2256 = vmatpush1.bf16.msra.mxu0 0
        %2257 = vmatprep.subr.bf16.mxu0 0
        %2258 = vmatpush1.bf16.msra.mxu0 0
        %2259 = vmatprep.subr.bf16.mxu0 0
        %2260 = vmatpush1.bf16.msra.mxu0 0
        %2261 = vmatprep.subr.bf16.mxu0 0
        %2262 = vmatpush1.bf16.msra.mxu0 0
        %2263 = vmatprep.subr.bf16.mxu0 0
        %2264 = vmatpush1.bf16.msra.mxu0 0
        %2265 = vmatprep.subr.bf16.mxu0 0
        %2266 = vmatpush1.bf16.msra.mxu0 %v2225
        %2267 = vmatprep.subr.bf16.mxu0 0
        %2268 = vmatpush2.bf16.msra.mxu0 0
        %2269 = vmatprep.subr.bf16.mxu0 0
        %2270 = vmatpush2.bf16.msra.mxu0 0
        %2271 = vmatprep.subr.bf16.mxu0 0
        %2272 = vmatpush2.bf16.msra.mxu0 0
        %2273 = vmatprep.subr.bf16.mxu0 0
        %2274 = vmatpush2.bf16.msra.mxu0 0
        %2275 = vmatprep.subr.bf16.mxu0 0
        %2276 = vmatpush2.bf16.msra.mxu0 0
        %2277 = vmatprep.subr.bf16.mxu0 0
        %2278 = vmatpush2.bf16.msra.mxu0 0
        %2279 = vmatprep.subr.bf16.mxu0 0
        %2280 = vmatpush2.bf16.msra.mxu0 0
        %2281 = vmatprep.subr.bf16.mxu0 0
        %2282 = vmatpush2.bf16.msra.mxu0 0
        %2283 = vmatprep.mubr.bf16.mxu0 0
        %2284 = vmatmul.mubr.bf16.gmra.mxu0 %v1462
        %v2285 = vpop.f32.mrf.mxu0
        %v2286 = vadd.f32 0.0, %v2285
        %v2287 = vpop.f32.mrf.mxu0
        %v2288 = vpop.f32.mrf.mxu0
        %v2289 = vadd.f32 0.0, %v2288
        %v2290 = vpop.f32.mrf.mxu0
        %2291 = vmatprep.mubr.bf16.mxu0 0
        %2292 = vmatmul.mubr.bf16.gmra.mxu0 %v1465
        %v2293 = vpop.f32.mrf.mxu0
        %v2294 = vadd.f32 0.0, %v2293
        %v2295 = vpop.f32.mrf.mxu0
        %v2296 = vpop.f32.mrf.mxu0
        %v2297 = vadd.f32 0.0, %v2296
        %v2298 = vpop.f32.mrf.mxu0
        %2299 = vmatprep.mubr.bf16.mxu0 0
        %2300 = vmatmul.mubr.bf16.gmra.mxu0 %v1468
        %v2301 = vpop.f32.mrf.mxu0
        %v2302 = vadd.f32 0.0, %v2301
        %v2303 = vpop.f32.mrf.mxu0
        %v2304 = vpop.f32.mrf.mxu0
        %v2305 = vadd.f32 0.0, %v2304
        %v2306 = vpop.f32.mrf.mxu0
        %2307 = vmatprep.mubr.bf16.mxu0 0
        %2308 = vmatmul.mubr.bf16.gmra.mxu0 %v1471
        %v2309 = vpop.f32.mrf.mxu0
        %v2310 = vadd.f32 0.0, %v2309
        %v2311 = vpop.f32.mrf.mxu0
        %v2312 = vpop.f32.mrf.mxu0
        %v2313 = vadd.f32 0.0, %v2312
        %v2314 = vpop.f32.mrf.mxu0
        %2315 = vmatprep.mubr.bf16.mxu0 0
        %2316 = vmatmul.mubr.bf16.gmra.mxu0 %v1474
        %v2317 = vpop.f32.mrf.mxu0
        %v2318 = vadd.f32 0.0, %v2317
        %v2319 = vpop.f32.mrf.mxu0
        %v2320 = vpop.f32.mrf.mxu0
        %v2321 = vadd.f32 0.0, %v2320
        %v2322 = vpop.f32.mrf.mxu0
        %2323 = vmatprep.mubr.bf16.mxu0 0
        %2324 = vmatmul.mubr.bf16.gmra.mxu0 %v1477
        %v2325 = vpop.f32.mrf.mxu0
        %v2326 = vadd.f32 0.0, %v2325
        %v2327 = vpop.f32.mrf.mxu0
        %v2328 = vpop.f32.mrf.mxu0
        %v2329 = vadd.f32 0.0, %v2328
        %v2330 = vpop.f32.mrf.mxu0
        %2331 = vmatprep.mubr.bf16.mxu0 0
        %2332 = vmatmul.mubr.bf16.gmra.mxu0 %v1480
        %v2333 = vpop.f32.mrf.mxu0
        %v2334 = vadd.f32 0.0, %v2333
        %v2335 = vpop.f32.mrf.mxu0
        %v2336 = vpop.f32.mrf.mxu0
        %v2337 = vadd.f32 0.0, %v2336
        %v2338 = vpop.f32.mrf.mxu0
        %2339 = vmatprep.mubr.bf16.mxu0 0
        %2340 = vmatmul.mubr.bf16.gmra.mxu0 %v1483
        %v2341 = vpop.f32.mrf.mxu0
        %v2342 = vadd.f32 0.0, %v2341
        %v2343 = vpop.f32.mrf.mxu0
        %v2344 = vpop.f32.mrf.mxu0
        %v2345 = vadd.f32 0.0, %v2344
        %v2346 = vpop.f32.mrf.mxu0
        %2347 = vmatprep.mubr.bf16.mxu0 0
        %2348 = vmatmul.mubr.bf16.gmra.mxu0 %v2228
        %v2349 = vpop.f32.mrf.mxu0
        %v2350 = vadd.f32 0.0, %v2349
        %v2351 = vpop.f32.mrf.mxu0
        %v2352 = vpop.f32.mrf.mxu0
        %v2353 = vadd.f32 0.0, %v2352
        %v2354 = vpop.f32.mrf.mxu0
        %2355 = vmatprep.mubr.bf16.mxu0 0
        %2356 = vmatmul.mubr.bf16.gmra.mxu0 %v2231
        %v2357 = vpop.f32.mrf.mxu0
        %v2358 = vadd.f32 0.0, %v2357
        %v2359 = vpop.f32.mrf.mxu0
        %v2360 = vpop.f32.mrf.mxu0
        %v2361 = vadd.f32 0.0, %v2360
        %v2362 = vpop.f32.mrf.mxu0
        %2363 = vmatprep.mubr.bf16.mxu0 0
        %2364 = vmatmul.mubr.bf16.gmra.mxu0 %v2234
        %v2365 = vpop.f32.mrf.mxu0
        %v2366 = vadd.f32 0.0, %v2365
        %v2367 = vpop.f32.mrf.mxu0
        %v2368 = vpop.f32.mrf.mxu0
        %v2369 = vadd.f32 0.0, %v2368
        %v2370 = vpop.f32.mrf.mxu0
        %2371 = vmatprep.mubr.bf16.mxu0 0
        %2372 = vmatmul.mubr.bf16.gmra.mxu0 %v2237
        %v2373 = vpop.f32.mrf.mxu0
        %v2374 = vadd.f32 0.0, %v2373
        %v2375 = vpop.f32.mrf.mxu0
        %v2376 = vpop.f32.mrf.mxu0
        %v2377 = vadd.f32 0.0, %v2376
        %v2378 = vpop.f32.mrf.mxu0
        %2379 = vmatprep.mubr.bf16.mxu0 0
        %2380 = vmatmul.mubr.bf16.gmra.mxu0 %v2240
        %v2381 = vpop.f32.mrf.mxu0
        %v2382 = vadd.f32 0.0, %v2381
        %v2383 = vpop.f32.mrf.mxu0
        %v2384 = vpop.f32.mrf.mxu0
        %v2385 = vadd.f32 0.0, %v2384
        %v2386 = vpop.f32.mrf.mxu0
        %2387 = vmatprep.mubr.bf16.mxu0 0
        %2388 = vmatmul.mubr.bf16.gmra.mxu0 %v2243
        %v2389 = vpop.f32.mrf.mxu0
        %v2390 = vadd.f32 0.0, %v2389
        %v2391 = vpop.f32.mrf.mxu0
        %v2392 = vpop.f32.mrf.mxu0
        %v2393 = vadd.f32 0.0, %v2392
        %v2394 = vpop.f32.mrf.mxu0
        %2395 = vmatprep.mubr.bf16.mxu0 0
        %2396 = vmatmul.mubr.bf16.gmra.mxu0 %v2246
        %v2397 = vpop.f32.mrf.mxu0
        %v2398 = vadd.f32 0.0, %v2397
        %v2399 = vpop.f32.mrf.mxu0
        %v2400 = vpop.f32.mrf.mxu0
        %v2401 = vadd.f32 0.0, %v2400
        %v2402 = vpop.f32.mrf.mxu0
        %2403 = vmatprep.mubr.bf16.mxu0 0
        %2404 = vmatmul.mubr.bf16.gmra.mxu0 %v2249
        %v2405 = vpop.f32.mrf.mxu0
        %v2406 = vadd.f32 0.0, %v2405
        %v2407 = vpop.f32.mrf.mxu0
        %v2408 = vpop.f32.mrf.mxu0
        %v2409 = vadd.f32 0.0, %v2408
        %v2410 = vpop.f32.mrf.mxu0
        %2411 = vdwg.mxu0
        %v2412 = vadd.f32 %v2130, %v2286
        %v2413 = vadd.f32 %v2131, %v2289
        %v2414 = vadd.f32 %v2132, %v2294
        %v2415 = vadd.f32 %v2133, %v2297
        %v2416 = vadd.f32 %v2134, %v2302
        %v2417 = vadd.f32 %v2135, %v2305
        %v2418 = vadd.f32 %v2136, %v2310
        %v2419 = vadd.f32 %v2137, %v2313
        %v2420 = vadd.f32 %v2138, %v2318
        %v2421 = vadd.f32 %v2139, %v2321
        %v2422 = vadd.f32 %v2140, %v2326
        %v2423 = vadd.f32 %v2141, %v2329
        %v2424 = vadd.f32 %v2142, %v2334
        %v2425 = vadd.f32 %v2143, %v2337
        %v2426 = vadd.f32 %v2144, %v2342
        %v2427 = vadd.f32 %v2145, %v2345
        %v2428 = vadd.f32 %v2146, %v2350
        %v2429 = vadd.f32 %v2147, %v2353
        %v2430 = vadd.f32 %v2148, %v2358
        %v2431 = vadd.f32 %v2149, %v2361
        %v2432 = vadd.f32 %v2150, %v2366
        %v2433 = vadd.f32 %v2151, %v2369
        %v2434 = vadd.f32 %v2152, %v2374
        %v2435 = vadd.f32 %v2153, %v2377
        %v2436 = vadd.f32 %v2154, %v2382
        %v2437 = vadd.f32 %v2155, %v2385
        %v2438 = vadd.f32 %v2156, %v2390
        %v2439 = vadd.f32 %v2157, %v2393
        %v2440 = vadd.f32 %v2158, %v2398
        %v2441 = vadd.f32 %v2159, %v2401
        %v2442 = vadd.f32 %v2160, %v2406
        %v2443 = vadd.f32 %v2161, %v2409
        %v2444 = vld [vmem:[%s653 + $0x4] sm:$0xf]
        %v2445 = vld [vmem:[%s653 + $0x8] sm:$0xf]
        %v2446 = vld [vmem:[%s653 + $0xc] sm:$0xf]
        %v2447 = vld [vmem:[%s653 + $0x10] sm:$0xf]
        %v2448 = vld [vmem:[%s653 + $0x14] sm:$0xf]
        %v2449 = vld [vmem:[%s653 + $0x18] sm:$0xf]
        %v2450 = vld [vmem:[%s653 + $0x1c] sm:$0xf]
        %v2451 = vld [vmem:[%s653 + $0x20] sm:$0xf]
        %v2460 = vunpack.c.l.b16 %v2444
        %v2461 = vunpack.c.l.b16 %v2445
        %v2462 = vunpack.c.l.b16 %v2446
        %v2463 = vunpack.c.l.b16 %v2447
        %v2464 = vunpack.c.l.b16 %v2448
        %v2465 = vunpack.c.l.b16 %v2449
        %v2466 = vunpack.c.l.b16 %v2450
        %v2467 = vunpack.c.l.b16 %v2451
        %v2468 = vpack.c.b16 %v2461, %v2460
        %v2469 = vpack.c.b16 %v2463, %v2462
        %v2470 = vpack.c.b16 %v2465, %v2464
        %v2471 = vpack.c.b16 %v2467, %v2466
        %s2472 = scalar_lea.vmem %s1, 56
        %v2473 = vld [vmem:[%s2472] sm:$0xf]
        %v2474 = vld [vmem:[%s2472 + $0x4] sm:$0xf]
        %v2477 = vunpack.c.l.b16 %v2473
        %v2478 = vunpack.c.l.b16 %v2474
        %v2479 = vpack.c.b16 %v2478, %v2477
        %v2482 = vsel %vm711, %v2468, 0
        %v2485 = vsel %vm711, %v2469, 0
        %v2488 = vsel %vm711, %v2470, 0
        %v2491 = vsel %vm711, %v2471, 0
        %2493 = vmatprep.subr.bf16.mxu0 0
        %2494 = vmatpush1.bf16.msra.mxu0 0
        %2495 = vmatprep.subr.bf16.mxu0 0
        %2496 = vmatpush1.bf16.msra.mxu0 0
        %2497 = vmatprep.subr.bf16.mxu0 0
        %2498 = vmatpush1.bf16.msra.mxu0 0
        %2499 = vmatprep.subr.bf16.mxu0 0
        %2500 = vmatpush1.bf16.msra.mxu0 0
        %2501 = vmatprep.subr.bf16.mxu0 0
        %2502 = vmatpush1.bf16.msra.mxu0 0
        %2503 = vmatprep.subr.bf16.mxu0 0
        %2504 = vmatpush1.bf16.msra.mxu0 0
        %2505 = vmatprep.subr.bf16.mxu0 0
        %2506 = vmatpush1.bf16.msra.mxu0 0
        %2507 = vmatprep.subr.bf16.mxu0 0
        %2508 = vmatpush1.bf16.msra.mxu0 %v2479
        %2509 = vmatprep.subr.bf16.mxu0 0
        %2510 = vmatpush2.bf16.msra.mxu0 0
        %2511 = vmatprep.subr.bf16.mxu0 0
        %2512 = vmatpush2.bf16.msra.mxu0 0
        %2513 = vmatprep.subr.bf16.mxu0 0
        %2514 = vmatpush2.bf16.msra.mxu0 0
        %2515 = vmatprep.subr.bf16.mxu0 0
        %2516 = vmatpush2.bf16.msra.mxu0 0
        %2517 = vmatprep.subr.bf16.mxu0 0
        %2518 = vmatpush2.bf16.msra.mxu0 0
        %2519 = vmatprep.subr.bf16.mxu0 0
        %2520 = vmatpush2.bf16.msra.mxu0 0
        %2521 = vmatprep.subr.bf16.mxu0 0
        %2522 = vmatpush2.bf16.msra.mxu0 0
        %2523 = vmatprep.subr.bf16.mxu0 0
        %2524 = vmatpush2.bf16.msra.mxu0 0
        %2525 = vmatprep.mubr.bf16.mxu0 0
        %2526 = vmatmul.mubr.bf16.gmra.mxu0 %v1474
        %v2527 = vpop.f32.mrf.mxu0
        %v2528 = vadd.f32 0.0, %v2527
        %v2529 = vpop.f32.mrf.mxu0
        %v2530 = vpop.f32.mrf.mxu0
        %v2531 = vadd.f32 0.0, %v2530
        %v2532 = vpop.f32.mrf.mxu0
        %2533 = vmatprep.mubr.bf16.mxu0 0
        %2534 = vmatmul.mubr.bf16.gmra.mxu0 %v1477
        %v2535 = vpop.f32.mrf.mxu0
        %v2536 = vadd.f32 0.0, %v2535
        %v2537 = vpop.f32.mrf.mxu0
        %v2538 = vpop.f32.mrf.mxu0
        %v2539 = vadd.f32 0.0, %v2538
        %v2540 = vpop.f32.mrf.mxu0
        %2541 = vmatprep.mubr.bf16.mxu0 0
        %2542 = vmatmul.mubr.bf16.gmra.mxu0 %v1480
        %v2543 = vpop.f32.mrf.mxu0
        %v2544 = vadd.f32 0.0, %v2543
        %v2545 = vpop.f32.mrf.mxu0
        %v2546 = vpop.f32.mrf.mxu0
        %v2547 = vadd.f32 0.0, %v2546
        %v2548 = vpop.f32.mrf.mxu0
        %2549 = vmatprep.mubr.bf16.mxu0 0
        %2550 = vmatmul.mubr.bf16.gmra.mxu0 %v1483
        %v2551 = vpop.f32.mrf.mxu0
        %v2552 = vadd.f32 0.0, %v2551
        %v2553 = vpop.f32.mrf.mxu0
        %v2554 = vpop.f32.mrf.mxu0
        %v2555 = vadd.f32 0.0, %v2554
        %v2556 = vpop.f32.mrf.mxu0
        %2557 = vmatprep.mubr.bf16.mxu0 0
        %2558 = vmatmul.mubr.bf16.gmra.mxu0 %v1716
        %v2559 = vpop.f32.mrf.mxu0
        %v2560 = vadd.f32 0.0, %v2559
        %v2561 = vpop.f32.mrf.mxu0
        %v2562 = vpop.f32.mrf.mxu0
        %v2563 = vadd.f32 0.0, %v2562
        %v2564 = vpop.f32.mrf.mxu0
        %2565 = vmatprep.mubr.bf16.mxu0 0
        %2566 = vmatmul.mubr.bf16.gmra.mxu0 %v1719
        %v2567 = vpop.f32.mrf.mxu0
        %v2568 = vadd.f32 0.0, %v2567
        %v2569 = vpop.f32.mrf.mxu0
        %v2570 = vpop.f32.mrf.mxu0
        %v2571 = vadd.f32 0.0, %v2570
        %v2572 = vpop.f32.mrf.mxu0
        %2573 = vmatprep.mubr.bf16.mxu0 0
        %2574 = vmatmul.mubr.bf16.gmra.mxu0 %v1722
        %v2575 = vpop.f32.mrf.mxu0
        %v2576 = vadd.f32 0.0, %v2575
        %v2577 = vpop.f32.mrf.mxu0
        %v2578 = vpop.f32.mrf.mxu0
        %v2579 = vadd.f32 0.0, %v2578
        %v2580 = vpop.f32.mrf.mxu0
        %2581 = vmatprep.mubr.bf16.mxu0 0
        %2582 = vmatmul.mubr.bf16.gmra.mxu0 %v1725
        %v2583 = vpop.f32.mrf.mxu0
        %v2584 = vadd.f32 0.0, %v2583
        %v2585 = vpop.f32.mrf.mxu0
        %v2586 = vpop.f32.mrf.mxu0
        %v2587 = vadd.f32 0.0, %v2586
        %v2588 = vpop.f32.mrf.mxu0
        %2589 = vmatprep.mubr.bf16.mxu0 0
        %2590 = vmatmul.mubr.bf16.gmra.mxu0 %v2240
        %v2591 = vpop.f32.mrf.mxu0
        %v2592 = vadd.f32 0.0, %v2591
        %v2593 = vpop.f32.mrf.mxu0
        %v2594 = vpop.f32.mrf.mxu0
        %v2595 = vadd.f32 0.0, %v2594
        %v2596 = vpop.f32.mrf.mxu0
        %2597 = vmatprep.mubr.bf16.mxu0 0
        %2598 = vmatmul.mubr.bf16.gmra.mxu0 %v2243
        %v2599 = vpop.f32.mrf.mxu0
        %v2600 = vadd.f32 0.0, %v2599
        %v2601 = vpop.f32.mrf.mxu0
        %v2602 = vpop.f32.mrf.mxu0
        %v2603 = vadd.f32 0.0, %v2602
        %v2604 = vpop.f32.mrf.mxu0
        %2605 = vmatprep.mubr.bf16.mxu0 0
        %2606 = vmatmul.mubr.bf16.gmra.mxu0 %v2246
        %v2607 = vpop.f32.mrf.mxu0
        %v2608 = vadd.f32 0.0, %v2607
        %v2609 = vpop.f32.mrf.mxu0
        %v2610 = vpop.f32.mrf.mxu0
        %v2611 = vadd.f32 0.0, %v2610
        %v2612 = vpop.f32.mrf.mxu0
        %2613 = vmatprep.mubr.bf16.mxu0 0
        %2614 = vmatmul.mubr.bf16.gmra.mxu0 %v2249
        %v2615 = vpop.f32.mrf.mxu0
        %v2616 = vadd.f32 0.0, %v2615
        %v2617 = vpop.f32.mrf.mxu0
        %v2618 = vpop.f32.mrf.mxu0
        %v2619 = vadd.f32 0.0, %v2618
        %v2620 = vpop.f32.mrf.mxu0
        %2621 = vmatprep.mubr.bf16.mxu0 0
        %2622 = vmatmul.mubr.bf16.gmra.mxu0 %v2482
        %v2623 = vpop.f32.mrf.mxu0
        %v2624 = vadd.f32 0.0, %v2623
        %v2625 = vpop.f32.mrf.mxu0
        %v2626 = vpop.f32.mrf.mxu0
        %v2627 = vadd.f32 0.0, %v2626
        %v2628 = vpop.f32.mrf.mxu0
        %2629 = vmatprep.mubr.bf16.mxu0 0
        %2630 = vmatmul.mubr.bf16.gmra.mxu0 %v2485
        %v2631 = vpop.f32.mrf.mxu0
        %v2632 = vadd.f32 0.0, %v2631
        %v2633 = vpop.f32.mrf.mxu0
        %v2634 = vpop.f32.mrf.mxu0
        %v2635 = vadd.f32 0.0, %v2634
        %v2636 = vpop.f32.mrf.mxu0
        %2637 = vmatprep.mubr.bf16.mxu0 0
        %2638 = vmatmul.mubr.bf16.gmra.mxu0 %v2488
        %v2639 = vpop.f32.mrf.mxu0
        %v2640 = vadd.f32 0.0, %v2639
        %v2641 = vpop.f32.mrf.mxu0
        %v2642 = vpop.f32.mrf.mxu0
        %v2643 = vadd.f32 0.0, %v2642
        %v2644 = vpop.f32.mrf.mxu0
        %2645 = vmatprep.mubr.bf16.mxu0 0
        %2646 = vmatmul.mubr.bf16.gmra.mxu0 %v2491
        %v2647 = vpop.f32.mrf.mxu0
        %v2648 = vadd.f32 0.0, %v2647
        %v2649 = vpop.f32.mrf.mxu0
        %v2650 = vpop.f32.mrf.mxu0
        %v2651 = vadd.f32 0.0, %v2650
        %v2652 = vpop.f32.mrf.mxu0
        %2653 = vdwg.mxu0
        %v2654 = vadd.f32 %v2412, %v2528
        %v2655 = vadd.f32 %v2413, %v2531
        %v2656 = vadd.f32 %v2414, %v2536
        %v2657 = vadd.f32 %v2415, %v2539
        %v2658 = vadd.f32 %v2416, %v2544
        %v2659 = vadd.f32 %v2417, %v2547
        %v2660 = vadd.f32 %v2418, %v2552
        %v2661 = vadd.f32 %v2419, %v2555
        %v2662 = vadd.f32 %v2420, %v2560
        %v2663 = vadd.f32 %v2421, %v2563
        %v2664 = vadd.f32 %v2422, %v2568
        %v2665 = vadd.f32 %v2423, %v2571
        %v2666 = vadd.f32 %v2424, %v2576
        %v2667 = vadd.f32 %v2425, %v2579
        %v2668 = vadd.f32 %v2426, %v2584
        %v2669 = vadd.f32 %v2427, %v2587
        %v2670 = vadd.f32 %v2428, %v2592
        %v2671 = vadd.f32 %v2429, %v2595
        %v2672 = vadd.f32 %v2430, %v2600
        %v2673 = vadd.f32 %v2431, %v2603
        %v2674 = vadd.f32 %v2432, %v2608
        %v2675 = vadd.f32 %v2433, %v2611
        %v2676 = vadd.f32 %v2434, %v2616
        %v2677 = vadd.f32 %v2435, %v2619
        %v2678 = vadd.f32 %v2436, %v2624
        %v2679 = vadd.f32 %v2437, %v2627
        %v2680 = vadd.f32 %v2438, %v2632
        %v2681 = vadd.f32 %v2439, %v2635
        %v2682 = vadd.f32 %v2440, %v2640
        %v2683 = vadd.f32 %v2441, %v2643
        %v2684 = vadd.f32 %v2442, %v2648
        %v2685 = vadd.f32 %v2443, %v2651
        %v2686 = vld [vmem:[%s1121 + $0x4] sm:$0xf]
        %v2687 = vld [vmem:[%s1121 + $0x8] sm:$0xf]
        %v2688 = vld [vmem:[%s1121 + $0xc] sm:$0xf]
        %v2689 = vld [vmem:[%s1121 + $0x10] sm:$0xf]
        %v2690 = vld [vmem:[%s1121 + $0x14] sm:$0xf]
        %v2691 = vld [vmem:[%s1121 + $0x18] sm:$0xf]
        %v2692 = vld [vmem:[%s1121 + $0x1c] sm:$0xf]
        %v2693 = vld [vmem:[%s1121 + $0x20] sm:$0xf]
        %v2702 = vunpack.c.l.b16 %v2686
        %v2703 = vunpack.c.l.b16 %v2687
        %v2704 = vunpack.c.l.b16 %v2688
        %v2705 = vunpack.c.l.b16 %v2689
        %v2706 = vunpack.c.l.b16 %v2690
        %v2707 = vunpack.c.l.b16 %v2691
        %v2708 = vunpack.c.l.b16 %v2692
        %v2709 = vunpack.c.l.b16 %v2693
        %v2710 = vpack.c.b16 %v2703, %v2702
        %v2711 = vpack.c.b16 %v2705, %v2704
        %v2712 = vpack.c.b16 %v2707, %v2706
        %v2713 = vpack.c.b16 %v2709, %v2708
        %s2714 = scalar_lea.vmem %s1, 64
        %v2715 = vld [vmem:[%s2714] sm:$0xf]
        %v2716 = vld [vmem:[%s2714 + $0x4] sm:$0xf]
        %v2719 = vunpack.c.l.b16 %v2715
        %v2720 = vunpack.c.l.b16 %v2716
        %v2721 = vpack.c.b16 %v2720, %v2719
        %v2724 = vsel %vm711, %v2710, 0
        %v2727 = vsel %vm711, %v2711, 0
        %v2730 = vsel %vm711, %v2712, 0
        %v2733 = vsel %vm711, %v2713, 0
        %2735 = vmatprep.subr.bf16.mxu0 0
        %2736 = vmatpush1.bf16.msra.mxu0 0
        %2737 = vmatprep.subr.bf16.mxu0 0
        %2738 = vmatpush1.bf16.msra.mxu0 0
        %2739 = vmatprep.subr.bf16.mxu0 0
        %2740 = vmatpush1.bf16.msra.mxu0 0
        %2741 = vmatprep.subr.bf16.mxu0 0
        %2742 = vmatpush1.bf16.msra.mxu0 0
        %2743 = vmatprep.subr.bf16.mxu0 0
        %2744 = vmatpush1.bf16.msra.mxu0 0
        %2745 = vmatprep.subr.bf16.mxu0 0
        %2746 = vmatpush1.bf16.msra.mxu0 0
        %2747 = vmatprep.subr.bf16.mxu0 0
        %2748 = vmatpush1.bf16.msra.mxu0 0
        %2749 = vmatprep.subr.bf16.mxu0 0
        %2750 = vmatpush1.bf16.msra.mxu0 %v2721
        %2751 = vmatprep.subr.bf16.mxu0 0
        %2752 = vmatpush2.bf16.msra.mxu0 0
        %2753 = vmatprep.subr.bf16.mxu0 0
        %2754 = vmatpush2.bf16.msra.mxu0 0
        %2755 = vmatprep.subr.bf16.mxu0 0
        %2756 = vmatpush2.bf16.msra.mxu0 0
        %2757 = vmatprep.subr.bf16.mxu0 0
        %2758 = vmatpush2.bf16.msra.mxu0 0
        %2759 = vmatprep.subr.bf16.mxu0 0
        %2760 = vmatpush2.bf16.msra.mxu0 0
        %2761 = vmatprep.subr.bf16.mxu0 0
        %2762 = vmatpush2.bf16.msra.mxu0 0
        %2763 = vmatprep.subr.bf16.mxu0 0
        %2764 = vmatpush2.bf16.msra.mxu0 0
        %2765 = vmatprep.subr.bf16.mxu0 0
        %2766 = vmatpush2.bf16.msra.mxu0 0
        %2767 = vmatprep.mubr.bf16.mxu0 0
        %2768 = vmatmul.mubr.bf16.gmra.mxu0 %v1716
        %v2769 = vpop.f32.mrf.mxu0
        %v2770 = vadd.f32 0.0, %v2769
        %v2771 = vpop.f32.mrf.mxu0
        %v2772 = vpop.f32.mrf.mxu0
        %v2773 = vadd.f32 0.0, %v2772
        %v2774 = vpop.f32.mrf.mxu0
        %2775 = vmatprep.mubr.bf16.mxu0 0
        %2776 = vmatmul.mubr.bf16.gmra.mxu0 %v1719
        %v2777 = vpop.f32.mrf.mxu0
        %v2778 = vadd.f32 0.0, %v2777
        %v2779 = vpop.f32.mrf.mxu0
        %v2780 = vpop.f32.mrf.mxu0
        %v2781 = vadd.f32 0.0, %v2780
        %v2782 = vpop.f32.mrf.mxu0
        %2783 = vmatprep.mubr.bf16.mxu0 0
        %2784 = vmatmul.mubr.bf16.gmra.mxu0 %v1722
        %v2785 = vpop.f32.mrf.mxu0
        %v2786 = vadd.f32 0.0, %v2785
        %v2787 = vpop.f32.mrf.mxu0
        %v2788 = vpop.f32.mrf.mxu0
        %v2789 = vadd.f32 0.0, %v2788
        %v2790 = vpop.f32.mrf.mxu0
        %2791 = vmatprep.mubr.bf16.mxu0 0
        %2792 = vmatmul.mubr.bf16.gmra.mxu0 %v1725
        %v2793 = vpop.f32.mrf.mxu0
        %v2794 = vadd.f32 0.0, %v2793
        %v2795 = vpop.f32.mrf.mxu0
        %v2796 = vpop.f32.mrf.mxu0
        %v2797 = vadd.f32 0.0, %v2796
        %v2798 = vpop.f32.mrf.mxu0
        %2799 = vmatprep.mubr.bf16.mxu0 0
        %2800 = vmatmul.mubr.bf16.gmra.mxu0 %v1958
        %v2801 = vpop.f32.mrf.mxu0
        %v2802 = vadd.f32 0.0, %v2801
        %v2803 = vpop.f32.mrf.mxu0
        %v2804 = vpop.f32.mrf.mxu0
        %v2805 = vadd.f32 0.0, %v2804
        %v2806 = vpop.f32.mrf.mxu0
        %2807 = vmatprep.mubr.bf16.mxu0 0
        %2808 = vmatmul.mubr.bf16.gmra.mxu0 %v1961
        %v2809 = vpop.f32.mrf.mxu0
        %v2810 = vadd.f32 0.0, %v2809
        %v2811 = vpop.f32.mrf.mxu0
        %v2812 = vpop.f32.mrf.mxu0
        %v2813 = vadd.f32 0.0, %v2812
        %v2814 = vpop.f32.mrf.mxu0
        %2815 = vmatprep.mubr.bf16.mxu0 0
        %2816 = vmatmul.mubr.bf16.gmra.mxu0 %v1964
        %v2817 = vpop.f32.mrf.mxu0
        %v2818 = vadd.f32 0.0, %v2817
        %v2819 = vpop.f32.mrf.mxu0
        %v2820 = vpop.f32.mrf.mxu0
        %v2821 = vadd.f32 0.0, %v2820
        %v2822 = vpop.f32.mrf.mxu0
        %2823 = vmatprep.mubr.bf16.mxu0 0
        %2824 = vmatmul.mubr.bf16.gmra.mxu0 %v1967
        %v2825 = vpop.f32.mrf.mxu0
        %v2826 = vadd.f32 0.0, %v2825
        %v2827 = vpop.f32.mrf.mxu0
        %v2828 = vpop.f32.mrf.mxu0
        %v2829 = vadd.f32 0.0, %v2828
        %v2830 = vpop.f32.mrf.mxu0
        %2831 = vmatprep.mubr.bf16.mxu0 0
        %2832 = vmatmul.mubr.bf16.gmra.mxu0 %v2482
        %v2833 = vpop.f32.mrf.mxu0
        %v2834 = vadd.f32 0.0, %v2833
        %v2835 = vpop.f32.mrf.mxu0
        %v2836 = vpop.f32.mrf.mxu0
        %v2837 = vadd.f32 0.0, %v2836
        %v2838 = vpop.f32.mrf.mxu0
        %2839 = vmatprep.mubr.bf16.mxu0 0
        %2840 = vmatmul.mubr.bf16.gmra.mxu0 %v2485
        %v2841 = vpop.f32.mrf.mxu0
        %v2842 = vadd.f32 0.0, %v2841
        %v2843 = vpop.f32.mrf.mxu0
        %v2844 = vpop.f32.mrf.mxu0
        %v2845 = vadd.f32 0.0, %v2844
        %v2846 = vpop.f32.mrf.mxu0
        %2847 = vmatprep.mubr.bf16.mxu0 0
        %2848 = vmatmul.mubr.bf16.gmra.mxu0 %v2488
        %v2849 = vpop.f32.mrf.mxu0
        %v2850 = vadd.f32 0.0, %v2849
        %v2851 = vpop.f32.mrf.mxu0
        %v2852 = vpop.f32.mrf.mxu0
        %v2853 = vadd.f32 0.0, %v2852
        %v2854 = vpop.f32.mrf.mxu0
        %2855 = vmatprep.mubr.bf16.mxu0 0
        %2856 = vmatmul.mubr.bf16.gmra.mxu0 %v2491
        %v2857 = vpop.f32.mrf.mxu0
        %v2858 = vadd.f32 0.0, %v2857
        %v2859 = vpop.f32.mrf.mxu0
        %v2860 = vpop.f32.mrf.mxu0
        %v2861 = vadd.f32 0.0, %v2860
        %v2862 = vpop.f32.mrf.mxu0
        %2863 = vmatprep.mubr.bf16.mxu0 0
        %2864 = vmatmul.mubr.bf16.gmra.mxu0 %v2724
        %v2865 = vpop.f32.mrf.mxu0
        %v2866 = vadd.f32 0.0, %v2865
        %v2867 = vpop.f32.mrf.mxu0
        %v2868 = vpop.f32.mrf.mxu0
        %v2869 = vadd.f32 0.0, %v2868
        %v2870 = vpop.f32.mrf.mxu0
        %2871 = vmatprep.mubr.bf16.mxu0 0
        %2872 = vmatmul.mubr.bf16.gmra.mxu0 %v2727
        %v2873 = vpop.f32.mrf.mxu0
        %v2874 = vadd.f32 0.0, %v2873
        %v2875 = vpop.f32.mrf.mxu0
        %v2876 = vpop.f32.mrf.mxu0
        %v2877 = vadd.f32 0.0, %v2876
        %v2878 = vpop.f32.mrf.mxu0
        %2879 = vmatprep.mubr.bf16.mxu0 0
        %2880 = vmatmul.mubr.bf16.gmra.mxu0 %v2730
        %v2881 = vpop.f32.mrf.mxu0
        %v2882 = vadd.f32 0.0, %v2881
        %v2883 = vpop.f32.mrf.mxu0
        %v2884 = vpop.f32.mrf.mxu0
        %v2885 = vadd.f32 0.0, %v2884
        %v2886 = vpop.f32.mrf.mxu0
        %2887 = vmatprep.mubr.bf16.mxu0 0
        %2888 = vmatmul.mubr.bf16.gmra.mxu0 %v2733
        %v2889 = vpop.f32.mrf.mxu0
        %v2890 = vadd.f32 0.0, %v2889
        %v2891 = vpop.f32.mrf.mxu0
        %v2892 = vpop.f32.mrf.mxu0
        %v2893 = vadd.f32 0.0, %v2892
        %v2894 = vpop.f32.mrf.mxu0
        %2895 = vdwg.mxu0
        %v2896 = vadd.f32 %v2654, %v2770
        %v2897 = vadd.f32 %v2655, %v2773
        %v2898 = vadd.f32 %v2656, %v2778
        %v2899 = vadd.f32 %v2657, %v2781
        %v2900 = vadd.f32 %v2658, %v2786
        %v2901 = vadd.f32 %v2659, %v2789
        %v2902 = vadd.f32 %v2660, %v2794
        %v2903 = vadd.f32 %v2661, %v2797
        %v2904 = vadd.f32 %v2662, %v2802
        %v2905 = vadd.f32 %v2663, %v2805
        %v2906 = vadd.f32 %v2664, %v2810
        %v2907 = vadd.f32 %v2665, %v2813
        %v2908 = vadd.f32 %v2666, %v2818
        %v2909 = vadd.f32 %v2667, %v2821
        %v2910 = vadd.f32 %v2668, %v2826
        %v2911 = vadd.f32 %v2669, %v2829
        %v2912 = vadd.f32 %v2670, %v2834
        %v2913 = vadd.f32 %v2671, %v2837
        %v2914 = vadd.f32 %v2672, %v2842
        %v2915 = vadd.f32 %v2673, %v2845
        %v2916 = vadd.f32 %v2674, %v2850
        %v2917 = vadd.f32 %v2675, %v2853
        %v2918 = vadd.f32 %v2676, %v2858
        %v2919 = vadd.f32 %v2677, %v2861
        %v2920 = vadd.f32 %v2678, %v2866
        %v2921 = vadd.f32 %v2679, %v2869
        %v2922 = vadd.f32 %v2680, %v2874
        %v2923 = vadd.f32 %v2681, %v2877
        %v2924 = vadd.f32 %v2682, %v2882
        %v2925 = vadd.f32 %v2683, %v2885
        %v2926 = vadd.f32 %v2684, %v2890
        %v2927 = vadd.f32 %v2685, %v2893
        %v2928 = vld [vmem:[%s2] sm:$0x1]
        %v2930 = vlaneseq
        %v2931 = vshrl.u32 %v2930, 7
        %v2932 = vsub.s32 0, %v2931
        %v2933 = vrot.slane %v2928, %v2932
        %v2935 = vmul.f32 %v2896, %v2933
        %v2936 = vmul.f32 %v2897, %v2933
        %v2937 = vmul.f32 %v2898, %v2933
        %v2938 = vmul.f32 %v2899, %v2933
        %v2939 = vmul.f32 %v2900, %v2933
        %v2940 = vmul.f32 %v2901, %v2933
        %v2941 = vmul.f32 %v2902, %v2933
        %v2942 = vmul.f32 %v2903, %v2933
        %v2943 = vmul.f32 %v2904, %v2933
        %v2944 = vmul.f32 %v2905, %v2933
        %v2945 = vmul.f32 %v2906, %v2933
        %v2946 = vmul.f32 %v2907, %v2933
        %v2947 = vmul.f32 %v2908, %v2933
        %v2948 = vmul.f32 %v2909, %v2933
        %v2949 = vmul.f32 %v2910, %v2933
        %v2950 = vmul.f32 %v2911, %v2933
        %v2951 = vmul.f32 %v2912, %v2933
        %v2952 = vmul.f32 %v2913, %v2933
        %v2953 = vmul.f32 %v2914, %v2933
        %v2954 = vmul.f32 %v2915, %v2933
        %v2955 = vmul.f32 %v2916, %v2933
        %v2956 = vmul.f32 %v2917, %v2933
        %v2957 = vmul.f32 %v2918, %v2933
        %v2958 = vmul.f32 %v2919, %v2933
        %v2959 = vmul.f32 %v2920, %v2933
        %v2960 = vmul.f32 %v2921, %v2933
        %v2961 = vmul.f32 %v2922, %v2933
        %v2962 = vmul.f32 %v2923, %v2933
        %v2963 = vmul.f32 %v2924, %v2933
        %v2964 = vmul.f32 %v2925, %v2933
        %v2965 = vmul.f32 %v2926, %v2933
        %v2966 = vmul.f32 %v2927, %v2933
        %v2967 = vld [vmem:[%s3] sm:$0x1]
        %v2969 = vlaneseq
        %v2970 = vshrl.u32 %v2969, 7
        %v2971 = vsub.s32 0, %v2970
        %v2972 = vrot.slane %v2967, %v2971
        %v2974 = vadd.f32 %v2935, %v2972
        %v2975 = vadd.f32 %v2936, %v2972
        %v2976 = vadd.f32 %v2937, %v2972
        %v2977 = vadd.f32 %v2938, %v2972
        %v2978 = vadd.f32 %v2939, %v2972
        %v2979 = vadd.f32 %v2940, %v2972
        %v2980 = vadd.f32 %v2941, %v2972
        %v2981 = vadd.f32 %v2942, %v2972
        %v2982 = vadd.f32 %v2943, %v2972
        %v2983 = vadd.f32 %v2944, %v2972
        %v2984 = vadd.f32 %v2945, %v2972
        %v2985 = vadd.f32 %v2946, %v2972
        %v2986 = vadd.f32 %v2947, %v2972
        %v2987 = vadd.f32 %v2948, %v2972
        %v2988 = vadd.f32 %v2949, %v2972
        %v2989 = vadd.f32 %v2950, %v2972
        %v2990 = vadd.f32 %v2951, %v2972
        %v2991 = vadd.f32 %v2952, %v2972
        %v2992 = vadd.f32 %v2953, %v2972
        %v2993 = vadd.f32 %v2954, %v2972
        %v2994 = vadd.f32 %v2955, %v2972
        %v2995 = vadd.f32 %v2956, %v2972
        %v2996 = vadd.f32 %v2957, %v2972
        %v2997 = vadd.f32 %v2958, %v2972
        %v2998 = vadd.f32 %v2959, %v2972
        %v2999 = vadd.f32 %v2960, %v2972
        %v3000 = vadd.f32 %v2961, %v2972
        %v3001 = vadd.f32 %v2962, %v2972
        %v3002 = vadd.f32 %v2963, %v2972
        %v3003 = vadd.f32 %v2964, %v2972
        %v3004 = vadd.f32 %v2965, %v2972
        %v3005 = vadd.f32 %v2966, %v2972
        %v3006 = vmax.f32 %v2974, 0.0
        %v3007 = vmax.f32 %v2975, 0.0
        %v3008 = vmax.f32 %v2976, 0.0
        %v3009 = vmax.f32 %v2977, 0.0
        %v3010 = vmax.f32 %v2978, 0.0
        %v3011 = vmax.f32 %v2979, 0.0
        %v3012 = vmax.f32 %v2980, 0.0
        %v3013 = vmax.f32 %v2981, 0.0
        %v3014 = vmax.f32 %v2982, 0.0
        %v3015 = vmax.f32 %v2983, 0.0
        %v3016 = vmax.f32 %v2984, 0.0
        %v3017 = vmax.f32 %v2985, 0.0
        %v3018 = vmax.f32 %v2986, 0.0
        %v3019 = vmax.f32 %v2987, 0.0
        %v3020 = vmax.f32 %v2988, 0.0
        %v3021 = vmax.f32 %v2989, 0.0
        %v3022 = vmax.f32 %v2990, 0.0
        %v3023 = vmax.f32 %v2991, 0.0
        %v3024 = vmax.f32 %v2992, 0.0
        %v3025 = vmax.f32 %v2993, 0.0
        %v3026 = vmax.f32 %v2994, 0.0
        %v3027 = vmax.f32 %v2995, 0.0
        %v3028 = vmax.f32 %v2996, 0.0
        %v3029 = vmax.f32 %v2997, 0.0
        %v3030 = vmax.f32 %v2998, 0.0
        %v3031 = vmax.f32 %v2999, 0.0
        %v3032 = vmax.f32 %v3000, 0.0
        %v3033 = vmax.f32 %v3001, 0.0
        %v3034 = vmax.f32 %v3002, 0.0
        %v3035 = vmax.f32 %v3003, 0.0
        %v3036 = vmax.f32 %v3004, 0.0
        %v3037 = vmax.f32 %v3005, 0.0
        %v3038 = vmax.f32 %v3006, %v3014
        %v3039 = vmax.f32 %v3007, %v3015
        %v3040 = vmax.f32 %v3008, %v3016
        %v3041 = vmax.f32 %v3009, %v3017
        %v3042 = vmax.f32 %v3010, %v3018
        %v3043 = vmax.f32 %v3011, %v3019
        %v3044 = vmax.f32 %v3012, %v3020
        %v3045 = vmax.f32 %v3013, %v3021
        %v3046 = vmax.f32 %v3022, %v3030
        %v3047 = vmax.f32 %v3023, %v3031
        %v3048 = vmax.f32 %v3024, %v3032
        %v3049 = vmax.f32 %v3025, %v3033
        %v3050 = vmax.f32 %v3026, %v3034
        %v3051 = vmax.f32 %v3027, %v3035
        %v3052 = vmax.f32 %v3028, %v3036
        %v3053 = vmax.f32 %v3029, %v3037
        %v3054 = vmax.f32 %v3038, %v3046
        %v3055 = vmax.f32 %v3039, %v3047
        %v3056 = vmax.f32 %v3040, %v3048
        %v3057 = vmax.f32 %v3041, %v3049
        %v3058 = vmax.f32 %v3042, %v3050
        %v3059 = vmax.f32 %v3043, %v3051
        %v3060 = vmax.f32 %v3044, %v3052
        %v3061 = vmax.f32 %v3045, %v3053
        %v3062 = vpack.c.bf16 %v3055, %v3054
        %v3063 = vpack.c.bf16 %v3057, %v3056
        %v3064 = vpack.c.bf16 %v3059, %v3058
        %v3065 = vpack.c.bf16 %v3061, %v3060
        %v3070 = vunpack.c.l.b16 %v3062
        %v3071 = vunpack.c.h.b16 %v3062
        %v3072 = vunpack.c.l.b16 %v3063
        %v3073 = vunpack.c.h.b16 %v3063
        %v3074 = vunpack.c.l.b16 %v3064
        %v3075 = vunpack.c.h.b16 %v3064
        %v3076 = vunpack.c.l.b16 %v3065
        %v3077 = vunpack.c.h.b16 %v3065
        %v3078 = vpack.c.b16 %v3070, %v3070
        %v3079 = vpack.c.b16 %v3071, %v3071
        %v3080 = vpack.c.b16 %v3072, %v3072
        %v3081 = vpack.c.b16 %v3073, %v3073
        %v3082 = vpack.c.b16 %v3074, %v3074
        %v3083 = vpack.c.b16 %v3075, %v3075
        %v3084 = vpack.c.b16 %v3076, %v3076
        %v3085 = vpack.c.b16 %v3077, %v3077
        %3094 = vst [vmem:[%s525] sm:$0xf] %v3078
        %3095 = vst [vmem:[%s525 + $0x4] sm:$0xf] %v3079
        %3096 = vst [vmem:[%s525 + $0x8] sm:$0xf] %v3080
        %3097 = vst [vmem:[%s525 + $0xc] sm:$0xf] %v3081
        %3098 = vst [vmem:[%s525 + $0x10] sm:$0xf] %v3082
        %3099 = vst [vmem:[%s525 + $0x14] sm:$0xf] %v3083
        %3100 = vst [vmem:[%s525 + $0x18] sm:$0xf] %v3084
        %3101 = vst [vmem:[%s525 + $0x1c] sm:$0xf] %v3085
        %p3102 = scmp.lt.s32.totalorder %s15, 1
        %s3103 = scalar_select %p3102, %s15, 1
        %s3104 = smul.addr %s3103, 8
        %s3105 = smul.addr %s3104, 4
        %s3106 = scalar_lea.vmem %s4, %s3105
        // Predicated region
        $region78: #{simple_cnn_forward.3} parent=72 // pred_check
          %p3107 = pneg %p122
        $region79: #{simple_cnn_forward.3} parent=72 // pred_check_branch
          %3109 = sbr.rel (%p3107) target = $region81
        $region80: #{simple_cnn_forward.3} parent=72 // pred_region
          _
        $region81: #{simple_cnn_forward.3} parent=72 // pred_fallthru
          _
      $region73: #{simple_cnn_forward.3} parent=5 // pred_fallthru
        _
      %p3110 = scmp.le.s32.totalorder 2, %s10
      // Predicated region
      $region82: #{simple_cnn_forward.3} parent=5 // pred_check
        %p3111 = pneg %p3110
      $region83: #{simple_cnn_forward.3} parent=5 // pred_check_branch
        %3113 = sbr.rel (%p3111) target = $region85
      $region84: #{simple_cnn_forward.3} parent=5 // pred_region
        %s3114 = ssub.s32 %s10, 2
        // Predicated region
        $region86: #{simple_cnn_forward.3} parent=84 // pred_check
          %p3115 = pneg %p128
        $region87: #{simple_cnn_forward.3} parent=84 // pred_check_branch
          %3117 = sbr.rel (%p3115) target = $region89
        $region88: #{simple_cnn_forward.3} parent=84 // pred_region
          %p3118 = scmp.lt.s32.totalorder %s16, 1
          %s3119 = scalar_select %p3118, %s16, 1
          %s3120 = smul.addr %s3119, 8
          %s3121 = smul.addr %s3120, 4
          %s3122 = scalar_lea.vmem %s4, %s3121
        $region89: #{simple_cnn_forward.3} parent=84 // pred_fallthru
          _
      $region85: #{simple_cnn_forward.3} parent=5 // pred_fallthru
        _
    $region6: #{simple_cnn_forward.3} parent=1 // loop_footer
      %s14 = sadd.s32 1, %s10
    $region7: #{simple_cnn_forward.3} parent=1 // loop_footer_branch
      %9 = sbr.rel target = $region3
    $region8: #{simple_cnn_forward.3} parent=1 // loop_exit
      _

// kernel: simple_cnn_forward.4
$region0: #{simple_cnn_forward.4}
  #allocation0 [shape = 'u32[]', space=smem, size = 0x4, offset = 0x4, fixed_abs, tag = 'smem constant byte address 0x4 - core index']
  #allocation1 [shape = 'u32[144,128]{1,0:T(1,128)}', space=vmem, size = 0x12000, scoped, tag = 'internal scratch']
  %s0 = inlined_call_operand.vmem [shape: bf16[8,2,20,128], index: 0, kind: input, shape index: {}]
  %s1 = inlined_call_operand.vmem [shape: bf16[9,128,128], index: 1, kind: input, shape index: {}]
  %s2 = inlined_call_operand.vmem [shape: f32[1,128], index: 2, kind: input, shape index: {}]
  %s3 = inlined_call_operand.vmem [shape: f32[1,128], index: 3, kind: input, shape index: {}]
  %s4 = inlined_call_operand.vmem [shape: bf16[2,16,128], index: 4, kind: output, shape index: {}]
  %s5 = sld [smem:[#allocation0]]
  $region90: #{simple_cnn_forward.4} parent=0
    _
  %s7 = ssub.s32 1, %s5
  %s8 = scalar_select 0, %s7, %s5
  $region1: #{simple_cnn_forward.4} parent=0
    #allocation2 [shape = 'u8[98304]{0}', space=vmem, size = 0x18000, scoped, tag = 'input window, operand 0']
    loop: start=0, step=1, limit=4
    $region2: #{simple_cnn_forward.4} parent=1 // loop_pre_header
      _
    $region3: #{simple_cnn_forward.4} parent=1 // loop_header
      %s10 = sphi 0, %s14
      %p11 = scmp.ge.s32.totalorder %s10, 4
      %s20 = sphi 0, %s22
      %s23 = sphi 0, %s20
      %s24 = sphi 0, %s23
      %s40 = sphi 0, %s24
      %s44 = sphi 0, %s44
      %s46 = sphi 0, %s44
      %s47 = sphi 0, %s46
      %s61 = sphi 0, %s47
      %s65 = sphi 0, %s65
      %s67 = sphi 0, %s65
      %s68 = sphi 0, %s67
      %s82 = sphi 0, %s68
      %s86 = sphi 0, %s86
      %s88 = sphi 0, %s86
      %s89 = sphi 0, %s88
      %s103 = sphi 0, %s89
      %s109 = sphi 0, %s111
      %s112 = sphi 0, %s109
      %s113 = sphi 0, %s112
      %s129 = sphi 0, %s113
    $region4: #{simple_cnn_forward.4} parent=1 // loop_header_branch
      %13 = sbr.rel (%p11) target = $region8
    $region5: #{simple_cnn_forward.4} parent=1 // loop_body
      %s15 = ssub.s32 %s10, 1
      %s16 = ssub.s32 %s10, 2
      %s17 = sadd.s32 %s10, 1
      %s18 = ssub.s32 %s10, %s17
      %p19 = scmp.eq.s32.totalorder %s18, 0
      %s21 = sadd.s32 %s20, 1
      %s22 = scalar_select %p19, %s20, %s21
      %p25 = pneg %p19
      %p26 = scmp.eq.s32.totalorder %s10, 1
      %p27 = por %p25, %p26
      %p28 = scmp.ne.s32.totalorder %s20, %s23
      %p29 = scmp.eq.s32.totalorder %s10, 0
      %p30 = por %p28, %p29
      %p31 = scmp.ne.s32.totalorder %s20, %s23
      %p32 = scmp.eq.s32.totalorder %s15, 1
      %p33 = por %p31, %p32
      %p34 = scmp.ne.s32.totalorder %s23, %s24
      %p35 = scmp.eq.s32.totalorder %s15, 0
      %p36 = por %p34, %p35
      %p37 = scmp.ne.s32.totalorder %s23, %s24
      %p38 = scmp.eq.s32.totalorder %s16, 1
      %p39 = por %p37, %p38
      %p41 = scmp.ne.s32.totalorder %s24, %s40
      %p42 = scmp.eq.s32.totalorder %s16, 0
      %p43 = por %p41, %p42
      %s45 = sadd.s32 %s44, 1
      %p48 = scmp.eq.s32.totalorder %s10, 1
      %p49 = scmp.ne.s32.totalorder %s44, %s46
      %p50 = scmp.eq.s32.totalorder %s10, 0
      %p51 = por %p49, %p50
      %p52 = scmp.ne.s32.totalorder %s44, %s46
      %p53 = scmp.eq.s32.totalorder %s15, 1
      %p54 = por %p52, %p53
      %p55 = scmp.ne.s32.totalorder %s46, %s47
      %p56 = scmp.eq.s32.totalorder %s15, 0
      %p57 = por %p55, %p56
      %p58 = scmp.ne.s32.totalorder %s46, %s47
      %p59 = scmp.eq.s32.totalorder %s16, 1
      %p60 = por %p58, %p59
      %p62 = scmp.ne.s32.totalorder %s47, %s61
      %p63 = scmp.eq.s32.totalorder %s16, 0
      %p64 = por %p62, %p63
      %s66 = sadd.s32 %s65, 1
      %p69 = scmp.eq.s32.totalorder %s10, 1
      %p70 = scmp.ne.s32.totalorder %s65, %s67
      %p71 = scmp.eq.s32.totalorder %s10, 0
      %p72 = por %p70, %p71
      %p73 = scmp.ne.s32.totalorder %s65, %s67
      %p74 = scmp.eq.s32.totalorder %s15, 1
      %p75 = por %p73, %p74
      %p76 = scmp.ne.s32.totalorder %s67, %s68
      %p77 = scmp.eq.s32.totalorder %s15, 0
      %p78 = por %p76, %p77
      %p79 = scmp.ne.s32.totalorder %s67, %s68
      %p80 = scmp.eq.s32.totalorder %s16, 1
      %p81 = por %p79, %p80
      %p83 = scmp.ne.s32.totalorder %s68, %s82
      %p84 = scmp.eq.s32.totalorder %s16, 0
      %p85 = por %p83, %p84
      %s87 = sadd.s32 %s86, 1
      %p90 = scmp.eq.s32.totalorder %s10, 1
      %p91 = scmp.ne.s32.totalorder %s86, %s88
      %p92 = scmp.eq.s32.totalorder %s10, 0
      %p93 = por %p91, %p92
      %p94 = scmp.ne.s32.totalorder %s86, %s88
      %p95 = scmp.eq.s32.totalorder %s15, 1
      %p96 = por %p94, %p95
      %p97 = scmp.ne.s32.totalorder %s88, %s89
      %p98 = scmp.eq.s32.totalorder %s15, 0
      %p99 = por %p97, %p98
      %p100 = scmp.ne.s32.totalorder %s88, %s89
      %p101 = scmp.eq.s32.totalorder %s16, 1
      %p102 = por %p100, %p101
      %p104 = scmp.ne.s32.totalorder %s89, %s103
      %p105 = scmp.eq.s32.totalorder %s16, 0
      %p106 = por %p104, %p105
      %s107 = ssub.s32 %s10, %s17
      %p108 = scmp.eq.s32.totalorder %s107, 0
      %s110 = sadd.s32 %s109, 1
      %s111 = scalar_select %p108, %s109, %s110
      %p114 = pneg %p108
      %p115 = scmp.eq.s32.totalorder %s10, 1
      %p116 = por %p114, %p115
      %p117 = scmp.ne.s32.totalorder %s109, %s112
      %p118 = scmp.eq.s32.totalorder %s10, 0
      %p119 = por %p117, %p118
      %p120 = scmp.ne.s32.totalorder %s109, %s112
      %p121 = scmp.eq.s32.totalorder %s15, 1
      %p122 = por %p120, %p121
      %p123 = scmp.ne.s32.totalorder %s112, %s113
      %p124 = scmp.eq.s32.totalorder %s15, 0
      %p125 = por %p123, %p124
      %p126 = scmp.ne.s32.totalorder %s112, %s113
      %p127 = scmp.eq.s32.totalorder %s16, 1
      %p128 = por %p126, %p127
      %p130 = scmp.ne.s32.totalorder %s113, %s129
      %p131 = scmp.eq.s32.totalorder %s16, 0
      %p132 = por %p130, %p131
      %p133 = scmp.le.s32.totalorder 1, %s10
      %p134 = scmp.lt.s32.totalorder %s10, 3
      %p135 = pnand %p133, %p134
      %p136 = pneg %p135
      // Predicated region
      $region9: #{simple_cnn_forward.4} parent=5 // pred_check
        _
      $region10: #{simple_cnn_forward.4} parent=5 // pred_check_branch
        %138 = sbr.rel (%p135) target = $region12
      $region11: #{simple_cnn_forward.4} parent=5 // pred_region
        %s139 = ssub.s32 %s10, 1
        // Predicated region
        $region13: #{simple_cnn_forward.4} parent=11 // pred_check
          %p140 = pneg %p57
        $region14: #{simple_cnn_forward.4} parent=11 // pred_check_branch
          %142 = sbr.rel (%p140) target = $region16
        $region15: #{simple_cnn_forward.4} parent=11 // pred_region
          _
        $region16: #{simple_cnn_forward.4} parent=11 // pred_fallthru
          _
        // Predicated region
        $region17: #{simple_cnn_forward.4} parent=11 // pred_check
          %p143 = pneg %p78
        $region18: #{simple_cnn_forward.4} parent=11 // pred_check_branch
          %145 = sbr.rel (%p143) target = $region20
        $region19: #{simple_cnn_forward.4} parent=11 // pred_region
          _
        $region20: #{simple_cnn_forward.4} parent=11 // pred_fallthru
          _
        // Predicated region
        $region21: #{simple_cnn_forward.4} parent=11 // pred_check
          %p146 = pneg %p99
        $region22: #{simple_cnn_forward.4} parent=11 // pred_check_branch
          %148 = sbr.rel (%p146) target = $region24
        $region23: #{simple_cnn_forward.4} parent=11 // pred_region
          _
        $region24: #{simple_cnn_forward.4} parent=11 // pred_fallthru
          _
      $region12: #{simple_cnn_forward.4} parent=5 // pred_fallthru
        _
      %p149 = scmp.lt.s32.totalorder %s10, 2
      // Predicated region
      $region25: #{simple_cnn_forward.4} parent=5 // pred_check
        %p150 = pneg %p149
      $region26: #{simple_cnn_forward.4} parent=5 // pred_check_branch
        %152 = sbr.rel (%p150) target = $region28
      $region27: #{simple_cnn_forward.4} parent=5 // pred_region
        // Predicated region
        $region29: #{simple_cnn_forward.4} parent=27 // pred_check
          %p153 = pneg %p30
        $region30: #{simple_cnn_forward.4} parent=27 // pred_check_branch
          %155 = sbr.rel (%p153) target = $region32
        $region31: #{simple_cnn_forward.4} parent=27 // pred_region
          %s156 = sand.u32 %s20, 1
          %s157 = sand.u32 %s20, 1
          %s158 = smul.addr %s157, 96
          %s159 = scalar_lea.vmem [#allocation2], %s158
          %s160 = smul.addr %s10, 3
          %s161 = smul.addr %s160, 4
          %s162 = scalar_lea.vmem %s0, %s161
          // Predicated region
          $region33: #{simple_cnn_forward.4} parent=31 // pred_check
            _
          $region34: #{simple_cnn_forward.4} parent=31 // pred_check_branch
            %164 = sbr.rel (0) target = $region36
          $region35: #{simple_cnn_forward.4} parent=31 // pred_region
            // Predicated region
            $region37: #{simple_cnn_forward.4} parent=35 // pred_check
              _
            $region38: #{simple_cnn_forward.4} parent=35 // pred_check_branch
              %166 = sbr.rel target = $region40
            $region39: #{simple_cnn_forward.4} parent=35 // pred_region
              // Predicated region
              $region52: #{simple_cnn_forward.4} parent=39 // pred_check
                _
              $region53: #{simple_cnn_forward.4} parent=39 // pred_check_branch
                %228 = sbr.rel (0) target = $region55
              $region54: #{simple_cnn_forward.4} parent=39 // pred_region
                loop: start=0, step=1, limit=1
                $region56: #{simple_cnn_forward.4} parent=54 // loop_pre_header
                  _
                $region57: #{simple_cnn_forward.4} parent=54 // loop_header
                  %s230 = sphi 0, %s234
                  %p231 = scmp.ge.s32.totalorder %s230, 1
                  %s235 = sphi %s162, %s162
                  %s236 = sphi %s159, %s159
                $region58: #{simple_cnn_forward.4} parent=54 // loop_header_branch
                  %233 = sbr.rel (%p231) target = $region62
                $region59: #{simple_cnn_forward.4} parent=54 // loop_body
                  _
                $region60: #{simple_cnn_forward.4} parent=54 // loop_footer
                  %s234 = sadd.s32 1, %s230
                $region61: #{simple_cnn_forward.4} parent=54 // loop_footer_branch
                  %229 = sbr.rel target = $region57
                $region62: #{simple_cnn_forward.4} parent=54 // loop_exit
                  _
                %s238 = ssub.s32 16, 1
                loop: start=0, step=1, limit=1
                $region63: #{simple_cnn_forward.4} parent=54 // loop_pre_header
                  _
                $region64: #{simple_cnn_forward.4} parent=54 // loop_header
                  %s240 = sphi 0, %s244
                  %p241 = scmp.ge.s32.totalorder %s240, 1
                  %s245 = sphi %s162, %s162
                  %s246 = sphi %s159, %s159
                $region65: #{simple_cnn_forward.4} parent=54 // loop_header_branch
                  %243 = sbr.rel (%p241) target = $region69
                $region66: #{simple_cnn_forward.4} parent=54 // loop_body
                  %v247 = vld [vmem:[%s245] sm:%s238]
                  %248 = vst [vmem:[%s246] sm:%s238] %v247
                  %v249 = vld [vmem:[%s245 + $0x4] sm:%s238]
                  %250 = vst [vmem:[%s246 + $0x4] sm:%s238] %v249
                  %v251 = vld [vmem:[%s245 + $0x8] sm:%s238]
                  %252 = vst [vmem:[%s246 + $0x8] sm:%s238] %v251
                  %v253 = vld [vmem:[%s245 + $0x18] sm:%s238]
                  %254 = vst [vmem:[%s246 + $0xc] sm:%s238] %v253
                  %v255 = vld [vmem:[%s245 + $0x1c] sm:%s238]
                  %256 = vst [vmem:[%s246 + $0x10] sm:%s238] %v255
                  %v257 = vld [vmem:[%s245 + $0x20] sm:%s238]
                  %258 = vst [vmem:[%s246 + $0x14] sm:%s238] %v257
                  %v259 = vld [vmem:[%s245 + $0x30] sm:%s238]
                  %260 = vst [vmem:[%s246 + $0x18] sm:%s238] %v259
                  %v261 = vld [vmem:[%s245 + $0x34] sm:%s238]
                  %262 = vst [vmem:[%s246 + $0x1c] sm:%s238] %v261
                  %v263 = vld [vmem:[%s245 + $0x38] sm:%s238]
                  %264 = vst [vmem:[%s246 + $0x20] sm:%s238] %v263
                  %v265 = vld [vmem:[%s245 + $0x48] sm:%s238]
                  %266 = vst [vmem:[%s246 + $0x24] sm:%s238] %v265
                  %v267 = vld [vmem:[%s245 + $0x4c] sm:%s238]
                  %268 = vst [vmem:[%s246 + $0x28] sm:%s238] %v267
                  %v269 = vld [vmem:[%s245 + $0x50] sm:%s238]
                  %270 = vst [vmem:[%s246 + $0x2c] sm:%s238] %v269
                  %v271 = vld [vmem:[%s245 + $0x60] sm:%s238]
                  %272 = vst [vmem:[%s246 + $0x30] sm:%s238] %v271
                  %v273 = vld [vmem:[%s245 + $0x64] sm:%s238]
                  %274 = vst [vmem:[%s246 + $0x34] sm:%s238] %v273
                  %v275 = vld [vmem:[%s245 + $0x68] sm:%s238]
                  %276 = vst [vmem:[%s246 + $0x38] sm:%s238] %v275
                  %v277 = vld [vmem:[%s245 + $0x78] sm:%s238]
                  %278 = vst [vmem:[%s246 + $0x3c] sm:%s238] %v277
                  %v279 = vld [vmem:[%s245 + $0x7c] sm:%s238]
                  %280 = vst [vmem:[%s246 + $0x40] sm:%s238] %v279
                  %v281 = vld [vmem:[%s245 + $0x80] sm:%s238]
                  %282 = vst [vmem:[%s246 + $0x44] sm:%s238] %v281
                  %v283 = vld [vmem:[%s245 + $0x90] sm:%s238]
                  %284 = vst [vmem:[%s246 + $0x48] sm:%s238] %v283
                  %v285 = vld [vmem:[%s245 + $0x94] sm:%s238]
                  %286 = vst [vmem:[%s246 + $0x4c] sm:%s238] %v285
                  %v287 = vld [vmem:[%s245 + $0x98] sm:%s238]
                  %288 = vst [vmem:[%s246 + $0x50] sm:%s238] %v287
                  %v289 = vld [vmem:[%s245 + $0xa8] sm:%s238]
                  %290 = vst [vmem:[%s246 + $0x54] sm:%s238] %v289
                  %v291 = vld [vmem:[%s245 + $0xac] sm:%s238]
                  %292 = vst [vmem:[%s246 + $0x58] sm:%s238] %v291
                  %v293 = vld [vmem:[%s245 + $0xb0] sm:%s238]
                  %294 = vst [vmem:[%s246 + $0x5c] sm:%s238] %v293
                $region67: #{simple_cnn_forward.4} parent=54 // loop_footer
                  %s244 = sadd.s32 1, %s240
                $region68: #{simple_cnn_forward.4} parent=54 // loop_footer_branch
                  %239 = sbr.rel target = $region64
                $region69: #{simple_cnn_forward.4} parent=54 // loop_exit
                  _
              $region55: #{simple_cnn_forward.4} parent=39 // pred_fallthru
                _
            $region40: #{simple_cnn_forward.4} parent=35 // pred_fallthru
              _
            // Predicated region
            $region41: #{simple_cnn_forward.4} parent=35 // pred_check
              _
            $region42: #{simple_cnn_forward.4} parent=35 // pred_check_branch
              %168 = sbr.rel (0) target = $region44
            $region43: #{simple_cnn_forward.4} parent=35 // pred_region
              %s170 = ssub.s32 16, 1
              loop: start=0, step=1, limit=1
              $region45: #{simple_cnn_forward.4} parent=43 // loop_pre_header
                _
              $region46: #{simple_cnn_forward.4} parent=43 // loop_header
                %s172 = sphi 0, %s176
                %p173 = scmp.ge.s32.totalorder %s172, 1
                %s177 = sphi %s162, %s162
                %s178 = sphi %s159, %s159
              $region47: #{simple_cnn_forward.4} parent=43 // loop_header_branch
                %175 = sbr.rel (%p173) target = $region51
              $region48: #{simple_cnn_forward.4} parent=43 // loop_body
                %v179 = vld [vmem:[%s177] sm:%s170]
                %180 = vst [vmem:[%s178] sm:%s170] %v179
                %v181 = vld [vmem:[%s177 + $0x4] sm:%s170]
                %182 = vst [vmem:[%s178 + $0x4] sm:%s170] %v181
                %v183 = vld [vmem:[%s177 + $0x8] sm:%s170]
                %184 = vst [vmem:[%s178 + $0x8] sm:%s170] %v183
                %v185 = vld [vmem:[%s177 + $0x18] sm:%s170]
                %186 = vst [vmem:[%s178 + $0xc] sm:%s170] %v185
                %v187 = vld [vmem:[%s177 + $0x1c] sm:%s170]
                %188 = vst [vmem:[%s178 + $0x10] sm:%s170] %v187
                %v189 = vld [vmem:[%s177 + $0x20] sm:%s170]
                %190 = vst [vmem:[%s178 + $0x14] sm:%s170] %v189
                %v191 = vld [vmem:[%s177 + $0x30] sm:%s170]
                %192 = vst [vmem:[%s178 + $0x18] sm:%s170] %v191
                %v193 = vld [vmem:[%s177 + $0x34] sm:%s170]
                %194 = vst [vmem:[%s178 + $0x1c] sm:%s170] %v193
                %v195 = vld [vmem:[%s177 + $0x38] sm:%s170]
                %196 = vst [vmem:[%s178 + $0x20] sm:%s170] %v195
                %v197 = vld [vmem:[%s177 + $0x48] sm:%s170]
                %198 = vst [vmem:[%s178 + $0x24] sm:%s170] %v197
                %v199 = vld [vmem:[%s177 + $0x4c] sm:%s170]
                %200 = vst [vmem:[%s178 + $0x28] sm:%s170] %v199
                %v201 = vld [vmem:[%s177 + $0x50] sm:%s170]
                %202 = vst [vmem:[%s178 + $0x2c] sm:%s170] %v201
                %v203 = vld [vmem:[%s177 + $0x60] sm:%s170]
                %204 = vst [vmem:[%s178 + $0x30] sm:%s170] %v203
                %v205 = vld [vmem:[%s177 + $0x64] sm:%s170]
                %206 = vst [vmem:[%s178 + $0x34] sm:%s170] %v205
                %v207 = vld [vmem:[%s177 + $0x68] sm:%s170]
                %208 = vst [vmem:[%s178 + $0x38] sm:%s170] %v207
                %v209 = vld [vmem:[%s177 + $0x78] sm:%s170]
                %210 = vst [vmem:[%s178 + $0x3c] sm:%s170] %v209
                %v211 = vld [vmem:[%s177 + $0x7c] sm:%s170]
                %212 = vst [vmem:[%s178 + $0x40] sm:%s170] %v211
                %v213 = vld [vmem:[%s177 + $0x80] sm:%s170]
                %214 = vst [vmem:[%s178 + $0x44] sm:%s170] %v213
                %v215 = vld [vmem:[%s177 + $0x90] sm:%s170]
                %216 = vst [vmem:[%s178 + $0x48] sm:%s170] %v215
                %v217 = vld [vmem:[%s177 + $0x94] sm:%s170]
                %218 = vst [vmem:[%s178 + $0x4c] sm:%s170] %v217
                %v219 = vld [vmem:[%s177 + $0x98] sm:%s170]
                %220 = vst [vmem:[%s178 + $0x50] sm:%s170] %v219
                %v221 = vld [vmem:[%s177 + $0xa8] sm:%s170]
                %222 = vst [vmem:[%s178 + $0x54] sm:%s170] %v221
                %v223 = vld [vmem:[%s177 + $0xac] sm:%s170]
                %224 = vst [vmem:[%s178 + $0x58] sm:%s170] %v223
                %v225 = vld [vmem:[%s177 + $0xb0] sm:%s170]
                %226 = vst [vmem:[%s178 + $0x5c] sm:%s170] %v225
              $region49: #{simple_cnn_forward.4} parent=43 // loop_footer
                %s176 = sadd.s32 1, %s172
              $region50: #{simple_cnn_forward.4} parent=43 // loop_footer_branch
                %171 = sbr.rel target = $region46
              $region51: #{simple_cnn_forward.4} parent=43 // loop_exit
                _
            $region44: #{simple_cnn_forward.4} parent=35 // pred_fallthru
              _
          $region36: #{simple_cnn_forward.4} parent=31 // pred_fallthru
            _
          %295 = vnop
        $region32: #{simple_cnn_forward.4} parent=27 // pred_fallthru
          _
      $region28: #{simple_cnn_forward.4} parent=5 // pred_fallthru
        _
      %p296 = scmp.le.s32.totalorder 1, %s10
      %p297 = scmp.lt.s32.totalorder %s10, 3
      %p298 = pnand %p296, %p297
      %p299 = pneg %p298
      // Predicated region
      $region70: #{simple_cnn_forward.4} parent=5 // pred_check
        _
      $region71: #{simple_cnn_forward.4} parent=5 // pred_check_branch
        %301 = sbr.rel (%p298) target = $region73
      $region72: #{simple_cnn_forward.4} parent=5 // pred_region
        %s302 = ssub.s32 %s10, 1
        %s303 = sand.u32 %s23, 1
        %s304 = sand.u32 %s23, 1
        %s305 = smul.addr %s304, 96
        %s306 = scalar_lea.vmem [#allocation2], %s305
        // Predicated region
        $region74: #{simple_cnn_forward.4} parent=72 // pred_check
          %p307 = pneg %p36
        $region75: #{simple_cnn_forward.4} parent=72 // pred_check_branch
          %309 = sbr.rel (%p307) target = $region77
        $region76: #{simple_cnn_forward.4} parent=72 // pred_region
          _
        $region77: #{simple_cnn_forward.4} parent=72 // pred_fallthru
          _
        %s310 = sand.u32 %s23, 1
        %s311 = sand.u32 %s23, 1
        %s312 = smul.addr %s311, 96
        %s313 = scalar_lea.vmem [#allocation2], %s312
        %p314 = pneg %p36
        %p315 = pneg %p33
        %p316 = pneg %p57
        %p317 = pneg %p54
        %p318 = pneg %p78
        %p319 = pneg %p75
        %p320 = pneg %p99
        %p321 = pneg %p96
        %p322 = pneg %p125
        %p323 = pneg %p122
        %p324 = scmp.lt.s32.totalorder %s15, 1
        %s325 = scalar_select %p324, %s15, 1
        %s326 = smul.addr %s325, 2
        %s327 = smul.addr %s326, 4
        %s328 = scalar_lea.vmem %s4, %s327
        %p329 = scmp.lt.s32.totalorder %s15, 1
        %s330 = scalar_select %p329, %s15, 1
        %s331 = smul.addr %s330, 2
        %s332 = smul.addr %s331, 4
        %s333 = scalar_lea.vmem %s4, %s332
        %v335 = vld [vmem:[%s306] sm:$0xf]
        %v336 = vld [vmem:[%s306 + $0x4] sm:$0xf]
        %s337 = scalar_lea.vmem %s306, 24 [#allocation2]
        %v338 = vld [vmem:[%s337] sm:$0xf]
        %v339 = vld [vmem:[%s337 + $0x4] sm:$0xf]
        %s340 = scalar_lea.vmem %s306, 48 [#allocation2]
        %v341 = vld [vmem:[%s340] sm:$0xf]
        %v342 = vld [vmem:[%s340 + $0x4] sm:$0xf]
        %s343 = scalar_lea.vmem %s306, 72 [#allocation2]
        %v344 = vld [vmem:[%s343] sm:$0xf]
        %v345 = vld [vmem:[%s343 + $0x4] sm:$0xf]
        %v348 = vunpack.c.l.b16 %v335
        %v349 = vunpack.c.l.b16 %v336
        %v350 = vpack.c.b16 %v349, %v348
        %v354 = vunpack.c.l.b16 %v338
        %v355 = vunpack.c.l.b16 %v339
        %v356 = vpack.c.b16 %v355, %v354
        %v360 = vunpack.c.l.b16 %v341
        %v361 = vunpack.c.l.b16 %v342
        %v362 = vpack.c.b16 %v361, %v360
        %v366 = vunpack.c.l.b16 %v344
        %v367 = vunpack.c.l.b16 %v345
        %v368 = vpack.c.b16 %v367, %v366
        %v370 = vld [vmem:[%s1] sm:$0xf]
        %v371 = vld [vmem:[%s1 + $0x4] sm:$0xf]
        %v372 = vld [vmem:[%s1 + $0x8] sm:$0xf]
        %v373 = vld [vmem:[%s1 + $0xc] sm:$0xf]
        %v374 = vld [vmem:[%s1 + $0x10] sm:$0xf]
        %v375 = vld [vmem:[%s1 + $0x14] sm:$0xf]
        %v376 = vld [vmem:[%s1 + $0x18] sm:$0xf]
        %v377 = vld [vmem:[%s1 + $0x1c] sm:$0xf]
        %v378 = vld [vmem:[%s1 + $0x20] sm:$0xf]
        %v379 = vld [vmem:[%s1 + $0x24] sm:$0xf]
        %v380 = vld [vmem:[%s1 + $0x28] sm:$0xf]
        %v381 = vld [vmem:[%s1 + $0x2c] sm:$0xf]
        %v382 = vld [vmem:[%s1 + $0x30] sm:$0xf]
        %v383 = vld [vmem:[%s1 + $0x34] sm:$0xf]
        %v384 = vld [vmem:[%s1 + $0x38] sm:$0xf]
        %v385 = vld [vmem:[%s1 + $0x3c] sm:$0xf]
        %s386 = scalar_lea.vmem %s306, 12 [#allocation2]
        %v387 = vld [vmem:[%s386] sm:$0xf]
        %v388 = vld [vmem:[%s386 + $0x4] sm:$0xf]
        %s389 = scalar_lea.vmem %s306, 60 [#allocation2]
        %v390 = vld [vmem:[%s389] sm:$0xf]
        %v391 = vld [vmem:[%s389 + $0x4] sm:$0xf]
        %v394 = vunpack.c.l.b16 %v387
        %v395 = vunpack.c.l.b16 %v388
        %v396 = vpack.c.b16 %v395, %v394
        %v400 = vunpack.c.l.b16 %v390
        %v401 = vunpack.c.l.b16 %v391
        %v402 = vpack.c.b16 %v401, %v400
        %s404 = scalar_lea.vmem %s1, 64
        %v405 = vld [vmem:[%s404] sm:$0xf]
        %v406 = vld [vmem:[%s404 + $0x4] sm:$0xf]
        %v407 = vld [vmem:[%s404 + $0x8] sm:$0xf]
        %v408 = vld [vmem:[%s404 + $0xc] sm:$0xf]
        %v409 = vld [vmem:[%s404 + $0x10] sm:$0xf]
        %v410 = vld [vmem:[%s404 + $0x14] sm:$0xf]
        %v411 = vld [vmem:[%s404 + $0x18] sm:$0xf]
        %v412 = vld [vmem:[%s404 + $0x1c] sm:$0xf]
        %v413 = vld [vmem:[%s404 + $0x20] sm:$0xf]
        %v414 = vld [vmem:[%s404 + $0x24] sm:$0xf]
        %v415 = vld [vmem:[%s404 + $0x28] sm:$0xf]
        %v416 = vld [vmem:[%s404 + $0x2c] sm:$0xf]
        %v417 = vld [vmem:[%s404 + $0x30] sm:$0xf]
        %v418 = vld [vmem:[%s404 + $0x34] sm:$0xf]
        %v419 = vld [vmem:[%s404 + $0x38] sm:$0xf]
        %v420 = vld [vmem:[%s404 + $0x3c] sm:$0xf]
        %v437 = vunpack.c.l.b16 %v405
        %v438 = vunpack.c.l.b16 %v406
        %v439 = vunpack.c.l.b16 %v407
        %v440 = vunpack.c.l.b16 %v408
        %v441 = vunpack.c.l.b16 %v409
        %v442 = vunpack.c.l.b16 %v410
        %v443 = vunpack.c.l.b16 %v411
        %v444 = vunpack.c.l.b16 %v412
        %v445 = vunpack.c.l.b16 %v413
        %v446 = vunpack.c.l.b16 %v414
        %v447 = vunpack.c.l.b16 %v415
        %v448 = vunpack.c.l.b16 %v416
        %v449 = vunpack.c.l.b16 %v417
        %v450 = vunpack.c.l.b16 %v418
        %v451 = vunpack.c.l.b16 %v419
        %v452 = vunpack.c.l.b16 %v420
        %v453 = vpack.c.b16 %v438, %v437
        %v454 = vpack.c.b16 %v440, %v439
        %v455 = vpack.c.b16 %v442, %v441
        %v456 = vpack.c.b16 %v444, %v443
        %v457 = vpack.c.b16 %v446, %v445
        %v458 = vpack.c.b16 %v448, %v447
        %v459 = vpack.c.b16 %v450, %v449
        %v460 = vpack.c.b16 %v452, %v451
        %469 = vmatprep.subr.bf16.mxu0 0
        %470 = vmatpush1.bf16.msra.mxu0 %v460
        %471 = vmatprep.subr.bf16.mxu0 0
        %472 = vmatpush1.bf16.msra.mxu0 %v459
        %473 = vmatprep.subr.bf16.mxu0 0
        %474 = vmatpush1.bf16.msra.mxu0 %v458
        %475 = vmatprep.subr.bf16.mxu0 0
        %476 = vmatpush1.bf16.msra.mxu0 %v457
        %477 = vmatprep.subr.bf16.mxu0 0
        %478 = vmatpush1.bf16.msra.mxu0 %v456
        %479 = vmatprep.subr.bf16.mxu0 0
        %480 = vmatpush1.bf16.msra.mxu0 %v455
        %481 = vmatprep.subr.bf16.mxu0 0
        %482 = vmatpush1.bf16.msra.mxu0 %v454
        %483 = vmatprep.subr.bf16.mxu0 0
        %484 = vmatpush1.bf16.msra.mxu0 %v453
        %485 = vmatprep.subr.bf16.mxu0 0
        %486 = vmatpush2.bf16.msra.mxu0 0
        %487 = vmatprep.subr.bf16.mxu0 0
        %488 = vmatpush2.bf16.msra.mxu0 0
        %489 = vmatprep.subr.bf16.mxu0 0
        %490 = vmatpush2.bf16.msra.mxu0 0
        %491 = vmatprep.subr.bf16.mxu0 0
        %492 = vmatpush2.bf16.msra.mxu0 0
        %493 = vmatprep.subr.bf16.mxu0 0
        %494 = vmatpush2.bf16.msra.mxu0 0
        %495 = vmatprep.subr.bf16.mxu0 0
        %496 = vmatpush2.bf16.msra.mxu0 0
        %497 = vmatprep.subr.bf16.mxu0 0
        %498 = vmatpush2.bf16.msra.mxu0 0
        %499 = vmatprep.subr.bf16.mxu0 0
        %500 = vmatpush2.bf16.msra.mxu0 0
        %501 = vmatprep.mubr.bf16.mxu0 0
        %502 = vmatmul.mubr.bf16.gmra.mxu0 %v356
        %v503 = vpop.f32.mrf.mxu0
        %v504 = vadd.f32 0.0, %v503
        %v505 = vpop.f32.mrf.mxu0
        %v506 = vpop.f32.mrf.mxu0
        %v507 = vadd.f32 0.0, %v506
        %v508 = vpop.f32.mrf.mxu0
        %509 = vmatprep.mubr.bf16.mxu0 0
        %510 = vmatmul.mubr.bf16.gmra.mxu0 %v396
        %v511 = vpop.f32.mrf.mxu0
        %v512 = vadd.f32 0.0, %v511
        %v513 = vpop.f32.mrf.mxu0
        %v514 = vpop.f32.mrf.mxu0
        %v515 = vadd.f32 0.0, %v514
        %v516 = vpop.f32.mrf.mxu0
        %517 = vmatprep.mubr.bf16.mxu0 0
        %518 = vmatmul.mubr.bf16.gmra.mxu0 %v368
        %v519 = vpop.f32.mrf.mxu0
        %v520 = vadd.f32 0.0, %v519
        %v521 = vpop.f32.mrf.mxu0
        %v522 = vpop.f32.mrf.mxu0
        %v523 = vadd.f32 0.0, %v522
        %v524 = vpop.f32.mrf.mxu0
        %525 = vmatprep.mubr.bf16.mxu0 0
        %526 = vmatmul.mubr.bf16.gmra.mxu0 %v402
        %v527 = vpop.f32.mrf.mxu0
        %v528 = vadd.f32 0.0, %v527
        %v529 = vpop.f32.mrf.mxu0
        %v530 = vpop.f32.mrf.mxu0
        %v531 = vadd.f32 0.0, %v530
        %v532 = vpop.f32.mrf.mxu0
        %533 = vdwg.mxu0
        %v550 = vunpack.c.l.b16 %v370
        %v551 = vunpack.c.l.b16 %v371
        %v552 = vunpack.c.l.b16 %v372
        %v553 = vunpack.c.l.b16 %v373
        %v554 = vunpack.c.l.b16 %v374
        %v555 = vunpack.c.l.b16 %v375
        %v556 = vunpack.c.l.b16 %v376
        %v557 = vunpack.c.l.b16 %v377
        %v558 = vunpack.c.l.b16 %v378
        %v559 = vunpack.c.l.b16 %v379
        %v560 = vunpack.c.l.b16 %v380
        %v561 = vunpack.c.l.b16 %v381
        %v562 = vunpack.c.l.b16 %v382
        %v563 = vunpack.c.l.b16 %v383
        %v564 = vunpack.c.l.b16 %v384
        %v565 = vunpack.c.l.b16 %v385
        %v566 = vpack.c.b16 %v551, %v550
        %v567 = vpack.c.b16 %v553, %v552
        %v568 = vpack.c.b16 %v555, %v554
        %v569 = vpack.c.b16 %v557, %v556
        %v570 = vpack.c.b16 %v559, %v558
        %v571 = vpack.c.b16 %v561, %v560
        %v572 = vpack.c.b16 %v563, %v562
        %v573 = vpack.c.b16 %v565, %v564
        %582 = vmatprep.subr.bf16.mxu0 0
        %583 = vmatpush1.bf16.msra.mxu0 %v573
        %584 = vmatprep.subr.bf16.mxu0 0
        %585 = vmatpush1.bf16.msra.mxu0 %v572
        %586 = vmatprep.subr.bf16.mxu0 0
        %587 = vmatpush1.bf16.msra.mxu0 %v571
        %588 = vmatprep.subr.bf16.mxu0 0
        %589 = vmatpush1.bf16.msra.mxu0 %v570
        %590 = vmatprep.subr.bf16.mxu0 0
        %591 = vmatpush1.bf16.msra.mxu0 %v569
        %592 = vmatprep.subr.bf16.mxu0 0
        %593 = vmatpush1.bf16.msra.mxu0 %v568
        %594 = vmatprep.subr.bf16.mxu0 0
        %595 = vmatpush1.bf16.msra.mxu0 %v567
        %596 = vmatprep.subr.bf16.mxu0 0
        %597 = vmatpush1.bf16.msra.mxu0 %v566
        %598 = vmatprep.subr.bf16.mxu0 0
        %599 = vmatpush2.bf16.msra.mxu0 0
        %600 = vmatprep.subr.bf16.mxu0 0
        %601 = vmatpush2.bf16.msra.mxu0 0
        %602 = vmatprep.subr.bf16.mxu0 0
        %603 = vmatpush2.bf16.msra.mxu0 0
        %604 = vmatprep.subr.bf16.mxu0 0
        %605 = vmatpush2.bf16.msra.mxu0 0
        %606 = vmatprep.subr.bf16.mxu0 0
        %607 = vmatpush2.bf16.msra.mxu0 0
        %608 = vmatprep.subr.bf16.mxu0 0
        %609 = vmatpush2.bf16.msra.mxu0 0
        %610 = vmatprep.subr.bf16.mxu0 0
        %611 = vmatpush2.bf16.msra.mxu0 0
        %612 = vmatprep.subr.bf16.mxu0 0
        %613 = vmatpush2.bf16.msra.mxu0 0
        %614 = vmatprep.mubr.bf16.mxu0 0
        %615 = vmatmul.mubr.bf16.gmra.mxu0 %v350
        %v616 = vpop.f32.mrf.mxu0
        %v617 = vadd.f32 %v504, %v616
        %v618 = vpop.f32.mrf.mxu0
        %v619 = vpop.f32.mrf.mxu0
        %v620 = vadd.f32 %v507, %v619
        %v621 = vpop.f32.mrf.mxu0
        %622 = vmatprep.mubr.bf16.mxu0 0
        %623 = vmatmul.mubr.bf16.gmra.mxu0 %v356
        %v624 = vpop.f32.mrf.mxu0
        %v625 = vadd.f32 %v512, %v624
        %v626 = vpop.f32.mrf.mxu0
        %v627 = vpop.f32.mrf.mxu0
        %v628 = vadd.f32 %v515, %v627
        %v629 = vpop.f32.mrf.mxu0
        %630 = vmatprep.mubr.bf16.mxu0 0
        %631 = vmatmul.mubr.bf16.gmra.mxu0 %v362
        %v632 = vpop.f32.mrf.mxu0
        %v633 = vadd.f32 %v520, %v632
        %v634 = vpop.f32.mrf.mxu0
        %v635 = vpop.f32.mrf.mxu0
        %v636 = vadd.f32 %v523, %v635
        %v637 = vpop.f32.mrf.mxu0
        %638 = vmatprep.mubr.bf16.mxu0 0
        %639 = vmatmul.mubr.bf16.gmra.mxu0 %v368
        %v640 = vpop.f32.mrf.mxu0
        %v641 = vadd.f32 %v528, %v640
        %v642 = vpop.f32.mrf.mxu0
        %v643 = vpop.f32.mrf.mxu0
        %v644 = vadd.f32 %v531, %v643
        %v645 = vpop.f32.mrf.mxu0
        %646 = vdwg.mxu0
        %s647 = scalar_lea.vmem %s306, 36 [#allocation2]
        %v648 = vld [vmem:[%s647] sm:$0xf]
        %v649 = vld [vmem:[%s647 + $0x4] sm:$0xf]
        %s650 = scalar_lea.vmem %s306, 84 [#allocation2]
        %v651 = vld [vmem:[%s650] sm:$0xf]
        %v652 = vld [vmem:[%s650 + $0x4] sm:$0xf]
        %v655 = vunpack.c.l.b16 %v648
        %v656 = vunpack.c.l.b16 %v649
        %v657 = vpack.c.b16 %v656, %v655
        %v661 = vunpack.c.l.b16 %v651
        %v662 = vunpack.c.l.b16 %v652
        %v663 = vpack.c.b16 %v662, %v661
        %s665 = scalar_lea.vmem %s1, 128
        %v666 = vld [vmem:[%s665] sm:$0xf]
        %v667 = vld [vmem:[%s665 + $0x4] sm:$0xf]
        %v668 = vld [vmem:[%s665 + $0x8] sm:$0xf]
        %v669 = vld [vmem:[%s665 + $0xc] sm:$0xf]
        %v670 = vld [vmem:[%s665 + $0x10] sm:$0xf]
        %v671 = vld [vmem:[%s665 + $0x14] sm:$0xf]
        %v672 = vld [vmem:[%s665 + $0x18] sm:$0xf]
        %v673 = vld [vmem:[%s665 + $0x1c] sm:$0xf]
        %v674 = vld [vmem:[%s665 + $0x20] sm:$0xf]
        %v675 = vld [vmem:[%s665 + $0x24] sm:$0xf]
        %v676 = vld [vmem:[%s665 + $0x28] sm:$0xf]
        %v677 = vld [vmem:[%s665 + $0x2c] sm:$0xf]
        %v678 = vld [vmem:[%s665 + $0x30] sm:$0xf]
        %v679 = vld [vmem:[%s665 + $0x34] sm:$0xf]
        %v680 = vld [vmem:[%s665 + $0x38] sm:$0xf]
        %v681 = vld [vmem:[%s665 + $0x3c] sm:$0xf]
        %v698 = vunpack.c.l.b16 %v666
        %v699 = vunpack.c.l.b16 %v667
        %v700 = vunpack.c.l.b16 %v668
        %v701 = vunpack.c.l.b16 %v669
        %v702 = vunpack.c.l.b16 %v670
        %v703 = vunpack.c.l.b16 %v671
        %v704 = vunpack.c.l.b16 %v672
        %v705 = vunpack.c.l.b16 %v673
        %v706 = vunpack.c.l.b16 %v674
        %v707 = vunpack.c.l.b16 %v675
        %v708 = vunpack.c.l.b16 %v676
        %v709 = vunpack.c.l.b16 %v677
        %v710 = vunpack.c.l.b16 %v678
        %v711 = vunpack.c.l.b16 %v679
        %v712 = vunpack.c.l.b16 %v680
        %v713 = vunpack.c.l.b16 %v681
        %v714 = vpack.c.b16 %v699, %v698
        %v715 = vpack.c.b16 %v701, %v700
        %v716 = vpack.c.b16 %v703, %v702
        %v717 = vpack.c.b16 %v705, %v704
        %v718 = vpack.c.b16 %v707, %v706
        %v719 = vpack.c.b16 %v709, %v708
        %v720 = vpack.c.b16 %v711, %v710
        %v721 = vpack.c.b16 %v713, %v712
        %730 = vmatprep.subr.bf16.mxu0 0
        %731 = vmatpush1.bf16.msra.mxu0 %v721
        %732 = vmatprep.subr.bf16.mxu0 0
        %733 = vmatpush1.bf16.msra.mxu0 %v720
        %734 = vmatprep.subr.bf16.mxu0 0
        %735 = vmatpush1.bf16.msra.mxu0 %v719
        %736 = vmatprep.subr.bf16.mxu0 0
        %737 = vmatpush1.bf16.msra.mxu0 %v718
        %738 = vmatprep.subr.bf16.mxu0 0
        %739 = vmatpush1.bf16.msra.mxu0 %v717
        %740 = vmatprep.subr.bf16.mxu0 0
        %741 = vmatpush1.bf16.msra.mxu0 %v716
        %742 = vmatprep.subr.bf16.mxu0 0
        %743 = vmatpush1.bf16.msra.mxu0 %v715
        %744 = vmatprep.subr.bf16.mxu0 0
        %745 = vmatpush1.bf16.msra.mxu0 %v714
        %746 = vmatprep.subr.bf16.mxu0 0
        %747 = vmatpush2.bf16.msra.mxu0 0
        %748 = vmatprep.subr.bf16.mxu0 0
        %749 = vmatpush2.bf16.msra.mxu0 0
        %750 = vmatprep.subr.bf16.mxu0 0
        %751 = vmatpush2.bf16.msra.mxu0 0
        %752 = vmatprep.subr.bf16.mxu0 0
        %753 = vmatpush2.bf16.msra.mxu0 0
        %754 = vmatprep.subr.bf16.mxu0 0
        %755 = vmatpush2.bf16.msra.mxu0 0
        %756 = vmatprep.subr.bf16.mxu0 0
        %757 = vmatpush2.bf16.msra.mxu0 0
        %758 = vmatprep.subr.bf16.mxu0 0
        %759 = vmatpush2.bf16.msra.mxu0 0
        %760 = vmatprep.subr.bf16.mxu0 0
        %761 = vmatpush2.bf16.msra.mxu0 0
        %762 = vmatprep.mubr.bf16.mxu0 0
        %763 = vmatmul.mubr.bf16.gmra.mxu0 %v396
        %v764 = vpop.f32.mrf.mxu0
        %v765 = vadd.f32 0.0, %v764
        %v766 = vpop.f32.mrf.mxu0
        %v767 = vpop.f32.mrf.mxu0
        %v768 = vadd.f32 0.0, %v767
        %v769 = vpop.f32.mrf.mxu0
        %770 = vmatprep.mubr.bf16.mxu0 0
        %771 = vmatmul.mubr.bf16.gmra.mxu0 %v657
        %v772 = vpop.f32.mrf.mxu0
        %v773 = vadd.f32 0.0, %v772
        %v774 = vpop.f32.mrf.mxu0
        %v775 = vpop.f32.mrf.mxu0
        %v776 = vadd.f32 0.0, %v775
        %v777 = vpop.f32.mrf.mxu0
        %778 = vmatprep.mubr.bf16.mxu0 0
        %779 = vmatmul.mubr.bf16.gmra.mxu0 %v402
        %v780 = vpop.f32.mrf.mxu0
        %v781 = vadd.f32 0.0, %v780
        %v782 = vpop.f32.mrf.mxu0
        %v783 = vpop.f32.mrf.mxu0
        %v784 = vadd.f32 0.0, %v783
        %v785 = vpop.f32.mrf.mxu0
        %786 = vmatprep.mubr.bf16.mxu0 0
        %787 = vmatmul.mubr.bf16.gmra.mxu0 %v663
        %v788 = vpop.f32.mrf.mxu0
        %v789 = vadd.f32 0.0, %v788
        %v790 = vpop.f32.mrf.mxu0
        %v791 = vpop.f32.mrf.mxu0
        %v792 = vadd.f32 0.0, %v791
        %v793 = vpop.f32.mrf.mxu0
        %794 = vdwg.mxu0
        %v795 = vadd.f32 %v617, %v765
        %v796 = vadd.f32 %v620, %v768
        %v797 = vadd.f32 %v625, %v773
        %v798 = vadd.f32 %v628, %v776
        %v799 = vadd.f32 %v633, %v781
        %v800 = vadd.f32 %v636, %v784
        %v801 = vadd.f32 %v641, %v789
        %v802 = vadd.f32 %v644, %v792
        %v803 = vld [vmem:[%s306] sm:$0xc]
        %v804 = vld [vmem:[%s306 + $0x4] sm:$0xf]
        %v805 = vld [vmem:[%s306 + $0x8] sm:$0x3]
        %v806 = vld [vmem:[%s337] sm:$0xc]
        %v807 = vld [vmem:[%s337 + $0x4] sm:$0xf]
        %v808 = vld [vmem:[%s337 + $0x8] sm:$0x3]
        %v812 = vunpack.c.l.b16 %v803
        %v813 = vunpack.c.l.b16 %v804
        %v814 = vunpack.c.l.b16 %v805
        %v815 = vpack.c.b16 %v813, %v812
        %v816 = vpack.c.b16 %v814, %v814
        %vm817 = vcmask 1045504
        %v818 = vrot.slane %v815, 2
        %v819 = vrot.slane %v816, 2
        %v820 = vsel %vm817, %v818, %v819
        %v825 = vunpack.c.l.b16 %v806
        %v826 = vunpack.c.l.b16 %v807
        %v827 = vunpack.c.l.b16 %v808
        %v828 = vpack.c.b16 %v826, %v825
        %v829 = vpack.c.b16 %v827, %v827
        %v830 = vrot.slane %v828, 2
        %v831 = vrot.slane %v829, 2
        %v832 = vsel %vm817, %v830, %v831
        %s834 = scalar_lea.vmem %s1, 192
        %v835 = vld [vmem:[%s834] sm:$0xf]
        %v836 = vld [vmem:[%s834 + $0x4] sm:$0xf]
        %v837 = vld [vmem:[%s834 + $0x8] sm:$0xf]
        %v838 = vld [vmem:[%s834 + $0xc] sm:$0xf]
        %v839 = vld [vmem:[%s834 + $0x10] sm:$0xf]
        %v840 = vld [vmem:[%s834 + $0x14] sm:$0xf]
        %v841 = vld [vmem:[%s834 + $0x18] sm:$0xf]
        %v842 = vld [vmem:[%s834 + $0x1c] sm:$0xf]
        %v843 = vld [vmem:[%s834 + $0x20] sm:$0xf]
        %v844 = vld [vmem:[%s834 + $0x24] sm:$0xf]
        %v845 = vld [vmem:[%s834 + $0x28] sm:$0xf]
        %v846 = vld [vmem:[%s834 + $0x2c] sm:$0xf]
        %v847 = vld [vmem:[%s834 + $0x30] sm:$0xf]
        %v848 = vld [vmem:[%s834 + $0x34] sm:$0xf]
        %v849 = vld [vmem:[%s834 + $0x38] sm:$0xf]
        %v850 = vld [vmem:[%s834 + $0x3c] sm:$0xf]
        %v867 = vunpack.c.l.b16 %v835
        %v868 = vunpack.c.l.b16 %v836
        %v869 = vunpack.c.l.b16 %v837
        %v870 = vunpack.c.l.b16 %v838
        %v871 = vunpack.c.l.b16 %v839
        %v872 = vunpack.c.l.b16 %v840
        %v873 = vunpack.c.l.b16 %v841
        %v874 = vunpack.c.l.b16 %v842
        %v875 = vunpack.c.l.b16 %v843
        %v876 = vunpack.c.l.b16 %v844
        %v877 = vunpack.c.l.b16 %v845
        %v878 = vunpack.c.l.b16 %v846
        %v879 = vunpack.c.l.b16 %v847
        %v880 = vunpack.c.l.b16 %v848
        %v881 = vunpack.c.l.b16 %v849
        %v882 = vunpack.c.l.b16 %v850
        %v883 = vpack.c.b16 %v868, %v867
        %v884 = vpack.c.b16 %v870, %v869
        %v885 = vpack.c.b16 %v872, %v871
        %v886 = vpack.c.b16 %v874, %v873
        %v887 = vpack.c.b16 %v876, %v875
        %v888 = vpack.c.b16 %v878, %v877
        %v889 = vpack.c.b16 %v880, %v879
        %v890 = vpack.c.b16 %v882, %v881
        %899 = vmatprep.subr.bf16.mxu0 0
        %900 = vmatpush1.bf16.msra.mxu0 %v890
        %901 = vmatprep.subr.bf16.mxu0 0
        %902 = vmatpush1.bf16.msra.mxu0 %v889
        %903 = vmatprep.subr.bf16.mxu0 0
        %904 = vmatpush1.bf16.msra.mxu0 %v888
        %905 = vmatprep.subr.bf16.mxu0 0
        %906 = vmatpush1.bf16.msra.mxu0 %v887
        %907 = vmatprep.subr.bf16.mxu0 0
        %908 = vmatpush1.bf16.msra.mxu0 %v886
        %909 = vmatprep.subr.bf16.mxu0 0
        %910 = vmatpush1.bf16.msra.mxu0 %v885
        %911 = vmatprep.subr.bf16.mxu0 0
        %912 = vmatpush1.bf16.msra.mxu0 %v884
        %913 = vmatprep.subr.bf16.mxu0 0
        %914 = vmatpush1.bf16.msra.mxu0 %v883
        %915 = vmatprep.subr.bf16.mxu0 0
        %916 = vmatpush2.bf16.msra.mxu0 0
        %917 = vmatprep.subr.bf16.mxu0 0
        %918 = vmatpush2.bf16.msra.mxu0 0
        %919 = vmatprep.subr.bf16.mxu0 0
        %920 = vmatpush2.bf16.msra.mxu0 0
        %921 = vmatprep.subr.bf16.mxu0 0
        %922 = vmatpush2.bf16.msra.mxu0 0
        %923 = vmatprep.subr.bf16.mxu0 0
        %924 = vmatpush2.bf16.msra.mxu0 0
        %925 = vmatprep.subr.bf16.mxu0 0
        %926 = vmatpush2.bf16.msra.mxu0 0
        %927 = vmatprep.subr.bf16.mxu0 0
        %928 = vmatpush2.bf16.msra.mxu0 0
        %929 = vmatprep.subr.bf16.mxu0 0
        %930 = vmatpush2.bf16.msra.mxu0 0
        %931 = vmatprep.mubr.bf16.mxu0 0
        %932 = vmatmul.mubr.bf16.gmra.mxu0 %v362
        %v933 = vpop.f32.mrf.mxu0
        %v934 = vadd.f32 0.0, %v933
        %v935 = vpop.f32.mrf.mxu0
        %v936 = vpop.f32.mrf.mxu0
        %v937 = vadd.f32 0.0, %v936
        %v938 = vpop.f32.mrf.mxu0
        %939 = vmatprep.mubr.bf16.mxu0 0
        %940 = vmatmul.mubr.bf16.gmra.mxu0 %v368
        %v941 = vpop.f32.mrf.mxu0
        %v942 = vadd.f32 0.0, %v941
        %v943 = vpop.f32.mrf.mxu0
        %v944 = vpop.f32.mrf.mxu0
        %v945 = vadd.f32 0.0, %v944
        %v946 = vpop.f32.mrf.mxu0
        %947 = vmatprep.mubr.bf16.mxu0 0
        %948 = vmatmul.mubr.bf16.gmra.mxu0 %v820
        %v949 = vpop.f32.mrf.mxu0
        %v950 = vadd.f32 0.0, %v949
        %v951 = vpop.f32.mrf.mxu0
        %v952 = vpop.f32.mrf.mxu0
        %v953 = vadd.f32 0.0, %v952
        %v954 = vpop.f32.mrf.mxu0
        %955 = vmatprep.mubr.bf16.mxu0 0
        %956 = vmatmul.mubr.bf16.gmra.mxu0 %v832
        %v957 = vpop.f32.mrf.mxu0
        %v958 = vadd.f32 0.0, %v957
        %v959 = vpop.f32.mrf.mxu0
        %v960 = vpop.f32.mrf.mxu0
        %v961 = vadd.f32 0.0, %v960
        %v962 = vpop.f32.mrf.mxu0
        %963 = vdwg.mxu0
        %v964 = vadd.f32 %v795, %v934
        %v965 = vadd.f32 %v796, %v937
        %v966 = vadd.f32 %v797, %v942
        %v967 = vadd.f32 %v798, %v945
        %v968 = vadd.f32 %v799, %v950
        %v969 = vadd.f32 %v800, %v953
        %v970 = vadd.f32 %v801, %v958
        %v971 = vadd.f32 %v802, %v961
        %v972 = vld [vmem:[%s386] sm:$0xc]
        %v973 = vld [vmem:[%s386 + $0x4] sm:$0xf]
        %v974 = vld [vmem:[%s386 + $0x8] sm:$0x3]
        %v978 = vunpack.c.l.b16 %v972
        %v979 = vunpack.c.l.b16 %v973
        %v980 = vunpack.c.l.b16 %v974
        %v981 = vpack.c.b16 %v979, %v978
        %v982 = vpack.c.b16 %v980, %v980
        %v983 = vrot.slane %v981, 2
        %v984 = vrot.slane %v982, 2
        %v985 = vsel %vm817, %v983, %v984
        %s987 = scalar_lea.vmem %s1, 256
        %v988 = vld [vmem:[%s987] sm:$0xf]
        %v989 = vld [vmem:[%s987 + $0x4] sm:$0xf]
        %v990 = vld [vmem:[%s987 + $0x8] sm:$0xf]
        %v991 = vld [vmem:[%s987 + $0xc] sm:$0xf]
        %v992 = vld [vmem:[%s987 + $0x10] sm:$0xf]
        %v993 = vld [vmem:[%s987 + $0x14] sm:$0xf]
        %v994 = vld [vmem:[%s987 + $0x18] sm:$0xf]
        %v995 = vld [vmem:[%s987 + $0x1c] sm:$0xf]
        %v996 = vld [vmem:[%s987 + $0x20] sm:$0xf]
        %v997 = vld [vmem:[%s987 + $0x24] sm:$0xf]
        %v998 = vld [vmem:[%s987 + $0x28] sm:$0xf]
        %v999 = vld [vmem:[%s987 + $0x2c] sm:$0xf]
        %v1000 = vld [vmem:[%s987 + $0x30] sm:$0xf]
        %v1001 = vld [vmem:[%s987 + $0x34] sm:$0xf]
        %v1002 = vld [vmem:[%s987 + $0x38] sm:$0xf]
        %v1003 = vld [vmem:[%s987 + $0x3c] sm:$0xf]
        %v1020 = vunpack.c.l.b16 %v988
        %v1021 = vunpack.c.l.b16 %v989
        %v1022 = vunpack.c.l.b16 %v990
        %v1023 = vunpack.c.l.b16 %v991
        %v1024 = vunpack.c.l.b16 %v992
        %v1025 = vunpack.c.l.b16 %v993
        %v1026 = vunpack.c.l.b16 %v994
        %v1027 = vunpack.c.l.b16 %v995
        %v1028 = vunpack.c.l.b16 %v996
        %v1029 = vunpack.c.l.b16 %v997
        %v1030 = vunpack.c.l.b16 %v998
        %v1031 = vunpack.c.l.b16 %v999
        %v1032 = vunpack.c.l.b16 %v1000
        %v1033 = vunpack.c.l.b16 %v1001
        %v1034 = vunpack.c.l.b16 %v1002
        %v1035 = vunpack.c.l.b16 %v1003
        %v1036 = vpack.c.b16 %v1021, %v1020
        %v1037 = vpack.c.b16 %v1023, %v1022
        %v1038 = vpack.c.b16 %v1025, %v1024
        %v1039 = vpack.c.b16 %v1027, %v1026
        %v1040 = vpack.c.b16 %v1029, %v1028
        %v1041 = vpack.c.b16 %v1031, %v1030
        %v1042 = vpack.c.b16 %v1033, %v1032
        %v1043 = vpack.c.b16 %v1035, %v1034
        %1052 = vmatprep.subr.bf16.mxu0 0
        %1053 = vmatpush1.bf16.msra.mxu0 %v1043
        %1054 = vmatprep.subr.bf16.mxu0 0
        %1055 = vmatpush1.bf16.msra.mxu0 %v1042
        %1056 = vmatprep.subr.bf16.mxu0 0
        %1057 = vmatpush1.bf16.msra.mxu0 %v1041
        %1058 = vmatprep.subr.bf16.mxu0 0
        %1059 = vmatpush1.bf16.msra.mxu0 %v1040
        %1060 = vmatprep.subr.bf16.mxu0 0
        %1061 = vmatpush1.bf16.msra.mxu0 %v1039
        %1062 = vmatprep.subr.bf16.mxu0 0
        %1063 = vmatpush1.bf16.msra.mxu0 %v1038
        %1064 = vmatprep.subr.bf16.mxu0 0
        %1065 = vmatpush1.bf16.msra.mxu0 %v1037
        %1066 = vmatprep.subr.bf16.mxu0 0
        %1067 = vmatpush1.bf16.msra.mxu0 %v1036
        %1068 = vmatprep.subr.bf16.mxu0 0
        %1069 = vmatpush2.bf16.msra.mxu0 0
        %1070 = vmatprep.subr.bf16.mxu0 0
        %1071 = vmatpush2.bf16.msra.mxu0 0
        %1072 = vmatprep.subr.bf16.mxu0 0
        %1073 = vmatpush2.bf16.msra.mxu0 0
        %1074 = vmatprep.subr.bf16.mxu0 0
        %1075 = vmatpush2.bf16.msra.mxu0 0
        %1076 = vmatprep.subr.bf16.mxu0 0
        %1077 = vmatpush2.bf16.msra.mxu0 0
        %1078 = vmatprep.subr.bf16.mxu0 0
        %1079 = vmatpush2.bf16.msra.mxu0 0
        %1080 = vmatprep.subr.bf16.mxu0 0
        %1081 = vmatpush2.bf16.msra.mxu0 0
        %1082 = vmatprep.subr.bf16.mxu0 0
        %1083 = vmatpush2.bf16.msra.mxu0 0
        %1084 = vmatprep.mubr.bf16.mxu0 0
        %1085 = vmatmul.mubr.bf16.gmra.mxu0 %v368
        %v1086 = vpop.f32.mrf.mxu0
        %v1087 = vadd.f32 0.0, %v1086
        %v1088 = vpop.f32.mrf.mxu0
        %v1089 = vpop.f32.mrf.mxu0
        %v1090 = vadd.f32 0.0, %v1089
        %v1091 = vpop.f32.mrf.mxu0
        %1092 = vmatprep.mubr.bf16.mxu0 0
        %1093 = vmatmul.mubr.bf16.gmra.mxu0 %v402
        %v1094 = vpop.f32.mrf.mxu0
        %v1095 = vadd.f32 0.0, %v1094
        %v1096 = vpop.f32.mrf.mxu0
        %v1097 = vpop.f32.mrf.mxu0
        %v1098 = vadd.f32 0.0, %v1097
        %v1099 = vpop.f32.mrf.mxu0
        %1100 = vmatprep.mubr.bf16.mxu0 0
        %1101 = vmatmul.mubr.bf16.gmra.mxu0 %v832
        %v1102 = vpop.f32.mrf.mxu0
        %v1103 = vadd.f32 0.0, %v1102
        %v1104 = vpop.f32.mrf.mxu0
        %v1105 = vpop.f32.mrf.mxu0
        %v1106 = vadd.f32 0.0, %v1105
        %v1107 = vpop.f32.mrf.mxu0
        %1108 = vmatprep.mubr.bf16.mxu0 0
        %1109 = vmatmul.mubr.bf16.gmra.mxu0 %v985
        %v1110 = vpop.f32.mrf.mxu0
        %v1111 = vadd.f32 0.0, %v1110
        %v1112 = vpop.f32.mrf.mxu0
        %v1113 = vpop.f32.mrf.mxu0
        %v1114 = vadd.f32 0.0, %v1113
        %v1115 = vpop.f32.mrf.mxu0
        %1116 = vdwg.mxu0
        %v1117 = vadd.f32 %v964, %v1087
        %v1118 = vadd.f32 %v965, %v1090
        %v1119 = vadd.f32 %v966, %v1095
        %v1120 = vadd.f32 %v967, %v1098
        %v1121 = vadd.f32 %v968, %v1103
        %v1122 = vadd.f32 %v969, %v1106
        %v1123 = vadd.f32 %v970, %v1111
        %v1124 = vadd.f32 %v971, %v1114
        %v1125 = vld [vmem:[%s647] sm:$0xc]
        %v1126 = vld [vmem:[%s647 + $0x4] sm:$0xf]
        %v1127 = vld [vmem:[%s647 + $0x8] sm:$0x3]
        %v1131 = vunpack.c.l.b16 %v1125
        %v1132 = vunpack.c.l.b16 %v1126
        %v1133 = vunpack.c.l.b16 %v1127
        %v1134 = vpack.c.b16 %v1132, %v1131
        %v1135 = vpack.c.b16 %v1133, %v1133
        %v1136 = vrot.slane %v1134, 2
        %v1137 = vrot.slane %v1135, 2
        %v1138 = vsel %vm817, %v1136, %v1137
        %s1140 = scalar_lea.vmem %s1, 320
        %v1141 = vld [vmem:[%s1140] sm:$0xf]
        %v1142 = vld [vmem:[%s1140 + $0x4] sm:$0xf]
        %v1143 = vld [vmem:[%s1140 + $0x8] sm:$0xf]
        %v1144 = vld [vmem:[%s1140 + $0xc] sm:$0xf]
        %v1145 = vld [vmem:[%s1140 + $0x10] sm:$0xf]
        %v1146 = vld [vmem:[%s1140 + $0x14] sm:$0xf]
        %v1147 = vld [vmem:[%s1140 + $0x18] sm:$0xf]
        %v1148 = vld [vmem:[%s1140 + $0x1c] sm:$0xf]
        %v1149 = vld [vmem:[%s1140 + $0x20] sm:$0xf]
        %v1150 = vld [vmem:[%s1140 + $0x24] sm:$0xf]
        %v1151 = vld [vmem:[%s1140 + $0x28] sm:$0xf]
        %v1152 = vld [vmem:[%s1140 + $0x2c] sm:$0xf]
        %v1153 = vld [vmem:[%s1140 + $0x30] sm:$0xf]
        %v1154 = vld [vmem:[%s1140 + $0x34] sm:$0xf]
        %v1155 = vld [vmem:[%s1140 + $0x38] sm:$0xf]
        %v1156 = vld [vmem:[%s1140 + $0x3c] sm:$0xf]
        %v1173 = vunpack.c.l.b16 %v1141
        %v1174 = vunpack.c.l.b16 %v1142
        %v1175 = vunpack.c.l.b16 %v1143
        %v1176 = vunpack.c.l.b16 %v1144
        %v1177 = vunpack.c.l.b16 %v1145
        %v1178 = vunpack.c.l.b16 %v1146
        %v1179 = vunpack.c.l.b16 %v1147
        %v1180 = vunpack.c.l.b16 %v1148
        %v1181 = vunpack.c.l.b16 %v1149
        %v1182 = vunpack.c.l.b16 %v1150
        %v1183 = vunpack.c.l.b16 %v1151
        %v1184 = vunpack.c.l.b16 %v1152
        %v1185 = vunpack.c.l.b16 %v1153
        %v1186 = vunpack.c.l.b16 %v1154
        %v1187 = vunpack.c.l.b16 %v1155
        %v1188 = vunpack.c.l.b16 %v1156
        %v1189 = vpack.c.b16 %v1174, %v1173
        %v1190 = vpack.c.b16 %v1176, %v1175
        %v1191 = vpack.c.b16 %v1178, %v1177
        %v1192 = vpack.c.b16 %v1180, %v1179
        %v1193 = vpack.c.b16 %v1182, %v1181
        %v1194 = vpack.c.b16 %v1184, %v1183
        %v1195 = vpack.c.b16 %v1186, %v1185
        %v1196 = vpack.c.b16 %v1188, %v1187
        %1205 = vmatprep.subr.bf16.mxu0 0
        %1206 = vmatpush1.bf16.msra.mxu0 %v1196
        %1207 = vmatprep.subr.bf16.mxu0 0
        %1208 = vmatpush1.bf16.msra.mxu0 %v1195
        %1209 = vmatprep.subr.bf16.mxu0 0
        %1210 = vmatpush1.bf16.msra.mxu0 %v1194
        %1211 = vmatprep.subr.bf16.mxu0 0
        %1212 = vmatpush1.bf16.msra.mxu0 %v1193
        %1213 = vmatprep.subr.bf16.mxu0 0
        %1214 = vmatpush1.bf16.msra.mxu0 %v1192
        %1215 = vmatprep.subr.bf16.mxu0 0
        %1216 = vmatpush1.bf16.msra.mxu0 %v1191
        %1217 = vmatprep.subr.bf16.mxu0 0
        %1218 = vmatpush1.bf16.msra.mxu0 %v1190
        %1219 = vmatprep.subr.bf16.mxu0 0
        %1220 = vmatpush1.bf16.msra.mxu0 %v1189
        %1221 = vmatprep.subr.bf16.mxu0 0
        %1222 = vmatpush2.bf16.msra.mxu0 0
        %1223 = vmatprep.subr.bf16.mxu0 0
        %1224 = vmatpush2.bf16.msra.mxu0 0
        %1225 = vmatprep.subr.bf16.mxu0 0
        %1226 = vmatpush2.bf16.msra.mxu0 0
        %1227 = vmatprep.subr.bf16.mxu0 0
        %1228 = vmatpush2.bf16.msra.mxu0 0
        %1229 = vmatprep.subr.bf16.mxu0 0
        %1230 = vmatpush2.bf16.msra.mxu0 0
        %1231 = vmatprep.subr.bf16.mxu0 0
        %1232 = vmatpush2.bf16.msra.mxu0 0
        %1233 = vmatprep.subr.bf16.mxu0 0
        %1234 = vmatpush2.bf16.msra.mxu0 0
        %1235 = vmatprep.subr.bf16.mxu0 0
        %1236 = vmatpush2.bf16.msra.mxu0 0
        %1237 = vmatprep.mubr.bf16.mxu0 0
        %1238 = vmatmul.mubr.bf16.gmra.mxu0 %v402
        %v1239 = vpop.f32.mrf.mxu0
        %v1240 = vadd.f32 0.0, %v1239
        %v1241 = vpop.f32.mrf.mxu0
        %v1242 = vpop.f32.mrf.mxu0
        %v1243 = vadd.f32 0.0, %v1242
        %v1244 = vpop.f32.mrf.mxu0
        %1245 = vmatprep.mubr.bf16.mxu0 0
        %1246 = vmatmul.mubr.bf16.gmra.mxu0 %v663
        %v1247 = vpop.f32.mrf.mxu0
        %v1248 = vadd.f32 0.0, %v1247
        %v1249 = vpop.f32.mrf.mxu0
        %v1250 = vpop.f32.mrf.mxu0
        %v1251 = vadd.f32 0.0, %v1250
        %v1252 = vpop.f32.mrf.mxu0
        %1253 = vmatprep.mubr.bf16.mxu0 0
        %1254 = vmatmul.mubr.bf16.gmra.mxu0 %v985
        %v1255 = vpop.f32.mrf.mxu0
        %v1256 = vadd.f32 0.0, %v1255
        %v1257 = vpop.f32.mrf.mxu0
        %v1258 = vpop.f32.mrf.mxu0
        %v1259 = vadd.f32 0.0, %v1258
        %v1260 = vpop.f32.mrf.mxu0
        %1261 = vmatprep.mubr.bf16.mxu0 0
        %1262 = vmatmul.mubr.bf16.gmra.mxu0 %v1138
        %v1263 = vpop.f32.mrf.mxu0
        %v1264 = vadd.f32 0.0, %v1263
        %v1265 = vpop.f32.mrf.mxu0
        %v1266 = vpop.f32.mrf.mxu0
        %v1267 = vadd.f32 0.0, %v1266
        %v1268 = vpop.f32.mrf.mxu0
        %1269 = vdwg.mxu0
        %v1270 = vadd.f32 %v1117, %v1240
        %v1271 = vadd.f32 %v1118, %v1243
        %v1272 = vadd.f32 %v1119, %v1248
        %v1273 = vadd.f32 %v1120, %v1251
        %v1274 = vadd.f32 %v1121, %v1256
        %v1275 = vadd.f32 %v1122, %v1259
        %v1276 = vadd.f32 %v1123, %v1264
        %v1277 = vadd.f32 %v1124, %v1267
        %v1278 = vld [vmem:[%s340] sm:$0xc]
        %v1279 = vld [vmem:[%s340 + $0x4] sm:$0xf]
        %v1280 = vld [vmem:[%s340 + $0x8] sm:$0x3]
        %v1281 = vld [vmem:[%s343] sm:$0xc]
        %v1282 = vld [vmem:[%s343 + $0x4] sm:$0xf]
        %v1283 = vld [vmem:[%s343 + $0x8] sm:$0x3]
        %v1287 = vunpack.c.l.b16 %v1278
        %v1288 = vunpack.c.l.b16 %v1279
        %v1289 = vunpack.c.l.b16 %v1280
        %v1290 = vpack.c.b16 %v1288, %v1287
        %v1291 = vpack.c.b16 %v1289, %v1289
        %v1292 = vrot.slane %v1290, 2
        %v1293 = vrot.slane %v1291, 2
        %v1294 = vsel %vm817, %v1292, %v1293
        %v1299 = vunpack.c.l.b16 %v1281
        %v1300 = vunpack.c.l.b16 %v1282
        %v1301 = vunpack.c.l.b16 %v1283
        %v1302 = vpack.c.b16 %v1300, %v1299
        %v1303 = vpack.c.b16 %v1301, %v1301
        %v1304 = vrot.slane %v1302, 2
        %v1305 = vrot.slane %v1303, 2
        %v1306 = vsel %vm817, %v1304, %v1305
        %s1308 = scalar_lea.vmem %s1, 384
        %v1309 = vld [vmem:[%s1308] sm:$0xf]
        %v1310 = vld [vmem:[%s1308 + $0x4] sm:$0xf]
        %v1311 = vld [vmem:[%s1308 + $0x8] sm:$0xf]
        %v1312 = vld [vmem:[%s1308 + $0xc] sm:$0xf]
        %v1313 = vld [vmem:[%s1308 + $0x10] sm:$0xf]
        %v1314 = vld [vmem:[%s1308 + $0x14] sm:$0xf]
        %v1315 = vld [vmem:[%s1308 + $0x18] sm:$0xf]
        %v1316 = vld [vmem:[%s1308 + $0x1c] sm:$0xf]
        %v1317 = vld [vmem:[%s1308 + $0x20] sm:$0xf]
        %v1318 = vld [vmem:[%s1308 + $0x24] sm:$0xf]
        %v1319 = vld [vmem:[%s1308 + $0x28] sm:$0xf]
        %v1320 = vld [vmem:[%s1308 + $0x2c] sm:$0xf]
        %v1321 = vld [vmem:[%s1308 + $0x30] sm:$0xf]
        %v1322 = vld [vmem:[%s1308 + $0x34] sm:$0xf]
        %v1323 = vld [vmem:[%s1308 + $0x38] sm:$0xf]
        %v1324 = vld [vmem:[%s1308 + $0x3c] sm:$0xf]
        %v1341 = vunpack.c.l.b16 %v1309
        %v1342 = vunpack.c.l.b16 %v1310
        %v1343 = vunpack.c.l.b16 %v1311
        %v1344 = vunpack.c.l.b16 %v1312
        %v1345 = vunpack.c.l.b16 %v1313
        %v1346 = vunpack.c.l.b16 %v1314
        %v1347 = vunpack.c.l.b16 %v1315
        %v1348 = vunpack.c.l.b16 %v1316
        %v1349 = vunpack.c.l.b16 %v1317
        %v1350 = vunpack.c.l.b16 %v1318
        %v1351 = vunpack.c.l.b16 %v1319
        %v1352 = vunpack.c.l.b16 %v1320
        %v1353 = vunpack.c.l.b16 %v1321
        %v1354 = vunpack.c.l.b16 %v1322
        %v1355 = vunpack.c.l.b16 %v1323
        %v1356 = vunpack.c.l.b16 %v1324
        %v1357 = vpack.c.b16 %v1342, %v1341
        %v1358 = vpack.c.b16 %v1344, %v1343
        %v1359 = vpack.c.b16 %v1346, %v1345
        %v1360 = vpack.c.b16 %v1348, %v1347
        %v1361 = vpack.c.b16 %v1350, %v1349
        %v1362 = vpack.c.b16 %v1352, %v1351
        %v1363 = vpack.c.b16 %v1354, %v1353
        %v1364 = vpack.c.b16 %v1356, %v1355
        %1373 = vmatprep.subr.bf16.mxu0 0
        %1374 = vmatpush1.bf16.msra.mxu0 %v1364
        %1375 = vmatprep.subr.bf16.mxu0 0
        %1376 = vmatpush1.bf16.msra.mxu0 %v1363
        %1377 = vmatprep.subr.bf16.mxu0 0
        %1378 = vmatpush1.bf16.msra.mxu0 %v1362
        %1379 = vmatprep.subr.bf16.mxu0 0
        %1380 = vmatpush1.bf16.msra.mxu0 %v1361
        %1381 = vmatprep.subr.bf16.mxu0 0
        %1382 = vmatpush1.bf16.msra.mxu0 %v1360
        %1383 = vmatprep.subr.bf16.mxu0 0
        %1384 = vmatpush1.bf16.msra.mxu0 %v1359
        %1385 = vmatprep.subr.bf16.mxu0 0
        %1386 = vmatpush1.bf16.msra.mxu0 %v1358
        %1387 = vmatprep.subr.bf16.mxu0 0
        %1388 = vmatpush1.bf16.msra.mxu0 %v1357
        %1389 = vmatprep.subr.bf16.mxu0 0
        %1390 = vmatpush2.bf16.msra.mxu0 0
        %1391 = vmatprep.subr.bf16.mxu0 0
        %1392 = vmatpush2.bf16.msra.mxu0 0
        %1393 = vmatprep.subr.bf16.mxu0 0
        %1394 = vmatpush2.bf16.msra.mxu0 0
        %1395 = vmatprep.subr.bf16.mxu0 0
        %1396 = vmatpush2.bf16.msra.mxu0 0
        %1397 = vmatprep.subr.bf16.mxu0 0
        %1398 = vmatpush2.bf16.msra.mxu0 0
        %1399 = vmatprep.subr.bf16.mxu0 0
        %1400 = vmatpush2.bf16.msra.mxu0 0
        %1401 = vmatprep.subr.bf16.mxu0 0
        %1402 = vmatpush2.bf16.msra.mxu0 0
        %1403 = vmatprep.subr.bf16.mxu0 0
        %1404 = vmatpush2.bf16.msra.mxu0 0
        %1405 = vmatprep.mubr.bf16.mxu0 0
        %1406 = vmatmul.mubr.bf16.gmra.mxu0 %v820
        %v1407 = vpop.f32.mrf.mxu0
        %v1408 = vadd.f32 0.0, %v1407
        %v1409 = vpop.f32.mrf.mxu0
        %v1410 = vpop.f32.mrf.mxu0
        %v1411 = vadd.f32 0.0, %v1410
        %v1412 = vpop.f32.mrf.mxu0
        %1413 = vmatprep.mubr.bf16.mxu0 0
        %1414 = vmatmul.mubr.bf16.gmra.mxu0 %v832
        %v1415 = vpop.f32.mrf.mxu0
        %v1416 = vadd.f32 0.0, %v1415
        %v1417 = vpop.f32.mrf.mxu0
        %v1418 = vpop.f32.mrf.mxu0
        %v1419 = vadd.f32 0.0, %v1418
        %v1420 = vpop.f32.mrf.mxu0
        %1421 = vmatprep.mubr.bf16.mxu0 0
        %1422 = vmatmul.mubr.bf16.gmra.mxu0 %v1294
        %v1423 = vpop.f32.mrf.mxu0
        %v1424 = vadd.f32 0.0, %v1423
        %v1425 = vpop.f32.mrf.mxu0
        %v1426 = vpop.f32.mrf.mxu0
        %v1427 = vadd.f32 0.0, %v1426
        %v1428 = vpop.f32.mrf.mxu0
        %1429 = vmatprep.mubr.bf16.mxu0 0
        %1430 = vmatmul.mubr.bf16.gmra.mxu0 %v1306
        %v1431 = vpop.f32.mrf.mxu0
        %v1432 = vadd.f32 0.0, %v1431
        %v1433 = vpop.f32.mrf.mxu0
        %v1434 = vpop.f32.mrf.mxu0
        %v1435 = vadd.f32 0.0, %v1434
        %v1436 = vpop.f32.mrf.mxu0
        %1437 = vdwg.mxu0
        %v1438 = vadd.f32 %v1270, %v1408
        %v1439 = vadd.f32 %v1271, %v1411
        %v1440 = vadd.f32 %v1272, %v1416
        %v1441 = vadd.f32 %v1273, %v1419
        %v1442 = vadd.f32 %v1274, %v1424
        %v1443 = vadd.f32 %v1275, %v1427
        %v1444 = vadd.f32 %v1276, %v1432
        %v1445 = vadd.f32 %v1277, %v1435
        %v1446 = vld [vmem:[%s389] sm:$0xc]
        %v1447 = vld [vmem:[%s389 + $0x4] sm:$0xf]
        %v1448 = vld [vmem:[%s389 + $0x8] sm:$0x3]
        %v1452 = vunpack.c.l.b16 %v1446
        %v1453 = vunpack.c.l.b16 %v1447
        %v1454 = vunpack.c.l.b16 %v1448
        %v1455 = vpack.c.b16 %v1453, %v1452
        %v1456 = vpack.c.b16 %v1454, %v1454
        %v1457 = vrot.slane %v1455, 2
        %v1458 = vrot.slane %v1456, 2
        %v1459 = vsel %vm817, %v1457, %v1458
        %s1461 = scalar_lea.vmem %s1, 448
        %v1462 = vld [vmem:[%s1461] sm:$0xf]
        %v1463 = vld [vmem:[%s1461 + $0x4] sm:$0xf]
        %v1464 = vld [vmem:[%s1461 + $0x8] sm:$0xf]
        %v1465 = vld [vmem:[%s1461 + $0xc] sm:$0xf]
        %v1466 = vld [vmem:[%s1461 + $0x10] sm:$0xf]
        %v1467 = vld [vmem:[%s1461 + $0x14] sm:$0xf]
        %v1468 = vld [vmem:[%s1461 + $0x18] sm:$0xf]
        %v1469 = vld [vmem:[%s1461 + $0x1c] sm:$0xf]
        %v1470 = vld [vmem:[%s1461 + $0x20] sm:$0xf]
        %v1471 = vld [vmem:[%s1461 + $0x24] sm:$0xf]
        %v1472 = vld [vmem:[%s1461 + $0x28] sm:$0xf]
        %v1473 = vld [vmem:[%s1461 + $0x2c] sm:$0xf]
        %v1474 = vld [vmem:[%s1461 + $0x30] sm:$0xf]
        %v1475 = vld [vmem:[%s1461 + $0x34] sm:$0xf]
        %v1476 = vld [vmem:[%s1461 + $0x38] sm:$0xf]
        %v1477 = vld [vmem:[%s1461 + $0x3c] sm:$0xf]
        %v1494 = vunpack.c.l.b16 %v1462
        %v1495 = vunpack.c.l.b16 %v1463
        %v1496 = vunpack.c.l.b16 %v1464
        %v1497 = vunpack.c.l.b16 %v1465
        %v1498 = vunpack.c.l.b16 %v1466
        %v1499 = vunpack.c.l.b16 %v1467
        %v1500 = vunpack.c.l.b16 %v1468
        %v1501 = vunpack.c.l.b16 %v1469
        %v1502 = vunpack.c.l.b16 %v1470
        %v1503 = vunpack.c.l.b16 %v1471
        %v1504 = vunpack.c.l.b16 %v1472
        %v1505 = vunpack.c.l.b16 %v1473
        %v1506 = vunpack.c.l.b16 %v1474
        %v1507 = vunpack.c.l.b16 %v1475
        %v1508 = vunpack.c.l.b16 %v1476
        %v1509 = vunpack.c.l.b16 %v1477
        %v1510 = vpack.c.b16 %v1495, %v1494
        %v1511 = vpack.c.b16 %v1497, %v1496
        %v1512 = vpack.c.b16 %v1499, %v1498
        %v1513 = vpack.c.b16 %v1501, %v1500
        %v1514 = vpack.c.b16 %v1503, %v1502
        %v1515 = vpack.c.b16 %v1505, %v1504
        %v1516 = vpack.c.b16 %v1507, %v1506
        %v1517 = vpack.c.b16 %v1509, %v1508
        %1526 = vmatprep.subr.bf16.mxu0 0
        %1527 = vmatpush1.bf16.msra.mxu0 %v1517
        %1528 = vmatprep.subr.bf16.mxu0 0
        %1529 = vmatpush1.bf16.msra.mxu0 %v1516
        %1530 = vmatprep.subr.bf16.mxu0 0
        %1531 = vmatpush1.bf16.msra.mxu0 %v1515
        %1532 = vmatprep.subr.bf16.mxu0 0
        %1533 = vmatpush1.bf16.msra.mxu0 %v1514
        %1534 = vmatprep.subr.bf16.mxu0 0
        %1535 = vmatpush1.bf16.msra.mxu0 %v1513
        %1536 = vmatprep.subr.bf16.mxu0 0
        %1537 = vmatpush1.bf16.msra.mxu0 %v1512
        %1538 = vmatprep.subr.bf16.mxu0 0
        %1539 = vmatpush1.bf16.msra.mxu0 %v1511
        %1540 = vmatprep.subr.bf16.mxu0 0
        %1541 = vmatpush1.bf16.msra.mxu0 %v1510
        %1542 = vmatprep.subr.bf16.mxu0 0
        %1543 = vmatpush2.bf16.msra.mxu0 0
        %1544 = vmatprep.subr.bf16.mxu0 0
        %1545 = vmatpush2.bf16.msra.mxu0 0
        %1546 = vmatprep.subr.bf16.mxu0 0
        %1547 = vmatpush2.bf16.msra.mxu0 0
        %1548 = vmatprep.subr.bf16.mxu0 0
        %1549 = vmatpush2.bf16.msra.mxu0 0
        %1550 = vmatprep.subr.bf16.mxu0 0
        %1551 = vmatpush2.bf16.msra.mxu0 0
        %1552 = vmatprep.subr.bf16.mxu0 0
        %1553 = vmatpush2.bf16.msra.mxu0 0
        %1554 = vmatprep.subr.bf16.mxu0 0
        %1555 = vmatpush2.bf16.msra.mxu0 0
        %1556 = vmatprep.subr.bf16.mxu0 0
        %1557 = vmatpush2.bf16.msra.mxu0 0
        %1558 = vmatprep.mubr.bf16.mxu0 0
        %1559 = vmatmul.mubr.bf16.gmra.mxu0 %v832
        %v1560 = vpop.f32.mrf.mxu0
        %v1561 = vadd.f32 0.0, %v1560
        %v1562 = vpop.f32.mrf.mxu0
        %v1563 = vpop.f32.mrf.mxu0
        %v1564 = vadd.f32 0.0, %v1563
        %v1565 = vpop.f32.mrf.mxu0
        %1566 = vmatprep.mubr.bf16.mxu0 0
        %1567 = vmatmul.mubr.bf16.gmra.mxu0 %v985
        %v1568 = vpop.f32.mrf.mxu0
        %v1569 = vadd.f32 0.0, %v1568
        %v1570 = vpop.f32.mrf.mxu0
        %v1571 = vpop.f32.mrf.mxu0
        %v1572 = vadd.f32 0.0, %v1571
        %v1573 = vpop.f32.mrf.mxu0
        %1574 = vmatprep.mubr.bf16.mxu0 0
        %1575 = vmatmul.mubr.bf16.gmra.mxu0 %v1306
        %v1576 = vpop.f32.mrf.mxu0
        %v1577 = vadd.f32 0.0, %v1576
        %v1578 = vpop.f32.mrf.mxu0
        %v1579 = vpop.f32.mrf.mxu0
        %v1580 = vadd.f32 0.0, %v1579
        %v1581 = vpop.f32.mrf.mxu0
        %1582 = vmatprep.mubr.bf16.mxu0 0
        %1583 = vmatmul.mubr.bf16.gmra.mxu0 %v1459
        %v1584 = vpop.f32.mrf.mxu0
        %v1585 = vadd.f32 0.0, %v1584
        %v1586 = vpop.f32.mrf.mxu0
        %v1587 = vpop.f32.mrf.mxu0
        %v1588 = vadd.f32 0.0, %v1587
        %v1589 = vpop.f32.mrf.mxu0
        %1590 = vdwg.mxu0
        %v1591 = vadd.f32 %v1438, %v1561
        %v1592 = vadd.f32 %v1439, %v1564
        %v1593 = vadd.f32 %v1440, %v1569
        %v1594 = vadd.f32 %v1441, %v1572
        %v1595 = vadd.f32 %v1442, %v1577
        %v1596 = vadd.f32 %v1443, %v1580
        %v1597 = vadd.f32 %v1444, %v1585
        %v1598 = vadd.f32 %v1445, %v1588
        %v1599 = vld [vmem:[%s650] sm:$0xc]
        %v1600 = vld [vmem:[%s650 + $0x4] sm:$0xf]
        %v1601 = vld [vmem:[%s650 + $0x8] sm:$0x3]
        %v1605 = vunpack.c.l.b16 %v1599
        %v1606 = vunpack.c.l.b16 %v1600
        %v1607 = vunpack.c.l.b16 %v1601
        %v1608 = vpack.c.b16 %v1606, %v1605
        %v1609 = vpack.c.b16 %v1607, %v1607
        %v1610 = vrot.slane %v1608, 2
        %v1611 = vrot.slane %v1609, 2
        %v1612 = vsel %vm817, %v1610, %v1611
        %s1614 = scalar_lea.vmem %s1, 512
        %v1615 = vld [vmem:[%s1614] sm:$0xf]
        %v1616 = vld [vmem:[%s1614 + $0x4] sm:$0xf]
        %v1617 = vld [vmem:[%s1614 + $0x8] sm:$0xf]
        %v1618 = vld [vmem:[%s1614 + $0xc] sm:$0xf]
        %v1619 = vld [vmem:[%s1614 + $0x10] sm:$0xf]
        %v1620 = vld [vmem:[%s1614 + $0x14] sm:$0xf]
        %v1621 = vld [vmem:[%s1614 + $0x18] sm:$0xf]
        %v1622 = vld [vmem:[%s1614 + $0x1c] sm:$0xf]
        %v1623 = vld [vmem:[%s1614 + $0x20] sm:$0xf]
        %v1624 = vld [vmem:[%s1614 + $0x24] sm:$0xf]
        %v1625 = vld [vmem:[%s1614 + $0x28] sm:$0xf]
        %v1626 = vld [vmem:[%s1614 + $0x2c] sm:$0xf]
        %v1627 = vld [vmem:[%s1614 + $0x30] sm:$0xf]
        %v1628 = vld [vmem:[%s1614 + $0x34] sm:$0xf]
        %v1629 = vld [vmem:[%s1614 + $0x38] sm:$0xf]
        %v1630 = vld [vmem:[%s1614 + $0x3c] sm:$0xf]
        %v1647 = vunpack.c.l.b16 %v1615
        %v1648 = vunpack.c.l.b16 %v1616
        %v1649 = vunpack.c.l.b16 %v1617
        %v1650 = vunpack.c.l.b16 %v1618
        %v1651 = vunpack.c.l.b16 %v1619
        %v1652 = vunpack.c.l.b16 %v1620
        %v1653 = vunpack.c.l.b16 %v1621
        %v1654 = vunpack.c.l.b16 %v1622
        %v1655 = vunpack.c.l.b16 %v1623
        %v1656 = vunpack.c.l.b16 %v1624
        %v1657 = vunpack.c.l.b16 %v1625
        %v1658 = vunpack.c.l.b16 %v1626
        %v1659 = vunpack.c.l.b16 %v1627
        %v1660 = vunpack.c.l.b16 %v1628
        %v1661 = vunpack.c.l.b16 %v1629
        %v1662 = vunpack.c.l.b16 %v1630
        %v1663 = vpack.c.b16 %v1648, %v1647
        %v1664 = vpack.c.b16 %v1650, %v1649
        %v1665 = vpack.c.b16 %v1652, %v1651
        %v1666 = vpack.c.b16 %v1654, %v1653
        %v1667 = vpack.c.b16 %v1656, %v1655
        %v1668 = vpack.c.b16 %v1658, %v1657
        %v1669 = vpack.c.b16 %v1660, %v1659
        %v1670 = vpack.c.b16 %v1662, %v1661
        %1679 = vmatprep.subr.bf16.mxu0 0
        %1680 = vmatpush1.bf16.msra.mxu0 %v1670
        %1681 = vmatprep.subr.bf16.mxu0 0
        %1682 = vmatpush1.bf16.msra.mxu0 %v1669
        %1683 = vmatprep.subr.bf16.mxu0 0
        %1684 = vmatpush1.bf16.msra.mxu0 %v1668
        %1685 = vmatprep.subr.bf16.mxu0 0
        %1686 = vmatpush1.bf16.msra.mxu0 %v1667
        %1687 = vmatprep.subr.bf16.mxu0 0
        %1688 = vmatpush1.bf16.msra.mxu0 %v1666
        %1689 = vmatprep.subr.bf16.mxu0 0
        %1690 = vmatpush1.bf16.msra.mxu0 %v1665
        %1691 = vmatprep.subr.bf16.mxu0 0
        %1692 = vmatpush1.bf16.msra.mxu0 %v1664
        %1693 = vmatprep.subr.bf16.mxu0 0
        %1694 = vmatpush1.bf16.msra.mxu0 %v1663
        %1695 = vmatprep.subr.bf16.mxu0 0
        %1696 = vmatpush2.bf16.msra.mxu0 0
        %1697 = vmatprep.subr.bf16.mxu0 0
        %1698 = vmatpush2.bf16.msra.mxu0 0
        %1699 = vmatprep.subr.bf16.mxu0 0
        %1700 = vmatpush2.bf16.msra.mxu0 0
        %1701 = vmatprep.subr.bf16.mxu0 0
        %1702 = vmatpush2.bf16.msra.mxu0 0
        %1703 = vmatprep.subr.bf16.mxu0 0
        %1704 = vmatpush2.bf16.msra.mxu0 0
        %1705 = vmatprep.subr.bf16.mxu0 0
        %1706 = vmatpush2.bf16.msra.mxu0 0
        %1707 = vmatprep.subr.bf16.mxu0 0
        %1708 = vmatpush2.bf16.msra.mxu0 0
        %1709 = vmatprep.subr.bf16.mxu0 0
        %1710 = vmatpush2.bf16.msra.mxu0 0
        %1711 = vmatprep.mubr.bf16.mxu0 0
        %1712 = vmatmul.mubr.bf16.gmra.mxu0 %v985
        %v1713 = vpop.f32.mrf.mxu0
        %v1714 = vadd.f32 0.0, %v1713
        %v1715 = vpop.f32.mrf.mxu0
        %v1716 = vpop.f32.mrf.mxu0
        %v1717 = vadd.f32 0.0, %v1716
        %v1718 = vpop.f32.mrf.mxu0
        %1719 = vmatprep.mubr.bf16.mxu0 0
        %1720 = vmatmul.mubr.bf16.gmra.mxu0 %v1138
        %v1721 = vpop.f32.mrf.mxu0
        %v1722 = vadd.f32 0.0, %v1721
        %v1723 = vpop.f32.mrf.mxu0
        %v1724 = vpop.f32.mrf.mxu0
        %v1725 = vadd.f32 0.0, %v1724
        %v1726 = vpop.f32.mrf.mxu0
        %1727 = vmatprep.mubr.bf16.mxu0 0
        %1728 = vmatmul.mubr.bf16.gmra.mxu0 %v1459
        %v1729 = vpop.f32.mrf.mxu0
        %v1730 = vadd.f32 0.0, %v1729
        %v1731 = vpop.f32.mrf.mxu0
        %v1732 = vpop.f32.mrf.mxu0
        %v1733 = vadd.f32 0.0, %v1732
        %v1734 = vpop.f32.mrf.mxu0
        %1735 = vmatprep.mubr.bf16.mxu0 0
        %1736 = vmatmul.mubr.bf16.gmra.mxu0 %v1612
        %v1737 = vpop.f32.mrf.mxu0
        %v1738 = vadd.f32 0.0, %v1737
        %v1739 = vpop.f32.mrf.mxu0
        %v1740 = vpop.f32.mrf.mxu0
        %v1741 = vadd.f32 0.0, %v1740
        %v1742 = vpop.f32.mrf.mxu0
        %1743 = vdwg.mxu0
        %v1744 = vadd.f32 %v1591, %v1714
        %v1745 = vadd.f32 %v1592, %v1717
        %v1746 = vadd.f32 %v1593, %v1722
        %v1747 = vadd.f32 %v1594, %v1725
        %v1748 = vadd.f32 %v1595, %v1730
        %v1749 = vadd.f32 %v1596, %v1733
        %v1750 = vadd.f32 %v1597, %v1738
        %v1751 = vadd.f32 %v1598, %v1741
        %v1752 = vld [vmem:[%s2] sm:$0x1]
        %v1754 = vlaneseq
        %v1755 = vshrl.u32 %v1754, 7
        %v1756 = vsub.s32 0, %v1755
        %v1757 = vrot.slane %v1752, %v1756
        %v1759 = vmul.f32 %v1744, %v1757
        %v1760 = vmul.f32 %v1745, %v1757
        %v1761 = vmul.f32 %v1746, %v1757
        %v1762 = vmul.f32 %v1747, %v1757
        %v1763 = vmul.f32 %v1748, %v1757
        %v1764 = vmul.f32 %v1749, %v1757
        %v1765 = vmul.f32 %v1750, %v1757
        %v1766 = vmul.f32 %v1751, %v1757
        %v1767 = vld [vmem:[%s3] sm:$0x1]
        %v1769 = vlaneseq
        %v1770 = vshrl.u32 %v1769, 7
        %v1771 = vsub.s32 0, %v1770
        %v1772 = vrot.slane %v1767, %v1771
        %v1774 = vadd.f32 %v1759, %v1772
        %v1775 = vadd.f32 %v1760, %v1772
        %v1776 = vadd.f32 %v1761, %v1772
        %v1777 = vadd.f32 %v1762, %v1772
        %v1778 = vadd.f32 %v1763, %v1772
        %v1779 = vadd.f32 %v1764, %v1772
        %v1780 = vadd.f32 %v1765, %v1772
        %v1781 = vadd.f32 %v1766, %v1772
        %v1782 = vmax.f32 %v1774, 0.0
        %v1783 = vmax.f32 %v1775, 0.0
        %v1784 = vmax.f32 %v1776, 0.0
        %v1785 = vmax.f32 %v1777, 0.0
        %v1786 = vmax.f32 %v1778, 0.0
        %v1787 = vmax.f32 %v1779, 0.0
        %v1788 = vmax.f32 %v1780, 0.0
        %v1789 = vmax.f32 %v1781, 0.0
        %v1790 = vmax.f32 %v1782, %v1784
        %v1791 = vmax.f32 %v1783, %v1785
        %v1792 = vmax.f32 %v1786, %v1788
        %v1793 = vmax.f32 %v1787, %v1789
        %v1794 = vmax.f32 %v1790, %v1792
        %v1795 = vmax.f32 %v1791, %v1793
        %v1796 = vpack.c.bf16 %v1795, %v1794
        %v1798 = vunpack.c.l.b16 %v1796
        %v1799 = vunpack.c.h.b16 %v1796
        %v1800 = vpack.c.b16 %v1798, %v1798
        %v1801 = vpack.c.b16 %v1799, %v1799
        %1804 = vst [vmem:[%s333] sm:$0xf] %v1800
        %1805 = vst [vmem:[%s333 + $0x4] sm:$0xf] %v1801
        %p1806 = scmp.lt.s32.totalorder %s15, 1
        %s1807 = scalar_select %p1806, %s15, 1
        %s1808 = smul.addr %s1807, 2
        %s1809 = smul.addr %s1808, 4
        %s1810 = scalar_lea.vmem %s4, %s1809
        // Predicated region
        $region78: #{simple_cnn_forward.4} parent=72 // pred_check
          %p1811 = pneg %p122
        $region79: #{simple_cnn_forward.4} parent=72 // pred_check_branch
          %1813 = sbr.rel (%p1811) target = $region81
        $region80: #{simple_cnn_forward.4} parent=72 // pred_region
          _
        $region81: #{simple_cnn_forward.4} parent=72 // pred_fallthru
          _
      $region73: #{simple_cnn_forward.4} parent=5 // pred_fallthru
        _
      %p1814 = scmp.le.s32.totalorder 2, %s10
      // Predicated region
      $region82: #{simple_cnn_forward.4} parent=5 // pred_check
        %p1815 = pneg %p1814
      $region83: #{simple_cnn_forward.4} parent=5 // pred_check_branch
        %1817 = sbr.rel (%p1815) target = $region85
      $region84: #{simple_cnn_forward.4} parent=5 // pred_region
        %s1818 = ssub.s32 %s10, 2
        // Predicated region
        $region86: #{simple_cnn_forward.4} parent=84 // pred_check
          %p1819 = pneg %p128
        $region87: #{simple_cnn_forward.4} parent=84 // pred_check_branch
          %1821 = sbr.rel (%p1819) target = $region89
        $region88: #{simple_cnn_forward.4} parent=84 // pred_region
          %p1822 = scmp.lt.s32.totalorder %s16, 1
          %s1823 = scalar_select %p1822, %s16, 1
          %s1824 = smul.addr %s1823, 2
          %s1825 = smul.addr %s1824, 4
          %s1826 = scalar_lea.vmem %s4, %s1825
        $region89: #{simple_cnn_forward.4} parent=84 // pred_fallthru
          _
      $region85: #{simple_cnn_forward.4} parent=5 // pred_fallthru
        _
    $region6: #{simple_cnn_forward.4} parent=1 // loop_footer
      %s14 = sadd.s32 1, %s10
    $region7: #{simple_cnn_forward.4} parent=1 // loop_footer_branch
      %9 = sbr.rel target = $region3
    $region8: #{simple_cnn_forward.4} parent=1 // loop_exit
      _

// kernel: simple_cnn_forward.5
$region0: #{simple_cnn_forward.5}
  #allocation0 [shape = 'u32[]', space=smem, size = 0x4, offset = 0x4, fixed_abs, tag = 'smem constant byte address 0x4 - core index']
  #allocation1 [shape = 'u32[144,128]{1,0:T(1,128)}', space=vmem, size = 0x12000, scoped, tag = 'internal scratch']
  %s0 = inlined_call_operand.vmem [shape: bf16[2,2048], index: 0, kind: input, shape index: {}]
  %s1 = inlined_call_operand.vmem [shape: bf16[2048,128], index: 1, kind: input, shape index: {}]
  %s2 = inlined_call_operand.vmem [shape: f32[1,128], index: 2, kind: input, shape index: {}]
  %s3 = inlined_call_operand.vmem [shape: bf16[128,128], index: 3, kind: input, shape index: {}]
  %s4 = inlined_call_operand.vmem [shape: f32[1,128], index: 4, kind: input, shape index: {}]
  %s5 = inlined_call_operand.hbm [shape: f32[2,128], index: 5, kind: output, shape index: {}]
  %s6 = sld [smem:[#allocation0]]
  $region30: #{simple_cnn_forward.5} parent=0
    _
  %s8 = ssub.s32 1, %s6
  %s9 = scalar_select 0, %s8, %s6
  $region1: #{simple_cnn_forward.5} parent=0
    #allocation2 [shape = 'u8[1024]{0}', space=vmem, size = 0x400, scoped, tag = 'output window, operand 0, single buffered']
    #allocation3 [shape = 's32[1]{0}', space=sflag, size = 0x4, scoped, tag = 'scoped memory for simple_cnn_forward.5']
    %10 = vsyncpa [#allocation3], 0
    // Predicated region
    $region2: #{simple_cnn_forward.5} parent=1 // pred_check
      _
    $region3: #{simple_cnn_forward.5} parent=1 // pred_check_branch
      %12 = sbr.rel (0) target = $region5
    $region4: #{simple_cnn_forward.5} parent=1 // pred_region
      _
    $region5: #{simple_cnn_forward.5} parent=1 // pred_fallthru
      _
    // Predicated region
    $region6: #{simple_cnn_forward.5} parent=1 // pred_check
      _
    $region7: #{simple_cnn_forward.5} parent=1 // pred_check_branch
      %14 = sbr.rel (0) target = $region9
    $region8: #{simple_cnn_forward.5} parent=1 // pred_region
      _
    $region9: #{simple_cnn_forward.5} parent=1 // pred_fallthru
      _
    // Predicated region
    $region10: #{simple_cnn_forward.5} parent=1 // pred_check
      _
    $region11: #{simple_cnn_forward.5} parent=1 // pred_check_branch
      %16 = sbr.rel (0) target = $region13
    $region12: #{simple_cnn_forward.5} parent=1 // pred_region
      _
    $region13: #{simple_cnn_forward.5} parent=1 // pred_fallthru
      _
    // Predicated region
    $region14: #{simple_cnn_forward.5} parent=1 // pred_check
      _
    $region15: #{simple_cnn_forward.5} parent=1 // pred_check_branch
      %18 = sbr.rel (0) target = $region17
    $region16: #{simple_cnn_forward.5} parent=1 // pred_region
      _
    $region17: #{simple_cnn_forward.5} parent=1 // pred_fallthru
      _
    // Predicated region
    $region18: #{simple_cnn_forward.5} parent=1 // pred_check
      _
    $region19: #{simple_cnn_forward.5} parent=1 // pred_check_branch
      %20 = sbr.rel (0) target = $region21
    $region20: #{simple_cnn_forward.5} parent=1 // pred_region
      _
    $region21: #{simple_cnn_forward.5} parent=1 // pred_fallthru
      _
    %v22 = vld [vmem:[%s0] sm:$0xff]
    %v23 = vld [vmem:[%s0 + $0x8] sm:$0xff]
    %v24 = vld [vmem:[%s1] sm:$0xf]
    %v25 = vld [vmem:[%s1 + $0x4] sm:$0xf]
    %v26 = vld [vmem:[%s1 + $0x8] sm:$0xf]
    %v27 = vld [vmem:[%s1 + $0xc] sm:$0xf]
    %v28 = vld [vmem:[%s1 + $0x10] sm:$0xf]
    %v29 = vld [vmem:[%s1 + $0x14] sm:$0xf]
    %v30 = vld [vmem:[%s1 + $0x18] sm:$0xf]
    %v31 = vld [vmem:[%s1 + $0x1c] sm:$0xf]
    %v32 = vld [vmem:[%s1 + $0x20] sm:$0xf]
    %v33 = vld [vmem:[%s1 + $0x24] sm:$0xf]
    %v34 = vld [vmem:[%s1 + $0x28] sm:$0xf]
    %v35 = vld [vmem:[%s1 + $0x2c] sm:$0xf]
    %v36 = vld [vmem:[%s1 + $0x30] sm:$0xf]
    %v37 = vld [vmem:[%s1 + $0x34] sm:$0xf]
    %v38 = vld [vmem:[%s1 + $0x38] sm:$0xf]
    %v39 = vld [vmem:[%s1 + $0x3c] sm:$0xf]
    %v40 = vld [vmem:[%s1 + $0x40] sm:$0xf]
    %v41 = vld [vmem:[%s1 + $0x44] sm:$0xf]
    %v42 = vld [vmem:[%s1 + $0x48] sm:$0xf]
    %v43 = vld [vmem:[%s1 + $0x4c] sm:$0xf]
    %v44 = vld [vmem:[%s1 + $0x50] sm:$0xf]
    %v45 = vld [vmem:[%s1 + $0x54] sm:$0xf]
    %v46 = vld [vmem:[%s1 + $0x58] sm:$0xf]
    %v47 = vld [vmem:[%s1 + $0x5c] sm:$0xf]
    %v48 = vld [vmem:[%s1 + $0x60] sm:$0xf]
    %v49 = vld [vmem:[%s1 + $0x64] sm:$0xf]
    %v50 = vld [vmem:[%s1 + $0x68] sm:$0xf]
    %v51 = vld [vmem:[%s1 + $0x6c] sm:$0xf]
    %v52 = vld [vmem:[%s1 + $0x70] sm:$0xf]
    %v53 = vld [vmem:[%s1 + $0x74] sm:$0xf]
    %v54 = vld [vmem:[%s1 + $0x78] sm:$0xf]
    %v55 = vld [vmem:[%s1 + $0x7c] sm:$0xf]
    %v56 = vld [vmem:[%s1 + $0x80] sm:$0xf]
    %v57 = vld [vmem:[%s1 + $0x84] sm:$0xf]
    %v58 = vld [vmem:[%s1 + $0x88] sm:$0xf]
    %v59 = vld [vmem:[%s1 + $0x8c] sm:$0xf]
    %v60 = vld [vmem:[%s1 + $0x90] sm:$0xf]
    %v61 = vld [vmem:[%s1 + $0x94] sm:$0xf]
    %v62 = vld [vmem:[%s1 + $0x98] sm:$0xf]
    %v63 = vld [vmem:[%s1 + $0x9c] sm:$0xf]
    %v64 = vld [vmem:[%s1 + $0xa0] sm:$0xf]
    %v65 = vld [vmem:[%s1 + $0xa4] sm:$0xf]
    %v66 = vld [vmem:[%s1 + $0xa8] sm:$0xf]
    %v67 = vld [vmem:[%s1 + $0xac] sm:$0xf]
    %v68 = vld [vmem:[%s1 + $0xb0] sm:$0xf]
    %v69 = vld [vmem:[%s1 + $0xb4] sm:$0xf]
    %v70 = vld [vmem:[%s1 + $0xb8] sm:$0xf]
    %v71 = vld [vmem:[%s1 + $0xbc] sm:$0xf]
    %v72 = vld [vmem:[%s1 + $0xc0] sm:$0xf]
    %v73 = vld [vmem:[%s1 + $0xc4] sm:$0xf]
    %v74 = vld [vmem:[%s1 + $0xc8] sm:$0xf]
    %v75 = vld [vmem:[%s1 + $0xcc] sm:$0xf]
    %v76 = vld [vmem:[%s1 + $0xd0] sm:$0xf]
    %v77 = vld [vmem:[%s1 + $0xd4] sm:$0xf]
    %v78 = vld [vmem:[%s1 + $0xd8] sm:$0xf]
    %v79 = vld [vmem:[%s1 + $0xdc] sm:$0xf]
    %v80 = vld [vmem:[%s1 + $0xe0] sm:$0xf]
    %v81 = vld [vmem:[%s1 + $0xe4] sm:$0xf]
    %v82 = vld [vmem:[%s1 + $0xe8] sm:$0xf]
    %v83 = vld [vmem:[%s1 + $0xec] sm:$0xf]
    %v84 = vld [vmem:[%s1 + $0xf0] sm:$0xf]
    %v85 = vld [vmem:[%s1 + $0xf4] sm:$0xf]
    %v86 = vld [vmem:[%s1 + $0xf8] sm:$0xf]
    %v87 = vld [vmem:[%s1 + $0xfc] sm:$0xf]
    %v88 = vld [vmem:[%s1 + $0x100] sm:$0xf]
    %v89 = vld [vmem:[%s1 + $0x104] sm:$0xf]
    %v90 = vld [vmem:[%s1 + $0x108] sm:$0xf]
    %v91 = vld [vmem:[%s1 + $0x10c] sm:$0xf]
    %v92 = vld [vmem:[%s1 + $0x110] sm:$0xf]
    %v93 = vld [vmem:[%s1 + $0x114] sm:$0xf]
    %v94 = vld [vmem:[%s1 + $0x118] sm:$0xf]
    %v95 = vld [vmem:[%s1 + $0x11c] sm:$0xf]
    %v96 = vld [vmem:[%s1 + $0x120] sm:$0xf]
    %v97 = vld [vmem:[%s1 + $0x124] sm:$0xf]
    %v98 = vld [vmem:[%s1 + $0x128] sm:$0xf]
    %v99 = vld [vmem:[%s1 + $0x12c] sm:$0xf]
    %v100 = vld [vmem:[%s1 + $0x130] sm:$0xf]
    %v101 = vld [vmem:[%s1 + $0x134] sm:$0xf]
    %v102 = vld [vmem:[%s1 + $0x138] sm:$0xf]
    %v103 = vld [vmem:[%s1 + $0x13c] sm:$0xf]
    %v104 = vld [vmem:[%s1 + $0x140] sm:$0xf]
    %v105 = vld [vmem:[%s1 + $0x144] sm:$0xf]
    %v106 = vld [vmem:[%s1 + $0x148] sm:$0xf]
    %v107 = vld [vmem:[%s1 + $0x14c] sm:$0xf]
    %v108 = vld [vmem:[%s1 + $0x150] sm:$0xf]
    %v109 = vld [vmem:[%s1 + $0x154] sm:$0xf]
    %v110 = vld [vmem:[%s1 + $0x158] sm:$0xf]
    %v111 = vld [vmem:[%s1 + $0x15c] sm:$0xf]
    %v112 = vld [vmem:[%s1 + $0x160] sm:$0xf]
    %v113 = vld [vmem:[%s1 + $0x164] sm:$0xf]
    %v114 = vld [vmem:[%s1 + $0x168] sm:$0xf]
    %v115 = vld [vmem:[%s1 + $0x16c] sm:$0xf]
    %v116 = vld [vmem:[%s1 + $0x170] sm:$0xf]
    %v117 = vld [vmem:[%s1 + $0x174] sm:$0xf]
    %v118 = vld [vmem:[%s1 + $0x178] sm:$0xf]
    %v119 = vld [vmem:[%s1 + $0x17c] sm:$0xf]
    %v120 = vld [vmem:[%s1 + $0x180] sm:$0xf]
    %v121 = vld [vmem:[%s1 + $0x184] sm:$0xf]
    %v122 = vld [vmem:[%s1 + $0x188] sm:$0xf]
    %v123 = vld [vmem:[%s1 + $0x18c] sm:$0xf]
    %v124 = vld [vmem:[%s1 + $0x190] sm:$0xf]
    %v125 = vld [vmem:[%s1 + $0x194] sm:$0xf]
    %v126 = vld [vmem:[%s1 + $0x198] sm:$0xf]
    %v127 = vld [vmem:[%s1 + $0x19c] sm:$0xf]
    %v128 = vld [vmem:[%s1 + $0x1a0] sm:$0xf]
    %v129 = vld [vmem:[%s1 + $0x1a4] sm:$0xf]
    %v130 = vld [vmem:[%s1 + $0x1a8] sm:$0xf]
    %v131 = vld [vmem:[%s1 + $0x1ac] sm:$0xf]
    %v132 = vld [vmem:[%s1 + $0x1b0] sm:$0xf]
    %v133 = vld [vmem:[%s1 + $0x1b4] sm:$0xf]
    %v134 = vld [vmem:[%s1 + $0x1b8] sm:$0xf]
    %v135 = vld [vmem:[%s1 + $0x1bc] sm:$0xf]
    %v136 = vld [vmem:[%s1 + $0x1c0] sm:$0xf]
    %v137 = vld [vmem:[%s1 + $0x1c4] sm:$0xf]
    %v138 = vld [vmem:[%s1 + $0x1c8] sm:$0xf]
    %v139 = vld [vmem:[%s1 + $0x1cc] sm:$0xf]
    %v140 = vld [vmem:[%s1 + $0x1d0] sm:$0xf]
    %v141 = vld [vmem:[%s1 + $0x1d4] sm:$0xf]
    %v142 = vld [vmem:[%s1 + $0x1d8] sm:$0xf]
    %v143 = vld [vmem:[%s1 + $0x1dc] sm:$0xf]
    %v144 = vld [vmem:[%s1 + $0x1e0] sm:$0xf]
    %v145 = vld [vmem:[%s1 + $0x1e4] sm:$0xf]
    %v146 = vld [vmem:[%s1 + $0x1e8] sm:$0xf]
    %v147 = vld [vmem:[%s1 + $0x1ec] sm:$0xf]
    %v148 = vld [vmem:[%s1 + $0x1f0] sm:$0xf]
    %v149 = vld [vmem:[%s1 + $0x1f4] sm:$0xf]
    %v150 = vld [vmem:[%s1 + $0x1f8] sm:$0xf]
    %v151 = vld [vmem:[%s1 + $0x1fc] sm:$0xf]
    %v152 = vld [vmem:[%s1 + $0x200] sm:$0xf]
    %v153 = vld [vmem:[%s1 + $0x204] sm:$0xf]
    %v154 = vld [vmem:[%s1 + $0x208] sm:$0xf]
    %v155 = vld [vmem:[%s1 + $0x20c] sm:$0xf]
    %v156 = vld [vmem:[%s1 + $0x210] sm:$0xf]
    %v157 = vld [vmem:[%s1 + $0x214] sm:$0xf]
    %v158 = vld [vmem:[%s1 + $0x218] sm:$0xf]
    %v159 = vld [vmem:[%s1 + $0x21c] sm:$0xf]
    %v160 = vld [vmem:[%s1 + $0x220] sm:$0xf]
    %v161 = vld [vmem:[%s1 + $0x224] sm:$0xf]
    %v162 = vld [vmem:[%s1 + $0x228] sm:$0xf]
    %v163 = vld [vmem:[%s1 + $0x22c] sm:$0xf]
    %v164 = vld [vmem:[%s1 + $0x230] sm:$0xf]
    %v165 = vld [vmem:[%s1 + $0x234] sm:$0xf]
    %v166 = vld [vmem:[%s1 + $0x238] sm:$0xf]
    %v167 = vld [vmem:[%s1 + $0x23c] sm:$0xf]
    %v168 = vld [vmem:[%s1 + $0x240] sm:$0xf]
    %v169 = vld [vmem:[%s1 + $0x244] sm:$0xf]
    %v170 = vld [vmem:[%s1 + $0x248] sm:$0xf]
    %v171 = vld [vmem:[%s1 + $0x24c] sm:$0xf]
    %v172 = vld [vmem:[%s1 + $0x250] sm:$0xf]
    %v173 = vld [vmem:[%s1 + $0x254] sm:$0xf]
    %v174 = vld [vmem:[%s1 + $0x258] sm:$0xf]
    %v175 = vld [vmem:[%s1 + $0x25c] sm:$0xf]
    %v176 = vld [vmem:[%s1 + $0x260] sm:$0xf]
    %v177 = vld [vmem:[%s1 + $0x264] sm:$0xf]
    %v178 = vld [vmem:[%s1 + $0x268] sm:$0xf]
    %v179 = vld [vmem:[%s1 + $0x26c] sm:$0xf]
    %v180 = vld [vmem:[%s1 + $0x270] sm:$0xf]
    %v181 = vld [vmem:[%s1 + $0x274] sm:$0xf]
    %v182 = vld [vmem:[%s1 + $0x278] sm:$0xf]
    %v183 = vld [vmem:[%s1 + $0x27c] sm:$0xf]
    %v184 = vld [vmem:[%s1 + $0x280] sm:$0xf]
    %v185 = vld [vmem:[%s1 + $0x284] sm:$0xf]
    %v186 = vld [vmem:[%s1 + $0x288] sm:$0xf]
    %v187 = vld [vmem:[%s1 + $0x28c] sm:$0xf]
    %v188 = vld [vmem:[%s1 + $0x290] sm:$0xf]
    %v189 = vld [vmem:[%s1 + $0x294] sm:$0xf]
    %v190 = vld [vmem:[%s1 + $0x298] sm:$0xf]
    %v191 = vld [vmem:[%s1 + $0x29c] sm:$0xf]
    %v192 = vld [vmem:[%s1 + $0x2a0] sm:$0xf]
    %v193 = vld [vmem:[%s1 + $0x2a4] sm:$0xf]
    %v194 = vld [vmem:[%s1 + $0x2a8] sm:$0xf]
    %v195 = vld [vmem:[%s1 + $0x2ac] sm:$0xf]
    %v196 = vld [vmem:[%s1 + $0x2b0] sm:$0xf]
    %v197 = vld [vmem:[%s1 + $0x2b4] sm:$0xf]
    %v198 = vld [vmem:[%s1 + $0x2b8] sm:$0xf]
    %v199 = vld [vmem:[%s1 + $0x2bc] sm:$0xf]
    %v200 = vld [vmem:[%s1 + $0x2c0] sm:$0xf]
    %v201 = vld [vmem:[%s1 + $0x2c4] sm:$0xf]
    %v202 = vld [vmem:[%s1 + $0x2c8] sm:$0xf]
    %v203 = vld [vmem:[%s1 + $0x2cc] sm:$0xf]
    %v204 = vld [vmem:[%s1 + $0x2d0] sm:$0xf]
    %v205 = vld [vmem:[%s1 + $0x2d4] sm:$0xf]
    %v206 = vld [vmem:[%s1 + $0x2d8] sm:$0xf]
    %v207 = vld [vmem:[%s1 + $0x2dc] sm:$0xf]
    %v208 = vld [vmem:[%s1 + $0x2e0] sm:$0xf]
    %v209 = vld [vmem:[%s1 + $0x2e4] sm:$0xf]
    %v210 = vld [vmem:[%s1 + $0x2e8] sm:$0xf]
    %v211 = vld [vmem:[%s1 + $0x2ec] sm:$0xf]
    %v212 = vld [vmem:[%s1 + $0x2f0] sm:$0xf]
    %v213 = vld [vmem:[%s1 + $0x2f4] sm:$0xf]
    %v214 = vld [vmem:[%s1 + $0x2f8] sm:$0xf]
    %v215 = vld [vmem:[%s1 + $0x2fc] sm:$0xf]
    %v216 = vld [vmem:[%s1 + $0x300] sm:$0xf]
    %v217 = vld [vmem:[%s1 + $0x304] sm:$0xf]
    %v218 = vld [vmem:[%s1 + $0x308] sm:$0xf]
    %v219 = vld [vmem:[%s1 + $0x30c] sm:$0xf]
    %v220 = vld [vmem:[%s1 + $0x310] sm:$0xf]
    %v221 = vld [vmem:[%s1 + $0x314] sm:$0xf]
    %v222 = vld [vmem:[%s1 + $0x318] sm:$0xf]
    %v223 = vld [vmem:[%s1 + $0x31c] sm:$0xf]
    %v224 = vld [vmem:[%s1 + $0x320] sm:$0xf]
    %v225 = vld [vmem:[%s1 + $0x324] sm:$0xf]
    %v226 = vld [vmem:[%s1 + $0x328] sm:$0xf]
    %v227 = vld [vmem:[%s1 + $0x32c] sm:$0xf]
    %v228 = vld [vmem:[%s1 + $0x330] sm:$0xf]
    %v229 = vld [vmem:[%s1 + $0x334] sm:$0xf]
    %v230 = vld [vmem:[%s1 + $0x338] sm:$0xf]
    %v231 = vld [vmem:[%s1 + $0x33c] sm:$0xf]
    %v232 = vld [vmem:[%s1 + $0x340] sm:$0xf]
    %v233 = vld [vmem:[%s1 + $0x344] sm:$0xf]
    %v234 = vld [vmem:[%s1 + $0x348] sm:$0xf]
    %v235 = vld [vmem:[%s1 + $0x34c] sm:$0xf]
    %v236 = vld [vmem:[%s1 + $0x350] sm:$0xf]
    %v237 = vld [vmem:[%s1 + $0x354] sm:$0xf]
    %v238 = vld [vmem:[%s1 + $0x358] sm:$0xf]
    %v239 = vld [vmem:[%s1 + $0x35c] sm:$0xf]
    %v240 = vld [vmem:[%s1 + $0x360] sm:$0xf]
    %v241 = vld [vmem:[%s1 + $0x364] sm:$0xf]
    %v242 = vld [vmem:[%s1 + $0x368] sm:$0xf]
    %v243 = vld [vmem:[%s1 + $0x36c] sm:$0xf]
    %v244 = vld [vmem:[%s1 + $0x370] sm:$0xf]
    %v245 = vld [vmem:[%s1 + $0x374] sm:$0xf]
    %v246 = vld [vmem:[%s1 + $0x378] sm:$0xf]
    %v247 = vld [vmem:[%s1 + $0x37c] sm:$0xf]
    %v248 = vld [vmem:[%s1 + $0x380] sm:$0xf]
    %v249 = vld [vmem:[%s1 + $0x384] sm:$0xf]
    %v250 = vld [vmem:[%s1 + $0x388] sm:$0xf]
    %v251 = vld [vmem:[%s1 + $0x38c] sm:$0xf]
    %v252 = vld [vmem:[%s1 + $0x390] sm:$0xf]
    %v253 = vld [vmem:[%s1 + $0x394] sm:$0xf]
    %v254 = vld [vmem:[%s1 + $0x398] sm:$0xf]
    %v255 = vld [vmem:[%s1 + $0x39c] sm:$0xf]
    %v256 = vld [vmem:[%s1 + $0x3a0] sm:$0xf]
    %v257 = vld [vmem:[%s1 + $0x3a4] sm:$0xf]
    %v258 = vld [vmem:[%s1 + $0x3a8] sm:$0xf]
    %v259 = vld [vmem:[%s1 + $0x3ac] sm:$0xf]
    %v260 = vld [vmem:[%s1 + $0x3b0] sm:$0xf]
    %v261 = vld [vmem:[%s1 + $0x3b4] sm:$0xf]
    %v262 = vld [vmem:[%s1 + $0x3b8] sm:$0xf]
    %v263 = vld [vmem:[%s1 + $0x3bc] sm:$0xf]
    %v264 = vld [vmem:[%s1 + $0x3c0] sm:$0xf]
    %v265 = vld [vmem:[%s1 + $0x3c4] sm:$0xf]
    %v266 = vld [vmem:[%s1 + $0x3c8] sm:$0xf]
    %v267 = vld [vmem:[%s1 + $0x3cc] sm:$0xf]
    %v268 = vld [vmem:[%s1 + $0x3d0] sm:$0xf]
    %v269 = vld [vmem:[%s1 + $0x3d4] sm:$0xf]
    %v270 = vld [vmem:[%s1 + $0x3d8] sm:$0xf]
    %v271 = vld [vmem:[%s1 + $0x3dc] sm:$0xf]
    %v272 = vld [vmem:[%s1 + $0x3e0] sm:$0xf]
    %v273 = vld [vmem:[%s1 + $0x3e4] sm:$0xf]
    %v274 = vld [vmem:[%s1 + $0x3e8] sm:$0xf]
    %v275 = vld [vmem:[%s1 + $0x3ec] sm:$0xf]
    %v276 = vld [vmem:[%s1 + $0x3f0] sm:$0xf]
    %v277 = vld [vmem:[%s1 + $0x3f4] sm:$0xf]
    %v278 = vld [vmem:[%s1 + $0x3f8] sm:$0xf]
    %v279 = vld [vmem:[%s1 + $0x3fc] sm:$0xf]
    %v280 = vld [vmem:[%s2] sm:$0x1]
    %v282 = vlaneseq
    %v283 = vshrl.u32 %v282, 7
    %v284 = vsub.s32 0, %v283
    %v285 = vrot.slane %v280, %v284
    %v289 = vcombine.high %v22, %v22
    %v291 = vunpack.c.l.s4 1966171168
    %v292 = vunpack.c.0.s8 %v291
    %v293 = vlaneseq
    %v294 = vshrl.u32 %v293, 7
    %v295 = vsub.s32 %v292, %v294
    %v296 = vrot.slane %v22, %v295
    %v298 = vunpack.c.l.s4 1966171168
    %v299 = vunpack.c.0.s8 %v298
    %v300 = vlaneseq
    %v301 = vshrl.u32 %v300, 7
    %v302 = vsub.s32 %v299, %v301
    %v303 = vrot.slane %v289, %v302
    %v304 = vcombine.high %v296, %v296
    %v305 = vcombine.high %v303, %v303
    %v307 = vunpack.c.l.s4 1966171168
    %v308 = vunpack.c.0.s8 %v307
    %v309 = vlaneseq
    %v310 = vshrl.u32 %v309, 7
    %v311 = vsub.s32 %v308, %v310
    %v312 = vrot.slane %v296, %v311
    %v314 = vunpack.c.l.s4 1966171168
    %v315 = vunpack.c.0.s8 %v314
    %v316 = vlaneseq
    %v317 = vshrl.u32 %v316, 7
    %v318 = vsub.s32 %v315, %v317
    %v319 = vrot.slane %v303, %v318
    %v321 = vunpack.c.l.s4 1966171168
    %v322 = vunpack.c.0.s8 %v321
    %v323 = vlaneseq
    %v324 = vshrl.u32 %v323, 7
    %v325 = vsub.s32 %v322, %v324
    %v326 = vrot.slane %v304, %v325
    %v328 = vunpack.c.l.s4 1966171168
    %v329 = vunpack.c.0.s8 %v328
    %v330 = vlaneseq
    %v331 = vshrl.u32 %v330, 7
    %v332 = vsub.s32 %v329, %v331
    %v333 = vrot.slane %v305, %v332
    %v334 = vcombine.high %v312, %v312
    %v335 = vcombine.high %v319, %v319
    %v336 = vcombine.high %v326, %v326
    %v337 = vcombine.high %v333, %v333
    %v338 = vcombine.high %v23, %v23
    %v340 = vunpack.c.l.s4 1966171168
    %v341 = vunpack.c.0.s8 %v340
    %v342 = vlaneseq
    %v343 = vshrl.u32 %v342, 7
    %v344 = vsub.s32 %v341, %v343
    %v345 = vrot.slane %v23, %v344
    %v347 = vunpack.c.l.s4 1966171168
    %v348 = vunpack.c.0.s8 %v347
    %v349 = vlaneseq
    %v350 = vshrl.u32 %v349, 7
    %v351 = vsub.s32 %v348, %v350
    %v352 = vrot.slane %v338, %v351
    %v353 = vcombine.high %v345, %v345
    %v354 = vcombine.high %v352, %v352
    %v356 = vunpack.c.l.s4 1966171168
    %v357 = vunpack.c.0.s8 %v356
    %v358 = vlaneseq
    %v359 = vshrl.u32 %v358, 7
    %v360 = vsub.s32 %v357, %v359
    %v361 = vrot.slane %v345, %v360
    %v363 = vunpack.c.l.s4 1966171168
    %v364 = vunpack.c.0.s8 %v363
    %v365 = vlaneseq
    %v366 = vshrl.u32 %v365, 7
    %v367 = vsub.s32 %v364, %v366
    %v368 = vrot.slane %v352, %v367
    %v370 = vunpack.c.l.s4 1966171168
    %v371 = vunpack.c.0.s8 %v370
    %v372 = vlaneseq
    %v373 = vshrl.u32 %v372, 7
    %v374 = vsub.s32 %v371, %v373
    %v375 = vrot.slane %v353, %v374
    %v377 = vunpack.c.l.s4 1966171168
    %v378 = vunpack.c.0.s8 %v377
    %v379 = vlaneseq
    %v380 = vshrl.u32 %v379, 7
    %v381 = vsub.s32 %v378, %v380
    %v382 = vrot.slane %v354, %v381
    %v383 = vcombine.high %v361, %v361
    %v384 = vcombine.high %v368, %v368
    %v385 = vcombine.high %v375, %v375
    %v386 = vcombine.high %v382, %v382
    %v659 = vunpack.c.l.b16 %v24
    %v660 = vunpack.c.l.b16 %v25
    %v661 = vunpack.c.l.b16 %v26
    %v662 = vunpack.c.l.b16 %v27
    %v663 = vunpack.c.l.b16 %v28
    %v664 = vunpack.c.l.b16 %v29
    %v665 = vunpack.c.l.b16 %v30
    %v666 = vunpack.c.l.b16 %v31
    %v667 = vunpack.c.l.b16 %v32
    %v668 = vunpack.c.l.b16 %v33
    %v669 = vunpack.c.l.b16 %v34
    %v670 = vunpack.c.l.b16 %v35
    %v671 = vunpack.c.l.b16 %v36
    %v672 = vunpack.c.l.b16 %v37
    %v673 = vunpack.c.l.b16 %v38
    %v674 = vunpack.c.l.b16 %v39
    %v675 = vunpack.c.l.b16 %v40
    %v676 = vunpack.c.l.b16 %v41
    %v677 = vunpack.c.l.b16 %v42
    %v678 = vunpack.c.l.b16 %v43
    %v679 = vunpack.c.l.b16 %v44
    %v680 = vunpack.c.l.b16 %v45
    %v681 = vunpack.c.l.b16 %v46
    %v682 = vunpack.c.l.b16 %v47
    %v683 = vunpack.c.l.b16 %v48
    %v684 = vunpack.c.l.b16 %v49
    %v685 = vunpack.c.l.b16 %v50
    %v686 = vunpack.c.l.b16 %v51
    %v687 = vunpack.c.l.b16 %v52
    %v688 = vunpack.c.l.b16 %v53
    %v689 = vunpack.c.l.b16 %v54
    %v690 = vunpack.c.l.b16 %v55
    %v691 = vunpack.c.l.b16 %v56
    %v692 = vunpack.c.l.b16 %v57
    %v693 = vunpack.c.l.b16 %v58
    %v694 = vunpack.c.l.b16 %v59
    %v695 = vunpack.c.l.b16 %v60
    %v696 = vunpack.c.l.b16 %v61
    %v697 = vunpack.c.l.b16 %v62
    %v698 = vunpack.c.l.b16 %v63
    %v699 = vunpack.c.l.b16 %v64
    %v700 = vunpack.c.l.b16 %v65
    %v701 = vunpack.c.l.b16 %v66
    %v702 = vunpack.c.l.b16 %v67
    %v703 = vunpack.c.l.b16 %v68
    %v704 = vunpack.c.l.b16 %v69
    %v705 = vunpack.c.l.b16 %v70
    %v706 = vunpack.c.l.b16 %v71
    %v707 = vunpack.c.l.b16 %v72
    %v708 = vunpack.c.l.b16 %v73
    %v709 = vunpack.c.l.b16 %v74
    %v710 = vunpack.c.l.b16 %v75
    %v711 = vunpack.c.l.b16 %v76
    %v712 = vunpack.c.l.b16 %v77
    %v713 = vunpack.c.l.b16 %v78
    %v714 = vunpack.c.l.b16 %v79
    %v715 = vunpack.c.l.b16 %v80
    %v716 = vunpack.c.l.b16 %v81
    %v717 = vunpack.c.l.b16 %v82
    %v718 = vunpack.c.l.b16 %v83
    %v719 = vunpack.c.l.b16 %v84
    %v720 = vunpack.c.l.b16 %v85
    %v721 = vunpack.c.l.b16 %v86
    %v722 = vunpack.c.l.b16 %v87
    %v723 = vunpack.c.l.b16 %v88
    %v724 = vunpack.c.l.b16 %v89
    %v725 = vunpack.c.l.b16 %v90
    %v726 = vunpack.c.l.b16 %v91
    %v727 = vunpack.c.l.b16 %v92
    %v728 = vunpack.c.l.b16 %v93
    %v729 = vunpack.c.l.b16 %v94
    %v730 = vunpack.c.l.b16 %v95
    %v731 = vunpack.c.l.b16 %v96
    %v732 = vunpack.c.l.b16 %v97
    %v733 = vunpack.c.l.b16 %v98
    %v734 = vunpack.c.l.b16 %v99
    %v735 = vunpack.c.l.b16 %v100
    %v736 = vunpack.c.l.b16 %v101
    %v737 = vunpack.c.l.b16 %v102
    %v738 = vunpack.c.l.b16 %v103
    %v739 = vunpack.c.l.b16 %v104
    %v740 = vunpack.c.l.b16 %v105
    %v741 = vunpack.c.l.b16 %v106
    %v742 = vunpack.c.l.b16 %v107
    %v743 = vunpack.c.l.b16 %v108
    %v744 = vunpack.c.l.b16 %v109
    %v745 = vunpack.c.l.b16 %v110
    %v746 = vunpack.c.l.b16 %v111
    %v747 = vunpack.c.l.b16 %v112
    %v748 = vunpack.c.l.b16 %v113
    %v749 = vunpack.c.l.b16 %v114
    %v750 = vunpack.c.l.b16 %v115
    %v751 = vunpack.c.l.b16 %v116
    %v752 = vunpack.c.l.b16 %v117
    %v753 = vunpack.c.l.b16 %v118
    %v754 = vunpack.c.l.b16 %v119
    %v755 = vunpack.c.l.b16 %v120
    %v756 = vunpack.c.l.b16 %v121
    %v757 = vunpack.c.l.b16 %v122
    %v758 = vunpack.c.l.b16 %v123
    %v759 = vunpack.c.l.b16 %v124
    %v760 = vunpack.c.l.b16 %v125
    %v761 = vunpack.c.l.b16 %v126
    %v762 = vunpack.c.l.b16 %v127
    %v763 = vunpack.c.l.b16 %v128
    %v764 = vunpack.c.l.b16 %v129
    %v765 = vunpack.c.l.b16 %v130
    %v766 = vunpack.c.l.b16 %v131
    %v767 = vunpack.c.l.b16 %v132
    %v768 = vunpack.c.l.b16 %v133
    %v769 = vunpack.c.l.b16 %v134
    %v770 = vunpack.c.l.b16 %v135
    %v771 = vunpack.c.l.b16 %v136
    %v772 = vunpack.c.l.b16 %v137
    %v773 = vunpack.c.l.b16 %v138
    %v774 = vunpack.c.l.b16 %v139
    %v775 = vunpack.c.l.b16 %v140
    %v776 = vunpack.c.l.b16 %v141
    %v777 = vunpack.c.l.b16 %v142
    %v778 = vunpack.c.l.b16 %v143
    %v779 = vunpack.c.l.b16 %v144
    %v780 = vunpack.c.l.b16 %v145
    %v781 = vunpack.c.l.b16 %v146
    %v782 = vunpack.c.l.b16 %v147
    %v783 = vunpack.c.l.b16 %v148
    %v784 = vunpack.c.l.b16 %v149
    %v785 = vunpack.c.l.b16 %v150
    %v786 = vunpack.c.l.b16 %v151
    %v787 = vunpack.c.l.b16 %v152
    %v788 = vunpack.c.l.b16 %v153
    %v789 = vunpack.c.l.b16 %v154
    %v790 = vunpack.c.l.b16 %v155
    %v791 = vunpack.c.l.b16 %v156
    %v792 = vunpack.c.l.b16 %v157
    %v793 = vunpack.c.l.b16 %v158
    %v794 = vunpack.c.l.b16 %v159
    %v795 = vunpack.c.l.b16 %v160
    %v796 = vunpack.c.l.b16 %v161
    %v797 = vunpack.c.l.b16 %v162
    %v798 = vunpack.c.l.b16 %v163
    %v799 = vunpack.c.l.b16 %v164
    %v800 = vunpack.c.l.b16 %v165
    %v801 = vunpack.c.l.b16 %v166
    %v802 = vunpack.c.l.b16 %v167
    %v803 = vunpack.c.l.b16 %v168
    %v804 = vunpack.c.l.b16 %v169
    %v805 = vunpack.c.l.b16 %v170
    %v806 = vunpack.c.l.b16 %v171
    %v807 = vunpack.c.l.b16 %v172
    %v808 = vunpack.c.l.b16 %v173
    %v809 = vunpack.c.l.b16 %v174
    %v810 = vunpack.c.l.b16 %v175
    %v811 = vunpack.c.l.b16 %v176
    %v812 = vunpack.c.l.b16 %v177
    %v813 = vunpack.c.l.b16 %v178
    %v814 = vunpack.c.l.b16 %v179
    %v815 = vunpack.c.l.b16 %v180
    %v816 = vunpack.c.l.b16 %v181
    %v817 = vunpack.c.l.b16 %v182
    %v818 = vunpack.c.l.b16 %v183
    %v819 = vunpack.c.l.b16 %v184
    %v820 = vunpack.c.l.b16 %v185
    %v821 = vunpack.c.l.b16 %v186
    %v822 = vunpack.c.l.b16 %v187
    %v823 = vunpack.c.l.b16 %v188
    %v824 = vunpack.c.l.b16 %v189
    %v825 = vunpack.c.l.b16 %v190
    %v826 = vunpack.c.l.b16 %v191
    %v827 = vunpack.c.l.b16 %v192
    %v828 = vunpack.c.l.b16 %v193
    %v829 = vunpack.c.l.b16 %v194
    %v830 = vunpack.c.l.b16 %v195
    %v831 = vunpack.c.l.b16 %v196
    %v832 = vunpack.c.l.b16 %v197
    %v833 = vunpack.c.l.b16 %v198
    %v834 = vunpack.c.l.b16 %v199
    %v835 = vunpack.c.l.b16 %v200
    %v836 = vunpack.c.l.b16 %v201
    %v837 = vunpack.c.l.b16 %v202
    %v838 = vunpack.c.l.b16 %v203
    %v839 = vunpack.c.l.b16 %v204
    %v840 = vunpack.c.l.b16 %v205
    %v841 = vunpack.c.l.b16 %v206
    %v842 = vunpack.c.l.b16 %v207
    %v843 = vunpack.c.l.b16 %v208
    %v844 = vunpack.c.l.b16 %v209
    %v845 = vunpack.c.l.b16 %v210
    %v846 = vunpack.c.l.b16 %v211
    %v847 = vunpack.c.l.b16 %v212
    %v848 = vunpack.c.l.b16 %v213
    %v849 = vunpack.c.l.b16 %v214
    %v850 = vunpack.c.l.b16 %v215
    %v851 = vunpack.c.l.b16 %v216
    %v852 = vunpack.c.l.b16 %v217
    %v853 = vunpack.c.l.b16 %v218
    %v854 = vunpack.c.l.b16 %v219
    %v855 = vunpack.c.l.b16 %v220
    %v856 = vunpack.c.l.b16 %v221
    %v857 = vunpack.c.l.b16 %v222
    %v858 = vunpack.c.l.b16 %v223
    %v859 = vunpack.c.l.b16 %v224
    %v860 = vunpack.c.l.b16 %v225
    %v861 = vunpack.c.l.b16 %v226
    %v862 = vunpack.c.l.b16 %v227
    %v863 = vunpack.c.l.b16 %v228
    %v864 = vunpack.c.l.b16 %v229
    %v865 = vunpack.c.l.b16 %v230
    %v866 = vunpack.c.l.b16 %v231
    %v867 = vunpack.c.l.b16 %v232
    %v868 = vunpack.c.l.b16 %v233
    %v869 = vunpack.c.l.b16 %v234
    %v870 = vunpack.c.l.b16 %v235
    %v871 = vunpack.c.l.b16 %v236
    %v872 = vunpack.c.l.b16 %v237
    %v873 = vunpack.c.l.b16 %v238
    %v874 = vunpack.c.l.b16 %v239
    %v875 = vunpack.c.l.b16 %v240
    %v876 = vunpack.c.l.b16 %v241
    %v877 = vunpack.c.l.b16 %v242
    %v878 = vunpack.c.l.b16 %v243
    %v879 = vunpack.c.l.b16 %v244
    %v880 = vunpack.c.l.b16 %v245
    %v881 = vunpack.c.l.b16 %v246
    %v882 = vunpack.c.l.b16 %v247
    %v883 = vunpack.c.l.b16 %v248
    %v884 = vunpack.c.l.b16 %v249
    %v885 = vunpack.c.l.b16 %v250
    %v886 = vunpack.c.l.b16 %v251
    %v887 = vunpack.c.l.b16 %v252
    %v888 = vunpack.c.l.b16 %v253
    %v889 = vunpack.c.l.b16 %v254
    %v890 = vunpack.c.l.b16 %v255
    %v891 = vunpack.c.l.b16 %v256
    %v892 = vunpack.c.l.b16 %v257
    %v893 = vunpack.c.l.b16 %v258
    %v894 = vunpack.c.l.b16 %v259
    %v895 = vunpack.c.l.b16 %v260
    %v896 = vunpack.c.l.b16 %v261
    %v897 = vunpack.c.l.b16 %v262
    %v898 = vunpack.c.l.b16 %v263
    %v899 = vunpack.c.l.b16 %v264
    %v900 = vunpack.c.l.b16 %v265
    %v901 = vunpack.c.l.b16 %v266
    %v902 = vunpack.c.l.b16 %v267
    %v903 = vunpack.c.l.b16 %v268
    %v904 = vunpack.c.l.b16 %v269
    %v905 = vunpack.c.l.b16 %v270
    %v906 = vunpack.c.l.b16 %v271
    %v907 = vunpack.c.l.b16 %v272
    %v908 = vunpack.c.l.b16 %v273
    %v909 = vunpack.c.l.b16 %v274
    %v910 = vunpack.c.l.b16 %v275
    %v911 = vunpack.c.l.b16 %v276
    %v912 = vunpack.c.l.b16 %v277
    %v913 = vunpack.c.l.b16 %v278
    %v914 = vunpack.c.l.b16 %v279
    %v915 = vpack.c.b16 %v660, %v659
    %v916 = vpack.c.b16 %v662, %v661
    %v917 = vpack.c.b16 %v664, %v663
    %v918 = vpack.c.b16 %v666, %v665
    %v919 = vpack.c.b16 %v668, %v667
    %v920 = vpack.c.b16 %v670, %v669
    %v921 = vpack.c.b16 %v672, %v671
    %v922 = vpack.c.b16 %v674, %v673
    %v923 = vpack.c.b16 %v676, %v675
    %v924 = vpack.c.b16 %v678, %v677
    %v925 = vpack.c.b16 %v680, %v679
    %v926 = vpack.c.b16 %v682, %v681
    %v927 = vpack.c.b16 %v684, %v683
    %v928 = vpack.c.b16 %v686, %v685
    %v929 = vpack.c.b16 %v688, %v687
    %v930 = vpack.c.b16 %v690, %v689
    %v931 = vpack.c.b16 %v692, %v691
    %v932 = vpack.c.b16 %v694, %v693
    %v933 = vpack.c.b16 %v696, %v695
    %v934 = vpack.c.b16 %v698, %v697
    %v935 = vpack.c.b16 %v700, %v699
    %v936 = vpack.c.b16 %v702, %v701
    %v937 = vpack.c.b16 %v704, %v703
    %v938 = vpack.c.b16 %v706, %v705
    %v939 = vpack.c.b16 %v708, %v707
    %v940 = vpack.c.b16 %v710, %v709
    %v941 = vpack.c.b16 %v712, %v711
    %v942 = vpack.c.b16 %v714, %v713
    %v943 = vpack.c.b16 %v716, %v715
    %v944 = vpack.c.b16 %v718, %v717
    %v945 = vpack.c.b16 %v720, %v719
    %v946 = vpack.c.b16 %v722, %v721
    %v947 = vpack.c.b16 %v724, %v723
    %v948 = vpack.c.b16 %v726, %v725
    %v949 = vpack.c.b16 %v728, %v727
    %v950 = vpack.c.b16 %v730, %v729
    %v951 = vpack.c.b16 %v732, %v731
    %v952 = vpack.c.b16 %v734, %v733
    %v953 = vpack.c.b16 %v736, %v735
    %v954 = vpack.c.b16 %v738, %v737
    %v955 = vpack.c.b16 %v740, %v739
    %v956 = vpack.c.b16 %v742, %v741
    %v957 = vpack.c.b16 %v744, %v743
    %v958 = vpack.c.b16 %v746, %v745
    %v959 = vpack.c.b16 %v748, %v747
    %v960 = vpack.c.b16 %v750, %v749
    %v961 = vpack.c.b16 %v752, %v751
    %v962 = vpack.c.b16 %v754, %v753
    %v963 = vpack.c.b16 %v756, %v755
    %v964 = vpack.c.b16 %v758, %v757
    %v965 = vpack.c.b16 %v760, %v759
    %v966 = vpack.c.b16 %v762, %v761
    %v967 = vpack.c.b16 %v764, %v763
    %v968 = vpack.c.b16 %v766, %v765
    %v969 = vpack.c.b16 %v768, %v767
    %v970 = vpack.c.b16 %v770, %v769
    %v971 = vpack.c.b16 %v772, %v771
    %v972 = vpack.c.b16 %v774, %v773
    %v973 = vpack.c.b16 %v776, %v775
    %v974 = vpack.c.b16 %v778, %v777
    %v975 = vpack.c.b16 %v780, %v779
    %v976 = vpack.c.b16 %v782, %v781
    %v977 = vpack.c.b16 %v784, %v783
    %v978 = vpack.c.b16 %v786, %v785
    %v979 = vpack.c.b16 %v788, %v787
    %v980 = vpack.c.b16 %v790, %v789
    %v981 = vpack.c.b16 %v792, %v791
    %v982 = vpack.c.b16 %v794, %v793
    %v983 = vpack.c.b16 %v796, %v795
    %v984 = vpack.c.b16 %v798, %v797
    %v985 = vpack.c.b16 %v800, %v799
    %v986 = vpack.c.b16 %v802, %v801
    %v987 = vpack.c.b16 %v804, %v803
    %v988 = vpack.c.b16 %v806, %v805
    %v989 = vpack.c.b16 %v808, %v807
    %v990 = vpack.c.b16 %v810, %v809
    %v991 = vpack.c.b16 %v812, %v811
    %v992 = vpack.c.b16 %v814, %v813
    %v993 = vpack.c.b16 %v816, %v815
    %v994 = vpack.c.b16 %v818, %v817
    %v995 = vpack.c.b16 %v820, %v819
    %v996 = vpack.c.b16 %v822, %v821
    %v997 = vpack.c.b16 %v824, %v823
    %v998 = vpack.c.b16 %v826, %v825
    %v999 = vpack.c.b16 %v828, %v827
    %v1000 = vpack.c.b16 %v830, %v829
    %v1001 = vpack.c.b16 %v832, %v831
    %v1002 = vpack.c.b16 %v834, %v833
    %v1003 = vpack.c.b16 %v836, %v835
    %v1004 = vpack.c.b16 %v838, %v837
    %v1005 = vpack.c.b16 %v840, %v839
    %v1006 = vpack.c.b16 %v842, %v841
    %v1007 = vpack.c.b16 %v844, %v843
    %v1008 = vpack.c.b16 %v846, %v845
    %v1009 = vpack.c.b16 %v848, %v847
    %v1010 = vpack.c.b16 %v850, %v849
    %v1011 = vpack.c.b16 %v852, %v851
    %v1012 = vpack.c.b16 %v854, %v853
    %v1013 = vpack.c.b16 %v856, %v855
    %v1014 = vpack.c.b16 %v858, %v857
    %v1015 = vpack.c.b16 %v860, %v859
    %v1016 = vpack.c.b16 %v862, %v861
    %v1017 = vpack.c.b16 %v864, %v863
    %v1018 = vpack.c.b16 %v866, %v865
    %v1019 = vpack.c.b16 %v868, %v867
    %v1020 = vpack.c.b16 %v870, %v869
    %v1021 = vpack.c.b16 %v872, %v871
    %v1022 = vpack.c.b16 %v874, %v873
    %v1023 = vpack.c.b16 %v876, %v875
    %v1024 = vpack.c.b16 %v878, %v877
    %v1025 = vpack.c.b16 %v880, %v879
    %v1026 = vpack.c.b16 %v882, %v881
    %v1027 = vpack.c.b16 %v884, %v883
    %v1028 = vpack.c.b16 %v886, %v885
    %v1029 = vpack.c.b16 %v888, %v887
    %v1030 = vpack.c.b16 %v890, %v889
    %v1031 = vpack.c.b16 %v892, %v891
    %v1032 = vpack.c.b16 %v894, %v893
    %v1033 = vpack.c.b16 %v896, %v895
    %v1034 = vpack.c.b16 %v898, %v897
    %v1035 = vpack.c.b16 %v900, %v899
    %v1036 = vpack.c.b16 %v902, %v901
    %v1037 = vpack.c.b16 %v904, %v903
    %v1038 = vpack.c.b16 %v906, %v905
    %v1039 = vpack.c.b16 %v908, %v907
    %v1040 = vpack.c.b16 %v910, %v909
    %v1041 = vpack.c.b16 %v912, %v911
    %v1042 = vpack.c.b16 %v914, %v913
    %1171 = vmatprep.subr.bf16.mxu0 0
    %1172 = vmatpush1.bf16.msra.mxu0 %v922
    %1173 = vmatprep.subr.bf16.mxu0 0
    %1174 = vmatpush1.bf16.msra.mxu0 %v921
    %1175 = vmatprep.subr.bf16.mxu0 0
    %1176 = vmatpush1.bf16.msra.mxu0 %v920
    %1177 = vmatprep.subr.bf16.mxu0 0
    %1178 = vmatpush1.bf16.msra.mxu0 %v919
    %1179 = vmatprep.subr.bf16.mxu0 0
    %1180 = vmatpush1.bf16.msra.mxu0 %v918
    %1181 = vmatprep.subr.bf16.mxu0 0
    %1182 = vmatpush1.bf16.msra.mxu0 %v917
    %1183 = vmatprep.subr.bf16.mxu0 0
    %1184 = vmatpush1.bf16.msra.mxu0 %v916
    %1185 = vmatprep.subr.bf16.mxu0 0
    %1186 = vmatpush1.bf16.msra.mxu0 %v915
    %1187 = vmatprep.subr.bf16.mxu0 0
    %1188 = vmatpush2.bf16.msra.mxu0 %v930
    %1189 = vmatprep.subr.bf16.mxu0 0
    %1190 = vmatpush2.bf16.msra.mxu0 %v929
    %1191 = vmatprep.subr.bf16.mxu0 0
    %1192 = vmatpush2.bf16.msra.mxu0 %v928
    %1193 = vmatprep.subr.bf16.mxu0 0
    %1194 = vmatpush2.bf16.msra.mxu0 %v927
    %1195 = vmatprep.subr.bf16.mxu0 0
    %1196 = vmatpush2.bf16.msra.mxu0 %v926
    %1197 = vmatprep.subr.bf16.mxu0 0
    %1198 = vmatpush2.bf16.msra.mxu0 %v925
    %1199 = vmatprep.subr.bf16.mxu0 0
    %1200 = vmatpush2.bf16.msra.mxu0 %v924
    %1201 = vmatprep.subr.bf16.mxu0 0
    %1202 = vmatpush2.bf16.msra.mxu0 %v923
    %1203 = vmatprep.mubr.bf16.mxu0 %v326
    %1204 = vmatmul.mubr.bf16.gmra.mxu0 %v312
    %v1205 = vpop.f32.mrf.mxu0
    %v1206 = vadd.f32 %v285, %v1205
    %v1207 = vpop.f32.mrf.mxu0
    %v1208 = vpop.f32.mrf.mxu0
    %v1209 = vpop.f32.mrf.mxu0
    %1210 = vdwg.mxu0
    %1211 = vmatprep.subr.bf16.mxu0 0
    %1212 = vmatpush1.bf16.msra.mxu0 %v938
    %1213 = vmatprep.subr.bf16.mxu0 0
    %1214 = vmatpush1.bf16.msra.mxu0 %v937
    %1215 = vmatprep.subr.bf16.mxu0 0
    %1216 = vmatpush1.bf16.msra.mxu0 %v936
    %1217 = vmatprep.subr.bf16.mxu0 0
    %1218 = vmatpush1.bf16.msra.mxu0 %v935
    %1219 = vmatprep.subr.bf16.mxu0 0
    %1220 = vmatpush1.bf16.msra.mxu0 %v934
    %1221 = vmatprep.subr.bf16.mxu0 0
    %1222 = vmatpush1.bf16.msra.mxu0 %v933
    %1223 = vmatprep.subr.bf16.mxu0 0
    %1224 = vmatpush1.bf16.msra.mxu0 %v932
    %1225 = vmatprep.subr.bf16.mxu0 0
    %1226 = vmatpush1.bf16.msra.mxu0 %v931
    %1227 = vmatprep.subr.bf16.mxu0 0
    %1228 = vmatpush2.bf16.msra.mxu0 %v946
    %1229 = vmatprep.subr.bf16.mxu0 0
    %1230 = vmatpush2.bf16.msra.mxu0 %v945
    %1231 = vmatprep.subr.bf16.mxu0 0
    %1232 = vmatpush2.bf16.msra.mxu0 %v944
    %1233 = vmatprep.subr.bf16.mxu0 0
    %1234 = vmatpush2.bf16.msra.mxu0 %v943
    %1235 = vmatprep.subr.bf16.mxu0 0
    %1236 = vmatpush2.bf16.msra.mxu0 %v942
    %1237 = vmatprep.subr.bf16.mxu0 0
    %1238 = vmatpush2.bf16.msra.mxu0 %v941
    %1239 = vmatprep.subr.bf16.mxu0 0
    %1240 = vmatpush2.bf16.msra.mxu0 %v940
    %1241 = vmatprep.subr.bf16.mxu0 0
    %1242 = vmatpush2.bf16.msra.mxu0 %v939
    %1243 = vmatprep.mubr.bf16.mxu0 %v336
    %1244 = vmatmul.mubr.bf16.gmra.mxu0 %v334
    %v1245 = vpop.f32.mrf.mxu0
    %v1246 = vadd.f32 %v1206, %v1245
    %v1247 = vpop.f32.mrf.mxu0
    %v1248 = vpop.f32.mrf.mxu0
    %v1249 = vpop.f32.mrf.mxu0
    %1250 = vdwg.mxu0
    %1251 = vmatprep.subr.bf16.mxu0 0
    %1252 = vmatpush1.bf16.msra.mxu0 %v954
    %1253 = vmatprep.subr.bf16.mxu0 0
    %1254 = vmatpush1.bf16.msra.mxu0 %v953
    %1255 = vmatprep.subr.bf16.mxu0 0
    %1256 = vmatpush1.bf16.msra.mxu0 %v952
    %1257 = vmatprep.subr.bf16.mxu0 0
    %1258 = vmatpush1.bf16.msra.mxu0 %v951
    %1259 = vmatprep.subr.bf16.mxu0 0
    %1260 = vmatpush1.bf16.msra.mxu0 %v950
    %1261 = vmatprep.subr.bf16.mxu0 0
    %1262 = vmatpush1.bf16.msra.mxu0 %v949
    %1263 = vmatprep.subr.bf16.mxu0 0
    %1264 = vmatpush1.bf16.msra.mxu0 %v948
    %1265 = vmatprep.subr.bf16.mxu0 0
    %1266 = vmatpush1.bf16.msra.mxu0 %v947
    %1267 = vmatprep.subr.bf16.mxu0 0
    %1268 = vmatpush2.bf16.msra.mxu0 %v962
    %1269 = vmatprep.subr.bf16.mxu0 0
    %1270 = vmatpush2.bf16.msra.mxu0 %v961
    %1271 = vmatprep.subr.bf16.mxu0 0
    %1272 = vmatpush2.bf16.msra.mxu0 %v960
    %1273 = vmatprep.subr.bf16.mxu0 0
    %1274 = vmatpush2.bf16.msra.mxu0 %v959
    %1275 = vmatprep.subr.bf16.mxu0 0
    %1276 = vmatpush2.bf16.msra.mxu0 %v958
    %1277 = vmatprep.subr.bf16.mxu0 0
    %1278 = vmatpush2.bf16.msra.mxu0 %v957
    %1279 = vmatprep.subr.bf16.mxu0 0
    %1280 = vmatpush2.bf16.msra.mxu0 %v956
    %1281 = vmatprep.subr.bf16.mxu0 0
    %1282 = vmatpush2.bf16.msra.mxu0 %v955
    %1283 = vmatprep.mubr.bf16.mxu0 %v333
    %1284 = vmatmul.mubr.bf16.gmra.mxu0 %v319
    %v1285 = vpop.f32.mrf.mxu0
    %v1286 = vadd.f32 %v1246, %v1285
    %v1287 = vpop.f32.mrf.mxu0
    %v1288 = vpop.f32.mrf.mxu0
    %v1289 = vpop.f32.mrf.mxu0
    %1290 = vdwg.mxu0
    %1291 = vmatprep.subr.bf16.mxu0 0
    %1292 = vmatpush1.bf16.msra.mxu0 %v970
    %1293 = vmatprep.subr.bf16.mxu0 0
    %1294 = vmatpush1.bf16.msra.mxu0 %v969
    %1295 = vmatprep.subr.bf16.mxu0 0
    %1296 = vmatpush1.bf16.msra.mxu0 %v968
    %1297 = vmatprep.subr.bf16.mxu0 0
    %1298 = vmatpush1.bf16.msra.mxu0 %v967
    %1299 = vmatprep.subr.bf16.mxu0 0
    %1300 = vmatpush1.bf16.msra.mxu0 %v966
    %1301 = vmatprep.subr.bf16.mxu0 0
    %1302 = vmatpush1.bf16.msra.mxu0 %v965
    %1303 = vmatprep.subr.bf16.mxu0 0
    %1304 = vmatpush1.bf16.msra.mxu0 %v964
    %1305 = vmatprep.subr.bf16.mxu0 0
    %1306 = vmatpush1.bf16.msra.mxu0 %v963
    %1307 = vmatprep.subr.bf16.mxu0 0
    %1308 = vmatpush2.bf16.msra.mxu0 %v978
    %1309 = vmatprep.subr.bf16.mxu0 0
    %1310 = vmatpush2.bf16.msra.mxu0 %v977
    %1311 = vmatprep.subr.bf16.mxu0 0
    %1312 = vmatpush2.bf16.msra.mxu0 %v976
    %1313 = vmatprep.subr.bf16.mxu0 0
    %1314 = vmatpush2.bf16.msra.mxu0 %v975
    %1315 = vmatprep.subr.bf16.mxu0 0
    %1316 = vmatpush2.bf16.msra.mxu0 %v974
    %1317 = vmatprep.subr.bf16.mxu0 0
    %1318 = vmatpush2.bf16.msra.mxu0 %v973
    %1319 = vmatprep.subr.bf16.mxu0 0
    %1320 = vmatpush2.bf16.msra.mxu0 %v972
    %1321 = vmatprep.subr.bf16.mxu0 0
    %1322 = vmatpush2.bf16.msra.mxu0 %v971
    %1323 = vmatprep.mubr.bf16.mxu0 %v337
    %1324 = vmatmul.mubr.bf16.gmra.mxu0 %v335
    %v1325 = vpop.f32.mrf.mxu0
    %v1326 = vadd.f32 %v1286, %v1325
    %v1327 = vpop.f32.mrf.mxu0
    %v1328 = vpop.f32.mrf.mxu0
    %v1329 = vpop.f32.mrf.mxu0
    %1330 = vdwg.mxu0
    %1331 = vmatprep.subr.bf16.mxu0 0
    %1332 = vmatpush1.bf16.msra.mxu0 %v986
    %1333 = vmatprep.subr.bf16.mxu0 0
    %1334 = vmatpush1.bf16.msra.mxu0 %v985
    %1335 = vmatprep.subr.bf16.mxu0 0
    %1336 = vmatpush1.bf16.msra.mxu0 %v984
    %1337 = vmatprep.subr.bf16.mxu0 0
    %1338 = vmatpush1.bf16.msra.mxu0 %v983
    %1339 = vmatprep.subr.bf16.mxu0 0
    %1340 = vmatpush1.bf16.msra.mxu0 %v982
    %1341 = vmatprep.subr.bf16.mxu0 0
    %1342 = vmatpush1.bf16.msra.mxu0 %v981
    %1343 = vmatprep.subr.bf16.mxu0 0
    %1344 = vmatpush1.bf16.msra.mxu0 %v980
    %1345 = vmatprep.subr.bf16.mxu0 0
    %1346 = vmatpush1.bf16.msra.mxu0 %v979
    %1347 = vmatprep.subr.bf16.mxu0 0
    %1348 = vmatpush2.bf16.msra.mxu0 %v994
    %1349 = vmatprep.subr.bf16.mxu0 0
    %1350 = vmatpush2.bf16.msra.mxu0 %v993
    %1351 = vmatprep.subr.bf16.mxu0 0
    %1352 = vmatpush2.bf16.msra.mxu0 %v992
    %1353 = vmatprep.subr.bf16.mxu0 0
    %1354 = vmatpush2.bf16.msra.mxu0 %v991
    %1355 = vmatprep.subr.bf16.mxu0 0
    %1356 = vmatpush2.bf16.msra.mxu0 %v990
    %1357 = vmatprep.subr.bf16.mxu0 0
    %1358 = vmatpush2.bf16.msra.mxu0 %v989
    %1359 = vmatprep.subr.bf16.mxu0 0
    %1360 = vmatpush2.bf16.msra.mxu0 %v988
    %1361 = vmatprep.subr.bf16.mxu0 0
    %1362 = vmatpush2.bf16.msra.mxu0 %v987
    %1363 = vmatprep.mubr.bf16.mxu0 %v375
    %1364 = vmatmul.mubr.bf16.gmra.mxu0 %v361
    %v1365 = vpop.f32.mrf.mxu0
    %v1366 = vadd.f32 %v1326, %v1365
    %v1367 = vpop.f32.mrf.mxu0
    %v1368 = vpop.f32.mrf.mxu0
    %v1369 = vpop.f32.mrf.mxu0
    %1370 = vdwg.mxu0
    %1371 = vmatprep.subr.bf16.mxu0 0
    %1372 = vmatpush1.bf16.msra.mxu0 %v1002
    %1373 = vmatprep.subr.bf16.mxu0 0
    %1374 = vmatpush1.bf16.msra.mxu0 %v1001
    %1375 = vmatprep.subr.bf16.mxu0 0
    %1376 = vmatpush1.bf16.msra.mxu0 %v1000
    %1377 = vmatprep.subr.bf16.mxu0 0
    %1378 = vmatpush1.bf16.msra.mxu0 %v999
    %1379 = vmatprep.subr.bf16.mxu0 0
    %1380 = vmatpush1.bf16.msra.mxu0 %v998
    %1381 = vmatprep.subr.bf16.mxu0 0
    %1382 = vmatpush1.bf16.msra.mxu0 %v997
    %1383 = vmatprep.subr.bf16.mxu0 0
    %1384 = vmatpush1.bf16.msra.mxu0 %v996
    %1385 = vmatprep.subr.bf16.mxu0 0
    %1386 = vmatpush1.bf16.msra.mxu0 %v995
    %1387 = vmatprep.subr.bf16.mxu0 0
    %1388 = vmatpush2.bf16.msra.mxu0 %v1010
    %1389 = vmatprep.subr.bf16.mxu0 0
    %1390 = vmatpush2.bf16.msra.mxu0 %v1009
    %1391 = vmatprep.subr.bf16.mxu0 0
    %1392 = vmatpush2.bf16.msra.mxu0 %v1008
    %1393 = vmatprep.subr.bf16.mxu0 0
    %1394 = vmatpush2.bf16.msra.mxu0 %v1007
    %1395 = vmatprep.subr.bf16.mxu0 0
    %1396 = vmatpush2.bf16.msra.mxu0 %v1006
    %1397 = vmatprep.subr.bf16.mxu0 0
    %1398 = vmatpush2.bf16.msra.mxu0 %v1005
    %1399 = vmatprep.subr.bf16.mxu0 0
    %1400 = vmatpush2.bf16.msra.mxu0 %v1004
    %1401 = vmatprep.subr.bf16.mxu0 0
    %1402 = vmatpush2.bf16.msra.mxu0 %v1003
    %1403 = vmatprep.mubr.bf16.mxu0 %v385
    %1404 = vmatmul.mubr.bf16.gmra.mxu0 %v383
    %v1405 = vpop.f32.mrf.mxu0
    %v1406 = vadd.f32 %v1366, %v1405
    %v1407 = vpop.f32.mrf.mxu0
    %v1408 = vpop.f32.mrf.mxu0
    %v1409 = vpop.f32.mrf.mxu0
    %1410 = vdwg.mxu0
    %1411 = vmatprep.subr.bf16.mxu0 0
    %1412 = vmatpush1.bf16.msra.mxu0 %v1018
    %1413 = vmatprep.subr.bf16.mxu0 0
    %1414 = vmatpush1.bf16.msra.mxu0 %v1017
    %1415 = vmatprep.subr.bf16.mxu0 0
    %1416 = vmatpush1.bf16.msra.mxu0 %v1016
    %1417 = vmatprep.subr.bf16.mxu0 0
    %1418 = vmatpush1.bf16.msra.mxu0 %v1015
    %1419 = vmatprep.subr.bf16.mxu0 0
    %1420 = vmatpush1.bf16.msra.mxu0 %v1014
    %1421 = vmatprep.subr.bf16.mxu0 0
    %1422 = vmatpush1.bf16.msra.mxu0 %v1013
    %1423 = vmatprep.subr.bf16.mxu0 0
    %1424 = vmatpush1.bf16.msra.mxu0 %v1012
    %1425 = vmatprep.subr.bf16.mxu0 0
    %1426 = vmatpush1.bf16.msra.mxu0 %v1011
    %1427 = vmatprep.subr.bf16.mxu0 0
    %1428 = vmatpush2.bf16.msra.mxu0 %v1026
    %1429 = vmatprep.subr.bf16.mxu0 0
    %1430 = vmatpush2.bf16.msra.mxu0 %v1025
    %1431 = vmatprep.subr.bf16.mxu0 0
    %1432 = vmatpush2.bf16.msra.mxu0 %v1024
    %1433 = vmatprep.subr.bf16.mxu0 0
    %1434 = vmatpush2.bf16.msra.mxu0 %v1023
    %1435 = vmatprep.subr.bf16.mxu0 0
    %1436 = vmatpush2.bf16.msra.mxu0 %v1022
    %1437 = vmatprep.subr.bf16.mxu0 0
    %1438 = vmatpush2.bf16.msra.mxu0 %v1021
    %1439 = vmatprep.subr.bf16.mxu0 0
    %1440 = vmatpush2.bf16.msra.mxu0 %v1020
    %1441 = vmatprep.subr.bf16.mxu0 0
    %1442 = vmatpush2.bf16.msra.mxu0 %v1019
    %1443 = vmatprep.mubr.bf16.mxu0 %v382
    %1444 = vmatmul.mubr.bf16.gmra.mxu0 %v368
    %v1445 = vpop.f32.mrf.mxu0
    %v1446 = vadd.f32 %v1406, %v1445
    %v1447 = vpop.f32.mrf.mxu0
    %v1448 = vpop.f32.mrf.mxu0
    %v1449 = vpop.f32.mrf.mxu0
    %1450 = vdwg.mxu0
    %1451 = vmatprep.subr.bf16.mxu0 0
    %1452 = vmatpush1.bf16.msra.mxu0 %v1034
    %1453 = vmatprep.subr.bf16.mxu0 0
    %1454 = vmatpush1.bf16.msra.mxu0 %v1033
    %1455 = vmatprep.subr.bf16.mxu0 0
    %1456 = vmatpush1.bf16.msra.mxu0 %v1032
    %1457 = vmatprep.subr.bf16.mxu0 0
    %1458 = vmatpush1.bf16.msra.mxu0 %v1031
    %1459 = vmatprep.subr.bf16.mxu0 0
    %1460 = vmatpush1.bf16.msra.mxu0 %v1030
    %1461 = vmatprep.subr.bf16.mxu0 0
    %1462 = vmatpush1.bf16.msra.mxu0 %v1029
    %1463 = vmatprep.subr.bf16.mxu0 0
    %1464 = vmatpush1.bf16.msra.mxu0 %v1028
    %1465 = vmatprep.subr.bf16.mxu0 0
    %1466 = vmatpush1.bf16.msra.mxu0 %v1027
    %1467 = vmatprep.subr.bf16.mxu0 0
    %1468 = vmatpush2.bf16.msra.mxu0 %v1042
    %1469 = vmatprep.subr.bf16.mxu0 0
    %1470 = vmatpush2.bf16.msra.mxu0 %v1041
    %1471 = vmatprep.subr.bf16.mxu0 0
    %1472 = vmatpush2.bf16.msra.mxu0 %v1040
    %1473 = vmatprep.subr.bf16.mxu0 0
    %1474 = vmatpush2.bf16.msra.mxu0 %v1039
    %1475 = vmatprep.subr.bf16.mxu0 0
    %1476 = vmatpush2.bf16.msra.mxu0 %v1038
    %1477 = vmatprep.subr.bf16.mxu0 0
    %1478 = vmatpush2.bf16.msra.mxu0 %v1037
    %1479 = vmatprep.subr.bf16.mxu0 0
    %1480 = vmatpush2.bf16.msra.mxu0 %v1036
    %1481 = vmatprep.subr.bf16.mxu0 0
    %1482 = vmatpush2.bf16.msra.mxu0 %v1035
    %1483 = vmatprep.mubr.bf16.mxu0 %v386
    %1484 = vmatmul.mubr.bf16.gmra.mxu0 %v384
    %v1485 = vpop.f32.mrf.mxu0
    %v1486 = vadd.f32 %v1446, %v1485
    %v1487 = vpop.f32.mrf.mxu0
    %v1488 = vpop.f32.mrf.mxu0
    %v1489 = vpop.f32.mrf.mxu0
    %1490 = vdwg.mxu0
    %v1491 = vmax.f32 %v1486, 0.0
    %v1492 = vpack.c.bf16 %v1491, %v1491
    %v1493 = vld [vmem:[%s3] sm:$0xf]
    %v1494 = vld [vmem:[%s3 + $0x4] sm:$0xf]
    %v1495 = vld [vmem:[%s3 + $0x8] sm:$0xf]
    %v1496 = vld [vmem:[%s3 + $0xc] sm:$0xf]
    %v1497 = vld [vmem:[%s3 + $0x10] sm:$0xf]
    %v1498 = vld [vmem:[%s3 + $0x14] sm:$0xf]
    %v1499 = vld [vmem:[%s3 + $0x18] sm:$0xf]
    %v1500 = vld [vmem:[%s3 + $0x1c] sm:$0xf]
    %v1501 = vld [vmem:[%s3 + $0x20] sm:$0xf]
    %v1502 = vld [vmem:[%s3 + $0x24] sm:$0xf]
    %v1503 = vld [vmem:[%s3 + $0x28] sm:$0xf]
    %v1504 = vld [vmem:[%s3 + $0x2c] sm:$0xf]
    %v1505 = vld [vmem:[%s3 + $0x30] sm:$0xf]
    %v1506 = vld [vmem:[%s3 + $0x34] sm:$0xf]
    %v1507 = vld [vmem:[%s3 + $0x38] sm:$0xf]
    %v1508 = vld [vmem:[%s3 + $0x3c] sm:$0xf]
    %v1509 = vld [vmem:[%s4] sm:$0x1]
    %v1511 = vlaneseq
    %v1512 = vshrl.u32 %v1511, 7
    %v1513 = vsub.s32 0, %v1512
    %v1514 = vrot.slane %v1509, %v1513
    %v1532 = vunpack.c.l.b16 %v1493
    %v1533 = vunpack.c.l.b16 %v1494
    %v1534 = vunpack.c.l.b16 %v1495
    %v1535 = vunpack.c.l.b16 %v1496
    %v1536 = vunpack.c.l.b16 %v1497
    %v1537 = vunpack.c.l.b16 %v1498
    %v1538 = vunpack.c.l.b16 %v1499
    %v1539 = vunpack.c.l.b16 %v1500
    %v1540 = vunpack.c.l.b16 %v1501
    %v1541 = vunpack.c.l.b16 %v1502
    %v1542 = vunpack.c.l.b16 %v1503
    %v1543 = vunpack.c.l.b16 %v1504
    %v1544 = vunpack.c.l.b16 %v1505
    %v1545 = vunpack.c.l.b16 %v1506
    %v1546 = vunpack.c.l.b16 %v1507
    %v1547 = vunpack.c.l.b16 %v1508
    %v1548 = vpack.c.b16 %v1533, %v1532
    %v1549 = vpack.c.b16 %v1535, %v1534
    %v1550 = vpack.c.b16 %v1537, %v1536
    %v1551 = vpack.c.b16 %v1539, %v1538
    %v1552 = vpack.c.b16 %v1541, %v1540
    %v1553 = vpack.c.b16 %v1543, %v1542
    %v1554 = vpack.c.b16 %v1545, %v1544
    %v1555 = vpack.c.b16 %v1547, %v1546
    %1564 = vmatprep.subr.bf16.mxu0 0
    %1565 = vmatpush1.bf16.msra.mxu0 %v1555
    %1566 = vmatprep.subr.bf16.mxu0 0
    %1567 = vmatpush1.bf16.msra.mxu0 %v1554
    %1568 = vmatprep.subr.bf16.mxu0 0
    %1569 = vmatpush1.bf16.msra.mxu0 %v1553
    %1570 = vmatprep.subr.bf16.mxu0 0
    %1571 = vmatpush1.bf16.msra.mxu0 %v1552
    %1572 = vmatprep.subr.bf16.mxu0 0
    %1573 = vmatpush1.bf16.msra.mxu0 %v1551
    %1574 = vmatprep.subr.bf16.mxu0 0
    %1575 = vmatpush1.bf16.msra.mxu0 %v1550
    %1576 = vmatprep.subr.bf16.mxu0 0
    %1577 = vmatpush1.bf16.msra.mxu0 %v1549
    %1578 = vmatprep.subr.bf16.mxu0 0
    %1579 = vmatpush1.bf16.msra.mxu0 %v1548
    %1580 = vmatprep.subr.bf16.mxu0 0
    %1581 = vmatpush2.bf16.msra.mxu0 0
    %1582 = vmatprep.subr.bf16.mxu0 0
    %1583 = vmatpush2.bf16.msra.mxu0 0
    %1584 = vmatprep.subr.bf16.mxu0 0
    %1585 = vmatpush2.bf16.msra.mxu0 0
    %1586 = vmatprep.subr.bf16.mxu0 0
    %1587 = vmatpush2.bf16.msra.mxu0 0
    %1588 = vmatprep.subr.bf16.mxu0 0
    %1589 = vmatpush2.bf16.msra.mxu0 0
    %1590 = vmatprep.subr.bf16.mxu0 0
    %1591 = vmatpush2.bf16.msra.mxu0 0
    %1592 = vmatprep.subr.bf16.mxu0 0
    %1593 = vmatpush2.bf16.msra.mxu0 0
    %1594 = vmatprep.subr.bf16.mxu0 0
    %1595 = vmatpush2.bf16.msra.mxu0 0
    %1596 = vmatprep.mubr.bf16.mxu0 0
    %1597 = vmatmul.mubr.bf16.gmra.mxu0 %v1492
    %v1598 = vpop.f32.mrf.mxu0
    %v1599 = vadd.f32 %v1514, %v1598
    %v1600 = vpop.f32.mrf.mxu0
    %v1601 = vpop.f32.mrf.mxu0
    %v1602 = vpop.f32.mrf.mxu0
    %1603 = vdwg.mxu0
    %1604 = vst [vmem:[#allocation2] sm:$0x3] %v1599
    // Predicated region
    $region22: #{simple_cnn_forward.5} parent=1 // pred_check
      _
    $region23: #{simple_cnn_forward.5} parent=1 // pred_check_branch
      %1606 = sbr.rel (0) target = $region25
    $region24: #{simple_cnn_forward.5} parent=1 // pred_region
      %s1608 = ssub.s32 32, 32
      %1609 = vsyncadd [#allocation3], %s1608
      %s1611 = sshll.u32 [#allocation2], 4
      %s1612 = int_to_ptr.vmem [resolvable:$true] %s1611
      %1614 = dma.vmem_to_hbm [thread:$0]  %s1612, 32, %s5, [#allocation3]
    $region25: #{simple_cnn_forward.5} parent=1 // pred_fallthru
      _
    // Predicated region
    $region26: #{simple_cnn_forward.5} parent=1 // pred_check
      _
    $region27: #{simple_cnn_forward.5} parent=1 // pred_check_branch
      %1616 = sbr.rel (0) target = $region29
    $region28: #{simple_cnn_forward.5} parent=1 // pred_region
      %1617 = dma.done [#allocation3], 32
    $region29: #{simple_cnn_forward.5} parent=1 // pred_fallthru
      _
    %1618 = vsyncpa [#allocation3], 1

</llo_original>
